<compile_context>
chip_gen: v5e
topology: v5e:2x2
jax: 0.10.0
libtpu: 0.0.40
codegen_flags: <defaults>
</compile_context>

<pallas_src>
import numpy as np
import jax
import jax.numpy as jnp
from jax import lax
from jax.experimental import pallas as pl
from jax.experimental.pallas import tpu as pltpu

# ---- static config matching the module's hard-coded sizes -------------------
NUM_CLASSES = 11
BATCH = 2
C_OUT, KH, KW = 16, 5, 5
H_IN, W_IN = 64, 510                              # chosen so flattened size == 48576
H_CONV, W_CONV = H_IN - KH + 1, W_IN - KW + 1     # 60, 506
PH, PW = 5, 2                                     # MaxPool2d((5, 2)), stride == kernel
HP, WP = H_CONV // PH, W_CONV // PW               # 12, 253
FEAT = C_OUT * HP * WP                            # 48576 (BatchNorm1d / fc3 in-features)
assert FEAT == 48576
ROWS = HP * C_OUT                                 # 192 pooled feature rows (i, c)
WPP = 256                                         # lane-padded WP
NPLANE = KW + 1                                   # 6 pre-shifted column planes
NTAP = NPLANE * KH                                # 30 real taps (plane m, row offset di)
TAPP = 32                                         # taps padded: +1 bias tap, +1 zero tap
RLANE = PH * WPP                                  # 1280: 5 conv rows side-by-side in lanes
OUT_ROWS = 16                                     # class dim padded to a sublane tile
NEG_SLOPE = 0.01                                  # nn.LeakyReLU default
BN_EPS = 1e-5                                     # nn.BatchNorm1d default


def _leaky(v):
    return jnp.where(v >= 0, v, NEG_SLOPE * v)


# ---------------- fused kernel: conv + pool + BN + fc3, one sample per grid step --------
def fused_kernel(wexp_ref, xq_ref, bn_ref, w3_ref, b3_ref, o_ref, feat_ref):
    # wexp_ref : VMEM (32, 32)  bf16   expanded conv weights; row = parity*16 + channel,
    #                                  col = plane*5 + row-tap (col 30 = bias, col 31 = 0)
    # xq_ref   : VMEM (1, HP, 32, 1280) bf16   im2col patches for this sample
    # bn_ref   : VMEM (2, ROWS, WPP) f32       folded BN scale / shift
    # w3_ref   : VMEM (11, ROWS, WPP) bf16     fc3 weight, (pooled_row, channel, lane) order
    # b3_ref   : VMEM (16, 128) f32            fc3 bias along sublanes (rows 11..15 = 0)
    # o_ref    : VMEM (1, 16, 128) f32         logits (classes along sublanes)
    # feat_ref : VMEM scratch (ROWS, WPP) f32  pooled + activated features

    wexp = wexp_ref[...]                                        # (32, 32) bf16, loaded once

    # ---- conv(5x5)+bias + maxpool(5,2) + 2x LeakyReLU: one MXU matmul per pooled row ----
    for i in range(HP):
        patches = xq_ref[0, i]                                  # (32, 1280) bf16
        acc = jnp.dot(wexp, patches,
                      preferred_element_type=jnp.float32)       # (32, 1280) f32 on the MXU
        # max over the 5 conv rows (aligned 256-lane blocks)
        m = acc[:, 0:WPP]
        for r in range(1, PH):
            m = jnp.maximum(m, acc[:, r * WPP:(r + 1) * WPP])
        # max over the 2 column parities (sublane halves 0:16 / 16:32)
        pooled = jnp.maximum(m[0:C_OUT, :], m[C_OUT:2 * C_OUT, :])        # (16, 256)
        # leaky(pool(leaky(conv))) == leaky(leaky(pool(conv)))  (LeakyReLU is monotone)
        feat_ref[i * C_OUT:(i + 1) * C_OUT, :] = _leaky(_leaky(pooled))   # dense (16,256) store

    # ---- head: BatchNorm1d (folded, eval) + LeakyReLU + (Dropout = identity) ------------
    # TODO(synk): BatchNorm1d training-mode batch statistics and Dropout(p=0.12) masking
    #             are not implemented (inference semantics only).
    feat_ref[...] = _leaky(feat_ref[...] * bn_ref[0] + bn_ref[1])

    # ---- fc3 + LeakyReLU: per-class multiply, sublane reduce (VALU), one lane reduce ----
    parts = []
    for o in range(NUM_CLASSES):
        prod = feat_ref[...] * w3_ref[o].astype(jnp.float32)    # (ROWS, WPP)
        parts.append(jnp.sum(prod, axis=0, keepdims=True))      # (1, WPP)
    parts.append(jnp.zeros((OUT_ROWS - NUM_CLASSES, WPP), jnp.float32))
    col = jnp.concatenate(parts, axis=0)                        # (16, WPP)
    logits = jnp.sum(col, axis=1, keepdims=True)                # (16, 1)
    o_ref[0] = _leaky(logits + b3_ref[...])                     # dense (16, 128) store


# ---------------------------------- wrapper ----------------------------------------------
def cnn_forward_pallas(x, p):
    n = x.shape[0]
    x2d = x[:, 0, :, :]                                          # (N, 64, 510)

    # 6 pre-shifted column planes: planes[n, m, h, j] = x[n, h, 2*j + m],  j in [0, 253)
    planes = jnp.stack([x2d[:, :, m:m + 2 * WP:2] for m in range(NPLANE)], axis=1)
    planes = jnp.pad(planes, ((0, 0), (0, 0), (0, 0), (0, WPP - WP)))    # (N, 6, 64, 256)

    # row quintuples: xq[n, m, s, r*256 + j] = planes[n, m, s + r, j],  s = conv row 0..59
    xq = jnp.concatenate([planes[:, :, r:r + H_CONV, :] for r in range(PH)],
                         axis=-1)                                        # (N, 6, 60, 1280)
    # regroup conv rows s = 5*i + di into (pooled row i, tap t = m*5 + di)
    xq = xq.reshape(n, NPLANE, HP, KH, RLANE).transpose(0, 2, 1, 3, 4)
    xq = xq.reshape(n, HP, NTAP, RLANE)
    # tap 30: constant ones (carries the conv bias through the matmul); tap 31: zero pad
    xq = jnp.concatenate(
        [xq,
         jnp.ones((n, HP, 1, RLANE), xq.dtype),
         jnp.zeros((n, HP, 1, RLANE), xq.dtype)],
        axis=2).astype(jnp.bfloat16)                                     # (N, 12, 32, 1280)

    # expanded conv weights (32, 32): row = parity*16 + c, col = m*5 + di, col 30 = bias
    w = p["conv_w"][:, 0, :, :].astype(jnp.float32)                      # (16, 5, 5) [c,di,dj]
    wexp = jnp.zeros((2 * C_OUT, TAPP), jnp.float32)
    for par in range(2):
        for m in range(NPLANE):
            dj = m - par
            if 0 <= dj < KW:
                wexp = wexp.at[par * C_OUT:(par + 1) * C_OUT,
                               m * KH:m * KH + KH].set(w[:, :, dj])
        wexp = wexp.at[par * C_OUT:(par + 1) * C_OUT, NTAP].set(p["conv_b"])
    wexp = wexp.astype(jnp.bfloat16)

    # BatchNorm folded to scale/shift, repacked to the (pooled_row, channel, lane) layout
    scale = p["bn_gamma"] * lax.rsqrt(p["bn_var"] + BN_EPS)
    shift = p["bn_beta"] - p["bn_mean"] * scale

    def pack_feat(v):        # (FEAT,) in (c, i, wp) order -> (ROWS, WPP) in (i, c, wp) order
        v = v.reshape(C_OUT, HP, WP).transpose(1, 0, 2).reshape(ROWS, WP)
        return jnp.pad(v, ((0, 0), (0, WPP - WP)))

    bn = jnp.stack([pack_feat(scale), pack_feat(shift)], axis=0)         # (2, 192, 256)

    w3 = p["fc3_w"].reshape(NUM_CLASSES, C_OUT, HP, WP).transpose(0, 2, 1, 3)
    w3 = jnp.pad(w3.reshape(NUM_CLASSES, ROWS, WP),
                 ((0, 0), (0, 0), (0, WPP - WP))).astype(jnp.bfloat16)   # (11, 192, 256)

    b3 = jnp.pad(p["fc3_b"], (0, OUT_ROWS - NUM_CLASSES))
    b3 = jnp.tile(b3[:, None], (1, 128)).astype(jnp.float32)             # (16, 128)

    out = pl.pallas_call(
        fused_kernel,
        out_shape=jax.ShapeDtypeStruct((n, OUT_ROWS, 128), jnp.float32),
        grid=(n,),
        in_specs=[
            pl.BlockSpec((2 * C_OUT, TAPP), lambda i: (0, 0)),            # wexp  (resident)
            pl.BlockSpec((1, HP, TAPP, RLANE), lambda i: (i, 0, 0, 0)),   # per-sample patches
            pl.BlockSpec((2, ROWS, WPP), lambda i: (0, 0, 0)),            # BN scale/shift
            pl.BlockSpec((NUM_CLASSES, ROWS, WPP), lambda i: (0, 0, 0)),  # fc3 weight
            pl.BlockSpec((OUT_ROWS, 128), lambda i: (0, 0)),              # fc3 bias
        ],
        out_specs=pl.BlockSpec((1, OUT_ROWS, 128), lambda i: (i, 0, 0)),
        scratch_shapes=[pltpu.VMEM((ROWS, WPP), jnp.float32)],
        compiler_params=pltpu.CompilerParams(
            dimension_semantics=("parallel",),          # batch across v7x TensorCores
            vmem_limit_bytes=32 * 1024 * 1024),
    )(wexp, xq, bn, w3, b3)
    return out[:, :NUM_CLASSES, 0]


# ----------------------- pure-JAX reference (for validation) -----------------------------
def cnn_forward_reference(x, p):
    y = lax.conv_general_dilated(x, p["conv_w"], (1, 1), "VALID",
                                 dimension_numbers=("NCHW", "OIHW", "NCHW"))
    y = _leaky(y + p["conv_b"][None, :, None, None])
    y = lax.reduce_window(y, -jnp.inf, lax.max, (1, 1, PH, PW), (1, 1, PH, PW), "VALID")
    y = _leaky(y)
    f = y.reshape(y.shape[0], -1)
    h = _leaky((f - p["bn_mean"]) * (lax.rsqrt(p["bn_var"] + BN_EPS) * p["bn_gamma"])
               + p["bn_beta"])
    return _leaky(h @ p["fc3_w"].T + p["fc3_b"])


if __name__ == "__main__":
    key = jax.random.PRNGKey(0)
    ks = jax.random.split(key, 9)
    params = dict(
        conv_w=0.1 * jax.random.normal(ks[0], (C_OUT, 1, KH, KW), jnp.float32),
        conv_b=0.1 * jax.random.normal(ks[1], (C_OUT,), jnp.float32),
        bn_gamma=jax.random.uniform(ks[2], (FEAT,), jnp.float32, 0.5, 1.5),
        bn_beta=0.1 * jax.random.normal(ks[3], (FEAT,), jnp.float32),
        bn_mean=0.1 * jax.random.normal(ks[4], (FEAT,), jnp.float32),
        bn_var=jax.random.uniform(ks[5], (FEAT,), jnp.float32, 0.5, 1.5),
        fc3_w=0.01 * jax.random.normal(ks[6], (NUM_CLASSES, FEAT), jnp.float32),
        fc3_b=0.1 * jax.random.normal(ks[7], (NUM_CLASSES,), jnp.float32),
    )
    x = jax.random.normal(ks[8], (BATCH, 1, H_IN, W_IN), jnp.float32)

    fwd = jax.jit(cnn_forward_pallas)
    out = jax.block_until_ready(fwd(x, params))
    ref = jax.block_until_ready(cnn_forward_reference(x, params))

    assert out.shape == (BATCH, NUM_CLASSES)
    # Tolerance covers the intentional bf16 cast of the conv patches/weights and of the
    # 48576-wide fc3 weight (estimated logit error ~5e-3); accumulation stays in f32.
    np.testing.assert_allclose(np.asarray(out), np.asarray(ref), rtol=2e-2, atol=2e-2)
    print("KERNEL_OK")
</pallas_src>

<mosaic_0001>
module attributes {stable_mosaic.version = 11 : i64} {
  func.func @fused_kernel(%arg0: i32, %arg1: memref<32x32xbf16, #tpu.memory_space<vmem>>, %arg2: memref<1x12x32x1280xbf16, #tpu.memory_space<vmem>>, %arg3: memref<2x192x256xf32, #tpu.memory_space<vmem>>, %arg4: memref<11x192x256xbf16, #tpu.memory_space<vmem>>, %arg5: memref<16x128xf32, #tpu.memory_space<vmem>>, %arg6: memref<1x16x128xf32, #tpu.memory_space<vmem>>, %arg7: memref<192x256xf32, #tpu.memory_space<vmem>>) attributes {dimension_semantics = [#tpu.dimension_semantics<parallel>], iteration_bounds = array<i64: 2>, scalar_prefetch = 0 : i64, scratch_operands = 1 : i64, tpu.core_type = #tpu.core_type<tc>, window_params = [{pipeline_mode = #tpu.pipeline_mode<synchronous>, transform_indices = @transform_0, window_bounds = array<i64: 32, 32>}, {transform_indices = @transform_1, window_bounds = array<i64: 1, 12, 32, 1280>}, {pipeline_mode = #tpu.pipeline_mode<synchronous>, transform_indices = @transform_2, window_bounds = array<i64: 2, 192, 256>}, {pipeline_mode = #tpu.pipeline_mode<synchronous>, transform_indices = @transform_3, window_bounds = array<i64: 11, 192, 256>}, {pipeline_mode = #tpu.pipeline_mode<synchronous>, transform_indices = @transform_4, window_bounds = array<i64: 16, 128>}, {transform_indices = @transform_5, window_bounds = array<i64: 1, 16, 128>}]} {
    %c0 = arith.constant 0 : index
    %c0_0 = arith.constant 0 : index
    %0 = vector.load %arg1[%c0, %c0_0] : memref<32x32xbf16, #tpu.memory_space<vmem>>, vector<32x32xbf16>
    %c0_1 = arith.constant 0 : index
    %c0_2 = arith.constant 0 : index
    %c0_3 = arith.constant 0 : index
    %c0_4 = arith.constant 0 : index
    %1 = vector.load %arg2[%c0_1, %c0_2, %c0_3, %c0_4] : memref<1x12x32x1280xbf16, #tpu.memory_space<vmem>>, vector<1x1x32x1280xbf16>
    %2 = vector.shape_cast %1 : vector<1x1x32x1280xbf16> to vector<32x1280xbf16>
    %cst = arith.constant dense<0.000000e+00> : vector<32x1280xf32>
    %3 = tpu.matmul %0, %2, %cst {dimension_numbers = #tpu.dot_dimension_numbers<[1], [0], [0], [1], [0, 0, 1, 1], [], []>} : vector<32x32xbf16>, vector<32x1280xbf16>, vector<32x1280xf32> -> vector<32x1280xf32>
    %4 = vector.extract_strided_slice %3 {offsets = [0, 0], sizes = [32, 256], strides = [1, 1]} : vector<32x1280xf32> to vector<32x256xf32>
    %5 = vector.extract_strided_slice %3 {offsets = [0, 256], sizes = [32, 256], strides = [1, 1]} : vector<32x1280xf32> to vector<32x256xf32>
    %6 = arith.maximumf %4, %5 : vector<32x256xf32>
    %7 = vector.extract_strided_slice %3 {offsets = [0, 512], sizes = [32, 256], strides = [1, 1]} : vector<32x1280xf32> to vector<32x256xf32>
    %8 = arith.maximumf %6, %7 : vector<32x256xf32>
    %9 = vector.extract_strided_slice %3 {offsets = [0, 768], sizes = [32, 256], strides = [1, 1]} : vector<32x1280xf32> to vector<32x256xf32>
    %10 = arith.maximumf %8, %9 : vector<32x256xf32>
    %11 = vector.extract_strided_slice %3 {offsets = [0, 1024], sizes = [32, 256], strides = [1, 1]} : vector<32x1280xf32> to vector<32x256xf32>
    %12 = arith.maximumf %10, %11 : vector<32x256xf32>
    %13 = vector.extract_strided_slice %12 {offsets = [0, 0], sizes = [16, 256], strides = [1, 1]} : vector<32x256xf32> to vector<16x256xf32>
    %14 = vector.extract_strided_slice %12 {offsets = [16, 0], sizes = [16, 256], strides = [1, 1]} : vector<32x256xf32> to vector<16x256xf32>
    %15 = arith.maximumf %13, %14 : vector<16x256xf32>
    %cst_5 = arith.constant 0.000000e+00 : f32
    %16 = vector.broadcast %cst_5 : f32 to vector<16x256xf32>
    %17 = arith.cmpf oge, %15, %16 : vector<16x256xf32>
    %cst_6 = arith.constant 0.00999999977 : f32
    %18 = vector.broadcast %cst_6 : f32 to vector<16x256xf32>
    %19 = arith.mulf %18, %15 : vector<16x256xf32>
    %20 = arith.select %17, %15, %19 : vector<16x256xi1>, vector<16x256xf32>
    %cst_7 = arith.constant 0.000000e+00 : f32
    %21 = vector.broadcast %cst_7 : f32 to vector<16x256xf32>
    %22 = arith.cmpf oge, %20, %21 : vector<16x256xf32>
    %cst_8 = arith.constant 0.00999999977 : f32
    %23 = vector.broadcast %cst_8 : f32 to vector<16x256xf32>
    %24 = arith.mulf %23, %20 : vector<16x256xf32>
    %25 = arith.select %22, %20, %24 : vector<16x256xi1>, vector<16x256xf32>
    %c0_9 = arith.constant 0 : index
    %c0_10 = arith.constant 0 : index
    %26 = vector.load %arg7[%c0_9, %c0_10] : memref<192x256xf32, #tpu.memory_space<vmem>>, vector<16x256xf32>
    tpu.vector_store %arg7[%c0_9, %c0_10], %25 {strides = array<i32>} : memref<192x256xf32, #tpu.memory_space<vmem>>, vector<16x256xf32>,
    %c0_11 = arith.constant 0 : index
    %c1 = arith.constant 1 : index
    %c0_12 = arith.constant 0 : index
    %c0_13 = arith.constant 0 : index
    %27 = vector.load %arg2[%c0_11, %c1, %c0_12, %c0_13] : memref<1x12x32x1280xbf16, #tpu.memory_space<vmem>>, vector<1x1x32x1280xbf16>
    %28 = vector.shape_cast %27 : vector<1x1x32x1280xbf16> to vector<32x1280xbf16>
    %cst_14 = arith.constant dense<0.000000e+00> : vector<32x1280xf32>
    %29 = tpu.matmul %0, %28, %cst_14 {dimension_numbers = #tpu.dot_dimension_numbers<[1], [0], [0], [1], [0, 0, 1, 1], [], []>} : vector<32x32xbf16>, vector<32x1280xbf16>, vector<32x1280xf32> -> vector<32x1280xf32>
    %30 = vector.extract_strided_slice %29 {offsets = [0, 0], sizes = [32, 256], strides = [1, 1]} : vector<32x1280xf32> to vector<32x256xf32>
    %31 = vector.extract_strided_slice %29 {offsets = [0, 256], sizes = [32, 256], strides = [1, 1]} : vector<32x1280xf32> to vector<32x256xf32>
    %32 = arith.maximumf %30, %31 : vector<32x256xf32>
    %33 = vector.extract_strided_slice %29 {offsets = [0, 512], sizes = [32, 256], strides = [1, 1]} : vector<32x1280xf32> to vector<32x256xf32>
    %34 = arith.maximumf %32, %33 : vector<32x256xf32>
    %35 = vector.extract_strided_slice %29 {offsets = [0, 768], sizes = [32, 256], strides = [1, 1]} : vector<32x1280xf32> to vector<32x256xf32>
    %36 = arith.maximumf %34, %35 : vector<32x256xf32>
    %37 = vector.extract_strided_slice %29 {offsets = [0, 1024], sizes = [32, 256], strides = [1, 1]} : vector<32x1280xf32> to vector<32x256xf32>
    %38 = arith.maximumf %36, %37 : vector<32x256xf32>
    %39 = vector.extract_strided_slice %38 {offsets = [0, 0], sizes = [16, 256], strides = [1, 1]} : vector<32x256xf32> to vector<16x256xf32>
    %40 = vector.extract_strided_slice %38 {offsets = [16, 0], sizes = [16, 256], strides = [1, 1]} : vector<32x256xf32> to vector<16x256xf32>
    %41 = arith.maximumf %39, %40 : vector<16x256xf32>
    %cst_15 = arith.constant 0.000000e+00 : f32
    %42 = vector.broadcast %cst_15 : f32 to vector<16x256xf32>
    %43 = arith.cmpf oge, %41, %42 : vector<16x256xf32>
    %cst_16 = arith.constant 0.00999999977 : f32
    %44 = vector.broadcast %cst_16 : f32 to vector<16x256xf32>
    %45 = arith.mulf %44, %41 : vector<16x256xf32>
    %46 = arith.select %43, %41, %45 : vector<16x256xi1>, vector<16x256xf32>
    %cst_17 = arith.constant 0.000000e+00 : f32
    %47 = vector.broadcast %cst_17 : f32 to vector<16x256xf32>
    %48 = arith.cmpf oge, %46, %47 : vector<16x256xf32>
    %cst_18 = arith.constant 0.00999999977 : f32
    %49 = vector.broadcast %cst_18 : f32 to vector<16x256xf32>
    %50 = arith.mulf %49, %46 : vector<16x256xf32>
    %51 = arith.select %48, %46, %50 : vector<16x256xi1>, vector<16x256xf32>
    %c16 = arith.constant 16 : index
    %c0_19 = arith.constant 0 : index
    %52 = vector.load %arg7[%c16, %c0_19] : memref<192x256xf32, #tpu.memory_space<vmem>>, vector<16x256xf32>
    tpu.vector_store %arg7[%c16, %c0_19], %51 {strides = array<i32>} : memref<192x256xf32, #tpu.memory_space<vmem>>, vector<16x256xf32>,
    %c0_20 = arith.constant 0 : index
    %c2 = arith.constant 2 : index
    %c0_21 = arith.constant 0 : index
    %c0_22 = arith.constant 0 : index
    %53 = vector.load %arg2[%c0_20, %c2, %c0_21, %c0_22] : memref<1x12x32x1280xbf16, #tpu.memory_space<vmem>>, vector<1x1x32x1280xbf16>
    %54 = vector.shape_cast %53 : vector<1x1x32x1280xbf16> to vector<32x1280xbf16>
    %cst_23 = arith.constant dense<0.000000e+00> : vector<32x1280xf32>
    %55 = tpu.matmul %0, %54, %cst_23 {dimension_numbers = #tpu.dot_dimension_numbers<[1], [0], [0], [1], [0, 0, 1, 1], [], []>} : vector<32x32xbf16>, vector<32x1280xbf16>, vector<32x1280xf32> -> vector<32x1280xf32>
    %56 = vector.extract_strided_slice %55 {offsets = [0, 0], sizes = [32, 256], strides = [1, 1]} : vector<32x1280xf32> to vector<32x256xf32>
    %57 = vector.extract_strided_slice %55 {offsets = [0, 256], sizes = [32, 256], strides = [1, 1]} : vector<32x1280xf32> to vector<32x256xf32>
    %58 = arith.maximumf %56, %57 : vector<32x256xf32>
    %59 = vector.extract_strided_slice %55 {offsets = [0, 512], sizes = [32, 256], strides = [1, 1]} : vector<32x1280xf32> to vector<32x256xf32>
    %60 = arith.maximumf %58, %59 : vector<32x256xf32>
    %61 = vector.extract_strided_slice %55 {offsets = [0, 768], sizes = [32, 256], strides = [1, 1]} : vector<32x1280xf32> to vector<32x256xf32>
    %62 = arith.maximumf %60, %61 : vector<32x256xf32>
    %63 = vector.extract_strided_slice %55 {offsets = [0, 1024], sizes = [32, 256], strides = [1, 1]} : vector<32x1280xf32> to vector<32x256xf32>
    %64 = arith.maximumf %62, %63 : vector<32x256xf32>
    %65 = vector.extract_strided_slice %64 {offsets = [0, 0], sizes = [16, 256], strides = [1, 1]} : vector<32x256xf32> to vector<16x256xf32>
    %66 = vector.extract_strided_slice %64 {offsets = [16, 0], sizes = [16, 256], strides = [1, 1]} : vector<32x256xf32> to vector<16x256xf32>
    %67 = arith.maximumf %65, %66 : vector<16x256xf32>
    %cst_24 = arith.constant 0.000000e+00 : f32
    %68 = vector.broadcast %cst_24 : f32 to vector<16x256xf32>
    %69 = arith.cmpf oge, %67, %68 : vector<16x256xf32>
    %cst_25 = arith.constant 0.00999999977 : f32
    %70 = vector.broadcast %cst_25 : f32 to vector<16x256xf32>
    %71 = arith.mulf %70, %67 : vector<16x256xf32>
    %72 = arith.select %69, %67, %71 : vector<16x256xi1>, vector<16x256xf32>
    %cst_26 = arith.constant 0.000000e+00 : f32
    %73 = vector.broadcast %cst_26 : f32 to vector<16x256xf32>
    %74 = arith.cmpf oge, %72, %73 : vector<16x256xf32>
    %cst_27 = arith.constant 0.00999999977 : f32
    %75 = vector.broadcast %cst_27 : f32 to vector<16x256xf32>
    %76 = arith.mulf %75, %72 : vector<16x256xf32>
    %77 = arith.select %74, %72, %76 : vector<16x256xi1>, vector<16x256xf32>
    %c32 = arith.constant 32 : index
    %c0_28 = arith.constant 0 : index
    %78 = vector.load %arg7[%c32, %c0_28] : memref<192x256xf32, #tpu.memory_space<vmem>>, vector<16x256xf32>
    tpu.vector_store %arg7[%c32, %c0_28], %77 {strides = array<i32>} : memref<192x256xf32, #tpu.memory_space<vmem>>, vector<16x256xf32>,
    %c0_29 = arith.constant 0 : index
    %c3 = arith.constant 3 : index
    %c0_30 = arith.constant 0 : index
    %c0_31 = arith.constant 0 : index
    %79 = vector.load %arg2[%c0_29, %c3, %c0_30, %c0_31] : memref<1x12x32x1280xbf16, #tpu.memory_space<vmem>>, vector<1x1x32x1280xbf16>
    %80 = vector.shape_cast %79 : vector<1x1x32x1280xbf16> to vector<32x1280xbf16>
    %cst_32 = arith.constant dense<0.000000e+00> : vector<32x1280xf32>
    %81 = tpu.matmul %0, %80, %cst_32 {dimension_numbers = #tpu.dot_dimension_numbers<[1], [0], [0], [1], [0, 0, 1, 1], [], []>} : vector<32x32xbf16>, vector<32x1280xbf16>, vector<32x1280xf32> -> vector<32x1280xf32>
    %82 = vector.extract_strided_slice %81 {offsets = [0, 0], sizes = [32, 256], strides = [1, 1]} : vector<32x1280xf32> to vector<32x256xf32>
    %83 = vector.extract_strided_slice %81 {offsets = [0, 256], sizes = [32, 256], strides = [1, 1]} : vector<32x1280xf32> to vector<32x256xf32>
    %84 = arith.maximumf %82, %83 : vector<32x256xf32>
    %85 = vector.extract_strided_slice %81 {offsets = [0, 512], sizes = [32, 256], strides = [1, 1]} : vector<32x1280xf32> to vector<32x256xf32>
    %86 = arith.maximumf %84, %85 : vector<32x256xf32>
    %87 = vector.extract_strided_slice %81 {offsets = [0, 768], sizes = [32, 256], strides = [1, 1]} : vector<32x1280xf32> to vector<32x256xf32>
    %88 = arith.maximumf %86, %87 : vector<32x256xf32>
    %89 = vector.extract_strided_slice %81 {offsets = [0, 1024], sizes = [32, 256], strides = [1, 1]} : vector<32x1280xf32> to vector<32x256xf32>
    %90 = arith.maximumf %88, %89 : vector<32x256xf32>
    %91 = vector.extract_strided_slice %90 {offsets = [0, 0], sizes = [16, 256], strides = [1, 1]} : vector<32x256xf32> to vector<16x256xf32>
    %92 = vector.extract_strided_slice %90 {offsets = [16, 0], sizes = [16, 256], strides = [1, 1]} : vector<32x256xf32> to vector<16x256xf32>
    %93 = arith.maximumf %91, %92 : vector<16x256xf32>
    %cst_33 = arith.constant 0.000000e+00 : f32
    %94 = vector.broadcast %cst_33 : f32 to vector<16x256xf32>
    %95 = arith.cmpf oge, %93, %94 : vector<16x256xf32>
    %cst_34 = arith.constant 0.00999999977 : f32
    %96 = vector.broadcast %cst_34 : f32 to vector<16x256xf32>
    %97 = arith.mulf %96, %93 : vector<16x256xf32>
    %98 = arith.select %95, %93, %97 : vector<16x256xi1>, vector<16x256xf32>
    %cst_35 = arith.constant 0.000000e+00 : f32
    %99 = vector.broadcast %cst_35 : f32 to vector<16x256xf32>
    %100 = arith.cmpf oge, %98, %99 : vector<16x256xf32>
    %cst_36 = arith.constant 0.00999999977 : f32
    %101 = vector.broadcast %cst_36 : f32 to vector<16x256xf32>
    %102 = arith.mulf %101, %98 : vector<16x256xf32>
    %103 = arith.select %100, %98, %102 : vector<16x256xi1>, vector<16x256xf32>
    %c48 = arith.constant 48 : index
    %c0_37 = arith.constant 0 : index
    %104 = vector.load %arg7[%c48, %c0_37] : memref<192x256xf32, #tpu.memory_space<vmem>>, vector<16x256xf32>
    tpu.vector_store %arg7[%c48, %c0_37], %103 {strides = array<i32>} : memref<192x256xf32, #tpu.memory_space<vmem>>, vector<16x256xf32>,
    %c0_38 = arith.constant 0 : index
    %c4 = arith.constant 4 : index
    %c0_39 = arith.constant 0 : index
    %c0_40 = arith.constant 0 : index
    %105 = vector.load %arg2[%c0_38, %c4, %c0_39, %c0_40] : memref<1x12x32x1280xbf16, #tpu.memory_space<vmem>>, vector<1x1x32x1280xbf16>
    %106 = vector.shape_cast %105 : vector<1x1x32x1280xbf16> to vector<32x1280xbf16>
    %cst_41 = arith.constant dense<0.000000e+00> : vector<32x1280xf32>
    %107 = tpu.matmul %0, %106, %cst_41 {dimension_numbers = #tpu.dot_dimension_numbers<[1], [0], [0], [1], [0, 0, 1, 1], [], []>} : vector<32x32xbf16>, vector<32x1280xbf16>, vector<32x1280xf32> -> vector<32x1280xf32>
    %108 = vector.extract_strided_slice %107 {offsets = [0, 0], sizes = [32, 256], strides = [1, 1]} : vector<32x1280xf32> to vector<32x256xf32>
    %109 = vector.extract_strided_slice %107 {offsets = [0, 256], sizes = [32, 256], strides = [1, 1]} : vector<32x1280xf32> to vector<32x256xf32>
    %110 = arith.maximumf %108, %109 : vector<32x256xf32>
    %111 = vector.extract_strided_slice %107 {offsets = [0, 512], sizes = [32, 256], strides = [1, 1]} : vector<32x1280xf32> to vector<32x256xf32>
    %112 = arith.maximumf %110, %111 : vector<32x256xf32>
    %113 = vector.extract_strided_slice %107 {offsets = [0, 768], sizes = [32, 256], strides = [1, 1]} : vector<32x1280xf32> to vector<32x256xf32>
    %114 = arith.maximumf %112, %113 : vector<32x256xf32>
    %115 = vector.extract_strided_slice %107 {offsets = [0, 1024], sizes = [32, 256], strides = [1, 1]} : vector<32x1280xf32> to vector<32x256xf32>
    %116 = arith.maximumf %114, %115 : vector<32x256xf32>
    %117 = vector.extract_strided_slice %116 {offsets = [0, 0], sizes = [16, 256], strides = [1, 1]} : vector<32x256xf32> to vector<16x256xf32>
    %118 = vector.extract_strided_slice %116 {offsets = [16, 0], sizes = [16, 256], strides = [1, 1]} : vector<32x256xf32> to vector<16x256xf32>
    %119 = arith.maximumf %117, %118 : vector<16x256xf32>
    %cst_42 = arith.constant 0.000000e+00 : f32
    %120 = vector.broadcast %cst_42 : f32 to vector<16x256xf32>
    %121 = arith.cmpf oge, %119, %120 : vector<16x256xf32>
    %cst_43 = arith.constant 0.00999999977 : f32
    %122 = vector.broadcast %cst_43 : f32 to vector<16x256xf32>
    %123 = arith.mulf %122, %119 : vector<16x256xf32>
    %124 = arith.select %121, %119, %123 : vector<16x256xi1>, vector<16x256xf32>
    %cst_44 = arith.constant 0.000000e+00 : f32
    %125 = vector.broadcast %cst_44 : f32 to vector<16x256xf32>
    %126 = arith.cmpf oge, %124, %125 : vector<16x256xf32>
    %cst_45 = arith.constant 0.00999999977 : f32
    %127 = vector.broadcast %cst_45 : f32 to vector<16x256xf32>
    %128 = arith.mulf %127, %124 : vector<16x256xf32>
    %129 = arith.select %126, %124, %128 : vector<16x256xi1>, vector<16x256xf32>
    %c64 = arith.constant 64 : index
    %c0_46 = arith.constant 0 : index
    %130 = vector.load %arg7[%c64, %c0_46] : memref<192x256xf32, #tpu.memory_space<vmem>>, vector<16x256xf32>
    tpu.vector_store %arg7[%c64, %c0_46], %129 {strides = array<i32>} : memref<192x256xf32, #tpu.memory_space<vmem>>, vector<16x256xf32>,
    %c0_47 = arith.constant 0 : index
    %c5 = arith.constant 5 : index
    %c0_48 = arith.constant 0 : index
    %c0_49 = arith.constant 0 : index
    %131 = vector.load %arg2[%c0_47, %c5, %c0_48, %c0_49] : memref<1x12x32x1280xbf16, #tpu.memory_space<vmem>>, vector<1x1x32x1280xbf16>
    %132 = vector.shape_cast %131 : vector<1x1x32x1280xbf16> to vector<32x1280xbf16>
    %cst_50 = arith.constant dense<0.000000e+00> : vector<32x1280xf32>
    %133 = tpu.matmul %0, %132, %cst_50 {dimension_numbers = #tpu.dot_dimension_numbers<[1], [0], [0], [1], [0, 0, 1, 1], [], []>} : vector<32x32xbf16>, vector<32x1280xbf16>, vector<32x1280xf32> -> vector<32x1280xf32>
    %134 = vector.extract_strided_slice %133 {offsets = [0, 0], sizes = [32, 256], strides = [1, 1]} : vector<32x1280xf32> to vector<32x256xf32>
    %135 = vector.extract_strided_slice %133 {offsets = [0, 256], sizes = [32, 256], strides = [1, 1]} : vector<32x1280xf32> to vector<32x256xf32>
    %136 = arith.maximumf %134, %135 : vector<32x256xf32>
    %137 = vector.extract_strided_slice %133 {offsets = [0, 512], sizes = [32, 256], strides = [1, 1]} : vector<32x1280xf32> to vector<32x256xf32>
    %138 = arith.maximumf %136, %137 : vector<32x256xf32>
    %139 = vector.extract_strided_slice %133 {offsets = [0, 768], sizes = [32, 256], strides = [1, 1]} : vector<32x1280xf32> to vector<32x256xf32>
    %140 = arith.maximumf %138, %139 : vector<32x256xf32>
    %141 = vector.extract_strided_slice %133 {offsets = [0, 1024], sizes = [32, 256], strides = [1, 1]} : vector<32x1280xf32> to vector<32x256xf32>
    %142 = arith.maximumf %140, %141 : vector<32x256xf32>
    %143 = vector.extract_strided_slice %142 {offsets = [0, 0], sizes = [16, 256], strides = [1, 1]} : vector<32x256xf32> to vector<16x256xf32>
    %144 = vector.extract_strided_slice %142 {offsets = [16, 0], sizes = [16, 256], strides = [1, 1]} : vector<32x256xf32> to vector<16x256xf32>
    %145 = arith.maximumf %143, %144 : vector<16x256xf32>
    %cst_51 = arith.constant 0.000000e+00 : f32
    %146 = vector.broadcast %cst_51 : f32 to vector<16x256xf32>
    %147 = arith.cmpf oge, %145, %146 : vector<16x256xf32>
    %cst_52 = arith.constant 0.00999999977 : f32
    %148 = vector.broadcast %cst_52 : f32 to vector<16x256xf32>
    %149 = arith.mulf %148, %145 : vector<16x256xf32>
    %150 = arith.select %147, %145, %149 : vector<16x256xi1>, vector<16x256xf32>
    %cst_53 = arith.constant 0.000000e+00 : f32
    %151 = vector.broadcast %cst_53 : f32 to vector<16x256xf32>
    %152 = arith.cmpf oge, %150, %151 : vector<16x256xf32>
    %cst_54 = arith.constant 0.00999999977 : f32
    %153 = vector.broadcast %cst_54 : f32 to vector<16x256xf32>
    %154 = arith.mulf %153, %150 : vector<16x256xf32>
    %155 = arith.select %152, %150, %154 : vector<16x256xi1>, vector<16x256xf32>
    %c80 = arith.constant 80 : index
    %c0_55 = arith.constant 0 : index
    %156 = vector.load %arg7[%c80, %c0_55] : memref<192x256xf32, #tpu.memory_space<vmem>>, vector<16x256xf32>
    tpu.vector_store %arg7[%c80, %c0_55], %155 {strides = array<i32>} : memref<192x256xf32, #tpu.memory_space<vmem>>, vector<16x256xf32>,
    %c0_56 = arith.constant 0 : index
    %c6 = arith.constant 6 : index
    %c0_57 = arith.constant 0 : index
    %c0_58 = arith.constant 0 : index
    %157 = vector.load %arg2[%c0_56, %c6, %c0_57, %c0_58] : memref<1x12x32x1280xbf16, #tpu.memory_space<vmem>>, vector<1x1x32x1280xbf16>
    %158 = vector.shape_cast %157 : vector<1x1x32x1280xbf16> to vector<32x1280xbf16>
    %cst_59 = arith.constant dense<0.000000e+00> : vector<32x1280xf32>
    %159 = tpu.matmul %0, %158, %cst_59 {dimension_numbers = #tpu.dot_dimension_numbers<[1], [0], [0], [1], [0, 0, 1, 1], [], []>} : vector<32x32xbf16>, vector<32x1280xbf16>, vector<32x1280xf32> -> vector<32x1280xf32>
    %160 = vector.extract_strided_slice %159 {offsets = [0, 0], sizes = [32, 256], strides = [1, 1]} : vector<32x1280xf32> to vector<32x256xf32>
    %161 = vector.extract_strided_slice %159 {offsets = [0, 256], sizes = [32, 256], strides = [1, 1]} : vector<32x1280xf32> to vector<32x256xf32>
    %162 = arith.maximumf %160, %161 : vector<32x256xf32>
    %163 = vector.extract_strided_slice %159 {offsets = [0, 512], sizes = [32, 256], strides = [1, 1]} : vector<32x1280xf32> to vector<32x256xf32>
    %164 = arith.maximumf %162, %163 : vector<32x256xf32>
    %165 = vector.extract_strided_slice %159 {offsets = [0, 768], sizes = [32, 256], strides = [1, 1]} : vector<32x1280xf32> to vector<32x256xf32>
    %166 = arith.maximumf %164, %165 : vector<32x256xf32>
    %167 = vector.extract_strided_slice %159 {offsets = [0, 1024], sizes = [32, 256], strides = [1, 1]} : vector<32x1280xf32> to vector<32x256xf32>
    %168 = arith.maximumf %166, %167 : vector<32x256xf32>
    %169 = vector.extract_strided_slice %168 {offsets = [0, 0], sizes = [16, 256], strides = [1, 1]} : vector<32x256xf32> to vector<16x256xf32>
    %170 = vector.extract_strided_slice %168 {offsets = [16, 0], sizes = [16, 256], strides = [1, 1]} : vector<32x256xf32> to vector<16x256xf32>
    %171 = arith.maximumf %169, %170 : vector<16x256xf32>
    %cst_60 = arith.constant 0.000000e+00 : f32
    %172 = vector.broadcast %cst_60 : f32 to vector<16x256xf32>
    %173 = arith.cmpf oge, %171, %172 : vector<16x256xf32>
    %cst_61 = arith.constant 0.00999999977 : f32
    %174 = vector.broadcast %cst_61 : f32 to vector<16x256xf32>
    %175 = arith.mulf %174, %171 : vector<16x256xf32>
    %176 = arith.select %173, %171, %175 : vector<16x256xi1>, vector<16x256xf32>
    %cst_62 = arith.constant 0.000000e+00 : f32
    %177 = vector.broadcast %cst_62 : f32 to vector<16x256xf32>
    %178 = arith.cmpf oge, %176, %177 : vector<16x256xf32>
    %cst_63 = arith.constant 0.00999999977 : f32
    %179 = vector.broadcast %cst_63 : f32 to vector<16x256xf32>
    %180 = arith.mulf %179, %176 : vector<16x256xf32>
    %181 = arith.select %178, %176, %180 : vector<16x256xi1>, vector<16x256xf32>
    %c96 = arith.constant 96 : index
    %c0_64 = arith.constant 0 : index
    %182 = vector.load %arg7[%c96, %c0_64] : memref<192x256xf32, #tpu.memory_space<vmem>>, vector<16x256xf32>
    tpu.vector_store %arg7[%c96, %c0_64], %181 {strides = array<i32>} : memref<192x256xf32, #tpu.memory_space<vmem>>, vector<16x256xf32>,
    %c0_65 = arith.constant 0 : index
    %c7 = arith.constant 7 : index
    %c0_66 = arith.constant 0 : index
    %c0_67 = arith.constant 0 : index
    %183 = vector.load %arg2[%c0_65, %c7, %c0_66, %c0_67] : memref<1x12x32x1280xbf16, #tpu.memory_space<vmem>>, vector<1x1x32x1280xbf16>
    %184 = vector.shape_cast %183 : vector<1x1x32x1280xbf16> to vector<32x1280xbf16>
    %cst_68 = arith.constant dense<0.000000e+00> : vector<32x1280xf32>
    %185 = tpu.matmul %0, %184, %cst_68 {dimension_numbers = #tpu.dot_dimension_numbers<[1], [0], [0], [1], [0, 0, 1, 1], [], []>} : vector<32x32xbf16>, vector<32x1280xbf16>, vector<32x1280xf32> -> vector<32x1280xf32>
    %186 = vector.extract_strided_slice %185 {offsets = [0, 0], sizes = [32, 256], strides = [1, 1]} : vector<32x1280xf32> to vector<32x256xf32>
    %187 = vector.extract_strided_slice %185 {offsets = [0, 256], sizes = [32, 256], strides = [1, 1]} : vector<32x1280xf32> to vector<32x256xf32>
    %188 = arith.maximumf %186, %187 : vector<32x256xf32>
    %189 = vector.extract_strided_slice %185 {offsets = [0, 512], sizes = [32, 256], strides = [1, 1]} : vector<32x1280xf32> to vector<32x256xf32>
    %190 = arith.maximumf %188, %189 : vector<32x256xf32>
    %191 = vector.extract_strided_slice %185 {offsets = [0, 768], sizes = [32, 256], strides = [1, 1]} : vector<32x1280xf32> to vector<32x256xf32>
    %192 = arith.maximumf %190, %191 : vector<32x256xf32>
    %193 = vector.extract_strided_slice %185 {offsets = [0, 1024], sizes = [32, 256], strides = [1, 1]} : vector<32x1280xf32> to vector<32x256xf32>
    %194 = arith.maximumf %192, %193 : vector<32x256xf32>
    %195 = vector.extract_strided_slice %194 {offsets = [0, 0], sizes = [16, 256], strides = [1, 1]} : vector<32x256xf32> to vector<16x256xf32>
    %196 = vector.extract_strided_slice %194 {offsets = [16, 0], sizes = [16, 256], strides = [1, 1]} : vector<32x256xf32> to vector<16x256xf32>
    %197 = arith.maximumf %195, %196 : vector<16x256xf32>
    %cst_69 = arith.constant 0.000000e+00 : f32
    %198 = vector.broadcast %cst_69 : f32 to vector<16x256xf32>
    %199 = arith.cmpf oge, %197, %198 : vector<16x256xf32>
    %cst_70 = arith.constant 0.00999999977 : f32
    %200 = vector.broadcast %cst_70 : f32 to vector<16x256xf32>
    %201 = arith.mulf %200, %197 : vector<16x256xf32>
    %202 = arith.select %199, %197, %201 : vector<16x256xi1>, vector<16x256xf32>
    %cst_71 = arith.constant 0.000000e+00 : f32
    %203 = vector.broadcast %cst_71 : f32 to vector<16x256xf32>
    %204 = arith.cmpf oge, %202, %203 : vector<16x256xf32>
    %cst_72 = arith.constant 0.00999999977 : f32
    %205 = vector.broadcast %cst_72 : f32 to vector<16x256xf32>
    %206 = arith.mulf %205, %202 : vector<16x256xf32>
    %207 = arith.select %204, %202, %206 : vector<16x256xi1>, vector<16x256xf32>
    %c112 = arith.constant 112 : index
    %c0_73 = arith.constant 0 : index
    %208 = vector.load %arg7[%c112, %c0_73] : memref<192x256xf32, #tpu.memory_space<vmem>>, vector<16x256xf32>
    tpu.vector_store %arg7[%c112, %c0_73], %207 {strides = array<i32>} : memref<192x256xf32, #tpu.memory_space<vmem>>, vector<16x256xf32>,
    %c0_74 = arith.constant 0 : index
    %c8 = arith.constant 8 : index
    %c0_75 = arith.constant 0 : index
    %c0_76 = arith.constant 0 : index
    %209 = vector.load %arg2[%c0_74, %c8, %c0_75, %c0_76] : memref<1x12x32x1280xbf16, #tpu.memory_space<vmem>>, vector<1x1x32x1280xbf16>
    %210 = vector.shape_cast %209 : vector<1x1x32x1280xbf16> to vector<32x1280xbf16>
    %cst_77 = arith.constant dense<0.000000e+00> : vector<32x1280xf32>
    %211 = tpu.matmul %0, %210, %cst_77 {dimension_numbers = #tpu.dot_dimension_numbers<[1], [0], [0], [1], [0, 0, 1, 1], [], []>} : vector<32x32xbf16>, vector<32x1280xbf16>, vector<32x1280xf32> -> vector<32x1280xf32>
    %212 = vector.extract_strided_slice %211 {offsets = [0, 0], sizes = [32, 256], strides = [1, 1]} : vector<32x1280xf32> to vector<32x256xf32>
    %213 = vector.extract_strided_slice %211 {offsets = [0, 256], sizes = [32, 256], strides = [1, 1]} : vector<32x1280xf32> to vector<32x256xf32>
    %214 = arith.maximumf %212, %213 : vector<32x256xf32>
    %215 = vector.extract_strided_slice %211 {offsets = [0, 512], sizes = [32, 256], strides = [1, 1]} : vector<32x1280xf32> to vector<32x256xf32>
    %216 = arith.maximumf %214, %215 : vector<32x256xf32>
    %217 = vector.extract_strided_slice %211 {offsets = [0, 768], sizes = [32, 256], strides = [1, 1]} : vector<32x1280xf32> to vector<32x256xf32>
    %218 = arith.maximumf %216, %217 : vector<32x256xf32>
    %219 = vector.extract_strided_slice %211 {offsets = [0, 1024], sizes = [32, 256], strides = [1, 1]} : vector<32x1280xf32> to vector<32x256xf32>
    %220 = arith.maximumf %218, %219 : vector<32x256xf32>
    %221 = vector.extract_strided_slice %220 {offsets = [0, 0], sizes = [16, 256], strides = [1, 1]} : vector<32x256xf32> to vector<16x256xf32>
    %222 = vector.extract_strided_slice %220 {offsets = [16, 0], sizes = [16, 256], strides = [1, 1]} : vector<32x256xf32> to vector<16x256xf32>
    %223 = arith.maximumf %221, %222 : vector<16x256xf32>
    %cst_78 = arith.constant 0.000000e+00 : f32
    %224 = vector.broadcast %cst_78 : f32 to vector<16x256xf32>
    %225 = arith.cmpf oge, %223, %224 : vector<16x256xf32>
    %cst_79 = arith.constant 0.00999999977 : f32
    %226 = vector.broadcast %cst_79 : f32 to vector<16x256xf32>
    %227 = arith.mulf %226, %223 : vector<16x256xf32>
    %228 = arith.select %225, %223, %227 : vector<16x256xi1>, vector<16x256xf32>
    %cst_80 = arith.constant 0.000000e+00 : f32
    %229 = vector.broadcast %cst_80 : f32 to vector<16x256xf32>
    %230 = arith.cmpf oge, %228, %229 : vector<16x256xf32>
    %cst_81 = arith.constant 0.00999999977 : f32
    %231 = vector.broadcast %cst_81 : f32 to vector<16x256xf32>
    %232 = arith.mulf %231, %228 : vector<16x256xf32>
    %233 = arith.select %230, %228, %232 : vector<16x256xi1>, vector<16x256xf32>
    %c128 = arith.constant 128 : index
    %c0_82 = arith.constant 0 : index
    %234 = vector.load %arg7[%c128, %c0_82] : memref<192x256xf32, #tpu.memory_space<vmem>>, vector<16x256xf32>
    tpu.vector_store %arg7[%c128, %c0_82], %233 {strides = array<i32>} : memref<192x256xf32, #tpu.memory_space<vmem>>, vector<16x256xf32>,
    %c0_83 = arith.constant 0 : index
    %c9 = arith.constant 9 : index
    %c0_84 = arith.constant 0 : index
    %c0_85 = arith.constant 0 : index
    %235 = vector.load %arg2[%c0_83, %c9, %c0_84, %c0_85] : memref<1x12x32x1280xbf16, #tpu.memory_space<vmem>>, vector<1x1x32x1280xbf16>
    %236 = vector.shape_cast %235 : vector<1x1x32x1280xbf16> to vector<32x1280xbf16>
    %cst_86 = arith.constant dense<0.000000e+00> : vector<32x1280xf32>
    %237 = tpu.matmul %0, %236, %cst_86 {dimension_numbers = #tpu.dot_dimension_numbers<[1], [0], [0], [1], [0, 0, 1, 1], [], []>} : vector<32x32xbf16>, vector<32x1280xbf16>, vector<32x1280xf32> -> vector<32x1280xf32>
    %238 = vector.extract_strided_slice %237 {offsets = [0, 0], sizes = [32, 256], strides = [1, 1]} : vector<32x1280xf32> to vector<32x256xf32>
    %239 = vector.extract_strided_slice %237 {offsets = [0, 256], sizes = [32, 256], strides = [1, 1]} : vector<32x1280xf32> to vector<32x256xf32>
    %240 = arith.maximumf %238, %239 : vector<32x256xf32>
    %241 = vector.extract_strided_slice %237 {offsets = [0, 512], sizes = [32, 256], strides = [1, 1]} : vector<32x1280xf32> to vector<32x256xf32>
    %242 = arith.maximumf %240, %241 : vector<32x256xf32>
    %243 = vector.extract_strided_slice %237 {offsets = [0, 768], sizes = [32, 256], strides = [1, 1]} : vector<32x1280xf32> to vector<32x256xf32>
    %244 = arith.maximumf %242, %243 : vector<32x256xf32>
    %245 = vector.extract_strided_slice %237 {offsets = [0, 1024], sizes = [32, 256], strides = [1, 1]} : vector<32x1280xf32> to vector<32x256xf32>
    %246 = arith.maximumf %244, %245 : vector<32x256xf32>
    %247 = vector.extract_strided_slice %246 {offsets = [0, 0], sizes = [16, 256], strides = [1, 1]} : vector<32x256xf32> to vector<16x256xf32>
    %248 = vector.extract_strided_slice %246 {offsets = [16, 0], sizes = [16, 256], strides = [1, 1]} : vector<32x256xf32> to vector<16x256xf32>
    %249 = arith.maximumf %247, %248 : vector<16x256xf32>
    %cst_87 = arith.constant 0.000000e+00 : f32
    %250 = vector.broadcast %cst_87 : f32 to vector<16x256xf32>
    %251 = arith.cmpf oge, %249, %250 : vector<16x256xf32>
    %cst_88 = arith.constant 0.00999999977 : f32
    %252 = vector.broadcast %cst_88 : f32 to vector<16x256xf32>
    %253 = arith.mulf %252, %249 : vector<16x256xf32>
    %254 = arith.select %251, %249, %253 : vector<16x256xi1>, vector<16x256xf32>
    %cst_89 = arith.constant 0.000000e+00 : f32
    %255 = vector.broadcast %cst_89 : f32 to vector<16x256xf32>
    %256 = arith.cmpf oge, %254, %255 : vector<16x256xf32>
    %cst_90 = arith.constant 0.00999999977 : f32
    %257 = vector.broadcast %cst_90 : f32 to vector<16x256xf32>
    %258 = arith.mulf %257, %254 : vector<16x256xf32>
    %259 = arith.select %256, %254, %258 : vector<16x256xi1>, vector<16x256xf32>
    %c144 = arith.constant 144 : index
    %c0_91 = arith.constant 0 : index
    %260 = vector.load %arg7[%c144, %c0_91] : memref<192x256xf32, #tpu.memory_space<vmem>>, vector<16x256xf32>
    tpu.vector_store %arg7[%c144, %c0_91], %259 {strides = array<i32>} : memref<192x256xf32, #tpu.memory_space<vmem>>, vector<16x256xf32>,
    %c0_92 = arith.constant 0 : index
    %c10 = arith.constant 10 : index
    %c0_93 = arith.constant 0 : index
    %c0_94 = arith.constant 0 : index
    %261 = vector.load %arg2[%c0_92, %c10, %c0_93, %c0_94] : memref<1x12x32x1280xbf16, #tpu.memory_space<vmem>>, vector<1x1x32x1280xbf16>
    %262 = vector.shape_cast %261 : vector<1x1x32x1280xbf16> to vector<32x1280xbf16>
    %cst_95 = arith.constant dense<0.000000e+00> : vector<32x1280xf32>
    %263 = tpu.matmul %0, %262, %cst_95 {dimension_numbers = #tpu.dot_dimension_numbers<[1], [0], [0], [1], [0, 0, 1, 1], [], []>} : vector<32x32xbf16>, vector<32x1280xbf16>, vector<32x1280xf32> -> vector<32x1280xf32>
    %264 = vector.extract_strided_slice %263 {offsets = [0, 0], sizes = [32, 256], strides = [1, 1]} : vector<32x1280xf32> to vector<32x256xf32>
    %265 = vector.extract_strided_slice %263 {offsets = [0, 256], sizes = [32, 256], strides = [1, 1]} : vector<32x1280xf32> to vector<32x256xf32>
    %266 = arith.maximumf %264, %265 : vector<32x256xf32>
    %267 = vector.extract_strided_slice %263 {offsets = [0, 512], sizes = [32, 256], strides = [1, 1]} : vector<32x1280xf32> to vector<32x256xf32>
    %268 = arith.maximumf %266, %267 : vector<32x256xf32>
    %269 = vector.extract_strided_slice %263 {offsets = [0, 768], sizes = [32, 256], strides = [1, 1]} : vector<32x1280xf32> to vector<32x256xf32>
    %270 = arith.maximumf %268, %269 : vector<32x256xf32>
    %271 = vector.extract_strided_slice %263 {offsets = [0, 1024], sizes = [32, 256], strides = [1, 1]} : vector<32x1280xf32> to vector<32x256xf32>
    %272 = arith.maximumf %270, %271 : vector<32x256xf32>
    %273 = vector.extract_strided_slice %272 {offsets = [0, 0], sizes = [16, 256], strides = [1, 1]} : vector<32x256xf32> to vector<16x256xf32>
    %274 = vector.extract_strided_slice %272 {offsets = [16, 0], sizes = [16, 256], strides = [1, 1]} : vector<32x256xf32> to vector<16x256xf32>
    %275 = arith.maximumf %273, %274 : vector<16x256xf32>
    %cst_96 = arith.constant 0.000000e+00 : f32
    %276 = vector.broadcast %cst_96 : f32 to vector<16x256xf32>
    %277 = arith.cmpf oge, %275, %276 : vector<16x256xf32>
    %cst_97 = arith.constant 0.00999999977 : f32
    %278 = vector.broadcast %cst_97 : f32 to vector<16x256xf32>
    %279 = arith.mulf %278, %275 : vector<16x256xf32>
    %280 = arith.select %277, %275, %279 : vector<16x256xi1>, vector<16x256xf32>
    %cst_98 = arith.constant 0.000000e+00 : f32
    %281 = vector.broadcast %cst_98 : f32 to vector<16x256xf32>
    %282 = arith.cmpf oge, %280, %281 : vector<16x256xf32>
    %cst_99 = arith.constant 0.00999999977 : f32
    %283 = vector.broadcast %cst_99 : f32 to vector<16x256xf32>
    %284 = arith.mulf %283, %280 : vector<16x256xf32>
    %285 = arith.select %282, %280, %284 : vector<16x256xi1>, vector<16x256xf32>
    %c160 = arith.constant 160 : index
    %c0_100 = arith.constant 0 : index
    %286 = vector.load %arg7[%c160, %c0_100] : memref<192x256xf32, #tpu.memory_space<vmem>>, vector<16x256xf32>
    tpu.vector_store %arg7[%c160, %c0_100], %285 {strides = array<i32>} : memref<192x256xf32, #tpu.memory_space<vmem>>, vector<16x256xf32>,
    %c0_101 = arith.constant 0 : index
    %c11 = arith.constant 11 : index
    %c0_102 = arith.constant 0 : index
    %c0_103 = arith.constant 0 : index
    %287 = vector.load %arg2[%c0_101, %c11, %c0_102, %c0_103] : memref<1x12x32x1280xbf16, #tpu.memory_space<vmem>>, vector<1x1x32x1280xbf16>
    %288 = vector.shape_cast %287 : vector<1x1x32x1280xbf16> to vector<32x1280xbf16>
    %cst_104 = arith.constant dense<0.000000e+00> : vector<32x1280xf32>
    %289 = tpu.matmul %0, %288, %cst_104 {dimension_numbers = #tpu.dot_dimension_numbers<[1], [0], [0], [1], [0, 0, 1, 1], [], []>} : vector<32x32xbf16>, vector<32x1280xbf16>, vector<32x1280xf32> -> vector<32x1280xf32>
    %290 = vector.extract_strided_slice %289 {offsets = [0, 0], sizes = [32, 256], strides = [1, 1]} : vector<32x1280xf32> to vector<32x256xf32>
    %291 = vector.extract_strided_slice %289 {offsets = [0, 256], sizes = [32, 256], strides = [1, 1]} : vector<32x1280xf32> to vector<32x256xf32>
    %292 = arith.maximumf %290, %291 : vector<32x256xf32>
    %293 = vector.extract_strided_slice %289 {offsets = [0, 512], sizes = [32, 256], strides = [1, 1]} : vector<32x1280xf32> to vector<32x256xf32>
    %294 = arith.maximumf %292, %293 : vector<32x256xf32>
    %295 = vector.extract_strided_slice %289 {offsets = [0, 768], sizes = [32, 256], strides = [1, 1]} : vector<32x1280xf32> to vector<32x256xf32>
    %296 = arith.maximumf %294, %295 : vector<32x256xf32>
    %297 = vector.extract_strided_slice %289 {offsets = [0, 1024], sizes = [32, 256], strides = [1, 1]} : vector<32x1280xf32> to vector<32x256xf32>
    %298 = arith.maximumf %296, %297 : vector<32x256xf32>
    %299 = vector.extract_strided_slice %298 {offsets = [0, 0], sizes = [16, 256], strides = [1, 1]} : vector<32x256xf32> to vector<16x256xf32>
    %300 = vector.extract_strided_slice %298 {offsets = [16, 0], sizes = [16, 256], strides = [1, 1]} : vector<32x256xf32> to vector<16x256xf32>
    %301 = arith.maximumf %299, %300 : vector<16x256xf32>
    %cst_105 = arith.constant 0.000000e+00 : f32
    %302 = vector.broadcast %cst_105 : f32 to vector<16x256xf32>
    %303 = arith.cmpf oge, %301, %302 : vector<16x256xf32>
    %cst_106 = arith.constant 0.00999999977 : f32
    %304 = vector.broadcast %cst_106 : f32 to vector<16x256xf32>
    %305 = arith.mulf %304, %301 : vector<16x256xf32>
    %306 = arith.select %303, %301, %305 : vector<16x256xi1>, vector<16x256xf32>
    %cst_107 = arith.constant 0.000000e+00 : f32
    %307 = vector.broadcast %cst_107 : f32 to vector<16x256xf32>
    %308 = arith.cmpf oge, %306, %307 : vector<16x256xf32>
    %cst_108 = arith.constant 0.00999999977 : f32
    %309 = vector.broadcast %cst_108 : f32 to vector<16x256xf32>
    %310 = arith.mulf %309, %306 : vector<16x256xf32>
    %311 = arith.select %308, %306, %310 : vector<16x256xi1>, vector<16x256xf32>
    %c176 = arith.constant 176 : index
    %c0_109 = arith.constant 0 : index
    %312 = vector.load %arg7[%c176, %c0_109] : memref<192x256xf32, #tpu.memory_space<vmem>>, vector<16x256xf32>
    tpu.vector_store %arg7[%c176, %c0_109], %311 {strides = array<i32>} : memref<192x256xf32, #tpu.memory_space<vmem>>, vector<16x256xf32>,
    %c0_110 = arith.constant 0 : index
    %c0_111 = arith.constant 0 : index
    %313 = vector.load %arg7[%c0_110, %c0_111] : memref<192x256xf32, #tpu.memory_space<vmem>>, vector<192x256xf32>
    %c0_112 = arith.constant 0 : index
    %c0_113 = arith.constant 0 : index
    %c0_114 = arith.constant 0 : index
    %314 = vector.load %arg3[%c0_112, %c0_113, %c0_114] : memref<2x192x256xf32, #tpu.memory_space<vmem>>, vector<1x192x256xf32>
    %315 = vector.shape_cast %314 : vector<1x192x256xf32> to vector<192x256xf32>
    %316 = arith.mulf %313, %315 : vector<192x256xf32>
    %c1_115 = arith.constant 1 : index
    %c0_116 = arith.constant 0 : index
    %c0_117 = arith.constant 0 : index
    %317 = vector.load %arg3[%c1_115, %c0_116, %c0_117] : memref<2x192x256xf32, #tpu.memory_space<vmem>>, vector<1x192x256xf32>
    %318 = vector.shape_cast %317 : vector<1x192x256xf32> to vector<192x256xf32>
    %319 = arith.addf %316, %318 : vector<192x256xf32>
    %cst_118 = arith.constant 0.000000e+00 : f32
    %320 = vector.broadcast %cst_118 : f32 to vector<192x256xf32>
    %321 = arith.cmpf oge, %319, %320 : vector<192x256xf32>
    %cst_119 = arith.constant 0.00999999977 : f32
    %322 = vector.broadcast %cst_119 : f32 to vector<192x256xf32>
    %323 = arith.mulf %322, %319 : vector<192x256xf32>
    %324 = arith.select %321, %319, %323 : vector<192x256xi1>, vector<192x256xf32>
    %c0_120 = arith.constant 0 : index
    %c0_121 = arith.constant 0 : index
    %325 = vector.load %arg7[%c0_120, %c0_121] : memref<192x256xf32, #tpu.memory_space<vmem>>, vector<192x256xf32>
    tpu.vector_store %arg7[%c0_120, %c0_121], %324 {strides = array<i32>} : memref<192x256xf32, #tpu.memory_space<vmem>>, vector<192x256xf32>,
    %c0_122 = arith.constant 0 : index
    %c0_123 = arith.constant 0 : index
    %326 = vector.load %arg7[%c0_122, %c0_123] : memref<192x256xf32, #tpu.memory_space<vmem>>, vector<192x256xf32>
    %c0_124 = arith.constant 0 : index
    %c0_125 = arith.constant 0 : index
    %c0_126 = arith.constant 0 : index
    %327 = vector.load %arg4[%c0_124, %c0_125, %c0_126] : memref<11x192x256xbf16, #tpu.memory_space<vmem>>, vector<1x192x256xbf16>
    %328 = vector.shape_cast %327 : vector<1x192x256xbf16> to vector<192x256xbf16>
    %329 = arith.extf %328 : vector<192x256xbf16> to vector<192x256xf32>
    %330 = arith.mulf %326, %329 : vector<192x256xf32>
    %cst_127 = arith.constant dense<0.000000e+00> : vector<256xf32>
    %331 = vector.multi_reduction <add>, %330, %cst_127 [0] : vector<192x256xf32> to vector<256xf32>
    %332 = vector.shape_cast %331 : vector<256xf32> to vector<1x256xf32>
    %c0_128 = arith.constant 0 : index
    %c0_129 = arith.constant 0 : index
    %333 = vector.load %arg7[%c0_128, %c0_129] : memref<192x256xf32, #tpu.memory_space<vmem>>, vector<192x256xf32>
    %c1_130 = arith.constant 1 : index
    %c0_131 = arith.constant 0 : index
    %c0_132 = arith.constant 0 : index
    %334 = vector.load %arg4[%c1_130, %c0_131, %c0_132] : memref<11x192x256xbf16, #tpu.memory_space<vmem>>, vector<1x192x256xbf16>
    %335 = vector.shape_cast %334 : vector<1x192x256xbf16> to vector<192x256xbf16>
    %336 = arith.extf %335 : vector<192x256xbf16> to vector<192x256xf32>
    %337 = arith.mulf %333, %336 : vector<192x256xf32>
    %cst_133 = arith.constant dense<0.000000e+00> : vector<256xf32>
    %338 = vector.multi_reduction <add>, %337, %cst_133 [0] : vector<192x256xf32> to vector<256xf32>
    %339 = vector.shape_cast %338 : vector<256xf32> to vector<1x256xf32>
    %c0_134 = arith.constant 0 : index
    %c0_135 = arith.constant 0 : index
    %340 = vector.load %arg7[%c0_134, %c0_135] : memref<192x256xf32, #tpu.memory_space<vmem>>, vector<192x256xf32>
    %c2_136 = arith.constant 2 : index
    %c0_137 = arith.constant 0 : index
    %c0_138 = arith.constant 0 : index
    %341 = vector.load %arg4[%c2_136, %c0_137, %c0_138] : memref<11x192x256xbf16, #tpu.memory_space<vmem>>, vector<1x192x256xbf16>
    %342 = vector.shape_cast %341 : vector<1x192x256xbf16> to vector<192x256xbf16>
    %343 = arith.extf %342 : vector<192x256xbf16> to vector<192x256xf32>
    %344 = arith.mulf %340, %343 : vector<192x256xf32>
    %cst_139 = arith.constant dense<0.000000e+00> : vector<256xf32>
    %345 = vector.multi_reduction <add>, %344, %cst_139 [0] : vector<192x256xf32> to vector<256xf32>
    %346 = vector.shape_cast %345 : vector<256xf32> to vector<1x256xf32>
    %c0_140 = arith.constant 0 : index
    %c0_141 = arith.constant 0 : index
    %347 = vector.load %arg7[%c0_140, %c0_141] : memref<192x256xf32, #tpu.memory_space<vmem>>, vector<192x256xf32>
    %c3_142 = arith.constant 3 : index
    %c0_143 = arith.constant 0 : index
    %c0_144 = arith.constant 0 : index
    %348 = vector.load %arg4[%c3_142, %c0_143, %c0_144] : memref<11x192x256xbf16, #tpu.memory_space<vmem>>, vector<1x192x256xbf16>
    %349 = vector.shape_cast %348 : vector<1x192x256xbf16> to vector<192x256xbf16>
    %350 = arith.extf %349 : vector<192x256xbf16> to vector<192x256xf32>
    %351 = arith.mulf %347, %350 : vector<192x256xf32>
    %cst_145 = arith.constant dense<0.000000e+00> : vector<256xf32>
    %352 = vector.multi_reduction <add>, %351, %cst_145 [0] : vector<192x256xf32> to vector<256xf32>
    %353 = vector.shape_cast %352 : vector<256xf32> to vector<1x256xf32>
    %c0_146 = arith.constant 0 : index
    %c0_147 = arith.constant 0 : index
    %354 = vector.load %arg7[%c0_146, %c0_147] : memref<192x256xf32, #tpu.memory_space<vmem>>, vector<192x256xf32>
    %c4_148 = arith.constant 4 : index
    %c0_149 = arith.constant 0 : index
    %c0_150 = arith.constant 0 : index
    %355 = vector.load %arg4[%c4_148, %c0_149, %c0_150] : memref<11x192x256xbf16, #tpu.memory_space<vmem>>, vector<1x192x256xbf16>
    %356 = vector.shape_cast %355 : vector<1x192x256xbf16> to vector<192x256xbf16>
    %357 = arith.extf %356 : vector<192x256xbf16> to vector<192x256xf32>
    %358 = arith.mulf %354, %357 : vector<192x256xf32>
    %cst_151 = arith.constant dense<0.000000e+00> : vector<256xf32>
    %359 = vector.multi_reduction <add>, %358, %cst_151 [0] : vector<192x256xf32> to vector<256xf32>
    %360 = vector.shape_cast %359 : vector<256xf32> to vector<1x256xf32>
    %c0_152 = arith.constant 0 : index
    %c0_153 = arith.constant 0 : index
    %361 = vector.load %arg7[%c0_152, %c0_153] : memref<192x256xf32, #tpu.memory_space<vmem>>, vector<192x256xf32>
    %c5_154 = arith.constant 5 : index
    %c0_155 = arith.constant 0 : index
    %c0_156 = arith.constant 0 : index
    %362 = vector.load %arg4[%c5_154, %c0_155, %c0_156] : memref<11x192x256xbf16, #tpu.memory_space<vmem>>, vector<1x192x256xbf16>
    %363 = vector.shape_cast %362 : vector<1x192x256xbf16> to vector<192x256xbf16>
    %364 = arith.extf %363 : vector<192x256xbf16> to vector<192x256xf32>
    %365 = arith.mulf %361, %364 : vector<192x256xf32>
    %cst_157 = arith.constant dense<0.000000e+00> : vector<256xf32>
    %366 = vector.multi_reduction <add>, %365, %cst_157 [0] : vector<192x256xf32> to vector<256xf32>
    %367 = vector.shape_cast %366 : vector<256xf32> to vector<1x256xf32>
    %c0_158 = arith.constant 0 : index
    %c0_159 = arith.constant 0 : index
    %368 = vector.load %arg7[%c0_158, %c0_159] : memref<192x256xf32, #tpu.memory_space<vmem>>, vector<192x256xf32>
    %c6_160 = arith.constant 6 : index
    %c0_161 = arith.constant 0 : index
    %c0_162 = arith.constant 0 : index
    %369 = vector.load %arg4[%c6_160, %c0_161, %c0_162] : memref<11x192x256xbf16, #tpu.memory_space<vmem>>, vector<1x192x256xbf16>
    %370 = vector.shape_cast %369 : vector<1x192x256xbf16> to vector<192x256xbf16>
    %371 = arith.extf %370 : vector<192x256xbf16> to vector<192x256xf32>
    %372 = arith.mulf %368, %371 : vector<192x256xf32>
    %cst_163 = arith.constant dense<0.000000e+00> : vector<256xf32>
    %373 = vector.multi_reduction <add>, %372, %cst_163 [0] : vector<192x256xf32> to vector<256xf32>
    %374 = vector.shape_cast %373 : vector<256xf32> to vector<1x256xf32>
    %c0_164 = arith.constant 0 : index
    %c0_165 = arith.constant 0 : index
    %375 = vector.load %arg7[%c0_164, %c0_165] : memref<192x256xf32, #tpu.memory_space<vmem>>, vector<192x256xf32>
    %c7_166 = arith.constant 7 : index
    %c0_167 = arith.constant 0 : index
    %c0_168 = arith.constant 0 : index
    %376 = vector.load %arg4[%c7_166, %c0_167, %c0_168] : memref<11x192x256xbf16, #tpu.memory_space<vmem>>, vector<1x192x256xbf16>
    %377 = vector.shape_cast %376 : vector<1x192x256xbf16> to vector<192x256xbf16>
    %378 = arith.extf %377 : vector<192x256xbf16> to vector<192x256xf32>
    %379 = arith.mulf %375, %378 : vector<192x256xf32>
    %cst_169 = arith.constant dense<0.000000e+00> : vector<256xf32>
    %380 = vector.multi_reduction <add>, %379, %cst_169 [0] : vector<192x256xf32> to vector<256xf32>
    %381 = vector.shape_cast %380 : vector<256xf32> to vector<1x256xf32>
    %c0_170 = arith.constant 0 : index
    %c0_171 = arith.constant 0 : index
    %382 = vector.load %arg7[%c0_170, %c0_171] : memref<192x256xf32, #tpu.memory_space<vmem>>, vector<192x256xf32>
    %c8_172 = arith.constant 8 : index
    %c0_173 = arith.constant 0 : index
    %c0_174 = arith.constant 0 : index
    %383 = vector.load %arg4[%c8_172, %c0_173, %c0_174] : memref<11x192x256xbf16, #tpu.memory_space<vmem>>, vector<1x192x256xbf16>
    %384 = vector.shape_cast %383 : vector<1x192x256xbf16> to vector<192x256xbf16>
    %385 = arith.extf %384 : vector<192x256xbf16> to vector<192x256xf32>
    %386 = arith.mulf %382, %385 : vector<192x256xf32>
    %cst_175 = arith.constant dense<0.000000e+00> : vector<256xf32>
    %387 = vector.multi_reduction <add>, %386, %cst_175 [0] : vector<192x256xf32> to vector<256xf32>
    %388 = vector.shape_cast %387 : vector<256xf32> to vector<1x256xf32>
    %c0_176 = arith.constant 0 : index
    %c0_177 = arith.constant 0 : index
    %389 = vector.load %arg7[%c0_176, %c0_177] : memref<192x256xf32, #tpu.memory_space<vmem>>, vector<192x256xf32>
    %c9_178 = arith.constant 9 : index
    %c0_179 = arith.constant 0 : index
    %c0_180 = arith.constant 0 : index
    %390 = vector.load %arg4[%c9_178, %c0_179, %c0_180] : memref<11x192x256xbf16, #tpu.memory_space<vmem>>, vector<1x192x256xbf16>
    %391 = vector.shape_cast %390 : vector<1x192x256xbf16> to vector<192x256xbf16>
    %392 = arith.extf %391 : vector<192x256xbf16> to vector<192x256xf32>
    %393 = arith.mulf %389, %392 : vector<192x256xf32>
    %cst_181 = arith.constant dense<0.000000e+00> : vector<256xf32>
    %394 = vector.multi_reduction <add>, %393, %cst_181 [0] : vector<192x256xf32> to vector<256xf32>
    %395 = vector.shape_cast %394 : vector<256xf32> to vector<1x256xf32>
    %c0_182 = arith.constant 0 : index
    %c0_183 = arith.constant 0 : index
    %396 = vector.load %arg7[%c0_182, %c0_183] : memref<192x256xf32, #tpu.memory_space<vmem>>, vector<192x256xf32>
    %c10_184 = arith.constant 10 : index
    %c0_185 = arith.constant 0 : index
    %c0_186 = arith.constant 0 : index
    %397 = vector.load %arg4[%c10_184, %c0_185, %c0_186] : memref<11x192x256xbf16, #tpu.memory_space<vmem>>, vector<1x192x256xbf16>
    %398 = vector.shape_cast %397 : vector<1x192x256xbf16> to vector<192x256xbf16>
    %399 = arith.extf %398 : vector<192x256xbf16> to vector<192x256xf32>
    %400 = arith.mulf %396, %399 : vector<192x256xf32>
    %cst_187 = arith.constant dense<0.000000e+00> : vector<256xf32>
    %401 = vector.multi_reduction <add>, %400, %cst_187 [0] : vector<192x256xf32> to vector<256xf32>
    %402 = vector.shape_cast %401 : vector<256xf32> to vector<1x256xf32>
    %cst_188 = arith.constant 0.000000e+00 : f32
    %403 = vector.broadcast %cst_188 : f32 to vector<5x256xf32>
    %404 = tpu.concatenate %332, %339, %346, %353, %360, %367, %374, %381, %388, %395, %402, %403 in 0 : vector<1x256xf32>, vector<1x256xf32>, vector<1x256xf32>, vector<1x256xf32>, vector<1x256xf32>, vector<1x256xf32>, vector<1x256xf32>, vector<1x256xf32>, vector<1x256xf32>, vector<1x256xf32>, vector<1x256xf32>, vector<5x256xf32> -> vector<16x256xf32>
    %cst_189 = arith.constant dense<0.000000e+00> : vector<16xf32>
    %405 = vector.multi_reduction <add>, %404, %cst_189 [1] : vector<16x256xf32> to vector<16xf32>
    %406 = vector.shape_cast %405 : vector<16xf32> to vector<16x1xf32>
    %c0_190 = arith.constant 0 : index
    %c0_191 = arith.constant 0 : index
    %407 = vector.load %arg5[%c0_190, %c0_191] : memref<16x128xf32, #tpu.memory_space<vmem>>, vector<16x128xf32>
    %408 = vector.broadcast %406 : vector<16x1xf32> to vector<16x128xf32>
    %409 = arith.addf %408, %407 : vector<16x128xf32>
    %cst_192 = arith.constant 0.000000e+00 : f32
    %410 = vector.broadcast %cst_192 : f32 to vector<16x128xf32>
    %411 = arith.cmpf oge, %409, %410 : vector<16x128xf32>
    %cst_193 = arith.constant 0.00999999977 : f32
    %412 = vector.broadcast %cst_193 : f32 to vector<16x128xf32>
    %413 = arith.mulf %412, %409 : vector<16x128xf32>
    %414 = arith.select %411, %409, %413 : vector<16x128xi1>, vector<16x128xf32>
    %c0_194 = arith.constant 0 : index
    %c0_195 = arith.constant 0 : index
    %c0_196 = arith.constant 0 : index
    %415 = vector.load %arg6[%c0_194, %c0_195, %c0_196] : memref<1x16x128xf32, #tpu.memory_space<vmem>>, vector<1x16x128xf32>
    %416 = vector.shape_cast %415 : vector<1x16x128xf32> to vector<16x128xf32>
    %417 = vector.shape_cast %414 : vector<16x128xf32> to vector<1x16x128xf32>
    tpu.vector_store %arg6[%c0_194, %c0_195, %c0_196], %417 {strides = array<i32>} : memref<1x16x128xf32, #tpu.memory_space<vmem>>, vector<1x16x128xf32>,
    return
  }
  func.func @transform_0(%arg0: i32) -> (i32, i32) {
    %c0_i32 = arith.constant 0 : i32
    %c0_i32_0 = arith.constant 0 : i32
    %c0_i32_1 = arith.constant 0 : i32
    return %c0_i32, %c0_i32_0 : i32, i32
  }
  func.func @transform_1(%arg0: i32) -> (i32, i32, i32, i32) {
    %c0_i32 = arith.constant 0 : i32
    %c0_i32_0 = arith.constant 0 : i32
    %c0_i32_1 = arith.constant 0 : i32
    %c0_i32_2 = arith.constant 0 : i32
    return %arg0, %c0_i32, %c0_i32_0, %c0_i32_1 : i32, i32, i32, i32
  }
  func.func @transform_2(%arg0: i32) -> (i32, i32, i32) {
    %c0_i32 = arith.constant 0 : i32
    %c0_i32_0 = arith.constant 0 : i32
    %c0_i32_1 = arith.constant 0 : i32
    %c0_i32_2 = arith.constant 0 : i32
    return %c0_i32, %c0_i32_0, %c0_i32_1 : i32, i32, i32
  }
  func.func @transform_3(%arg0: i32) -> (i32, i32, i32) {
    %c0_i32 = arith.constant 0 : i32
    %c0_i32_0 = arith.constant 0 : i32
    %c0_i32_1 = arith.constant 0 : i32
    %c0_i32_2 = arith.constant 0 : i32
    return %c0_i32, %c0_i32_0, %c0_i32_1 : i32, i32, i32
  }
  func.func @transform_4(%arg0: i32) -> (i32, i32) {
    %c0_i32 = arith.constant 0 : i32
    %c0_i32_0 = arith.constant 0 : i32
    %c0_i32_1 = arith.constant 0 : i32
    return %c0_i32, %c0_i32_0 : i32, i32
  }
  func.func @transform_5(%arg0: i32) -> (i32, i32, i32) {
    %c0_i32 = arith.constant 0 : i32
    %c0_i32_0 = arith.constant 0 : i32
    %c0_i32_1 = arith.constant 0 : i32
    return %arg0, %c0_i32, %c0_i32_0 : i32, i32, i32
  }
}

</mosaic_0001>

<llo_original>
// kernel: cnn_forward_pallas.1
$region0: #{cnn_forward_pallas.1}
  #allocation0 [shape = 'u32[]', space=smem, size = 0x4, offset = 0x4, fixed_abs, tag = 'smem constant byte address 0x4 - core index']
  #allocation1 [shape = 'u32[72,128]{1,0:T(1,128)}', space=vmem, size = 0x9000, scoped, tag = 'internal scratch']
  #allocation2 [shape = 'f32[192,256]{1,0:T(8,128)}', space=vmem, size = 0x30000, scoped, tag = 'scratch operand']
  %s0 = inlined_call_operand.vmem [shape: bf16[32,32], index: 0, kind: input, shape index: {}]
  %s1 = inlined_call_operand.vmem [shape: bf16[2,12,32,1280], index: 1, kind: input, shape index: {}]
  %s2 = inlined_call_operand.vmem [shape: f32[2,192,256], index: 2, kind: input, shape index: {}]
  %s3 = inlined_call_operand.vmem [shape: bf16[11,192,256], index: 3, kind: input, shape index: {}]
  %s4 = inlined_call_operand.vmem [shape: f32[16,128], index: 4, kind: input, shape index: {}]
  %s5 = inlined_call_operand.vmem [shape: f32[2,16,128], index: 5, kind: output, shape index: {}]
  %s6 = sld [smem:[#allocation0]]
  $region53: #{cnn_forward_pallas.1} parent=0
    _
  %s8 = ssub.s32 1, %s6
  %s9 = scalar_select 0, %s8, %s6
  loop: start=0, step=1, limit=4
  $region2: #{cnn_forward_pallas.1} parent=0 // loop_pre_header
    _
  $region3: #{cnn_forward_pallas.1} parent=0 // loop_header
    %s11 = sphi 0, %s15
    %p12 = scmp.ge.s32.totalorder %s11, 4
    %s19 = sphi 0, %s19
    %s21 = sphi 0, %s19
    %s22 = sphi 0, %s21
    %s36 = sphi 0, %s22
    %s42 = sphi 0, %s44
    %s45 = sphi 0, %s42
    %s46 = sphi 0, %s45
    %s62 = sphi 0, %s46
    %s66 = sphi 0, %s66
    %s68 = sphi 0, %s66
    %s69 = sphi 0, %s68
    %s83 = sphi 0, %s69
    %s87 = sphi 0, %s87
    %s89 = sphi 0, %s87
    %s90 = sphi 0, %s89
    %s104 = sphi 0, %s90
    %s108 = sphi 0, %s108
    %s110 = sphi 0, %s108
    %s111 = sphi 0, %s110
    %s125 = sphi 0, %s111
    %s131 = sphi 0, %s133
    %s134 = sphi 0, %s131
    %s135 = sphi 0, %s134
    %s151 = sphi 0, %s135
  $region4: #{cnn_forward_pallas.1} parent=0 // loop_header_branch
    %14 = sbr.rel (%p12) target = $region8
  $region5: #{cnn_forward_pallas.1} parent=0 // loop_body
    %s16 = ssub.s32 %s11, 1
    %s17 = ssub.s32 %s11, 2
    %s18 = sadd.s32 %s11, 1
    %s20 = sadd.s32 %s19, 1
    %p23 = scmp.eq.s32.totalorder %s11, 1
    %p24 = scmp.ne.s32.totalorder %s19, %s21
    %p25 = scmp.eq.s32.totalorder %s11, 0
    %p26 = por %p24, %p25
    %p27 = scmp.ne.s32.totalorder %s19, %s21
    %p28 = scmp.eq.s32.totalorder %s16, 1
    %p29 = por %p27, %p28
    %p30 = scmp.ne.s32.totalorder %s21, %s22
    %p31 = scmp.eq.s32.totalorder %s16, 0
    %p32 = por %p30, %p31
    %p33 = scmp.ne.s32.totalorder %s21, %s22
    %p34 = scmp.eq.s32.totalorder %s17, 1
    %p35 = por %p33, %p34
    %p37 = scmp.ne.s32.totalorder %s22, %s36
    %p38 = scmp.eq.s32.totalorder %s17, 0
    %p39 = por %p37, %p38
    %s40 = ssub.s32 %s11, %s18
    %p41 = scmp.eq.s32.totalorder %s40, 0
    %s43 = sadd.s32 %s42, 1
    %s44 = scalar_select %p41, %s42, %s43
    %p47 = pneg %p41
    %p48 = scmp.eq.s32.totalorder %s11, 1
    %p49 = por %p47, %p48
    %p50 = scmp.ne.s32.totalorder %s42, %s45
    %p51 = scmp.eq.s32.totalorder %s11, 0
    %p52 = por %p50, %p51
    %p53 = scmp.ne.s32.totalorder %s42, %s45
    %p54 = scmp.eq.s32.totalorder %s16, 1
    %p55 = por %p53, %p54
    %p56 = scmp.ne.s32.totalorder %s45, %s46
    %p57 = scmp.eq.s32.totalorder %s16, 0
    %p58 = por %p56, %p57
    %p59 = scmp.ne.s32.totalorder %s45, %s46
    %p60 = scmp.eq.s32.totalorder %s17, 1
    %p61 = por %p59, %p60
    %p63 = scmp.ne.s32.totalorder %s46, %s62
    %p64 = scmp.eq.s32.totalorder %s17, 0
    %p65 = por %p63, %p64
    %s67 = sadd.s32 %s66, 1
    %p70 = scmp.eq.s32.totalorder %s11, 1
    %p71 = scmp.ne.s32.totalorder %s66, %s68
    %p72 = scmp.eq.s32.totalorder %s11, 0
    %p73 = por %p71, %p72
    %p74 = scmp.ne.s32.totalorder %s66, %s68
    %p75 = scmp.eq.s32.totalorder %s16, 1
    %p76 = por %p74, %p75
    %p77 = scmp.ne.s32.totalorder %s68, %s69
    %p78 = scmp.eq.s32.totalorder %s16, 0
    %p79 = por %p77, %p78
    %p80 = scmp.ne.s32.totalorder %s68, %s69
    %p81 = scmp.eq.s32.totalorder %s17, 1
    %p82 = por %p80, %p81
    %p84 = scmp.ne.s32.totalorder %s69, %s83
    %p85 = scmp.eq.s32.totalorder %s17, 0
    %p86 = por %p84, %p85
    %s88 = sadd.s32 %s87, 1
    %p91 = scmp.eq.s32.totalorder %s11, 1
    %p92 = scmp.ne.s32.totalorder %s87, %s89
    %p93 = scmp.eq.s32.totalorder %s11, 0
    %p94 = por %p92, %p93
    %p95 = scmp.ne.s32.totalorder %s87, %s89
    %p96 = scmp.eq.s32.totalorder %s16, 1
    %p97 = por %p95, %p96
    %p98 = scmp.ne.s32.totalorder %s89, %s90
    %p99 = scmp.eq.s32.totalorder %s16, 0
    %p100 = por %p98, %p99
    %p101 = scmp.ne.s32.totalorder %s89, %s90
    %p102 = scmp.eq.s32.totalorder %s17, 1
    %p103 = por %p101, %p102
    %p105 = scmp.ne.s32.totalorder %s90, %s104
    %p106 = scmp.eq.s32.totalorder %s17, 0
    %p107 = por %p105, %p106
    %s109 = sadd.s32 %s108, 1
    %p112 = scmp.eq.s32.totalorder %s11, 1
    %p113 = scmp.ne.s32.totalorder %s108, %s110
    %p114 = scmp.eq.s32.totalorder %s11, 0
    %p115 = por %p113, %p114
    %p116 = scmp.ne.s32.totalorder %s108, %s110
    %p117 = scmp.eq.s32.totalorder %s16, 1
    %p118 = por %p116, %p117
    %p119 = scmp.ne.s32.totalorder %s110, %s111
    %p120 = scmp.eq.s32.totalorder %s16, 0
    %p121 = por %p119, %p120
    %p122 = scmp.ne.s32.totalorder %s110, %s111
    %p123 = scmp.eq.s32.totalorder %s17, 1
    %p124 = por %p122, %p123
    %p126 = scmp.ne.s32.totalorder %s111, %s125
    %p127 = scmp.eq.s32.totalorder %s17, 0
    %p128 = por %p126, %p127
    %s129 = ssub.s32 %s11, %s18
    %p130 = scmp.eq.s32.totalorder %s129, 0
    %s132 = sadd.s32 %s131, 1
    %s133 = scalar_select %p130, %s131, %s132
    %p136 = pneg %p130
    %p137 = scmp.eq.s32.totalorder %s11, 1
    %p138 = por %p136, %p137
    %p139 = scmp.ne.s32.totalorder %s131, %s134
    %p140 = scmp.eq.s32.totalorder %s11, 0
    %p141 = por %p139, %p140
    %p142 = scmp.ne.s32.totalorder %s131, %s134
    %p143 = scmp.eq.s32.totalorder %s16, 1
    %p144 = por %p142, %p143
    %p145 = scmp.ne.s32.totalorder %s134, %s135
    %p146 = scmp.eq.s32.totalorder %s16, 0
    %p147 = por %p145, %p146
    %p148 = scmp.ne.s32.totalorder %s134, %s135
    %p149 = scmp.eq.s32.totalorder %s17, 1
    %p150 = por %p148, %p149
    %p152 = scmp.ne.s32.totalorder %s135, %s151
    %p153 = scmp.eq.s32.totalorder %s17, 0
    %p154 = por %p152, %p153
    %p155 = scmp.le.s32.totalorder 1, %s11
    %p156 = scmp.lt.s32.totalorder %s11, 3
    %p157 = pnand %p155, %p156
    %p158 = pneg %p157
    // Predicated region
    $region9: #{cnn_forward_pallas.1} parent=5 // pred_check
      _
    $region10: #{cnn_forward_pallas.1} parent=5 // pred_check_branch
      %160 = sbr.rel (%p157) target = $region12
    $region11: #{cnn_forward_pallas.1} parent=5 // pred_region
      %s161 = ssub.s32 %s11, 1
      // Predicated region
      $region13: #{cnn_forward_pallas.1} parent=11 // pred_check
        %p162 = pneg %p32
      $region14: #{cnn_forward_pallas.1} parent=11 // pred_check_branch
        %164 = sbr.rel (%p162) target = $region16
      $region15: #{cnn_forward_pallas.1} parent=11 // pred_region
        _
      $region16: #{cnn_forward_pallas.1} parent=11 // pred_fallthru
        _
      // Predicated region
      $region17: #{cnn_forward_pallas.1} parent=11 // pred_check
        %p165 = pneg %p79
      $region18: #{cnn_forward_pallas.1} parent=11 // pred_check_branch
        %167 = sbr.rel (%p165) target = $region20
      $region19: #{cnn_forward_pallas.1} parent=11 // pred_region
        _
      $region20: #{cnn_forward_pallas.1} parent=11 // pred_fallthru
        _
      // Predicated region
      $region21: #{cnn_forward_pallas.1} parent=11 // pred_check
        %p168 = pneg %p100
      $region22: #{cnn_forward_pallas.1} parent=11 // pred_check_branch
        %170 = sbr.rel (%p168) target = $region24
      $region23: #{cnn_forward_pallas.1} parent=11 // pred_region
        _
      $region24: #{cnn_forward_pallas.1} parent=11 // pred_fallthru
        _
      // Predicated region
      $region25: #{cnn_forward_pallas.1} parent=11 // pred_check
        %p171 = pneg %p121
      $region26: #{cnn_forward_pallas.1} parent=11 // pred_check_branch
        %173 = sbr.rel (%p171) target = $region28
      $region27: #{cnn_forward_pallas.1} parent=11 // pred_region
        _
      $region28: #{cnn_forward_pallas.1} parent=11 // pred_fallthru
        _
    $region12: #{cnn_forward_pallas.1} parent=5 // pred_fallthru
      _
    %p174 = scmp.lt.s32.totalorder %s11, 2
    // Predicated region
    $region29: #{cnn_forward_pallas.1} parent=5 // pred_check
      %p175 = pneg %p174
    $region30: #{cnn_forward_pallas.1} parent=5 // pred_check_branch
      %177 = sbr.rel (%p175) target = $region32
    $region31: #{cnn_forward_pallas.1} parent=5 // pred_region
      // Predicated region
      $region33: #{cnn_forward_pallas.1} parent=31 // pred_check
        %p178 = pneg %p52
      $region34: #{cnn_forward_pallas.1} parent=31 // pred_check_branch
        %180 = sbr.rel (%p178) target = $region36
      $region35: #{cnn_forward_pallas.1} parent=31 // pred_region
        %p181 = scmp.lt.s32.totalorder %s11, 1
        %s182 = scalar_select %p181, %s11, 1
        %s183 = smul.addr %s182, 480
        %s184 = smul.addr %s183, 4
        %s185 = scalar_lea.vmem %s1, %s184
      $region36: #{cnn_forward_pallas.1} parent=31 // pred_fallthru
        _
    $region32: #{cnn_forward_pallas.1} parent=5 // pred_fallthru
      _
    %p186 = scmp.le.s32.totalorder 1, %s11
    %p187 = scmp.lt.s32.totalorder %s11, 3
    %p188 = pnand %p186, %p187
    %p189 = pneg %p188
    // Predicated region
    $region37: #{cnn_forward_pallas.1} parent=5 // pred_check
      _
    $region38: #{cnn_forward_pallas.1} parent=5 // pred_check_branch
      %191 = sbr.rel (%p188) target = $region40
    $region39: #{cnn_forward_pallas.1} parent=5 // pred_region
      %s192 = ssub.s32 %s11, 1
      %p193 = pneg %p32
      %p194 = pneg %p29
      %p195 = scmp.lt.s32.totalorder %s16, 1
      %s196 = scalar_select %p195, %s16, 1
      %s197 = smul.addr %s196, 480
      %s198 = smul.addr %s197, 4
      %s199 = scalar_lea.vmem %s1, %s198
      %p200 = pneg %p58
      %p201 = pneg %p55
      %p202 = pneg %p79
      %p203 = pneg %p76
      %p204 = pneg %p100
      %p205 = pneg %p97
      %p206 = pneg %p121
      %p207 = pneg %p118
      %p208 = pneg %p147
      %p209 = pneg %p144
      %p210 = scmp.lt.s32.totalorder %s16, 1
      %s211 = scalar_select %p210, %s16, 1
      %s212 = smul.addr %s211, 2
      %s213 = smul.addr %s212, 8
      %s214 = scalar_lea.vmem %s5, %s213
      %p215 = scmp.lt.s32.totalorder %s16, 1
      %s216 = scalar_select %p215, %s16, 1
      %s217 = smul.addr %s216, 480
      %s218 = smul.addr %s217, 4
      %s219 = scalar_lea.vmem %s1, %s218
      %p220 = scmp.lt.s32.totalorder %s16, 1
      %s221 = scalar_select %p220, %s16, 1
      %s222 = smul.addr %s221, 2
      %s223 = smul.addr %s222, 8
      %s224 = scalar_lea.vmem %s5, %s223
      %v226 = vld [vmem:[%s0] sm:$0xf]
      %v227 = vld [vmem:[%s0 + $0x4] sm:$0xf]
      %v228 = vld [vmem:[%s0 + $0x8] sm:$0xf]
      %v229 = vld [vmem:[%s0 + $0xc] sm:$0xf]
      %v230 = vld [vmem:[%s219] sm:$0xff]
      %v231 = vld [vmem:[%s219 + $0x8] sm:$0xff]
      %v232 = vld [vmem:[%s219 + $0x10] sm:$0xff]
      %v233 = vld [vmem:[%s219 + $0x18] sm:$0xff]
      %v234 = vld [vmem:[%s219 + $0x20] sm:$0xff]
      %v235 = vld [vmem:[%s219 + $0x28] sm:$0xff]
      %v236 = vld [vmem:[%s219 + $0x30] sm:$0xff]
      %v237 = vld [vmem:[%s219 + $0x38] sm:$0xff]
      %v238 = vld [vmem:[%s219 + $0x40] sm:$0xff]
      %v239 = vld [vmem:[%s219 + $0x48] sm:$0xff]
      %v240 = vld [vmem:[%s219 + $0x50] sm:$0xff]
      %v241 = vld [vmem:[%s219 + $0x58] sm:$0xff]
      %v242 = vld [vmem:[%s219 + $0x60] sm:$0xff]
      %v243 = vld [vmem:[%s219 + $0x68] sm:$0xff]
      %v244 = vld [vmem:[%s219 + $0x70] sm:$0xff]
      %v245 = vld [vmem:[%s219 + $0x78] sm:$0xff]
      %v246 = vld [vmem:[%s219 + $0x80] sm:$0xff]
      %v247 = vld [vmem:[%s219 + $0x88] sm:$0xff]
      %v248 = vld [vmem:[%s219 + $0x90] sm:$0xff]
      %v249 = vld [vmem:[%s219 + $0x98] sm:$0xff]
      %v254 = vunpack.c.l.b16 %v226
      %v255 = vunpack.c.l.b16 %v227
      %v256 = vunpack.c.l.b16 %v228
      %v257 = vunpack.c.l.b16 %v229
      %v258 = vpack.c.b16 %v255, %v254
      %v259 = vpack.c.b16 %v257, %v256
      %v280 = vunpack.c.l.b16 %v230
      %v281 = vunpack.c.h.b16 %v230
      %v282 = vunpack.c.l.b16 %v231
      %v283 = vunpack.c.h.b16 %v231
      %v284 = vunpack.c.l.b16 %v232
      %v285 = vunpack.c.h.b16 %v232
      %v286 = vunpack.c.l.b16 %v233
      %v287 = vunpack.c.h.b16 %v233
      %v288 = vunpack.c.l.b16 %v234
      %v289 = vunpack.c.h.b16 %v234
      %v290 = vunpack.c.l.b16 %v235
      %v291 = vunpack.c.h.b16 %v235
      %v292 = vunpack.c.l.b16 %v236
      %v293 = vunpack.c.h.b16 %v236
      %v294 = vunpack.c.l.b16 %v237
      %v295 = vunpack.c.h.b16 %v237
      %v296 = vunpack.c.l.b16 %v238
      %v297 = vunpack.c.h.b16 %v238
      %v298 = vunpack.c.l.b16 %v239
      %v299 = vunpack.c.h.b16 %v239
      %v300 = vunpack.c.l.b16 %v240
      %v301 = vunpack.c.h.b16 %v240
      %v302 = vunpack.c.l.b16 %v241
      %v303 = vunpack.c.h.b16 %v241
      %v304 = vunpack.c.l.b16 %v242
      %v305 = vunpack.c.h.b16 %v242
      %v306 = vunpack.c.l.b16 %v243
      %v307 = vunpack.c.h.b16 %v243
      %v308 = vunpack.c.l.b16 %v244
      %v309 = vunpack.c.h.b16 %v244
      %v310 = vunpack.c.l.b16 %v245
      %v311 = vunpack.c.h.b16 %v245
      %v312 = vunpack.c.l.b16 %v246
      %v313 = vunpack.c.h.b16 %v246
      %v314 = vunpack.c.l.b16 %v247
      %v315 = vunpack.c.h.b16 %v247
      %v316 = vunpack.c.l.b16 %v248
      %v317 = vunpack.c.h.b16 %v248
      %v318 = vunpack.c.l.b16 %v249
      %v319 = vunpack.c.h.b16 %v249
      %v320 = vpack.c.b16 %v290, %v280
      %v321 = vpack.c.b16 %v291, %v281
      %v322 = vpack.c.b16 %v292, %v282
      %v323 = vpack.c.b16 %v293, %v283
      %v324 = vpack.c.b16 %v294, %v284
      %v325 = vpack.c.b16 %v295, %v285
      %v326 = vpack.c.b16 %v296, %v286
      %v327 = vpack.c.b16 %v297, %v287
      %v328 = vpack.c.b16 %v298, %v288
      %v329 = vpack.c.b16 %v299, %v289
      %v330 = vpack.c.b16 %v310, %v300
      %v331 = vpack.c.b16 %v311, %v301
      %v332 = vpack.c.b16 %v312, %v302
      %v333 = vpack.c.b16 %v313, %v303
      %v334 = vpack.c.b16 %v314, %v304
      %v335 = vpack.c.b16 %v315, %v305
      %v336 = vpack.c.b16 %v316, %v306
      %v337 = vpack.c.b16 %v317, %v307
      %v338 = vpack.c.b16 %v318, %v308
      %v339 = vpack.c.b16 %v319, %v309
      %vm360 = vcmask 261120
      %v362 = vsel %vm360, %v258, 0
      %v365 = vsel %vm360, %v259, 0
      %367 = vmatpush.bf16.msra.mxu0 0
      %368 = vmatpush.bf16.msra.mxu0 0
      %369 = vmatpush.bf16.msra.mxu0 0
      %370 = vmatpush.bf16.msra.mxu0 0
      %371 = vmatpush.bf16.msra.mxu0 0
      %372 = vmatpush.bf16.msra.mxu0 0
      %373 = vmatpush.bf16.msra.mxu0 %v330
      %374 = vmatpush.bf16.msra.mxu0 %v320
      %375 = vmatmul.bf16.gmra.mxu0 %v362
      %v376 = vpop.f32.mrf.mxu0
      %v377 = vadd.f32 0.0, %v376
      %v378 = vpop.f32.mrf.mxu0
      %v379 = vadd.f32 0.0, %v378
      %380 = vmatmul.bf16.gmra.mxu0 %v365
      %v381 = vpop.f32.mrf.mxu0
      %v382 = vadd.f32 0.0, %v381
      %v383 = vpop.f32.mrf.mxu0
      %v384 = vadd.f32 0.0, %v383
      %385 = vdwg.mxu0
      %386 = vmatpush.bf16.msra.mxu0 0
      %387 = vmatpush.bf16.msra.mxu0 0
      %388 = vmatpush.bf16.msra.mxu0 0
      %389 = vmatpush.bf16.msra.mxu0 0
      %390 = vmatpush.bf16.msra.mxu0 0
      %391 = vmatpush.bf16.msra.mxu0 0
      %392 = vmatpush.bf16.msra.mxu0 %v331
      %393 = vmatpush.bf16.msra.mxu0 %v321
      %394 = vmatmul.bf16.gmra.mxu0 %v362
      %v395 = vpop.f32.mrf.mxu0
      %v396 = vadd.f32 0.0, %v395
      %v397 = vpop.f32.mrf.mxu0
      %v398 = vadd.f32 0.0, %v397
      %399 = vmatmul.bf16.gmra.mxu0 %v365
      %v400 = vpop.f32.mrf.mxu0
      %v401 = vadd.f32 0.0, %v400
      %v402 = vpop.f32.mrf.mxu0
      %v403 = vadd.f32 0.0, %v402
      %404 = vdwg.mxu0
      %405 = vmatpush.bf16.msra.mxu0 0
      %406 = vmatpush.bf16.msra.mxu0 0
      %407 = vmatpush.bf16.msra.mxu0 0
      %408 = vmatpush.bf16.msra.mxu0 0
      %409 = vmatpush.bf16.msra.mxu0 0
      %410 = vmatpush.bf16.msra.mxu0 0
      %411 = vmatpush.bf16.msra.mxu0 %v332
      %412 = vmatpush.bf16.msra.mxu0 %v322
      %413 = vmatmul.bf16.gmra.mxu0 %v362
      %v414 = vpop.f32.mrf.mxu0
      %v415 = vadd.f32 0.0, %v414
      %v416 = vpop.f32.mrf.mxu0
      %v417 = vadd.f32 0.0, %v416
      %418 = vmatmul.bf16.gmra.mxu0 %v365
      %v419 = vpop.f32.mrf.mxu0
      %v420 = vadd.f32 0.0, %v419
      %v421 = vpop.f32.mrf.mxu0
      %v422 = vadd.f32 0.0, %v421
      %423 = vdwg.mxu0
      %424 = vmatpush.bf16.msra.mxu0 0
      %425 = vmatpush.bf16.msra.mxu0 0
      %426 = vmatpush.bf16.msra.mxu0 0
      %427 = vmatpush.bf16.msra.mxu0 0
      %428 = vmatpush.bf16.msra.mxu0 0
      %429 = vmatpush.bf16.msra.mxu0 0
      %430 = vmatpush.bf16.msra.mxu0 %v333
      %431 = vmatpush.bf16.msra.mxu0 %v323
      %432 = vmatmul.bf16.gmra.mxu0 %v362
      %v433 = vpop.f32.mrf.mxu0
      %v434 = vadd.f32 0.0, %v433
      %v435 = vpop.f32.mrf.mxu0
      %v436 = vadd.f32 0.0, %v435
      %437 = vmatmul.bf16.gmra.mxu0 %v365
      %v438 = vpop.f32.mrf.mxu0
      %v439 = vadd.f32 0.0, %v438
      %v440 = vpop.f32.mrf.mxu0
      %v441 = vadd.f32 0.0, %v440
      %442 = vdwg.mxu0
      %443 = vmatpush.bf16.msra.mxu0 0
      %444 = vmatpush.bf16.msra.mxu0 0
      %445 = vmatpush.bf16.msra.mxu0 0
      %446 = vmatpush.bf16.msra.mxu0 0
      %447 = vmatpush.bf16.msra.mxu0 0
      %448 = vmatpush.bf16.msra.mxu0 0
      %449 = vmatpush.bf16.msra.mxu0 %v334
      %450 = vmatpush.bf16.msra.mxu0 %v324
      %451 = vmatmul.bf16.gmra.mxu0 %v362
      %v452 = vpop.f32.mrf.mxu0
      %v453 = vadd.f32 0.0, %v452
      %v454 = vpop.f32.mrf.mxu0
      %v455 = vadd.f32 0.0, %v454
      %456 = vmatmul.bf16.gmra.mxu0 %v365
      %v457 = vpop.f32.mrf.mxu0
      %v458 = vadd.f32 0.0, %v457
      %v459 = vpop.f32.mrf.mxu0
      %v460 = vadd.f32 0.0, %v459
      %461 = vdwg.mxu0
      %462 = vmatpush.bf16.msra.mxu0 0
      %463 = vmatpush.bf16.msra.mxu0 0
      %464 = vmatpush.bf16.msra.mxu0 0
      %465 = vmatpush.bf16.msra.mxu0 0
      %466 = vmatpush.bf16.msra.mxu0 0
      %467 = vmatpush.bf16.msra.mxu0 0
      %468 = vmatpush.bf16.msra.mxu0 %v335
      %469 = vmatpush.bf16.msra.mxu0 %v325
      %470 = vmatmul.bf16.gmra.mxu0 %v362
      %v471 = vpop.f32.mrf.mxu0
      %v472 = vadd.f32 0.0, %v471
      %v473 = vpop.f32.mrf.mxu0
      %v474 = vadd.f32 0.0, %v473
      %475 = vmatmul.bf16.gmra.mxu0 %v365
      %v476 = vpop.f32.mrf.mxu0
      %v477 = vadd.f32 0.0, %v476
      %v478 = vpop.f32.mrf.mxu0
      %v479 = vadd.f32 0.0, %v478
      %480 = vdwg.mxu0
      %481 = vmatpush.bf16.msra.mxu0 0
      %482 = vmatpush.bf16.msra.mxu0 0
      %483 = vmatpush.bf16.msra.mxu0 0
      %484 = vmatpush.bf16.msra.mxu0 0
      %485 = vmatpush.bf16.msra.mxu0 0
      %486 = vmatpush.bf16.msra.mxu0 0
      %487 = vmatpush.bf16.msra.mxu0 %v336
      %488 = vmatpush.bf16.msra.mxu0 %v326
      %489 = vmatmul.bf16.gmra.mxu0 %v362
      %v490 = vpop.f32.mrf.mxu0
      %v491 = vadd.f32 0.0, %v490
      %v492 = vpop.f32.mrf.mxu0
      %v493 = vadd.f32 0.0, %v492
      %494 = vmatmul.bf16.gmra.mxu0 %v365
      %v495 = vpop.f32.mrf.mxu0
      %v496 = vadd.f32 0.0, %v495
      %v497 = vpop.f32.mrf.mxu0
      %v498 = vadd.f32 0.0, %v497
      %499 = vdwg.mxu0
      %500 = vmatpush.bf16.msra.mxu0 0
      %501 = vmatpush.bf16.msra.mxu0 0
      %502 = vmatpush.bf16.msra.mxu0 0
      %503 = vmatpush.bf16.msra.mxu0 0
      %504 = vmatpush.bf16.msra.mxu0 0
      %505 = vmatpush.bf16.msra.mxu0 0
      %506 = vmatpush.bf16.msra.mxu0 %v337
      %507 = vmatpush.bf16.msra.mxu0 %v327
      %508 = vmatmul.bf16.gmra.mxu0 %v362
      %v509 = vpop.f32.mrf.mxu0
      %v510 = vadd.f32 0.0, %v509
      %v511 = vpop.f32.mrf.mxu0
      %v512 = vadd.f32 0.0, %v511
      %513 = vmatmul.bf16.gmra.mxu0 %v365
      %v514 = vpop.f32.mrf.mxu0
      %v515 = vadd.f32 0.0, %v514
      %v516 = vpop.f32.mrf.mxu0
      %v517 = vadd.f32 0.0, %v516
      %518 = vdwg.mxu0
      %519 = vmatpush.bf16.msra.mxu0 0
      %520 = vmatpush.bf16.msra.mxu0 0
      %521 = vmatpush.bf16.msra.mxu0 0
      %522 = vmatpush.bf16.msra.mxu0 0
      %523 = vmatpush.bf16.msra.mxu0 0
      %524 = vmatpush.bf16.msra.mxu0 0
      %525 = vmatpush.bf16.msra.mxu0 %v338
      %526 = vmatpush.bf16.msra.mxu0 %v328
      %527 = vmatmul.bf16.gmra.mxu0 %v362
      %v528 = vpop.f32.mrf.mxu0
      %v529 = vadd.f32 0.0, %v528
      %v530 = vpop.f32.mrf.mxu0
      %v531 = vadd.f32 0.0, %v530
      %532 = vmatmul.bf16.gmra.mxu0 %v365
      %v533 = vpop.f32.mrf.mxu0
      %v534 = vadd.f32 0.0, %v533
      %v535 = vpop.f32.mrf.mxu0
      %v536 = vadd.f32 0.0, %v535
      %537 = vdwg.mxu0
      %538 = vmatpush.bf16.msra.mxu0 0
      %539 = vmatpush.bf16.msra.mxu0 0
      %540 = vmatpush.bf16.msra.mxu0 0
      %541 = vmatpush.bf16.msra.mxu0 0
      %542 = vmatpush.bf16.msra.mxu0 0
      %543 = vmatpush.bf16.msra.mxu0 0
      %544 = vmatpush.bf16.msra.mxu0 %v339
      %545 = vmatpush.bf16.msra.mxu0 %v329
      %546 = vmatmul.bf16.gmra.mxu0 %v362
      %v547 = vpop.f32.mrf.mxu0
      %v548 = vadd.f32 0.0, %v547
      %v549 = vpop.f32.mrf.mxu0
      %v550 = vadd.f32 0.0, %v549
      %551 = vmatmul.bf16.gmra.mxu0 %v365
      %v552 = vpop.f32.mrf.mxu0
      %v553 = vadd.f32 0.0, %v552
      %v554 = vpop.f32.mrf.mxu0
      %v555 = vadd.f32 0.0, %v554
      %556 = vdwg.mxu0
      %v557 = vmax.f32 %v377, %v415
      %v558 = vmax.f32 %v396, %v434
      %v559 = vmax.f32 %v379, %v417
      %v560 = vmax.f32 %v398, %v436
      %v561 = vmax.f32 %v382, %v420
      %v562 = vmax.f32 %v401, %v439
      %v563 = vmax.f32 %v384, %v422
      %v564 = vmax.f32 %v403, %v441
      %v565 = vmax.f32 %v557, %v453
      %v566 = vmax.f32 %v558, %v472
      %v567 = vmax.f32 %v559, %v455
      %v568 = vmax.f32 %v560, %v474
      %v569 = vmax.f32 %v561, %v458
      %v570 = vmax.f32 %v562, %v477
      %v571 = vmax.f32 %v563, %v460
      %v572 = vmax.f32 %v564, %v479
      %v573 = vmax.f32 %v565, %v491
      %v574 = vmax.f32 %v566, %v510
      %v575 = vmax.f32 %v567, %v493
      %v576 = vmax.f32 %v568, %v512
      %v577 = vmax.f32 %v569, %v496
      %v578 = vmax.f32 %v570, %v515
      %v579 = vmax.f32 %v571, %v498
      %v580 = vmax.f32 %v572, %v517
      %v581 = vmax.f32 %v573, %v529
      %v582 = vmax.f32 %v574, %v548
      %v583 = vmax.f32 %v575, %v531
      %v584 = vmax.f32 %v576, %v550
      %v585 = vmax.f32 %v577, %v534
      %v586 = vmax.f32 %v578, %v553
      %v587 = vmax.f32 %v579, %v536
      %v588 = vmax.f32 %v580, %v555
      %v589 = vmax.f32 %v581, %v585
      %v590 = vmax.f32 %v582, %v586
      %v591 = vmax.f32 %v583, %v587
      %v592 = vmax.f32 %v584, %v588
      %vm593 = vcmp.ge.f32.partialorder %v589, 0.0
      %vm594 = vcmp.ge.f32.partialorder %v590, 0.0
      %vm595 = vcmp.ge.f32.partialorder %v591, 0.0
      %vm596 = vcmp.ge.f32.partialorder %v592, 0.0
      %v597 = vmul.f32 %v589, 0.01
      %v598 = vmul.f32 %v590, 0.01
      %v599 = vmul.f32 %v591, 0.01
      %v600 = vmul.f32 %v592, 0.01
      %v601 = vsel %vm593, %v589, %v597
      %v602 = vsel %vm594, %v590, %v598
      %v603 = vsel %vm595, %v591, %v599
      %v604 = vsel %vm596, %v592, %v600
      %vm605 = vcmp.ge.f32.partialorder %v601, 0.0
      %vm606 = vcmp.ge.f32.partialorder %v602, 0.0
      %vm607 = vcmp.ge.f32.partialorder %v603, 0.0
      %vm608 = vcmp.ge.f32.partialorder %v604, 0.0
      %v609 = vmul.f32 %v601, 0.01
      %v610 = vmul.f32 %v602, 0.01
      %v611 = vmul.f32 %v603, 0.01
      %v612 = vmul.f32 %v604, 0.01
      %v613 = vsel %vm605, %v601, %v609
      %v614 = vsel %vm606, %v602, %v610
      %v615 = vsel %vm607, %v603, %v611
      %v616 = vsel %vm608, %v604, %v612
      %617 = vst [vmem:[#allocation2] sm:$0xff] %v613
      %618 = vst [vmem:[#allocation2 + $0x8] sm:$0xff] %v614
      %619 = vst [vmem:[#allocation2 + $0x10] sm:$0xff] %v615
      %620 = vst [vmem:[#allocation2 + $0x18] sm:$0xff] %v616
      %s621 = scalar_lea.vmem %s219, 160
      %v622 = vld [vmem:[%s621] sm:$0xff]
      %v623 = vld [vmem:[%s621 + $0x8] sm:$0xff]
      %v624 = vld [vmem:[%s621 + $0x10] sm:$0xff]
      %v625 = vld [vmem:[%s621 + $0x18] sm:$0xff]
      %v626 = vld [vmem:[%s621 + $0x20] sm:$0xff]
      %v627 = vld [vmem:[%s621 + $0x28] sm:$0xff]
      %v628 = vld [vmem:[%s621 + $0x30] sm:$0xff]
      %v629 = vld [vmem:[%s621 + $0x38] sm:$0xff]
      %v630 = vld [vmem:[%s621 + $0x40] sm:$0xff]
      %v631 = vld [vmem:[%s621 + $0x48] sm:$0xff]
      %v632 = vld [vmem:[%s621 + $0x50] sm:$0xff]
      %v633 = vld [vmem:[%s621 + $0x58] sm:$0xff]
      %v634 = vld [vmem:[%s621 + $0x60] sm:$0xff]
      %v635 = vld [vmem:[%s621 + $0x68] sm:$0xff]
      %v636 = vld [vmem:[%s621 + $0x70] sm:$0xff]
      %v637 = vld [vmem:[%s621 + $0x78] sm:$0xff]
      %v638 = vld [vmem:[%s621 + $0x80] sm:$0xff]
      %v639 = vld [vmem:[%s621 + $0x88] sm:$0xff]
      %v640 = vld [vmem:[%s621 + $0x90] sm:$0xff]
      %v641 = vld [vmem:[%s621 + $0x98] sm:$0xff]
      %v662 = vunpack.c.l.b16 %v622
      %v663 = vunpack.c.h.b16 %v622
      %v664 = vunpack.c.l.b16 %v623
      %v665 = vunpack.c.h.b16 %v623
      %v666 = vunpack.c.l.b16 %v624
      %v667 = vunpack.c.h.b16 %v624
      %v668 = vunpack.c.l.b16 %v625
      %v669 = vunpack.c.h.b16 %v625
      %v670 = vunpack.c.l.b16 %v626
      %v671 = vunpack.c.h.b16 %v626
      %v672 = vunpack.c.l.b16 %v627
      %v673 = vunpack.c.h.b16 %v627
      %v674 = vunpack.c.l.b16 %v628
      %v675 = vunpack.c.h.b16 %v628
      %v676 = vunpack.c.l.b16 %v629
      %v677 = vunpack.c.h.b16 %v629
      %v678 = vunpack.c.l.b16 %v630
      %v679 = vunpack.c.h.b16 %v630
      %v680 = vunpack.c.l.b16 %v631
      %v681 = vunpack.c.h.b16 %v631
      %v682 = vunpack.c.l.b16 %v632
      %v683 = vunpack.c.h.b16 %v632
      %v684 = vunpack.c.l.b16 %v633
      %v685 = vunpack.c.h.b16 %v633
      %v686 = vunpack.c.l.b16 %v634
      %v687 = vunpack.c.h.b16 %v634
      %v688 = vunpack.c.l.b16 %v635
      %v689 = vunpack.c.h.b16 %v635
      %v690 = vunpack.c.l.b16 %v636
      %v691 = vunpack.c.h.b16 %v636
      %v692 = vunpack.c.l.b16 %v637
      %v693 = vunpack.c.h.b16 %v637
      %v694 = vunpack.c.l.b16 %v638
      %v695 = vunpack.c.h.b16 %v638
      %v696 = vunpack.c.l.b16 %v639
      %v697 = vunpack.c.h.b16 %v639
      %v698 = vunpack.c.l.b16 %v640
      %v699 = vunpack.c.h.b16 %v640
      %v700 = vunpack.c.l.b16 %v641
      %v701 = vunpack.c.h.b16 %v641
      %v702 = vpack.c.b16 %v672, %v662
      %v703 = vpack.c.b16 %v673, %v663
      %v704 = vpack.c.b16 %v674, %v664
      %v705 = vpack.c.b16 %v675, %v665
      %v706 = vpack.c.b16 %v676, %v666
      %v707 = vpack.c.b16 %v677, %v667
      %v708 = vpack.c.b16 %v678, %v668
      %v709 = vpack.c.b16 %v679, %v669
      %v710 = vpack.c.b16 %v680, %v670
      %v711 = vpack.c.b16 %v681, %v671
      %v712 = vpack.c.b16 %v692, %v682
      %v713 = vpack.c.b16 %v693, %v683
      %v714 = vpack.c.b16 %v694, %v684
      %v715 = vpack.c.b16 %v695, %v685
      %v716 = vpack.c.b16 %v696, %v686
      %v717 = vpack.c.b16 %v697, %v687
      %v718 = vpack.c.b16 %v698, %v688
      %v719 = vpack.c.b16 %v699, %v689
      %v720 = vpack.c.b16 %v700, %v690
      %v721 = vpack.c.b16 %v701, %v691
      %742 = vmatpush.bf16.msra.mxu0 0
      %743 = vmatpush.bf16.msra.mxu0 0
      %744 = vmatpush.bf16.msra.mxu0 0
      %745 = vmatpush.bf16.msra.mxu0 0
      %746 = vmatpush.bf16.msra.mxu0 0
      %747 = vmatpush.bf16.msra.mxu0 0
      %748 = vmatpush.bf16.msra.mxu0 %v712
      %749 = vmatpush.bf16.msra.mxu0 %v702
      %750 = vmatmul.bf16.gmra.mxu0 %v362
      %v751 = vpop.f32.mrf.mxu0
      %v752 = vadd.f32 0.0, %v751
      %v753 = vpop.f32.mrf.mxu0
      %v754 = vadd.f32 0.0, %v753
      %755 = vmatmul.bf16.gmra.mxu0 %v365
      %v756 = vpop.f32.mrf.mxu0
      %v757 = vadd.f32 0.0, %v756
      %v758 = vpop.f32.mrf.mxu0
      %v759 = vadd.f32 0.0, %v758
      %760 = vdwg.mxu0
      %761 = vmatpush.bf16.msra.mxu0 0
      %762 = vmatpush.bf16.msra.mxu0 0
      %763 = vmatpush.bf16.msra.mxu0 0
      %764 = vmatpush.bf16.msra.mxu0 0
      %765 = vmatpush.bf16.msra.mxu0 0
      %766 = vmatpush.bf16.msra.mxu0 0
      %767 = vmatpush.bf16.msra.mxu0 %v713
      %768 = vmatpush.bf16.msra.mxu0 %v703
      %769 = vmatmul.bf16.gmra.mxu0 %v362
      %v770 = vpop.f32.mrf.mxu0
      %v771 = vadd.f32 0.0, %v770
      %v772 = vpop.f32.mrf.mxu0
      %v773 = vadd.f32 0.0, %v772
      %774 = vmatmul.bf16.gmra.mxu0 %v365
      %v775 = vpop.f32.mrf.mxu0
      %v776 = vadd.f32 0.0, %v775
      %v777 = vpop.f32.mrf.mxu0
      %v778 = vadd.f32 0.0, %v777
      %779 = vdwg.mxu0
      %780 = vmatpush.bf16.msra.mxu0 0
      %781 = vmatpush.bf16.msra.mxu0 0
      %782 = vmatpush.bf16.msra.mxu0 0
      %783 = vmatpush.bf16.msra.mxu0 0
      %784 = vmatpush.bf16.msra.mxu0 0
      %785 = vmatpush.bf16.msra.mxu0 0
      %786 = vmatpush.bf16.msra.mxu0 %v714
      %787 = vmatpush.bf16.msra.mxu0 %v704
      %788 = vmatmul.bf16.gmra.mxu0 %v362
      %v789 = vpop.f32.mrf.mxu0
      %v790 = vadd.f32 0.0, %v789
      %v791 = vpop.f32.mrf.mxu0
      %v792 = vadd.f32 0.0, %v791
      %793 = vmatmul.bf16.gmra.mxu0 %v365
      %v794 = vpop.f32.mrf.mxu0
      %v795 = vadd.f32 0.0, %v794
      %v796 = vpop.f32.mrf.mxu0
      %v797 = vadd.f32 0.0, %v796
      %798 = vdwg.mxu0
      %799 = vmatpush.bf16.msra.mxu0 0
      %800 = vmatpush.bf16.msra.mxu0 0
      %801 = vmatpush.bf16.msra.mxu0 0
      %802 = vmatpush.bf16.msra.mxu0 0
      %803 = vmatpush.bf16.msra.mxu0 0
      %804 = vmatpush.bf16.msra.mxu0 0
      %805 = vmatpush.bf16.msra.mxu0 %v715
      %806 = vmatpush.bf16.msra.mxu0 %v705
      %807 = vmatmul.bf16.gmra.mxu0 %v362
      %v808 = vpop.f32.mrf.mxu0
      %v809 = vadd.f32 0.0, %v808
      %v810 = vpop.f32.mrf.mxu0
      %v811 = vadd.f32 0.0, %v810
      %812 = vmatmul.bf16.gmra.mxu0 %v365
      %v813 = vpop.f32.mrf.mxu0
      %v814 = vadd.f32 0.0, %v813
      %v815 = vpop.f32.mrf.mxu0
      %v816 = vadd.f32 0.0, %v815
      %817 = vdwg.mxu0
      %818 = vmatpush.bf16.msra.mxu0 0
      %819 = vmatpush.bf16.msra.mxu0 0
      %820 = vmatpush.bf16.msra.mxu0 0
      %821 = vmatpush.bf16.msra.mxu0 0
      %822 = vmatpush.bf16.msra.mxu0 0
      %823 = vmatpush.bf16.msra.mxu0 0
      %824 = vmatpush.bf16.msra.mxu0 %v716
      %825 = vmatpush.bf16.msra.mxu0 %v706
      %826 = vmatmul.bf16.gmra.mxu0 %v362
      %v827 = vpop.f32.mrf.mxu0
      %v828 = vadd.f32 0.0, %v827
      %v829 = vpop.f32.mrf.mxu0
      %v830 = vadd.f32 0.0, %v829
      %831 = vmatmul.bf16.gmra.mxu0 %v365
      %v832 = vpop.f32.mrf.mxu0
      %v833 = vadd.f32 0.0, %v832
      %v834 = vpop.f32.mrf.mxu0
      %v835 = vadd.f32 0.0, %v834
      %836 = vdwg.mxu0
      %837 = vmatpush.bf16.msra.mxu0 0
      %838 = vmatpush.bf16.msra.mxu0 0
      %839 = vmatpush.bf16.msra.mxu0 0
      %840 = vmatpush.bf16.msra.mxu0 0
      %841 = vmatpush.bf16.msra.mxu0 0
      %842 = vmatpush.bf16.msra.mxu0 0
      %843 = vmatpush.bf16.msra.mxu0 %v717
      %844 = vmatpush.bf16.msra.mxu0 %v707
      %845 = vmatmul.bf16.gmra.mxu0 %v362
      %v846 = vpop.f32.mrf.mxu0
      %v847 = vadd.f32 0.0, %v846
      %v848 = vpop.f32.mrf.mxu0
      %v849 = vadd.f32 0.0, %v848
      %850 = vmatmul.bf16.gmra.mxu0 %v365
      %v851 = vpop.f32.mrf.mxu0
      %v852 = vadd.f32 0.0, %v851
      %v853 = vpop.f32.mrf.mxu0
      %v854 = vadd.f32 0.0, %v853
      %855 = vdwg.mxu0
      %856 = vmatpush.bf16.msra.mxu0 0
      %857 = vmatpush.bf16.msra.mxu0 0
      %858 = vmatpush.bf16.msra.mxu0 0
      %859 = vmatpush.bf16.msra.mxu0 0
      %860 = vmatpush.bf16.msra.mxu0 0
      %861 = vmatpush.bf16.msra.mxu0 0
      %862 = vmatpush.bf16.msra.mxu0 %v718
      %863 = vmatpush.bf16.msra.mxu0 %v708
      %864 = vmatmul.bf16.gmra.mxu0 %v362
      %v865 = vpop.f32.mrf.mxu0
      %v866 = vadd.f32 0.0, %v865
      %v867 = vpop.f32.mrf.mxu0
      %v868 = vadd.f32 0.0, %v867
      %869 = vmatmul.bf16.gmra.mxu0 %v365
      %v870 = vpop.f32.mrf.mxu0
      %v871 = vadd.f32 0.0, %v870
      %v872 = vpop.f32.mrf.mxu0
      %v873 = vadd.f32 0.0, %v872
      %874 = vdwg.mxu0
      %875 = vmatpush.bf16.msra.mxu0 0
      %876 = vmatpush.bf16.msra.mxu0 0
      %877 = vmatpush.bf16.msra.mxu0 0
      %878 = vmatpush.bf16.msra.mxu0 0
      %879 = vmatpush.bf16.msra.mxu0 0
      %880 = vmatpush.bf16.msra.mxu0 0
      %881 = vmatpush.bf16.msra.mxu0 %v719
      %882 = vmatpush.bf16.msra.mxu0 %v709
      %883 = vmatmul.bf16.gmra.mxu0 %v362
      %v884 = vpop.f32.mrf.mxu0
      %v885 = vadd.f32 0.0, %v884
      %v886 = vpop.f32.mrf.mxu0
      %v887 = vadd.f32 0.0, %v886
      %888 = vmatmul.bf16.gmra.mxu0 %v365
      %v889 = vpop.f32.mrf.mxu0
      %v890 = vadd.f32 0.0, %v889
      %v891 = vpop.f32.mrf.mxu0
      %v892 = vadd.f32 0.0, %v891
      %893 = vdwg.mxu0
      %894 = vmatpush.bf16.msra.mxu0 0
      %895 = vmatpush.bf16.msra.mxu0 0
      %896 = vmatpush.bf16.msra.mxu0 0
      %897 = vmatpush.bf16.msra.mxu0 0
      %898 = vmatpush.bf16.msra.mxu0 0
      %899 = vmatpush.bf16.msra.mxu0 0
      %900 = vmatpush.bf16.msra.mxu0 %v720
      %901 = vmatpush.bf16.msra.mxu0 %v710
      %902 = vmatmul.bf16.gmra.mxu0 %v362
      %v903 = vpop.f32.mrf.mxu0
      %v904 = vadd.f32 0.0, %v903
      %v905 = vpop.f32.mrf.mxu0
      %v906 = vadd.f32 0.0, %v905
      %907 = vmatmul.bf16.gmra.mxu0 %v365
      %v908 = vpop.f32.mrf.mxu0
      %v909 = vadd.f32 0.0, %v908
      %v910 = vpop.f32.mrf.mxu0
      %v911 = vadd.f32 0.0, %v910
      %912 = vdwg.mxu0
      %913 = vmatpush.bf16.msra.mxu0 0
      %914 = vmatpush.bf16.msra.mxu0 0
      %915 = vmatpush.bf16.msra.mxu0 0
      %916 = vmatpush.bf16.msra.mxu0 0
      %917 = vmatpush.bf16.msra.mxu0 0
      %918 = vmatpush.bf16.msra.mxu0 0
      %919 = vmatpush.bf16.msra.mxu0 %v721
      %920 = vmatpush.bf16.msra.mxu0 %v711
      %921 = vmatmul.bf16.gmra.mxu0 %v362
      %v922 = vpop.f32.mrf.mxu0
      %v923 = vadd.f32 0.0, %v922
      %v924 = vpop.f32.mrf.mxu0
      %v925 = vadd.f32 0.0, %v924
      %926 = vmatmul.bf16.gmra.mxu0 %v365
      %v927 = vpop.f32.mrf.mxu0
      %v928 = vadd.f32 0.0, %v927
      %v929 = vpop.f32.mrf.mxu0
      %v930 = vadd.f32 0.0, %v929
      %931 = vdwg.mxu0
      %v932 = vmax.f32 %v752, %v790
      %v933 = vmax.f32 %v771, %v809
      %v934 = vmax.f32 %v754, %v792
      %v935 = vmax.f32 %v773, %v811
      %v936 = vmax.f32 %v757, %v795
      %v937 = vmax.f32 %v776, %v814
      %v938 = vmax.f32 %v759, %v797
      %v939 = vmax.f32 %v778, %v816
      %v940 = vmax.f32 %v932, %v828
      %v941 = vmax.f32 %v933, %v847
      %v942 = vmax.f32 %v934, %v830
      %v943 = vmax.f32 %v935, %v849
      %v944 = vmax.f32 %v936, %v833
      %v945 = vmax.f32 %v937, %v852
      %v946 = vmax.f32 %v938, %v835
      %v947 = vmax.f32 %v939, %v854
      %v948 = vmax.f32 %v940, %v866
      %v949 = vmax.f32 %v941, %v885
      %v950 = vmax.f32 %v942, %v868
      %v951 = vmax.f32 %v943, %v887
      %v952 = vmax.f32 %v944, %v871
      %v953 = vmax.f32 %v945, %v890
      %v954 = vmax.f32 %v946, %v873
      %v955 = vmax.f32 %v947, %v892
      %v956 = vmax.f32 %v948, %v904
      %v957 = vmax.f32 %v949, %v923
      %v958 = vmax.f32 %v950, %v906
      %v959 = vmax.f32 %v951, %v925
      %v960 = vmax.f32 %v952, %v909
      %v961 = vmax.f32 %v953, %v928
      %v962 = vmax.f32 %v954, %v911
      %v963 = vmax.f32 %v955, %v930
      %v964 = vmax.f32 %v956, %v960
      %v965 = vmax.f32 %v957, %v961
      %v966 = vmax.f32 %v958, %v962
      %v967 = vmax.f32 %v959, %v963
      %vm968 = vcmp.ge.f32.partialorder %v964, 0.0
      %vm969 = vcmp.ge.f32.partialorder %v965, 0.0
      %vm970 = vcmp.ge.f32.partialorder %v966, 0.0
      %vm971 = vcmp.ge.f32.partialorder %v967, 0.0
      %v972 = vmul.f32 %v964, 0.01
      %v973 = vmul.f32 %v965, 0.01
      %v974 = vmul.f32 %v966, 0.01
      %v975 = vmul.f32 %v967, 0.01
      %v976 = vsel %vm968, %v964, %v972
      %v977 = vsel %vm969, %v965, %v973
      %v978 = vsel %vm970, %v966, %v974
      %v979 = vsel %vm971, %v967, %v975
      %vm980 = vcmp.ge.f32.partialorder %v976, 0.0
      %vm981 = vcmp.ge.f32.partialorder %v977, 0.0
      %vm982 = vcmp.ge.f32.partialorder %v978, 0.0
      %vm983 = vcmp.ge.f32.partialorder %v979, 0.0
      %v984 = vmul.f32 %v976, 0.01
      %v985 = vmul.f32 %v977, 0.01
      %v986 = vmul.f32 %v978, 0.01
      %v987 = vmul.f32 %v979, 0.01
      %v988 = vsel %vm980, %v976, %v984
      %v989 = vsel %vm981, %v977, %v985
      %v990 = vsel %vm982, %v978, %v986
      %v991 = vsel %vm983, %v979, %v987
      %992 = vst [vmem:[#allocation2 + $0x20] sm:$0xff] %v988
      %993 = vst [vmem:[#allocation2 + $0x28] sm:$0xff] %v989
      %994 = vst [vmem:[#allocation2 + $0x30] sm:$0xff] %v990
      %995 = vst [vmem:[#allocation2 + $0x38] sm:$0xff] %v991
      %s996 = scalar_lea.vmem %s219, 320
      %v997 = vld [vmem:[%s996] sm:$0xff]
      %v998 = vld [vmem:[%s996 + $0x8] sm:$0xff]
      %v999 = vld [vmem:[%s996 + $0x10] sm:$0xff]
      %v1000 = vld [vmem:[%s996 + $0x18] sm:$0xff]
      %v1001 = vld [vmem:[%s996 + $0x20] sm:$0xff]
      %v1002 = vld [vmem:[%s996 + $0x28] sm:$0xff]
      %v1003 = vld [vmem:[%s996 + $0x30] sm:$0xff]
      %v1004 = vld [vmem:[%s996 + $0x38] sm:$0xff]
      %v1005 = vld [vmem:[%s996 + $0x40] sm:$0xff]
      %v1006 = vld [vmem:[%s996 + $0x48] sm:$0xff]
      %v1007 = vld [vmem:[%s996 + $0x50] sm:$0xff]
      %v1008 = vld [vmem:[%s996 + $0x58] sm:$0xff]
      %v1009 = vld [vmem:[%s996 + $0x60] sm:$0xff]
      %v1010 = vld [vmem:[%s996 + $0x68] sm:$0xff]
      %v1011 = vld [vmem:[%s996 + $0x70] sm:$0xff]
      %v1012 = vld [vmem:[%s996 + $0x78] sm:$0xff]
      %v1013 = vld [vmem:[%s996 + $0x80] sm:$0xff]
      %v1014 = vld [vmem:[%s996 + $0x88] sm:$0xff]
      %v1015 = vld [vmem:[%s996 + $0x90] sm:$0xff]
      %v1016 = vld [vmem:[%s996 + $0x98] sm:$0xff]
      %v1037 = vunpack.c.l.b16 %v997
      %v1038 = vunpack.c.h.b16 %v997
      %v1039 = vunpack.c.l.b16 %v998
      %v1040 = vunpack.c.h.b16 %v998
      %v1041 = vunpack.c.l.b16 %v999
      %v1042 = vunpack.c.h.b16 %v999
      %v1043 = vunpack.c.l.b16 %v1000
      %v1044 = vunpack.c.h.b16 %v1000
      %v1045 = vunpack.c.l.b16 %v1001
      %v1046 = vunpack.c.h.b16 %v1001
      %v1047 = vunpack.c.l.b16 %v1002
      %v1048 = vunpack.c.h.b16 %v1002
      %v1049 = vunpack.c.l.b16 %v1003
      %v1050 = vunpack.c.h.b16 %v1003
      %v1051 = vunpack.c.l.b16 %v1004
      %v1052 = vunpack.c.h.b16 %v1004
      %v1053 = vunpack.c.l.b16 %v1005
      %v1054 = vunpack.c.h.b16 %v1005
      %v1055 = vunpack.c.l.b16 %v1006
      %v1056 = vunpack.c.h.b16 %v1006
      %v1057 = vunpack.c.l.b16 %v1007
      %v1058 = vunpack.c.h.b16 %v1007
      %v1059 = vunpack.c.l.b16 %v1008
      %v1060 = vunpack.c.h.b16 %v1008
      %v1061 = vunpack.c.l.b16 %v1009
      %v1062 = vunpack.c.h.b16 %v1009
      %v1063 = vunpack.c.l.b16 %v1010
      %v1064 = vunpack.c.h.b16 %v1010
      %v1065 = vunpack.c.l.b16 %v1011
      %v1066 = vunpack.c.h.b16 %v1011
      %v1067 = vunpack.c.l.b16 %v1012
      %v1068 = vunpack.c.h.b16 %v1012
      %v1069 = vunpack.c.l.b16 %v1013
      %v1070 = vunpack.c.h.b16 %v1013
      %v1071 = vunpack.c.l.b16 %v1014
      %v1072 = vunpack.c.h.b16 %v1014
      %v1073 = vunpack.c.l.b16 %v1015
      %v1074 = vunpack.c.h.b16 %v1015
      %v1075 = vunpack.c.l.b16 %v1016
      %v1076 = vunpack.c.h.b16 %v1016
      %v1077 = vpack.c.b16 %v1047, %v1037
      %v1078 = vpack.c.b16 %v1048, %v1038
      %v1079 = vpack.c.b16 %v1049, %v1039
      %v1080 = vpack.c.b16 %v1050, %v1040
      %v1081 = vpack.c.b16 %v1051, %v1041
      %v1082 = vpack.c.b16 %v1052, %v1042
      %v1083 = vpack.c.b16 %v1053, %v1043
      %v1084 = vpack.c.b16 %v1054, %v1044
      %v1085 = vpack.c.b16 %v1055, %v1045
      %v1086 = vpack.c.b16 %v1056, %v1046
      %v1087 = vpack.c.b16 %v1067, %v1057
      %v1088 = vpack.c.b16 %v1068, %v1058
      %v1089 = vpack.c.b16 %v1069, %v1059
      %v1090 = vpack.c.b16 %v1070, %v1060
      %v1091 = vpack.c.b16 %v1071, %v1061
      %v1092 = vpack.c.b16 %v1072, %v1062
      %v1093 = vpack.c.b16 %v1073, %v1063
      %v1094 = vpack.c.b16 %v1074, %v1064
      %v1095 = vpack.c.b16 %v1075, %v1065
      %v1096 = vpack.c.b16 %v1076, %v1066
      %1117 = vmatpush.bf16.msra.mxu0 0
      %1118 = vmatpush.bf16.msra.mxu0 0
      %1119 = vmatpush.bf16.msra.mxu0 0
      %1120 = vmatpush.bf16.msra.mxu0 0
      %1121 = vmatpush.bf16.msra.mxu0 0
      %1122 = vmatpush.bf16.msra.mxu0 0
      %1123 = vmatpush.bf16.msra.mxu0 %v1087
      %1124 = vmatpush.bf16.msra.mxu0 %v1077
      %1125 = vmatmul.bf16.gmra.mxu0 %v362
      %v1126 = vpop.f32.mrf.mxu0
      %v1127 = vadd.f32 0.0, %v1126
      %v1128 = vpop.f32.mrf.mxu0
      %v1129 = vadd.f32 0.0, %v1128
      %1130 = vmatmul.bf16.gmra.mxu0 %v365
      %v1131 = vpop.f32.mrf.mxu0
      %v1132 = vadd.f32 0.0, %v1131
      %v1133 = vpop.f32.mrf.mxu0
      %v1134 = vadd.f32 0.0, %v1133
      %1135 = vdwg.mxu0
      %1136 = vmatpush.bf16.msra.mxu0 0
      %1137 = vmatpush.bf16.msra.mxu0 0
      %1138 = vmatpush.bf16.msra.mxu0 0
      %1139 = vmatpush.bf16.msra.mxu0 0
      %1140 = vmatpush.bf16.msra.mxu0 0
      %1141 = vmatpush.bf16.msra.mxu0 0
      %1142 = vmatpush.bf16.msra.mxu0 %v1088
      %1143 = vmatpush.bf16.msra.mxu0 %v1078
      %1144 = vmatmul.bf16.gmra.mxu0 %v362
      %v1145 = vpop.f32.mrf.mxu0
      %v1146 = vadd.f32 0.0, %v1145
      %v1147 = vpop.f32.mrf.mxu0
      %v1148 = vadd.f32 0.0, %v1147
      %1149 = vmatmul.bf16.gmra.mxu0 %v365
      %v1150 = vpop.f32.mrf.mxu0
      %v1151 = vadd.f32 0.0, %v1150
      %v1152 = vpop.f32.mrf.mxu0
      %v1153 = vadd.f32 0.0, %v1152
      %1154 = vdwg.mxu0
      %1155 = vmatpush.bf16.msra.mxu0 0
      %1156 = vmatpush.bf16.msra.mxu0 0
      %1157 = vmatpush.bf16.msra.mxu0 0
      %1158 = vmatpush.bf16.msra.mxu0 0
      %1159 = vmatpush.bf16.msra.mxu0 0
      %1160 = vmatpush.bf16.msra.mxu0 0
      %1161 = vmatpush.bf16.msra.mxu0 %v1089
      %1162 = vmatpush.bf16.msra.mxu0 %v1079
      %1163 = vmatmul.bf16.gmra.mxu0 %v362
      %v1164 = vpop.f32.mrf.mxu0
      %v1165 = vadd.f32 0.0, %v1164
      %v1166 = vpop.f32.mrf.mxu0
      %v1167 = vadd.f32 0.0, %v1166
      %1168 = vmatmul.bf16.gmra.mxu0 %v365
      %v1169 = vpop.f32.mrf.mxu0
      %v1170 = vadd.f32 0.0, %v1169
      %v1171 = vpop.f32.mrf.mxu0
      %v1172 = vadd.f32 0.0, %v1171
      %1173 = vdwg.mxu0
      %1174 = vmatpush.bf16.msra.mxu0 0
      %1175 = vmatpush.bf16.msra.mxu0 0
      %1176 = vmatpush.bf16.msra.mxu0 0
      %1177 = vmatpush.bf16.msra.mxu0 0
      %1178 = vmatpush.bf16.msra.mxu0 0
      %1179 = vmatpush.bf16.msra.mxu0 0
      %1180 = vmatpush.bf16.msra.mxu0 %v1090
      %1181 = vmatpush.bf16.msra.mxu0 %v1080
      %1182 = vmatmul.bf16.gmra.mxu0 %v362
      %v1183 = vpop.f32.mrf.mxu0
      %v1184 = vadd.f32 0.0, %v1183
      %v1185 = vpop.f32.mrf.mxu0
      %v1186 = vadd.f32 0.0, %v1185
      %1187 = vmatmul.bf16.gmra.mxu0 %v365
      %v1188 = vpop.f32.mrf.mxu0
      %v1189 = vadd.f32 0.0, %v1188
      %v1190 = vpop.f32.mrf.mxu0
      %v1191 = vadd.f32 0.0, %v1190
      %1192 = vdwg.mxu0
      %1193 = vmatpush.bf16.msra.mxu0 0
      %1194 = vmatpush.bf16.msra.mxu0 0
      %1195 = vmatpush.bf16.msra.mxu0 0
      %1196 = vmatpush.bf16.msra.mxu0 0
      %1197 = vmatpush.bf16.msra.mxu0 0
      %1198 = vmatpush.bf16.msra.mxu0 0
      %1199 = vmatpush.bf16.msra.mxu0 %v1091
      %1200 = vmatpush.bf16.msra.mxu0 %v1081
      %1201 = vmatmul.bf16.gmra.mxu0 %v362
      %v1202 = vpop.f32.mrf.mxu0
      %v1203 = vadd.f32 0.0, %v1202
      %v1204 = vpop.f32.mrf.mxu0
      %v1205 = vadd.f32 0.0, %v1204
      %1206 = vmatmul.bf16.gmra.mxu0 %v365
      %v1207 = vpop.f32.mrf.mxu0
      %v1208 = vadd.f32 0.0, %v1207
      %v1209 = vpop.f32.mrf.mxu0
      %v1210 = vadd.f32 0.0, %v1209
      %1211 = vdwg.mxu0
      %1212 = vmatpush.bf16.msra.mxu0 0
      %1213 = vmatpush.bf16.msra.mxu0 0
      %1214 = vmatpush.bf16.msra.mxu0 0
      %1215 = vmatpush.bf16.msra.mxu0 0
      %1216 = vmatpush.bf16.msra.mxu0 0
      %1217 = vmatpush.bf16.msra.mxu0 0
      %1218 = vmatpush.bf16.msra.mxu0 %v1092
      %1219 = vmatpush.bf16.msra.mxu0 %v1082
      %1220 = vmatmul.bf16.gmra.mxu0 %v362
      %v1221 = vpop.f32.mrf.mxu0
      %v1222 = vadd.f32 0.0, %v1221
      %v1223 = vpop.f32.mrf.mxu0
      %v1224 = vadd.f32 0.0, %v1223
      %1225 = vmatmul.bf16.gmra.mxu0 %v365
      %v1226 = vpop.f32.mrf.mxu0
      %v1227 = vadd.f32 0.0, %v1226
      %v1228 = vpop.f32.mrf.mxu0
      %v1229 = vadd.f32 0.0, %v1228
      %1230 = vdwg.mxu0
      %1231 = vmatpush.bf16.msra.mxu0 0
      %1232 = vmatpush.bf16.msra.mxu0 0
      %1233 = vmatpush.bf16.msra.mxu0 0
      %1234 = vmatpush.bf16.msra.mxu0 0
      %1235 = vmatpush.bf16.msra.mxu0 0
      %1236 = vmatpush.bf16.msra.mxu0 0
      %1237 = vmatpush.bf16.msra.mxu0 %v1093
      %1238 = vmatpush.bf16.msra.mxu0 %v1083
      %1239 = vmatmul.bf16.gmra.mxu0 %v362
      %v1240 = vpop.f32.mrf.mxu0
      %v1241 = vadd.f32 0.0, %v1240
      %v1242 = vpop.f32.mrf.mxu0
      %v1243 = vadd.f32 0.0, %v1242
      %1244 = vmatmul.bf16.gmra.mxu0 %v365
      %v1245 = vpop.f32.mrf.mxu0
      %v1246 = vadd.f32 0.0, %v1245
      %v1247 = vpop.f32.mrf.mxu0
      %v1248 = vadd.f32 0.0, %v1247
      %1249 = vdwg.mxu0
      %1250 = vmatpush.bf16.msra.mxu0 0
      %1251 = vmatpush.bf16.msra.mxu0 0
      %1252 = vmatpush.bf16.msra.mxu0 0
      %1253 = vmatpush.bf16.msra.mxu0 0
      %1254 = vmatpush.bf16.msra.mxu0 0
      %1255 = vmatpush.bf16.msra.mxu0 0
      %1256 = vmatpush.bf16.msra.mxu0 %v1094
      %1257 = vmatpush.bf16.msra.mxu0 %v1084
      %1258 = vmatmul.bf16.gmra.mxu0 %v362
      %v1259 = vpop.f32.mrf.mxu0
      %v1260 = vadd.f32 0.0, %v1259
      %v1261 = vpop.f32.mrf.mxu0
      %v1262 = vadd.f32 0.0, %v1261
      %1263 = vmatmul.bf16.gmra.mxu0 %v365
      %v1264 = vpop.f32.mrf.mxu0
      %v1265 = vadd.f32 0.0, %v1264
      %v1266 = vpop.f32.mrf.mxu0
      %v1267 = vadd.f32 0.0, %v1266
      %1268 = vdwg.mxu0
      %1269 = vmatpush.bf16.msra.mxu0 0
      %1270 = vmatpush.bf16.msra.mxu0 0
      %1271 = vmatpush.bf16.msra.mxu0 0
      %1272 = vmatpush.bf16.msra.mxu0 0
      %1273 = vmatpush.bf16.msra.mxu0 0
      %1274 = vmatpush.bf16.msra.mxu0 0
      %1275 = vmatpush.bf16.msra.mxu0 %v1095
      %1276 = vmatpush.bf16.msra.mxu0 %v1085
      %1277 = vmatmul.bf16.gmra.mxu0 %v362
      %v1278 = vpop.f32.mrf.mxu0
      %v1279 = vadd.f32 0.0, %v1278
      %v1280 = vpop.f32.mrf.mxu0
      %v1281 = vadd.f32 0.0, %v1280
      %1282 = vmatmul.bf16.gmra.mxu0 %v365
      %v1283 = vpop.f32.mrf.mxu0
      %v1284 = vadd.f32 0.0, %v1283
      %v1285 = vpop.f32.mrf.mxu0
      %v1286 = vadd.f32 0.0, %v1285
      %1287 = vdwg.mxu0
      %1288 = vmatpush.bf16.msra.mxu0 0
      %1289 = vmatpush.bf16.msra.mxu0 0
      %1290 = vmatpush.bf16.msra.mxu0 0
      %1291 = vmatpush.bf16.msra.mxu0 0
      %1292 = vmatpush.bf16.msra.mxu0 0
      %1293 = vmatpush.bf16.msra.mxu0 0
      %1294 = vmatpush.bf16.msra.mxu0 %v1096
      %1295 = vmatpush.bf16.msra.mxu0 %v1086
      %1296 = vmatmul.bf16.gmra.mxu0 %v362
      %v1297 = vpop.f32.mrf.mxu0
      %v1298 = vadd.f32 0.0, %v1297
      %v1299 = vpop.f32.mrf.mxu0
      %v1300 = vadd.f32 0.0, %v1299
      %1301 = vmatmul.bf16.gmra.mxu0 %v365
      %v1302 = vpop.f32.mrf.mxu0
      %v1303 = vadd.f32 0.0, %v1302
      %v1304 = vpop.f32.mrf.mxu0
      %v1305 = vadd.f32 0.0, %v1304
      %1306 = vdwg.mxu0
      %v1307 = vmax.f32 %v1127, %v1165
      %v1308 = vmax.f32 %v1146, %v1184
      %v1309 = vmax.f32 %v1129, %v1167
      %v1310 = vmax.f32 %v1148, %v1186
      %v1311 = vmax.f32 %v1132, %v1170
      %v1312 = vmax.f32 %v1151, %v1189
      %v1313 = vmax.f32 %v1134, %v1172
      %v1314 = vmax.f32 %v1153, %v1191
      %v1315 = vmax.f32 %v1307, %v1203
      %v1316 = vmax.f32 %v1308, %v1222
      %v1317 = vmax.f32 %v1309, %v1205
      %v1318 = vmax.f32 %v1310, %v1224
      %v1319 = vmax.f32 %v1311, %v1208
      %v1320 = vmax.f32 %v1312, %v1227
      %v1321 = vmax.f32 %v1313, %v1210
      %v1322 = vmax.f32 %v1314, %v1229
      %v1323 = vmax.f32 %v1315, %v1241
      %v1324 = vmax.f32 %v1316, %v1260
      %v1325 = vmax.f32 %v1317, %v1243
      %v1326 = vmax.f32 %v1318, %v1262
      %v1327 = vmax.f32 %v1319, %v1246
      %v1328 = vmax.f32 %v1320, %v1265
      %v1329 = vmax.f32 %v1321, %v1248
      %v1330 = vmax.f32 %v1322, %v1267
      %v1331 = vmax.f32 %v1323, %v1279
      %v1332 = vmax.f32 %v1324, %v1298
      %v1333 = vmax.f32 %v1325, %v1281
      %v1334 = vmax.f32 %v1326, %v1300
      %v1335 = vmax.f32 %v1327, %v1284
      %v1336 = vmax.f32 %v1328, %v1303
      %v1337 = vmax.f32 %v1329, %v1286
      %v1338 = vmax.f32 %v1330, %v1305
      %v1339 = vmax.f32 %v1331, %v1335
      %v1340 = vmax.f32 %v1332, %v1336
      %v1341 = vmax.f32 %v1333, %v1337
      %v1342 = vmax.f32 %v1334, %v1338
      %vm1343 = vcmp.ge.f32.partialorder %v1339, 0.0
      %vm1344 = vcmp.ge.f32.partialorder %v1340, 0.0
      %vm1345 = vcmp.ge.f32.partialorder %v1341, 0.0
      %vm1346 = vcmp.ge.f32.partialorder %v1342, 0.0
      %v1347 = vmul.f32 %v1339, 0.01
      %v1348 = vmul.f32 %v1340, 0.01
      %v1349 = vmul.f32 %v1341, 0.01
      %v1350 = vmul.f32 %v1342, 0.01
      %v1351 = vsel %vm1343, %v1339, %v1347
      %v1352 = vsel %vm1344, %v1340, %v1348
      %v1353 = vsel %vm1345, %v1341, %v1349
      %v1354 = vsel %vm1346, %v1342, %v1350
      %vm1355 = vcmp.ge.f32.partialorder %v1351, 0.0
      %vm1356 = vcmp.ge.f32.partialorder %v1352, 0.0
      %vm1357 = vcmp.ge.f32.partialorder %v1353, 0.0
      %vm1358 = vcmp.ge.f32.partialorder %v1354, 0.0
      %v1359 = vmul.f32 %v1351, 0.01
      %v1360 = vmul.f32 %v1352, 0.01
      %v1361 = vmul.f32 %v1353, 0.01
      %v1362 = vmul.f32 %v1354, 0.01
      %v1363 = vsel %vm1355, %v1351, %v1359
      %v1364 = vsel %vm1356, %v1352, %v1360
      %v1365 = vsel %vm1357, %v1353, %v1361
      %v1366 = vsel %vm1358, %v1354, %v1362
      %1367 = vst [vmem:[#allocation2 + $0x40] sm:$0xff] %v1363
      %1368 = vst [vmem:[#allocation2 + $0x48] sm:$0xff] %v1364
      %1369 = vst [vmem:[#allocation2 + $0x50] sm:$0xff] %v1365
      %1370 = vst [vmem:[#allocation2 + $0x58] sm:$0xff] %v1366
      %s1371 = scalar_lea.vmem %s219, 480
      %v1372 = vld [vmem:[%s1371] sm:$0xff]
      %v1373 = vld [vmem:[%s1371 + $0x8] sm:$0xff]
      %v1374 = vld [vmem:[%s1371 + $0x10] sm:$0xff]
      %v1375 = vld [vmem:[%s1371 + $0x18] sm:$0xff]
      %v1376 = vld [vmem:[%s1371 + $0x20] sm:$0xff]
      %v1377 = vld [vmem:[%s1371 + $0x28] sm:$0xff]
      %v1378 = vld [vmem:[%s1371 + $0x30] sm:$0xff]
      %v1379 = vld [vmem:[%s1371 + $0x38] sm:$0xff]
      %v1380 = vld [vmem:[%s1371 + $0x40] sm:$0xff]
      %v1381 = vld [vmem:[%s1371 + $0x48] sm:$0xff]
      %v1382 = vld [vmem:[%s1371 + $0x50] sm:$0xff]
      %v1383 = vld [vmem:[%s1371 + $0x58] sm:$0xff]
      %v1384 = vld [vmem:[%s1371 + $0x60] sm:$0xff]
      %v1385 = vld [vmem:[%s1371 + $0x68] sm:$0xff]
      %v1386 = vld [vmem:[%s1371 + $0x70] sm:$0xff]
      %v1387 = vld [vmem:[%s1371 + $0x78] sm:$0xff]
      %v1388 = vld [vmem:[%s1371 + $0x80] sm:$0xff]
      %v1389 = vld [vmem:[%s1371 + $0x88] sm:$0xff]
      %v1390 = vld [vmem:[%s1371 + $0x90] sm:$0xff]
      %v1391 = vld [vmem:[%s1371 + $0x98] sm:$0xff]
      %v1412 = vunpack.c.l.b16 %v1372
      %v1413 = vunpack.c.h.b16 %v1372
      %v1414 = vunpack.c.l.b16 %v1373
      %v1415 = vunpack.c.h.b16 %v1373
      %v1416 = vunpack.c.l.b16 %v1374
      %v1417 = vunpack.c.h.b16 %v1374
      %v1418 = vunpack.c.l.b16 %v1375
      %v1419 = vunpack.c.h.b16 %v1375
      %v1420 = vunpack.c.l.b16 %v1376
      %v1421 = vunpack.c.h.b16 %v1376
      %v1422 = vunpack.c.l.b16 %v1377
      %v1423 = vunpack.c.h.b16 %v1377
      %v1424 = vunpack.c.l.b16 %v1378
      %v1425 = vunpack.c.h.b16 %v1378
      %v1426 = vunpack.c.l.b16 %v1379
      %v1427 = vunpack.c.h.b16 %v1379
      %v1428 = vunpack.c.l.b16 %v1380
      %v1429 = vunpack.c.h.b16 %v1380
      %v1430 = vunpack.c.l.b16 %v1381
      %v1431 = vunpack.c.h.b16 %v1381
      %v1432 = vunpack.c.l.b16 %v1382
      %v1433 = vunpack.c.h.b16 %v1382
      %v1434 = vunpack.c.l.b16 %v1383
      %v1435 = vunpack.c.h.b16 %v1383
      %v1436 = vunpack.c.l.b16 %v1384
      %v1437 = vunpack.c.h.b16 %v1384
      %v1438 = vunpack.c.l.b16 %v1385
      %v1439 = vunpack.c.h.b16 %v1385
      %v1440 = vunpack.c.l.b16 %v1386
      %v1441 = vunpack.c.h.b16 %v1386
      %v1442 = vunpack.c.l.b16 %v1387
      %v1443 = vunpack.c.h.b16 %v1387
      %v1444 = vunpack.c.l.b16 %v1388
      %v1445 = vunpack.c.h.b16 %v1388
      %v1446 = vunpack.c.l.b16 %v1389
      %v1447 = vunpack.c.h.b16 %v1389
      %v1448 = vunpack.c.l.b16 %v1390
      %v1449 = vunpack.c.h.b16 %v1390
      %v1450 = vunpack.c.l.b16 %v1391
      %v1451 = vunpack.c.h.b16 %v1391
      %v1452 = vpack.c.b16 %v1422, %v1412
      %v1453 = vpack.c.b16 %v1423, %v1413
      %v1454 = vpack.c.b16 %v1424, %v1414
      %v1455 = vpack.c.b16 %v1425, %v1415
      %v1456 = vpack.c.b16 %v1426, %v1416
      %v1457 = vpack.c.b16 %v1427, %v1417
      %v1458 = vpack.c.b16 %v1428, %v1418
      %v1459 = vpack.c.b16 %v1429, %v1419
      %v1460 = vpack.c.b16 %v1430, %v1420
      %v1461 = vpack.c.b16 %v1431, %v1421
      %v1462 = vpack.c.b16 %v1442, %v1432
      %v1463 = vpack.c.b16 %v1443, %v1433
      %v1464 = vpack.c.b16 %v1444, %v1434
      %v1465 = vpack.c.b16 %v1445, %v1435
      %v1466 = vpack.c.b16 %v1446, %v1436
      %v1467 = vpack.c.b16 %v1447, %v1437
      %v1468 = vpack.c.b16 %v1448, %v1438
      %v1469 = vpack.c.b16 %v1449, %v1439
      %v1470 = vpack.c.b16 %v1450, %v1440
      %v1471 = vpack.c.b16 %v1451, %v1441
      %1492 = vmatpush.bf16.msra.mxu0 0
      %1493 = vmatpush.bf16.msra.mxu0 0
      %1494 = vmatpush.bf16.msra.mxu0 0
      %1495 = vmatpush.bf16.msra.mxu0 0
      %1496 = vmatpush.bf16.msra.mxu0 0
      %1497 = vmatpush.bf16.msra.mxu0 0
      %1498 = vmatpush.bf16.msra.mxu0 %v1462
      %1499 = vmatpush.bf16.msra.mxu0 %v1452
      %1500 = vmatmul.bf16.gmra.mxu0 %v362
      %v1501 = vpop.f32.mrf.mxu0
      %v1502 = vadd.f32 0.0, %v1501
      %v1503 = vpop.f32.mrf.mxu0
      %v1504 = vadd.f32 0.0, %v1503
      %1505 = vmatmul.bf16.gmra.mxu0 %v365
      %v1506 = vpop.f32.mrf.mxu0
      %v1507 = vadd.f32 0.0, %v1506
      %v1508 = vpop.f32.mrf.mxu0
      %v1509 = vadd.f32 0.0, %v1508
      %1510 = vdwg.mxu0
      %1511 = vmatpush.bf16.msra.mxu0 0
      %1512 = vmatpush.bf16.msra.mxu0 0
      %1513 = vmatpush.bf16.msra.mxu0 0
      %1514 = vmatpush.bf16.msra.mxu0 0
      %1515 = vmatpush.bf16.msra.mxu0 0
      %1516 = vmatpush.bf16.msra.mxu0 0
      %1517 = vmatpush.bf16.msra.mxu0 %v1463
      %1518 = vmatpush.bf16.msra.mxu0 %v1453
      %1519 = vmatmul.bf16.gmra.mxu0 %v362
      %v1520 = vpop.f32.mrf.mxu0
      %v1521 = vadd.f32 0.0, %v1520
      %v1522 = vpop.f32.mrf.mxu0
      %v1523 = vadd.f32 0.0, %v1522
      %1524 = vmatmul.bf16.gmra.mxu0 %v365
      %v1525 = vpop.f32.mrf.mxu0
      %v1526 = vadd.f32 0.0, %v1525
      %v1527 = vpop.f32.mrf.mxu0
      %v1528 = vadd.f32 0.0, %v1527
      %1529 = vdwg.mxu0
      %1530 = vmatpush.bf16.msra.mxu0 0
      %1531 = vmatpush.bf16.msra.mxu0 0
      %1532 = vmatpush.bf16.msra.mxu0 0
      %1533 = vmatpush.bf16.msra.mxu0 0
      %1534 = vmatpush.bf16.msra.mxu0 0
      %1535 = vmatpush.bf16.msra.mxu0 0
      %1536 = vmatpush.bf16.msra.mxu0 %v1464
      %1537 = vmatpush.bf16.msra.mxu0 %v1454
      %1538 = vmatmul.bf16.gmra.mxu0 %v362
      %v1539 = vpop.f32.mrf.mxu0
      %v1540 = vadd.f32 0.0, %v1539
      %v1541 = vpop.f32.mrf.mxu0
      %v1542 = vadd.f32 0.0, %v1541
      %1543 = vmatmul.bf16.gmra.mxu0 %v365
      %v1544 = vpop.f32.mrf.mxu0
      %v1545 = vadd.f32 0.0, %v1544
      %v1546 = vpop.f32.mrf.mxu0
      %v1547 = vadd.f32 0.0, %v1546
      %1548 = vdwg.mxu0
      %1549 = vmatpush.bf16.msra.mxu0 0
      %1550 = vmatpush.bf16.msra.mxu0 0
      %1551 = vmatpush.bf16.msra.mxu0 0
      %1552 = vmatpush.bf16.msra.mxu0 0
      %1553 = vmatpush.bf16.msra.mxu0 0
      %1554 = vmatpush.bf16.msra.mxu0 0
      %1555 = vmatpush.bf16.msra.mxu0 %v1465
      %1556 = vmatpush.bf16.msra.mxu0 %v1455
      %1557 = vmatmul.bf16.gmra.mxu0 %v362
      %v1558 = vpop.f32.mrf.mxu0
      %v1559 = vadd.f32 0.0, %v1558
      %v1560 = vpop.f32.mrf.mxu0
      %v1561 = vadd.f32 0.0, %v1560
      %1562 = vmatmul.bf16.gmra.mxu0 %v365
      %v1563 = vpop.f32.mrf.mxu0
      %v1564 = vadd.f32 0.0, %v1563
      %v1565 = vpop.f32.mrf.mxu0
      %v1566 = vadd.f32 0.0, %v1565
      %1567 = vdwg.mxu0
      %1568 = vmatpush.bf16.msra.mxu0 0
      %1569 = vmatpush.bf16.msra.mxu0 0
      %1570 = vmatpush.bf16.msra.mxu0 0
      %1571 = vmatpush.bf16.msra.mxu0 0
      %1572 = vmatpush.bf16.msra.mxu0 0
      %1573 = vmatpush.bf16.msra.mxu0 0
      %1574 = vmatpush.bf16.msra.mxu0 %v1466
      %1575 = vmatpush.bf16.msra.mxu0 %v1456
      %1576 = vmatmul.bf16.gmra.mxu0 %v362
      %v1577 = vpop.f32.mrf.mxu0
      %v1578 = vadd.f32 0.0, %v1577
      %v1579 = vpop.f32.mrf.mxu0
      %v1580 = vadd.f32 0.0, %v1579
      %1581 = vmatmul.bf16.gmra.mxu0 %v365
      %v1582 = vpop.f32.mrf.mxu0
      %v1583 = vadd.f32 0.0, %v1582
      %v1584 = vpop.f32.mrf.mxu0
      %v1585 = vadd.f32 0.0, %v1584
      %1586 = vdwg.mxu0
      %1587 = vmatpush.bf16.msra.mxu0 0
      %1588 = vmatpush.bf16.msra.mxu0 0
      %1589 = vmatpush.bf16.msra.mxu0 0
      %1590 = vmatpush.bf16.msra.mxu0 0
      %1591 = vmatpush.bf16.msra.mxu0 0
      %1592 = vmatpush.bf16.msra.mxu0 0
      %1593 = vmatpush.bf16.msra.mxu0 %v1467
      %1594 = vmatpush.bf16.msra.mxu0 %v1457
      %1595 = vmatmul.bf16.gmra.mxu0 %v362
      %v1596 = vpop.f32.mrf.mxu0
      %v1597 = vadd.f32 0.0, %v1596
      %v1598 = vpop.f32.mrf.mxu0
      %v1599 = vadd.f32 0.0, %v1598
      %1600 = vmatmul.bf16.gmra.mxu0 %v365
      %v1601 = vpop.f32.mrf.mxu0
      %v1602 = vadd.f32 0.0, %v1601
      %v1603 = vpop.f32.mrf.mxu0
      %v1604 = vadd.f32 0.0, %v1603
      %1605 = vdwg.mxu0
      %1606 = vmatpush.bf16.msra.mxu0 0
      %1607 = vmatpush.bf16.msra.mxu0 0
      %1608 = vmatpush.bf16.msra.mxu0 0
      %1609 = vmatpush.bf16.msra.mxu0 0
      %1610 = vmatpush.bf16.msra.mxu0 0
      %1611 = vmatpush.bf16.msra.mxu0 0
      %1612 = vmatpush.bf16.msra.mxu0 %v1468
      %1613 = vmatpush.bf16.msra.mxu0 %v1458
      %1614 = vmatmul.bf16.gmra.mxu0 %v362
      %v1615 = vpop.f32.mrf.mxu0
      %v1616 = vadd.f32 0.0, %v1615
      %v1617 = vpop.f32.mrf.mxu0
      %v1618 = vadd.f32 0.0, %v1617
      %1619 = vmatmul.bf16.gmra.mxu0 %v365
      %v1620 = vpop.f32.mrf.mxu0
      %v1621 = vadd.f32 0.0, %v1620
      %v1622 = vpop.f32.mrf.mxu0
      %v1623 = vadd.f32 0.0, %v1622
      %1624 = vdwg.mxu0
      %1625 = vmatpush.bf16.msra.mxu0 0
      %1626 = vmatpush.bf16.msra.mxu0 0
      %1627 = vmatpush.bf16.msra.mxu0 0
      %1628 = vmatpush.bf16.msra.mxu0 0
      %1629 = vmatpush.bf16.msra.mxu0 0
      %1630 = vmatpush.bf16.msra.mxu0 0
      %1631 = vmatpush.bf16.msra.mxu0 %v1469
      %1632 = vmatpush.bf16.msra.mxu0 %v1459
      %1633 = vmatmul.bf16.gmra.mxu0 %v362
      %v1634 = vpop.f32.mrf.mxu0
      %v1635 = vadd.f32 0.0, %v1634
      %v1636 = vpop.f32.mrf.mxu0
      %v1637 = vadd.f32 0.0, %v1636
      %1638 = vmatmul.bf16.gmra.mxu0 %v365
      %v1639 = vpop.f32.mrf.mxu0
      %v1640 = vadd.f32 0.0, %v1639
      %v1641 = vpop.f32.mrf.mxu0
      %v1642 = vadd.f32 0.0, %v1641
      %1643 = vdwg.mxu0
      %1644 = vmatpush.bf16.msra.mxu0 0
      %1645 = vmatpush.bf16.msra.mxu0 0
      %1646 = vmatpush.bf16.msra.mxu0 0
      %1647 = vmatpush.bf16.msra.mxu0 0
      %1648 = vmatpush.bf16.msra.mxu0 0
      %1649 = vmatpush.bf16.msra.mxu0 0
      %1650 = vmatpush.bf16.msra.mxu0 %v1470
      %1651 = vmatpush.bf16.msra.mxu0 %v1460
      %1652 = vmatmul.bf16.gmra.mxu0 %v362
      %v1653 = vpop.f32.mrf.mxu0
      %v1654 = vadd.f32 0.0, %v1653
      %v1655 = vpop.f32.mrf.mxu0
      %v1656 = vadd.f32 0.0, %v1655
      %1657 = vmatmul.bf16.gmra.mxu0 %v365
      %v1658 = vpop.f32.mrf.mxu0
      %v1659 = vadd.f32 0.0, %v1658
      %v1660 = vpop.f32.mrf.mxu0
      %v1661 = vadd.f32 0.0, %v1660
      %1662 = vdwg.mxu0
      %1663 = vmatpush.bf16.msra.mxu0 0
      %1664 = vmatpush.bf16.msra.mxu0 0
      %1665 = vmatpush.bf16.msra.mxu0 0
      %1666 = vmatpush.bf16.msra.mxu0 0
      %1667 = vmatpush.bf16.msra.mxu0 0
      %1668 = vmatpush.bf16.msra.mxu0 0
      %1669 = vmatpush.bf16.msra.mxu0 %v1471
      %1670 = vmatpush.bf16.msra.mxu0 %v1461
      %1671 = vmatmul.bf16.gmra.mxu0 %v362
      %v1672 = vpop.f32.mrf.mxu0
      %v1673 = vadd.f32 0.0, %v1672
      %v1674 = vpop.f32.mrf.mxu0
      %v1675 = vadd.f32 0.0, %v1674
      %1676 = vmatmul.bf16.gmra.mxu0 %v365
      %v1677 = vpop.f32.mrf.mxu0
      %v1678 = vadd.f32 0.0, %v1677
      %v1679 = vpop.f32.mrf.mxu0
      %v1680 = vadd.f32 0.0, %v1679
      %1681 = vdwg.mxu0
      %v1682 = vmax.f32 %v1502, %v1540
      %v1683 = vmax.f32 %v1521, %v1559
      %v1684 = vmax.f32 %v1504, %v1542
      %v1685 = vmax.f32 %v1523, %v1561
      %v1686 = vmax.f32 %v1507, %v1545
      %v1687 = vmax.f32 %v1526, %v1564
      %v1688 = vmax.f32 %v1509, %v1547
      %v1689 = vmax.f32 %v1528, %v1566
      %v1690 = vmax.f32 %v1682, %v1578
      %v1691 = vmax.f32 %v1683, %v1597
      %v1692 = vmax.f32 %v1684, %v1580
      %v1693 = vmax.f32 %v1685, %v1599
      %v1694 = vmax.f32 %v1686, %v1583
      %v1695 = vmax.f32 %v1687, %v1602
      %v1696 = vmax.f32 %v1688, %v1585
      %v1697 = vmax.f32 %v1689, %v1604
      %v1698 = vmax.f32 %v1690, %v1616
      %v1699 = vmax.f32 %v1691, %v1635
      %v1700 = vmax.f32 %v1692, %v1618
      %v1701 = vmax.f32 %v1693, %v1637
      %v1702 = vmax.f32 %v1694, %v1621
      %v1703 = vmax.f32 %v1695, %v1640
      %v1704 = vmax.f32 %v1696, %v1623
      %v1705 = vmax.f32 %v1697, %v1642
      %v1706 = vmax.f32 %v1698, %v1654
      %v1707 = vmax.f32 %v1699, %v1673
      %v1708 = vmax.f32 %v1700, %v1656
      %v1709 = vmax.f32 %v1701, %v1675
      %v1710 = vmax.f32 %v1702, %v1659
      %v1711 = vmax.f32 %v1703, %v1678
      %v1712 = vmax.f32 %v1704, %v1661
      %v1713 = vmax.f32 %v1705, %v1680
      %v1714 = vmax.f32 %v1706, %v1710
      %v1715 = vmax.f32 %v1707, %v1711
      %v1716 = vmax.f32 %v1708, %v1712
      %v1717 = vmax.f32 %v1709, %v1713
      %vm1718 = vcmp.ge.f32.partialorder %v1714, 0.0
      %vm1719 = vcmp.ge.f32.partialorder %v1715, 0.0
      %vm1720 = vcmp.ge.f32.partialorder %v1716, 0.0
      %vm1721 = vcmp.ge.f32.partialorder %v1717, 0.0
      %v1722 = vmul.f32 %v1714, 0.01
      %v1723 = vmul.f32 %v1715, 0.01
      %v1724 = vmul.f32 %v1716, 0.01
      %v1725 = vmul.f32 %v1717, 0.01
      %v1726 = vsel %vm1718, %v1714, %v1722
      %v1727 = vsel %vm1719, %v1715, %v1723
      %v1728 = vsel %vm1720, %v1716, %v1724
      %v1729 = vsel %vm1721, %v1717, %v1725
      %vm1730 = vcmp.ge.f32.partialorder %v1726, 0.0
      %vm1731 = vcmp.ge.f32.partialorder %v1727, 0.0
      %vm1732 = vcmp.ge.f32.partialorder %v1728, 0.0
      %vm1733 = vcmp.ge.f32.partialorder %v1729, 0.0
      %v1734 = vmul.f32 %v1726, 0.01
      %v1735 = vmul.f32 %v1727, 0.01
      %v1736 = vmul.f32 %v1728, 0.01
      %v1737 = vmul.f32 %v1729, 0.01
      %v1738 = vsel %vm1730, %v1726, %v1734
      %v1739 = vsel %vm1731, %v1727, %v1735
      %v1740 = vsel %vm1732, %v1728, %v1736
      %v1741 = vsel %vm1733, %v1729, %v1737
      %1742 = vst [vmem:[#allocation2 + $0x60] sm:$0xff] %v1738
      %1743 = vst [vmem:[#allocation2 + $0x68] sm:$0xff] %v1739
      %1744 = vst [vmem:[#allocation2 + $0x70] sm:$0xff] %v1740
      %1745 = vst [vmem:[#allocation2 + $0x78] sm:$0xff] %v1741
      %s1746 = scalar_lea.vmem %s219, 640
      %v1747 = vld [vmem:[%s1746] sm:$0xff]
      %v1748 = vld [vmem:[%s1746 + $0x8] sm:$0xff]
      %v1749 = vld [vmem:[%s1746 + $0x10] sm:$0xff]
      %v1750 = vld [vmem:[%s1746 + $0x18] sm:$0xff]
      %v1751 = vld [vmem:[%s1746 + $0x20] sm:$0xff]
      %v1752 = vld [vmem:[%s1746 + $0x28] sm:$0xff]
      %v1753 = vld [vmem:[%s1746 + $0x30] sm:$0xff]
      %v1754 = vld [vmem:[%s1746 + $0x38] sm:$0xff]
      %v1755 = vld [vmem:[%s1746 + $0x40] sm:$0xff]
      %v1756 = vld [vmem:[%s1746 + $0x48] sm:$0xff]
      %v1757 = vld [vmem:[%s1746 + $0x50] sm:$0xff]
      %v1758 = vld [vmem:[%s1746 + $0x58] sm:$0xff]
      %v1759 = vld [vmem:[%s1746 + $0x60] sm:$0xff]
      %v1760 = vld [vmem:[%s1746 + $0x68] sm:$0xff]
      %v1761 = vld [vmem:[%s1746 + $0x70] sm:$0xff]
      %v1762 = vld [vmem:[%s1746 + $0x78] sm:$0xff]
      %v1763 = vld [vmem:[%s1746 + $0x80] sm:$0xff]
      %v1764 = vld [vmem:[%s1746 + $0x88] sm:$0xff]
      %v1765 = vld [vmem:[%s1746 + $0x90] sm:$0xff]
      %v1766 = vld [vmem:[%s1746 + $0x98] sm:$0xff]
      %v1787 = vunpack.c.l.b16 %v1747
      %v1788 = vunpack.c.h.b16 %v1747
      %v1789 = vunpack.c.l.b16 %v1748
      %v1790 = vunpack.c.h.b16 %v1748
      %v1791 = vunpack.c.l.b16 %v1749
      %v1792 = vunpack.c.h.b16 %v1749
      %v1793 = vunpack.c.l.b16 %v1750
      %v1794 = vunpack.c.h.b16 %v1750
      %v1795 = vunpack.c.l.b16 %v1751
      %v1796 = vunpack.c.h.b16 %v1751
      %v1797 = vunpack.c.l.b16 %v1752
      %v1798 = vunpack.c.h.b16 %v1752
      %v1799 = vunpack.c.l.b16 %v1753
      %v1800 = vunpack.c.h.b16 %v1753
      %v1801 = vunpack.c.l.b16 %v1754
      %v1802 = vunpack.c.h.b16 %v1754
      %v1803 = vunpack.c.l.b16 %v1755
      %v1804 = vunpack.c.h.b16 %v1755
      %v1805 = vunpack.c.l.b16 %v1756
      %v1806 = vunpack.c.h.b16 %v1756
      %v1807 = vunpack.c.l.b16 %v1757
      %v1808 = vunpack.c.h.b16 %v1757
      %v1809 = vunpack.c.l.b16 %v1758
      %v1810 = vunpack.c.h.b16 %v1758
      %v1811 = vunpack.c.l.b16 %v1759
      %v1812 = vunpack.c.h.b16 %v1759
      %v1813 = vunpack.c.l.b16 %v1760
      %v1814 = vunpack.c.h.b16 %v1760
      %v1815 = vunpack.c.l.b16 %v1761
      %v1816 = vunpack.c.h.b16 %v1761
      %v1817 = vunpack.c.l.b16 %v1762
      %v1818 = vunpack.c.h.b16 %v1762
      %v1819 = vunpack.c.l.b16 %v1763
      %v1820 = vunpack.c.h.b16 %v1763
      %v1821 = vunpack.c.l.b16 %v1764
      %v1822 = vunpack.c.h.b16 %v1764
      %v1823 = vunpack.c.l.b16 %v1765
      %v1824 = vunpack.c.h.b16 %v1765
      %v1825 = vunpack.c.l.b16 %v1766
      %v1826 = vunpack.c.h.b16 %v1766
      %v1827 = vpack.c.b16 %v1797, %v1787
      %v1828 = vpack.c.b16 %v1798, %v1788
      %v1829 = vpack.c.b16 %v1799, %v1789
      %v1830 = vpack.c.b16 %v1800, %v1790
      %v1831 = vpack.c.b16 %v1801, %v1791
      %v1832 = vpack.c.b16 %v1802, %v1792
      %v1833 = vpack.c.b16 %v1803, %v1793
      %v1834 = vpack.c.b16 %v1804, %v1794
      %v1835 = vpack.c.b16 %v1805, %v1795
      %v1836 = vpack.c.b16 %v1806, %v1796
      %v1837 = vpack.c.b16 %v1817, %v1807
      %v1838 = vpack.c.b16 %v1818, %v1808
      %v1839 = vpack.c.b16 %v1819, %v1809
      %v1840 = vpack.c.b16 %v1820, %v1810
      %v1841 = vpack.c.b16 %v1821, %v1811
      %v1842 = vpack.c.b16 %v1822, %v1812
      %v1843 = vpack.c.b16 %v1823, %v1813
      %v1844 = vpack.c.b16 %v1824, %v1814
      %v1845 = vpack.c.b16 %v1825, %v1815
      %v1846 = vpack.c.b16 %v1826, %v1816
      %1867 = vmatpush.bf16.msra.mxu0 0
      %1868 = vmatpush.bf16.msra.mxu0 0
      %1869 = vmatpush.bf16.msra.mxu0 0
      %1870 = vmatpush.bf16.msra.mxu0 0
      %1871 = vmatpush.bf16.msra.mxu0 0
      %1872 = vmatpush.bf16.msra.mxu0 0
      %1873 = vmatpush.bf16.msra.mxu0 %v1837
      %1874 = vmatpush.bf16.msra.mxu0 %v1827
      %1875 = vmatmul.bf16.gmra.mxu0 %v362
      %v1876 = vpop.f32.mrf.mxu0
      %v1877 = vadd.f32 0.0, %v1876
      %v1878 = vpop.f32.mrf.mxu0
      %v1879 = vadd.f32 0.0, %v1878
      %1880 = vmatmul.bf16.gmra.mxu0 %v365
      %v1881 = vpop.f32.mrf.mxu0
      %v1882 = vadd.f32 0.0, %v1881
      %v1883 = vpop.f32.mrf.mxu0
      %v1884 = vadd.f32 0.0, %v1883
      %1885 = vdwg.mxu0
      %1886 = vmatpush.bf16.msra.mxu0 0
      %1887 = vmatpush.bf16.msra.mxu0 0
      %1888 = vmatpush.bf16.msra.mxu0 0
      %1889 = vmatpush.bf16.msra.mxu0 0
      %1890 = vmatpush.bf16.msra.mxu0 0
      %1891 = vmatpush.bf16.msra.mxu0 0
      %1892 = vmatpush.bf16.msra.mxu0 %v1838
      %1893 = vmatpush.bf16.msra.mxu0 %v1828
      %1894 = vmatmul.bf16.gmra.mxu0 %v362
      %v1895 = vpop.f32.mrf.mxu0
      %v1896 = vadd.f32 0.0, %v1895
      %v1897 = vpop.f32.mrf.mxu0
      %v1898 = vadd.f32 0.0, %v1897
      %1899 = vmatmul.bf16.gmra.mxu0 %v365
      %v1900 = vpop.f32.mrf.mxu0
      %v1901 = vadd.f32 0.0, %v1900
      %v1902 = vpop.f32.mrf.mxu0
      %v1903 = vadd.f32 0.0, %v1902
      %1904 = vdwg.mxu0
      %1905 = vmatpush.bf16.msra.mxu0 0
      %1906 = vmatpush.bf16.msra.mxu0 0
      %1907 = vmatpush.bf16.msra.mxu0 0
      %1908 = vmatpush.bf16.msra.mxu0 0
      %1909 = vmatpush.bf16.msra.mxu0 0
      %1910 = vmatpush.bf16.msra.mxu0 0
      %1911 = vmatpush.bf16.msra.mxu0 %v1839
      %1912 = vmatpush.bf16.msra.mxu0 %v1829
      %1913 = vmatmul.bf16.gmra.mxu0 %v362
      %v1914 = vpop.f32.mrf.mxu0
      %v1915 = vadd.f32 0.0, %v1914
      %v1916 = vpop.f32.mrf.mxu0
      %v1917 = vadd.f32 0.0, %v1916
      %1918 = vmatmul.bf16.gmra.mxu0 %v365
      %v1919 = vpop.f32.mrf.mxu0
      %v1920 = vadd.f32 0.0, %v1919
      %v1921 = vpop.f32.mrf.mxu0
      %v1922 = vadd.f32 0.0, %v1921
      %1923 = vdwg.mxu0
      %1924 = vmatpush.bf16.msra.mxu0 0
      %1925 = vmatpush.bf16.msra.mxu0 0
      %1926 = vmatpush.bf16.msra.mxu0 0
      %1927 = vmatpush.bf16.msra.mxu0 0
      %1928 = vmatpush.bf16.msra.mxu0 0
      %1929 = vmatpush.bf16.msra.mxu0 0
      %1930 = vmatpush.bf16.msra.mxu0 %v1840
      %1931 = vmatpush.bf16.msra.mxu0 %v1830
      %1932 = vmatmul.bf16.gmra.mxu0 %v362
      %v1933 = vpop.f32.mrf.mxu0
      %v1934 = vadd.f32 0.0, %v1933
      %v1935 = vpop.f32.mrf.mxu0
      %v1936 = vadd.f32 0.0, %v1935
      %1937 = vmatmul.bf16.gmra.mxu0 %v365
      %v1938 = vpop.f32.mrf.mxu0
      %v1939 = vadd.f32 0.0, %v1938
      %v1940 = vpop.f32.mrf.mxu0
      %v1941 = vadd.f32 0.0, %v1940
      %1942 = vdwg.mxu0
      %1943 = vmatpush.bf16.msra.mxu0 0
      %1944 = vmatpush.bf16.msra.mxu0 0
      %1945 = vmatpush.bf16.msra.mxu0 0
      %1946 = vmatpush.bf16.msra.mxu0 0
      %1947 = vmatpush.bf16.msra.mxu0 0
      %1948 = vmatpush.bf16.msra.mxu0 0
      %1949 = vmatpush.bf16.msra.mxu0 %v1841
      %1950 = vmatpush.bf16.msra.mxu0 %v1831
      %1951 = vmatmul.bf16.gmra.mxu0 %v362
      %v1952 = vpop.f32.mrf.mxu0
      %v1953 = vadd.f32 0.0, %v1952
      %v1954 = vpop.f32.mrf.mxu0
      %v1955 = vadd.f32 0.0, %v1954
      %1956 = vmatmul.bf16.gmra.mxu0 %v365
      %v1957 = vpop.f32.mrf.mxu0
      %v1958 = vadd.f32 0.0, %v1957
      %v1959 = vpop.f32.mrf.mxu0
      %v1960 = vadd.f32 0.0, %v1959
      %1961 = vdwg.mxu0
      %1962 = vmatpush.bf16.msra.mxu0 0
      %1963 = vmatpush.bf16.msra.mxu0 0
      %1964 = vmatpush.bf16.msra.mxu0 0
      %1965 = vmatpush.bf16.msra.mxu0 0
      %1966 = vmatpush.bf16.msra.mxu0 0
      %1967 = vmatpush.bf16.msra.mxu0 0
      %1968 = vmatpush.bf16.msra.mxu0 %v1842
      %1969 = vmatpush.bf16.msra.mxu0 %v1832
      %1970 = vmatmul.bf16.gmra.mxu0 %v362
      %v1971 = vpop.f32.mrf.mxu0
      %v1972 = vadd.f32 0.0, %v1971
      %v1973 = vpop.f32.mrf.mxu0
      %v1974 = vadd.f32 0.0, %v1973
      %1975 = vmatmul.bf16.gmra.mxu0 %v365
      %v1976 = vpop.f32.mrf.mxu0
      %v1977 = vadd.f32 0.0, %v1976
      %v1978 = vpop.f32.mrf.mxu0
      %v1979 = vadd.f32 0.0, %v1978
      %1980 = vdwg.mxu0
      %1981 = vmatpush.bf16.msra.mxu0 0
      %1982 = vmatpush.bf16.msra.mxu0 0
      %1983 = vmatpush.bf16.msra.mxu0 0
      %1984 = vmatpush.bf16.msra.mxu0 0
      %1985 = vmatpush.bf16.msra.mxu0 0
      %1986 = vmatpush.bf16.msra.mxu0 0
      %1987 = vmatpush.bf16.msra.mxu0 %v1843
      %1988 = vmatpush.bf16.msra.mxu0 %v1833
      %1989 = vmatmul.bf16.gmra.mxu0 %v362
      %v1990 = vpop.f32.mrf.mxu0
      %v1991 = vadd.f32 0.0, %v1990
      %v1992 = vpop.f32.mrf.mxu0
      %v1993 = vadd.f32 0.0, %v1992
      %1994 = vmatmul.bf16.gmra.mxu0 %v365
      %v1995 = vpop.f32.mrf.mxu0
      %v1996 = vadd.f32 0.0, %v1995
      %v1997 = vpop.f32.mrf.mxu0
      %v1998 = vadd.f32 0.0, %v1997
      %1999 = vdwg.mxu0
      %2000 = vmatpush.bf16.msra.mxu0 0
      %2001 = vmatpush.bf16.msra.mxu0 0
      %2002 = vmatpush.bf16.msra.mxu0 0
      %2003 = vmatpush.bf16.msra.mxu0 0
      %2004 = vmatpush.bf16.msra.mxu0 0
      %2005 = vmatpush.bf16.msra.mxu0 0
      %2006 = vmatpush.bf16.msra.mxu0 %v1844
      %2007 = vmatpush.bf16.msra.mxu0 %v1834
      %2008 = vmatmul.bf16.gmra.mxu0 %v362
      %v2009 = vpop.f32.mrf.mxu0
      %v2010 = vadd.f32 0.0, %v2009
      %v2011 = vpop.f32.mrf.mxu0
      %v2012 = vadd.f32 0.0, %v2011
      %2013 = vmatmul.bf16.gmra.mxu0 %v365
      %v2014 = vpop.f32.mrf.mxu0
      %v2015 = vadd.f32 0.0, %v2014
      %v2016 = vpop.f32.mrf.mxu0
      %v2017 = vadd.f32 0.0, %v2016
      %2018 = vdwg.mxu0
      %2019 = vmatpush.bf16.msra.mxu0 0
      %2020 = vmatpush.bf16.msra.mxu0 0
      %2021 = vmatpush.bf16.msra.mxu0 0
      %2022 = vmatpush.bf16.msra.mxu0 0
      %2023 = vmatpush.bf16.msra.mxu0 0
      %2024 = vmatpush.bf16.msra.mxu0 0
      %2025 = vmatpush.bf16.msra.mxu0 %v1845
      %2026 = vmatpush.bf16.msra.mxu0 %v1835
      %2027 = vmatmul.bf16.gmra.mxu0 %v362
      %v2028 = vpop.f32.mrf.mxu0
      %v2029 = vadd.f32 0.0, %v2028
      %v2030 = vpop.f32.mrf.mxu0
      %v2031 = vadd.f32 0.0, %v2030
      %2032 = vmatmul.bf16.gmra.mxu0 %v365
      %v2033 = vpop.f32.mrf.mxu0
      %v2034 = vadd.f32 0.0, %v2033
      %v2035 = vpop.f32.mrf.mxu0
      %v2036 = vadd.f32 0.0, %v2035
      %2037 = vdwg.mxu0
      %2038 = vmatpush.bf16.msra.mxu0 0
      %2039 = vmatpush.bf16.msra.mxu0 0
      %2040 = vmatpush.bf16.msra.mxu0 0
      %2041 = vmatpush.bf16.msra.mxu0 0
      %2042 = vmatpush.bf16.msra.mxu0 0
      %2043 = vmatpush.bf16.msra.mxu0 0
      %2044 = vmatpush.bf16.msra.mxu0 %v1846
      %2045 = vmatpush.bf16.msra.mxu0 %v1836
      %2046 = vmatmul.bf16.gmra.mxu0 %v362
      %v2047 = vpop.f32.mrf.mxu0
      %v2048 = vadd.f32 0.0, %v2047
      %v2049 = vpop.f32.mrf.mxu0
      %v2050 = vadd.f32 0.0, %v2049
      %2051 = vmatmul.bf16.gmra.mxu0 %v365
      %v2052 = vpop.f32.mrf.mxu0
      %v2053 = vadd.f32 0.0, %v2052
      %v2054 = vpop.f32.mrf.mxu0
      %v2055 = vadd.f32 0.0, %v2054
      %2056 = vdwg.mxu0
      %v2057 = vmax.f32 %v1877, %v1915
      %v2058 = vmax.f32 %v1896, %v1934
      %v2059 = vmax.f32 %v1879, %v1917
      %v2060 = vmax.f32 %v1898, %v1936
      %v2061 = vmax.f32 %v1882, %v1920
      %v2062 = vmax.f32 %v1901, %v1939
      %v2063 = vmax.f32 %v1884, %v1922
      %v2064 = vmax.f32 %v1903, %v1941
      %v2065 = vmax.f32 %v2057, %v1953
      %v2066 = vmax.f32 %v2058, %v1972
      %v2067 = vmax.f32 %v2059, %v1955
      %v2068 = vmax.f32 %v2060, %v1974
      %v2069 = vmax.f32 %v2061, %v1958
      %v2070 = vmax.f32 %v2062, %v1977
      %v2071 = vmax.f32 %v2063, %v1960
      %v2072 = vmax.f32 %v2064, %v1979
      %v2073 = vmax.f32 %v2065, %v1991
      %v2074 = vmax.f32 %v2066, %v2010
      %v2075 = vmax.f32 %v2067, %v1993
      %v2076 = vmax.f32 %v2068, %v2012
      %v2077 = vmax.f32 %v2069, %v1996
      %v2078 = vmax.f32 %v2070, %v2015
      %v2079 = vmax.f32 %v2071, %v1998
      %v2080 = vmax.f32 %v2072, %v2017
      %v2081 = vmax.f32 %v2073, %v2029
      %v2082 = vmax.f32 %v2074, %v2048
      %v2083 = vmax.f32 %v2075, %v2031
      %v2084 = vmax.f32 %v2076, %v2050
      %v2085 = vmax.f32 %v2077, %v2034
      %v2086 = vmax.f32 %v2078, %v2053
      %v2087 = vmax.f32 %v2079, %v2036
      %v2088 = vmax.f32 %v2080, %v2055
      %v2089 = vmax.f32 %v2081, %v2085
      %v2090 = vmax.f32 %v2082, %v2086
      %v2091 = vmax.f32 %v2083, %v2087
      %v2092 = vmax.f32 %v2084, %v2088
      %vm2093 = vcmp.ge.f32.partialorder %v2089, 0.0
      %vm2094 = vcmp.ge.f32.partialorder %v2090, 0.0
      %vm2095 = vcmp.ge.f32.partialorder %v2091, 0.0
      %vm2096 = vcmp.ge.f32.partialorder %v2092, 0.0
      %v2097 = vmul.f32 %v2089, 0.01
      %v2098 = vmul.f32 %v2090, 0.01
      %v2099 = vmul.f32 %v2091, 0.01
      %v2100 = vmul.f32 %v2092, 0.01
      %v2101 = vsel %vm2093, %v2089, %v2097
      %v2102 = vsel %vm2094, %v2090, %v2098
      %v2103 = vsel %vm2095, %v2091, %v2099
      %v2104 = vsel %vm2096, %v2092, %v2100
      %vm2105 = vcmp.ge.f32.partialorder %v2101, 0.0
      %vm2106 = vcmp.ge.f32.partialorder %v2102, 0.0
      %vm2107 = vcmp.ge.f32.partialorder %v2103, 0.0
      %vm2108 = vcmp.ge.f32.partialorder %v2104, 0.0
      %v2109 = vmul.f32 %v2101, 0.01
      %v2110 = vmul.f32 %v2102, 0.01
      %v2111 = vmul.f32 %v2103, 0.01
      %v2112 = vmul.f32 %v2104, 0.01
      %v2113 = vsel %vm2105, %v2101, %v2109
      %v2114 = vsel %vm2106, %v2102, %v2110
      %v2115 = vsel %vm2107, %v2103, %v2111
      %v2116 = vsel %vm2108, %v2104, %v2112
      %2117 = vst [vmem:[#allocation2 + $0x80] sm:$0xff] %v2113
      %2118 = vst [vmem:[#allocation2 + $0x88] sm:$0xff] %v2114
      %2119 = vst [vmem:[#allocation2 + $0x90] sm:$0xff] %v2115
      %2120 = vst [vmem:[#allocation2 + $0x98] sm:$0xff] %v2116
      %s2121 = scalar_lea.vmem %s219, 800
      %v2122 = vld [vmem:[%s2121] sm:$0xff]
      %v2123 = vld [vmem:[%s2121 + $0x8] sm:$0xff]
      %v2124 = vld [vmem:[%s2121 + $0x10] sm:$0xff]
      %v2125 = vld [vmem:[%s2121 + $0x18] sm:$0xff]
      %v2126 = vld [vmem:[%s2121 + $0x20] sm:$0xff]
      %v2127 = vld [vmem:[%s2121 + $0x28] sm:$0xff]
      %v2128 = vld [vmem:[%s2121 + $0x30] sm:$0xff]
      %v2129 = vld [vmem:[%s2121 + $0x38] sm:$0xff]
      %v2130 = vld [vmem:[%s2121 + $0x40] sm:$0xff]
      %v2131 = vld [vmem:[%s2121 + $0x48] sm:$0xff]
      %v2132 = vld [vmem:[%s2121 + $0x50] sm:$0xff]
      %v2133 = vld [vmem:[%s2121 + $0x58] sm:$0xff]
      %v2134 = vld [vmem:[%s2121 + $0x60] sm:$0xff]
      %v2135 = vld [vmem:[%s2121 + $0x68] sm:$0xff]
      %v2136 = vld [vmem:[%s2121 + $0x70] sm:$0xff]
      %v2137 = vld [vmem:[%s2121 + $0x78] sm:$0xff]
      %v2138 = vld [vmem:[%s2121 + $0x80] sm:$0xff]
      %v2139 = vld [vmem:[%s2121 + $0x88] sm:$0xff]
      %v2140 = vld [vmem:[%s2121 + $0x90] sm:$0xff]
      %v2141 = vld [vmem:[%s2121 + $0x98] sm:$0xff]
      %v2162 = vunpack.c.l.b16 %v2122
      %v2163 = vunpack.c.h.b16 %v2122
      %v2164 = vunpack.c.l.b16 %v2123
      %v2165 = vunpack.c.h.b16 %v2123
      %v2166 = vunpack.c.l.b16 %v2124
      %v2167 = vunpack.c.h.b16 %v2124
      %v2168 = vunpack.c.l.b16 %v2125
      %v2169 = vunpack.c.h.b16 %v2125
      %v2170 = vunpack.c.l.b16 %v2126
      %v2171 = vunpack.c.h.b16 %v2126
      %v2172 = vunpack.c.l.b16 %v2127
      %v2173 = vunpack.c.h.b16 %v2127
      %v2174 = vunpack.c.l.b16 %v2128
      %v2175 = vunpack.c.h.b16 %v2128
      %v2176 = vunpack.c.l.b16 %v2129
      %v2177 = vunpack.c.h.b16 %v2129
      %v2178 = vunpack.c.l.b16 %v2130
      %v2179 = vunpack.c.h.b16 %v2130
      %v2180 = vunpack.c.l.b16 %v2131
      %v2181 = vunpack.c.h.b16 %v2131
      %v2182 = vunpack.c.l.b16 %v2132
      %v2183 = vunpack.c.h.b16 %v2132
      %v2184 = vunpack.c.l.b16 %v2133
      %v2185 = vunpack.c.h.b16 %v2133
      %v2186 = vunpack.c.l.b16 %v2134
      %v2187 = vunpack.c.h.b16 %v2134
      %v2188 = vunpack.c.l.b16 %v2135
      %v2189 = vunpack.c.h.b16 %v2135
      %v2190 = vunpack.c.l.b16 %v2136
      %v2191 = vunpack.c.h.b16 %v2136
      %v2192 = vunpack.c.l.b16 %v2137
      %v2193 = vunpack.c.h.b16 %v2137
      %v2194 = vunpack.c.l.b16 %v2138
      %v2195 = vunpack.c.h.b16 %v2138
      %v2196 = vunpack.c.l.b16 %v2139
      %v2197 = vunpack.c.h.b16 %v2139
      %v2198 = vunpack.c.l.b16 %v2140
      %v2199 = vunpack.c.h.b16 %v2140
      %v2200 = vunpack.c.l.b16 %v2141
      %v2201 = vunpack.c.h.b16 %v2141
      %v2202 = vpack.c.b16 %v2172, %v2162
      %v2203 = vpack.c.b16 %v2173, %v2163
      %v2204 = vpack.c.b16 %v2174, %v2164
      %v2205 = vpack.c.b16 %v2175, %v2165
      %v2206 = vpack.c.b16 %v2176, %v2166
      %v2207 = vpack.c.b16 %v2177, %v2167
      %v2208 = vpack.c.b16 %v2178, %v2168
      %v2209 = vpack.c.b16 %v2179, %v2169
      %v2210 = vpack.c.b16 %v2180, %v2170
      %v2211 = vpack.c.b16 %v2181, %v2171
      %v2212 = vpack.c.b16 %v2192, %v2182
      %v2213 = vpack.c.b16 %v2193, %v2183
      %v2214 = vpack.c.b16 %v2194, %v2184
      %v2215 = vpack.c.b16 %v2195, %v2185
      %v2216 = vpack.c.b16 %v2196, %v2186
      %v2217 = vpack.c.b16 %v2197, %v2187
      %v2218 = vpack.c.b16 %v2198, %v2188
      %v2219 = vpack.c.b16 %v2199, %v2189
      %v2220 = vpack.c.b16 %v2200, %v2190
      %v2221 = vpack.c.b16 %v2201, %v2191
      %2242 = vmatpush.bf16.msra.mxu0 0
      %2243 = vmatpush.bf16.msra.mxu0 0
      %2244 = vmatpush.bf16.msra.mxu0 0
      %2245 = vmatpush.bf16.msra.mxu0 0
      %2246 = vmatpush.bf16.msra.mxu0 0
      %2247 = vmatpush.bf16.msra.mxu0 0
      %2248 = vmatpush.bf16.msra.mxu0 %v2212
      %2249 = vmatpush.bf16.msra.mxu0 %v2202
      %2250 = vmatmul.bf16.gmra.mxu0 %v362
      %v2251 = vpop.f32.mrf.mxu0
      %v2252 = vadd.f32 0.0, %v2251
      %v2253 = vpop.f32.mrf.mxu0
      %v2254 = vadd.f32 0.0, %v2253
      %2255 = vmatmul.bf16.gmra.mxu0 %v365
      %v2256 = vpop.f32.mrf.mxu0
      %v2257 = vadd.f32 0.0, %v2256
      %v2258 = vpop.f32.mrf.mxu0
      %v2259 = vadd.f32 0.0, %v2258
      %2260 = vdwg.mxu0
      %2261 = vmatpush.bf16.msra.mxu0 0
      %2262 = vmatpush.bf16.msra.mxu0 0
      %2263 = vmatpush.bf16.msra.mxu0 0
      %2264 = vmatpush.bf16.msra.mxu0 0
      %2265 = vmatpush.bf16.msra.mxu0 0
      %2266 = vmatpush.bf16.msra.mxu0 0
      %2267 = vmatpush.bf16.msra.mxu0 %v2213
      %2268 = vmatpush.bf16.msra.mxu0 %v2203
      %2269 = vmatmul.bf16.gmra.mxu0 %v362
      %v2270 = vpop.f32.mrf.mxu0
      %v2271 = vadd.f32 0.0, %v2270
      %v2272 = vpop.f32.mrf.mxu0
      %v2273 = vadd.f32 0.0, %v2272
      %2274 = vmatmul.bf16.gmra.mxu0 %v365
      %v2275 = vpop.f32.mrf.mxu0
      %v2276 = vadd.f32 0.0, %v2275
      %v2277 = vpop.f32.mrf.mxu0
      %v2278 = vadd.f32 0.0, %v2277
      %2279 = vdwg.mxu0
      %2280 = vmatpush.bf16.msra.mxu0 0
      %2281 = vmatpush.bf16.msra.mxu0 0
      %2282 = vmatpush.bf16.msra.mxu0 0
      %2283 = vmatpush.bf16.msra.mxu0 0
      %2284 = vmatpush.bf16.msra.mxu0 0
      %2285 = vmatpush.bf16.msra.mxu0 0
      %2286 = vmatpush.bf16.msra.mxu0 %v2214
      %2287 = vmatpush.bf16.msra.mxu0 %v2204
      %2288 = vmatmul.bf16.gmra.mxu0 %v362
      %v2289 = vpop.f32.mrf.mxu0
      %v2290 = vadd.f32 0.0, %v2289
      %v2291 = vpop.f32.mrf.mxu0
      %v2292 = vadd.f32 0.0, %v2291
      %2293 = vmatmul.bf16.gmra.mxu0 %v365
      %v2294 = vpop.f32.mrf.mxu0
      %v2295 = vadd.f32 0.0, %v2294
      %v2296 = vpop.f32.mrf.mxu0
      %v2297 = vadd.f32 0.0, %v2296
      %2298 = vdwg.mxu0
      %2299 = vmatpush.bf16.msra.mxu0 0
      %2300 = vmatpush.bf16.msra.mxu0 0
      %2301 = vmatpush.bf16.msra.mxu0 0
      %2302 = vmatpush.bf16.msra.mxu0 0
      %2303 = vmatpush.bf16.msra.mxu0 0
      %2304 = vmatpush.bf16.msra.mxu0 0
      %2305 = vmatpush.bf16.msra.mxu0 %v2215
      %2306 = vmatpush.bf16.msra.mxu0 %v2205
      %2307 = vmatmul.bf16.gmra.mxu0 %v362
      %v2308 = vpop.f32.mrf.mxu0
      %v2309 = vadd.f32 0.0, %v2308
      %v2310 = vpop.f32.mrf.mxu0
      %v2311 = vadd.f32 0.0, %v2310
      %2312 = vmatmul.bf16.gmra.mxu0 %v365
      %v2313 = vpop.f32.mrf.mxu0
      %v2314 = vadd.f32 0.0, %v2313
      %v2315 = vpop.f32.mrf.mxu0
      %v2316 = vadd.f32 0.0, %v2315
      %2317 = vdwg.mxu0
      %2318 = vmatpush.bf16.msra.mxu0 0
      %2319 = vmatpush.bf16.msra.mxu0 0
      %2320 = vmatpush.bf16.msra.mxu0 0
      %2321 = vmatpush.bf16.msra.mxu0 0
      %2322 = vmatpush.bf16.msra.mxu0 0
      %2323 = vmatpush.bf16.msra.mxu0 0
      %2324 = vmatpush.bf16.msra.mxu0 %v2216
      %2325 = vmatpush.bf16.msra.mxu0 %v2206
      %2326 = vmatmul.bf16.gmra.mxu0 %v362
      %v2327 = vpop.f32.mrf.mxu0
      %v2328 = vadd.f32 0.0, %v2327
      %v2329 = vpop.f32.mrf.mxu0
      %v2330 = vadd.f32 0.0, %v2329
      %2331 = vmatmul.bf16.gmra.mxu0 %v365
      %v2332 = vpop.f32.mrf.mxu0
      %v2333 = vadd.f32 0.0, %v2332
      %v2334 = vpop.f32.mrf.mxu0
      %v2335 = vadd.f32 0.0, %v2334
      %2336 = vdwg.mxu0
      %2337 = vmatpush.bf16.msra.mxu0 0
      %2338 = vmatpush.bf16.msra.mxu0 0
      %2339 = vmatpush.bf16.msra.mxu0 0
      %2340 = vmatpush.bf16.msra.mxu0 0
      %2341 = vmatpush.bf16.msra.mxu0 0
      %2342 = vmatpush.bf16.msra.mxu0 0
      %2343 = vmatpush.bf16.msra.mxu0 %v2217
      %2344 = vmatpush.bf16.msra.mxu0 %v2207
      %2345 = vmatmul.bf16.gmra.mxu0 %v362
      %v2346 = vpop.f32.mrf.mxu0
      %v2347 = vadd.f32 0.0, %v2346
      %v2348 = vpop.f32.mrf.mxu0
      %v2349 = vadd.f32 0.0, %v2348
      %2350 = vmatmul.bf16.gmra.mxu0 %v365
      %v2351 = vpop.f32.mrf.mxu0
      %v2352 = vadd.f32 0.0, %v2351
      %v2353 = vpop.f32.mrf.mxu0
      %v2354 = vadd.f32 0.0, %v2353
      %2355 = vdwg.mxu0
      %2356 = vmatpush.bf16.msra.mxu0 0
      %2357 = vmatpush.bf16.msra.mxu0 0
      %2358 = vmatpush.bf16.msra.mxu0 0
      %2359 = vmatpush.bf16.msra.mxu0 0
      %2360 = vmatpush.bf16.msra.mxu0 0
      %2361 = vmatpush.bf16.msra.mxu0 0
      %2362 = vmatpush.bf16.msra.mxu0 %v2218
      %2363 = vmatpush.bf16.msra.mxu0 %v2208
      %2364 = vmatmul.bf16.gmra.mxu0 %v362
      %v2365 = vpop.f32.mrf.mxu0
      %v2366 = vadd.f32 0.0, %v2365
      %v2367 = vpop.f32.mrf.mxu0
      %v2368 = vadd.f32 0.0, %v2367
      %2369 = vmatmul.bf16.gmra.mxu0 %v365
      %v2370 = vpop.f32.mrf.mxu0
      %v2371 = vadd.f32 0.0, %v2370
      %v2372 = vpop.f32.mrf.mxu0
      %v2373 = vadd.f32 0.0, %v2372
      %2374 = vdwg.mxu0
      %2375 = vmatpush.bf16.msra.mxu0 0
      %2376 = vmatpush.bf16.msra.mxu0 0
      %2377 = vmatpush.bf16.msra.mxu0 0
      %2378 = vmatpush.bf16.msra.mxu0 0
      %2379 = vmatpush.bf16.msra.mxu0 0
      %2380 = vmatpush.bf16.msra.mxu0 0
      %2381 = vmatpush.bf16.msra.mxu0 %v2219
      %2382 = vmatpush.bf16.msra.mxu0 %v2209
      %2383 = vmatmul.bf16.gmra.mxu0 %v362
      %v2384 = vpop.f32.mrf.mxu0
      %v2385 = vadd.f32 0.0, %v2384
      %v2386 = vpop.f32.mrf.mxu0
      %v2387 = vadd.f32 0.0, %v2386
      %2388 = vmatmul.bf16.gmra.mxu0 %v365
      %v2389 = vpop.f32.mrf.mxu0
      %v2390 = vadd.f32 0.0, %v2389
      %v2391 = vpop.f32.mrf.mxu0
      %v2392 = vadd.f32 0.0, %v2391
      %2393 = vdwg.mxu0
      %2394 = vmatpush.bf16.msra.mxu0 0
      %2395 = vmatpush.bf16.msra.mxu0 0
      %2396 = vmatpush.bf16.msra.mxu0 0
      %2397 = vmatpush.bf16.msra.mxu0 0
      %2398 = vmatpush.bf16.msra.mxu0 0
      %2399 = vmatpush.bf16.msra.mxu0 0
      %2400 = vmatpush.bf16.msra.mxu0 %v2220
      %2401 = vmatpush.bf16.msra.mxu0 %v2210
      %2402 = vmatmul.bf16.gmra.mxu0 %v362
      %v2403 = vpop.f32.mrf.mxu0
      %v2404 = vadd.f32 0.0, %v2403
      %v2405 = vpop.f32.mrf.mxu0
      %v2406 = vadd.f32 0.0, %v2405
      %2407 = vmatmul.bf16.gmra.mxu0 %v365
      %v2408 = vpop.f32.mrf.mxu0
      %v2409 = vadd.f32 0.0, %v2408
      %v2410 = vpop.f32.mrf.mxu0
      %v2411 = vadd.f32 0.0, %v2410
      %2412 = vdwg.mxu0
      %2413 = vmatpush.bf16.msra.mxu0 0
      %2414 = vmatpush.bf16.msra.mxu0 0
      %2415 = vmatpush.bf16.msra.mxu0 0
      %2416 = vmatpush.bf16.msra.mxu0 0
      %2417 = vmatpush.bf16.msra.mxu0 0
      %2418 = vmatpush.bf16.msra.mxu0 0
      %2419 = vmatpush.bf16.msra.mxu0 %v2221
      %2420 = vmatpush.bf16.msra.mxu0 %v2211
      %2421 = vmatmul.bf16.gmra.mxu0 %v362
      %v2422 = vpop.f32.mrf.mxu0
      %v2423 = vadd.f32 0.0, %v2422
      %v2424 = vpop.f32.mrf.mxu0
      %v2425 = vadd.f32 0.0, %v2424
      %2426 = vmatmul.bf16.gmra.mxu0 %v365
      %v2427 = vpop.f32.mrf.mxu0
      %v2428 = vadd.f32 0.0, %v2427
      %v2429 = vpop.f32.mrf.mxu0
      %v2430 = vadd.f32 0.0, %v2429
      %2431 = vdwg.mxu0
      %v2432 = vmax.f32 %v2252, %v2290
      %v2433 = vmax.f32 %v2271, %v2309
      %v2434 = vmax.f32 %v2254, %v2292
      %v2435 = vmax.f32 %v2273, %v2311
      %v2436 = vmax.f32 %v2257, %v2295
      %v2437 = vmax.f32 %v2276, %v2314
      %v2438 = vmax.f32 %v2259, %v2297
      %v2439 = vmax.f32 %v2278, %v2316
      %v2440 = vmax.f32 %v2432, %v2328
      %v2441 = vmax.f32 %v2433, %v2347
      %v2442 = vmax.f32 %v2434, %v2330
      %v2443 = vmax.f32 %v2435, %v2349
      %v2444 = vmax.f32 %v2436, %v2333
      %v2445 = vmax.f32 %v2437, %v2352
      %v2446 = vmax.f32 %v2438, %v2335
      %v2447 = vmax.f32 %v2439, %v2354
      %v2448 = vmax.f32 %v2440, %v2366
      %v2449 = vmax.f32 %v2441, %v2385
      %v2450 = vmax.f32 %v2442, %v2368
      %v2451 = vmax.f32 %v2443, %v2387
      %v2452 = vmax.f32 %v2444, %v2371
      %v2453 = vmax.f32 %v2445, %v2390
      %v2454 = vmax.f32 %v2446, %v2373
      %v2455 = vmax.f32 %v2447, %v2392
      %v2456 = vmax.f32 %v2448, %v2404
      %v2457 = vmax.f32 %v2449, %v2423
      %v2458 = vmax.f32 %v2450, %v2406
      %v2459 = vmax.f32 %v2451, %v2425
      %v2460 = vmax.f32 %v2452, %v2409
      %v2461 = vmax.f32 %v2453, %v2428
      %v2462 = vmax.f32 %v2454, %v2411
      %v2463 = vmax.f32 %v2455, %v2430
      %v2464 = vmax.f32 %v2456, %v2460
      %v2465 = vmax.f32 %v2457, %v2461
      %v2466 = vmax.f32 %v2458, %v2462
      %v2467 = vmax.f32 %v2459, %v2463
      %vm2468 = vcmp.ge.f32.partialorder %v2464, 0.0
      %vm2469 = vcmp.ge.f32.partialorder %v2465, 0.0
      %vm2470 = vcmp.ge.f32.partialorder %v2466, 0.0
      %vm2471 = vcmp.ge.f32.partialorder %v2467, 0.0
      %v2472 = vmul.f32 %v2464, 0.01
      %v2473 = vmul.f32 %v2465, 0.01
      %v2474 = vmul.f32 %v2466, 0.01
      %v2475 = vmul.f32 %v2467, 0.01
      %v2476 = vsel %vm2468, %v2464, %v2472
      %v2477 = vsel %vm2469, %v2465, %v2473
      %v2478 = vsel %vm2470, %v2466, %v2474
      %v2479 = vsel %vm2471, %v2467, %v2475
      %vm2480 = vcmp.ge.f32.partialorder %v2476, 0.0
      %vm2481 = vcmp.ge.f32.partialorder %v2477, 0.0
      %vm2482 = vcmp.ge.f32.partialorder %v2478, 0.0
      %vm2483 = vcmp.ge.f32.partialorder %v2479, 0.0
      %v2484 = vmul.f32 %v2476, 0.01
      %v2485 = vmul.f32 %v2477, 0.01
      %v2486 = vmul.f32 %v2478, 0.01
      %v2487 = vmul.f32 %v2479, 0.01
      %v2488 = vsel %vm2480, %v2476, %v2484
      %v2489 = vsel %vm2481, %v2477, %v2485
      %v2490 = vsel %vm2482, %v2478, %v2486
      %v2491 = vsel %vm2483, %v2479, %v2487
      %2492 = vst [vmem:[#allocation2 + $0xa0] sm:$0xff] %v2488
      %2493 = vst [vmem:[#allocation2 + $0xa8] sm:$0xff] %v2489
      %2494 = vst [vmem:[#allocation2 + $0xb0] sm:$0xff] %v2490
      %2495 = vst [vmem:[#allocation2 + $0xb8] sm:$0xff] %v2491
      %s2496 = scalar_lea.vmem %s219, 960
      %v2497 = vld [vmem:[%s2496] sm:$0xff]
      %v2498 = vld [vmem:[%s2496 + $0x8] sm:$0xff]
      %v2499 = vld [vmem:[%s2496 + $0x10] sm:$0xff]
      %v2500 = vld [vmem:[%s2496 + $0x18] sm:$0xff]
      %v2501 = vld [vmem:[%s2496 + $0x20] sm:$0xff]
      %v2502 = vld [vmem:[%s2496 + $0x28] sm:$0xff]
      %v2503 = vld [vmem:[%s2496 + $0x30] sm:$0xff]
      %v2504 = vld [vmem:[%s2496 + $0x38] sm:$0xff]
      %v2505 = vld [vmem:[%s2496 + $0x40] sm:$0xff]
      %v2506 = vld [vmem:[%s2496 + $0x48] sm:$0xff]
      %v2507 = vld [vmem:[%s2496 + $0x50] sm:$0xff]
      %v2508 = vld [vmem:[%s2496 + $0x58] sm:$0xff]
      %v2509 = vld [vmem:[%s2496 + $0x60] sm:$0xff]
      %v2510 = vld [vmem:[%s2496 + $0x68] sm:$0xff]
      %v2511 = vld [vmem:[%s2496 + $0x70] sm:$0xff]
      %v2512 = vld [vmem:[%s2496 + $0x78] sm:$0xff]
      %v2513 = vld [vmem:[%s2496 + $0x80] sm:$0xff]
      %v2514 = vld [vmem:[%s2496 + $0x88] sm:$0xff]
      %v2515 = vld [vmem:[%s2496 + $0x90] sm:$0xff]
      %v2516 = vld [vmem:[%s2496 + $0x98] sm:$0xff]
      %v2537 = vunpack.c.l.b16 %v2497
      %v2538 = vunpack.c.h.b16 %v2497
      %v2539 = vunpack.c.l.b16 %v2498
      %v2540 = vunpack.c.h.b16 %v2498
      %v2541 = vunpack.c.l.b16 %v2499
      %v2542 = vunpack.c.h.b16 %v2499
      %v2543 = vunpack.c.l.b16 %v2500
      %v2544 = vunpack.c.h.b16 %v2500
      %v2545 = vunpack.c.l.b16 %v2501
      %v2546 = vunpack.c.h.b16 %v2501
      %v2547 = vunpack.c.l.b16 %v2502
      %v2548 = vunpack.c.h.b16 %v2502
      %v2549 = vunpack.c.l.b16 %v2503
      %v2550 = vunpack.c.h.b16 %v2503
      %v2551 = vunpack.c.l.b16 %v2504
      %v2552 = vunpack.c.h.b16 %v2504
      %v2553 = vunpack.c.l.b16 %v2505
      %v2554 = vunpack.c.h.b16 %v2505
      %v2555 = vunpack.c.l.b16 %v2506
      %v2556 = vunpack.c.h.b16 %v2506
      %v2557 = vunpack.c.l.b16 %v2507
      %v2558 = vunpack.c.h.b16 %v2507
      %v2559 = vunpack.c.l.b16 %v2508
      %v2560 = vunpack.c.h.b16 %v2508
      %v2561 = vunpack.c.l.b16 %v2509
      %v2562 = vunpack.c.h.b16 %v2509
      %v2563 = vunpack.c.l.b16 %v2510
      %v2564 = vunpack.c.h.b16 %v2510
      %v2565 = vunpack.c.l.b16 %v2511
      %v2566 = vunpack.c.h.b16 %v2511
      %v2567 = vunpack.c.l.b16 %v2512
      %v2568 = vunpack.c.h.b16 %v2512
      %v2569 = vunpack.c.l.b16 %v2513
      %v2570 = vunpack.c.h.b16 %v2513
      %v2571 = vunpack.c.l.b16 %v2514
      %v2572 = vunpack.c.h.b16 %v2514
      %v2573 = vunpack.c.l.b16 %v2515
      %v2574 = vunpack.c.h.b16 %v2515
      %v2575 = vunpack.c.l.b16 %v2516
      %v2576 = vunpack.c.h.b16 %v2516
      %v2577 = vpack.c.b16 %v2547, %v2537
      %v2578 = vpack.c.b16 %v2548, %v2538
      %v2579 = vpack.c.b16 %v2549, %v2539
      %v2580 = vpack.c.b16 %v2550, %v2540
      %v2581 = vpack.c.b16 %v2551, %v2541
      %v2582 = vpack.c.b16 %v2552, %v2542
      %v2583 = vpack.c.b16 %v2553, %v2543
      %v2584 = vpack.c.b16 %v2554, %v2544
      %v2585 = vpack.c.b16 %v2555, %v2545
      %v2586 = vpack.c.b16 %v2556, %v2546
      %v2587 = vpack.c.b16 %v2567, %v2557
      %v2588 = vpack.c.b16 %v2568, %v2558
      %v2589 = vpack.c.b16 %v2569, %v2559
      %v2590 = vpack.c.b16 %v2570, %v2560
      %v2591 = vpack.c.b16 %v2571, %v2561
      %v2592 = vpack.c.b16 %v2572, %v2562
      %v2593 = vpack.c.b16 %v2573, %v2563
      %v2594 = vpack.c.b16 %v2574, %v2564
      %v2595 = vpack.c.b16 %v2575, %v2565
      %v2596 = vpack.c.b16 %v2576, %v2566
      %2617 = vmatpush.bf16.msra.mxu0 0
      %2618 = vmatpush.bf16.msra.mxu0 0
      %2619 = vmatpush.bf16.msra.mxu0 0
      %2620 = vmatpush.bf16.msra.mxu0 0
      %2621 = vmatpush.bf16.msra.mxu0 0
      %2622 = vmatpush.bf16.msra.mxu0 0
      %2623 = vmatpush.bf16.msra.mxu0 %v2587
      %2624 = vmatpush.bf16.msra.mxu0 %v2577
      %2625 = vmatmul.bf16.gmra.mxu0 %v362
      %v2626 = vpop.f32.mrf.mxu0
      %v2627 = vadd.f32 0.0, %v2626
      %v2628 = vpop.f32.mrf.mxu0
      %v2629 = vadd.f32 0.0, %v2628
      %2630 = vmatmul.bf16.gmra.mxu0 %v365
      %v2631 = vpop.f32.mrf.mxu0
      %v2632 = vadd.f32 0.0, %v2631
      %v2633 = vpop.f32.mrf.mxu0
      %v2634 = vadd.f32 0.0, %v2633
      %2635 = vdwg.mxu0
      %2636 = vmatpush.bf16.msra.mxu0 0
      %2637 = vmatpush.bf16.msra.mxu0 0
      %2638 = vmatpush.bf16.msra.mxu0 0
      %2639 = vmatpush.bf16.msra.mxu0 0
      %2640 = vmatpush.bf16.msra.mxu0 0
      %2641 = vmatpush.bf16.msra.mxu0 0
      %2642 = vmatpush.bf16.msra.mxu0 %v2588
      %2643 = vmatpush.bf16.msra.mxu0 %v2578
      %2644 = vmatmul.bf16.gmra.mxu0 %v362
      %v2645 = vpop.f32.mrf.mxu0
      %v2646 = vadd.f32 0.0, %v2645
      %v2647 = vpop.f32.mrf.mxu0
      %v2648 = vadd.f32 0.0, %v2647
      %2649 = vmatmul.bf16.gmra.mxu0 %v365
      %v2650 = vpop.f32.mrf.mxu0
      %v2651 = vadd.f32 0.0, %v2650
      %v2652 = vpop.f32.mrf.mxu0
      %v2653 = vadd.f32 0.0, %v2652
      %2654 = vdwg.mxu0
      %2655 = vmatpush.bf16.msra.mxu0 0
      %2656 = vmatpush.bf16.msra.mxu0 0
      %2657 = vmatpush.bf16.msra.mxu0 0
      %2658 = vmatpush.bf16.msra.mxu0 0
      %2659 = vmatpush.bf16.msra.mxu0 0
      %2660 = vmatpush.bf16.msra.mxu0 0
      %2661 = vmatpush.bf16.msra.mxu0 %v2589
      %2662 = vmatpush.bf16.msra.mxu0 %v2579
      %2663 = vmatmul.bf16.gmra.mxu0 %v362
      %v2664 = vpop.f32.mrf.mxu0
      %v2665 = vadd.f32 0.0, %v2664
      %v2666 = vpop.f32.mrf.mxu0
      %v2667 = vadd.f32 0.0, %v2666
      %2668 = vmatmul.bf16.gmra.mxu0 %v365
      %v2669 = vpop.f32.mrf.mxu0
      %v2670 = vadd.f32 0.0, %v2669
      %v2671 = vpop.f32.mrf.mxu0
      %v2672 = vadd.f32 0.0, %v2671
      %2673 = vdwg.mxu0
      %2674 = vmatpush.bf16.msra.mxu0 0
      %2675 = vmatpush.bf16.msra.mxu0 0
      %2676 = vmatpush.bf16.msra.mxu0 0
      %2677 = vmatpush.bf16.msra.mxu0 0
      %2678 = vmatpush.bf16.msra.mxu0 0
      %2679 = vmatpush.bf16.msra.mxu0 0
      %2680 = vmatpush.bf16.msra.mxu0 %v2590
      %2681 = vmatpush.bf16.msra.mxu0 %v2580
      %2682 = vmatmul.bf16.gmra.mxu0 %v362
      %v2683 = vpop.f32.mrf.mxu0
      %v2684 = vadd.f32 0.0, %v2683
      %v2685 = vpop.f32.mrf.mxu0
      %v2686 = vadd.f32 0.0, %v2685
      %2687 = vmatmul.bf16.gmra.mxu0 %v365
      %v2688 = vpop.f32.mrf.mxu0
      %v2689 = vadd.f32 0.0, %v2688
      %v2690 = vpop.f32.mrf.mxu0
      %v2691 = vadd.f32 0.0, %v2690
      %2692 = vdwg.mxu0
      %2693 = vmatpush.bf16.msra.mxu0 0
      %2694 = vmatpush.bf16.msra.mxu0 0
      %2695 = vmatpush.bf16.msra.mxu0 0
      %2696 = vmatpush.bf16.msra.mxu0 0
      %2697 = vmatpush.bf16.msra.mxu0 0
      %2698 = vmatpush.bf16.msra.mxu0 0
      %2699 = vmatpush.bf16.msra.mxu0 %v2591
      %2700 = vmatpush.bf16.msra.mxu0 %v2581
      %2701 = vmatmul.bf16.gmra.mxu0 %v362
      %v2702 = vpop.f32.mrf.mxu0
      %v2703 = vadd.f32 0.0, %v2702
      %v2704 = vpop.f32.mrf.mxu0
      %v2705 = vadd.f32 0.0, %v2704
      %2706 = vmatmul.bf16.gmra.mxu0 %v365
      %v2707 = vpop.f32.mrf.mxu0
      %v2708 = vadd.f32 0.0, %v2707
      %v2709 = vpop.f32.mrf.mxu0
      %v2710 = vadd.f32 0.0, %v2709
      %2711 = vdwg.mxu0
      %2712 = vmatpush.bf16.msra.mxu0 0
      %2713 = vmatpush.bf16.msra.mxu0 0
      %2714 = vmatpush.bf16.msra.mxu0 0
      %2715 = vmatpush.bf16.msra.mxu0 0
      %2716 = vmatpush.bf16.msra.mxu0 0
      %2717 = vmatpush.bf16.msra.mxu0 0
      %2718 = vmatpush.bf16.msra.mxu0 %v2592
      %2719 = vmatpush.bf16.msra.mxu0 %v2582
      %2720 = vmatmul.bf16.gmra.mxu0 %v362
      %v2721 = vpop.f32.mrf.mxu0
      %v2722 = vadd.f32 0.0, %v2721
      %v2723 = vpop.f32.mrf.mxu0
      %v2724 = vadd.f32 0.0, %v2723
      %2725 = vmatmul.bf16.gmra.mxu0 %v365
      %v2726 = vpop.f32.mrf.mxu0
      %v2727 = vadd.f32 0.0, %v2726
      %v2728 = vpop.f32.mrf.mxu0
      %v2729 = vadd.f32 0.0, %v2728
      %2730 = vdwg.mxu0
      %2731 = vmatpush.bf16.msra.mxu0 0
      %2732 = vmatpush.bf16.msra.mxu0 0
      %2733 = vmatpush.bf16.msra.mxu0 0
      %2734 = vmatpush.bf16.msra.mxu0 0
      %2735 = vmatpush.bf16.msra.mxu0 0
      %2736 = vmatpush.bf16.msra.mxu0 0
      %2737 = vmatpush.bf16.msra.mxu0 %v2593
      %2738 = vmatpush.bf16.msra.mxu0 %v2583
      %2739 = vmatmul.bf16.gmra.mxu0 %v362
      %v2740 = vpop.f32.mrf.mxu0
      %v2741 = vadd.f32 0.0, %v2740
      %v2742 = vpop.f32.mrf.mxu0
      %v2743 = vadd.f32 0.0, %v2742
      %2744 = vmatmul.bf16.gmra.mxu0 %v365
      %v2745 = vpop.f32.mrf.mxu0
      %v2746 = vadd.f32 0.0, %v2745
      %v2747 = vpop.f32.mrf.mxu0
      %v2748 = vadd.f32 0.0, %v2747
      %2749 = vdwg.mxu0
      %2750 = vmatpush.bf16.msra.mxu0 0
      %2751 = vmatpush.bf16.msra.mxu0 0
      %2752 = vmatpush.bf16.msra.mxu0 0
      %2753 = vmatpush.bf16.msra.mxu0 0
      %2754 = vmatpush.bf16.msra.mxu0 0
      %2755 = vmatpush.bf16.msra.mxu0 0
      %2756 = vmatpush.bf16.msra.mxu0 %v2594
      %2757 = vmatpush.bf16.msra.mxu0 %v2584
      %2758 = vmatmul.bf16.gmra.mxu0 %v362
      %v2759 = vpop.f32.mrf.mxu0
      %v2760 = vadd.f32 0.0, %v2759
      %v2761 = vpop.f32.mrf.mxu0
      %v2762 = vadd.f32 0.0, %v2761
      %2763 = vmatmul.bf16.gmra.mxu0 %v365
      %v2764 = vpop.f32.mrf.mxu0
      %v2765 = vadd.f32 0.0, %v2764
      %v2766 = vpop.f32.mrf.mxu0
      %v2767 = vadd.f32 0.0, %v2766
      %2768 = vdwg.mxu0
      %2769 = vmatpush.bf16.msra.mxu0 0
      %2770 = vmatpush.bf16.msra.mxu0 0
      %2771 = vmatpush.bf16.msra.mxu0 0
      %2772 = vmatpush.bf16.msra.mxu0 0
      %2773 = vmatpush.bf16.msra.mxu0 0
      %2774 = vmatpush.bf16.msra.mxu0 0
      %2775 = vmatpush.bf16.msra.mxu0 %v2595
      %2776 = vmatpush.bf16.msra.mxu0 %v2585
      %2777 = vmatmul.bf16.gmra.mxu0 %v362
      %v2778 = vpop.f32.mrf.mxu0
      %v2779 = vadd.f32 0.0, %v2778
      %v2780 = vpop.f32.mrf.mxu0
      %v2781 = vadd.f32 0.0, %v2780
      %2782 = vmatmul.bf16.gmra.mxu0 %v365
      %v2783 = vpop.f32.mrf.mxu0
      %v2784 = vadd.f32 0.0, %v2783
      %v2785 = vpop.f32.mrf.mxu0
      %v2786 = vadd.f32 0.0, %v2785
      %2787 = vdwg.mxu0
      %2788 = vmatpush.bf16.msra.mxu0 0
      %2789 = vmatpush.bf16.msra.mxu0 0
      %2790 = vmatpush.bf16.msra.mxu0 0
      %2791 = vmatpush.bf16.msra.mxu0 0
      %2792 = vmatpush.bf16.msra.mxu0 0
      %2793 = vmatpush.bf16.msra.mxu0 0
      %2794 = vmatpush.bf16.msra.mxu0 %v2596
      %2795 = vmatpush.bf16.msra.mxu0 %v2586
      %2796 = vmatmul.bf16.gmra.mxu0 %v362
      %v2797 = vpop.f32.mrf.mxu0
      %v2798 = vadd.f32 0.0, %v2797
      %v2799 = vpop.f32.mrf.mxu0
      %v2800 = vadd.f32 0.0, %v2799
      %2801 = vmatmul.bf16.gmra.mxu0 %v365
      %v2802 = vpop.f32.mrf.mxu0
      %v2803 = vadd.f32 0.0, %v2802
      %v2804 = vpop.f32.mrf.mxu0
      %v2805 = vadd.f32 0.0, %v2804
      %2806 = vdwg.mxu0
      %v2807 = vmax.f32 %v2627, %v2665
      %v2808 = vmax.f32 %v2646, %v2684
      %v2809 = vmax.f32 %v2629, %v2667
      %v2810 = vmax.f32 %v2648, %v2686
      %v2811 = vmax.f32 %v2632, %v2670
      %v2812 = vmax.f32 %v2651, %v2689
      %v2813 = vmax.f32 %v2634, %v2672
      %v2814 = vmax.f32 %v2653, %v2691
      %v2815 = vmax.f32 %v2807, %v2703
      %v2816 = vmax.f32 %v2808, %v2722
      %v2817 = vmax.f32 %v2809, %v2705
      %v2818 = vmax.f32 %v2810, %v2724
      %v2819 = vmax.f32 %v2811, %v2708
      %v2820 = vmax.f32 %v2812, %v2727
      %v2821 = vmax.f32 %v2813, %v2710
      %v2822 = vmax.f32 %v2814, %v2729
      %v2823 = vmax.f32 %v2815, %v2741
      %v2824 = vmax.f32 %v2816, %v2760
      %v2825 = vmax.f32 %v2817, %v2743
      %v2826 = vmax.f32 %v2818, %v2762
      %v2827 = vmax.f32 %v2819, %v2746
      %v2828 = vmax.f32 %v2820, %v2765
      %v2829 = vmax.f32 %v2821, %v2748
      %v2830 = vmax.f32 %v2822, %v2767
      %v2831 = vmax.f32 %v2823, %v2779
      %v2832 = vmax.f32 %v2824, %v2798
      %v2833 = vmax.f32 %v2825, %v2781
      %v2834 = vmax.f32 %v2826, %v2800
      %v2835 = vmax.f32 %v2827, %v2784
      %v2836 = vmax.f32 %v2828, %v2803
      %v2837 = vmax.f32 %v2829, %v2786
      %v2838 = vmax.f32 %v2830, %v2805
      %v2839 = vmax.f32 %v2831, %v2835
      %v2840 = vmax.f32 %v2832, %v2836
      %v2841 = vmax.f32 %v2833, %v2837
      %v2842 = vmax.f32 %v2834, %v2838
      %vm2843 = vcmp.ge.f32.partialorder %v2839, 0.0
      %vm2844 = vcmp.ge.f32.partialorder %v2840, 0.0
      %vm2845 = vcmp.ge.f32.partialorder %v2841, 0.0
      %vm2846 = vcmp.ge.f32.partialorder %v2842, 0.0
      %v2847 = vmul.f32 %v2839, 0.01
      %v2848 = vmul.f32 %v2840, 0.01
      %v2849 = vmul.f32 %v2841, 0.01
      %v2850 = vmul.f32 %v2842, 0.01
      %v2851 = vsel %vm2843, %v2839, %v2847
      %v2852 = vsel %vm2844, %v2840, %v2848
      %v2853 = vsel %vm2845, %v2841, %v2849
      %v2854 = vsel %vm2846, %v2842, %v2850
      %vm2855 = vcmp.ge.f32.partialorder %v2851, 0.0
      %vm2856 = vcmp.ge.f32.partialorder %v2852, 0.0
      %vm2857 = vcmp.ge.f32.partialorder %v2853, 0.0
      %vm2858 = vcmp.ge.f32.partialorder %v2854, 0.0
      %v2859 = vmul.f32 %v2851, 0.01
      %v2860 = vmul.f32 %v2852, 0.01
      %v2861 = vmul.f32 %v2853, 0.01
      %v2862 = vmul.f32 %v2854, 0.01
      %v2863 = vsel %vm2855, %v2851, %v2859
      %v2864 = vsel %vm2856, %v2852, %v2860
      %v2865 = vsel %vm2857, %v2853, %v2861
      %v2866 = vsel %vm2858, %v2854, %v2862
      %2867 = vst [vmem:[#allocation2 + $0xc0] sm:$0xff] %v2863
      %2868 = vst [vmem:[#allocation2 + $0xc8] sm:$0xff] %v2864
      %2869 = vst [vmem:[#allocation2 + $0xd0] sm:$0xff] %v2865
      %2870 = vst [vmem:[#allocation2 + $0xd8] sm:$0xff] %v2866
      %s2871 = scalar_lea.vmem %s219, 1120
      %v2872 = vld [vmem:[%s2871] sm:$0xff]
      %v2873 = vld [vmem:[%s2871 + $0x8] sm:$0xff]
      %v2874 = vld [vmem:[%s2871 + $0x10] sm:$0xff]
      %v2875 = vld [vmem:[%s2871 + $0x18] sm:$0xff]
      %v2876 = vld [vmem:[%s2871 + $0x20] sm:$0xff]
      %v2877 = vld [vmem:[%s2871 + $0x28] sm:$0xff]
      %v2878 = vld [vmem:[%s2871 + $0x30] sm:$0xff]
      %v2879 = vld [vmem:[%s2871 + $0x38] sm:$0xff]
      %v2880 = vld [vmem:[%s2871 + $0x40] sm:$0xff]
      %v2881 = vld [vmem:[%s2871 + $0x48] sm:$0xff]
      %v2882 = vld [vmem:[%s2871 + $0x50] sm:$0xff]
      %v2883 = vld [vmem:[%s2871 + $0x58] sm:$0xff]
      %v2884 = vld [vmem:[%s2871 + $0x60] sm:$0xff]
      %v2885 = vld [vmem:[%s2871 + $0x68] sm:$0xff]
      %v2886 = vld [vmem:[%s2871 + $0x70] sm:$0xff]
      %v2887 = vld [vmem:[%s2871 + $0x78] sm:$0xff]
      %v2888 = vld [vmem:[%s2871 + $0x80] sm:$0xff]
      %v2889 = vld [vmem:[%s2871 + $0x88] sm:$0xff]
      %v2890 = vld [vmem:[%s2871 + $0x90] sm:$0xff]
      %v2891 = vld [vmem:[%s2871 + $0x98] sm:$0xff]
      %v2912 = vunpack.c.l.b16 %v2872
      %v2913 = vunpack.c.h.b16 %v2872
      %v2914 = vunpack.c.l.b16 %v2873
      %v2915 = vunpack.c.h.b16 %v2873
      %v2916 = vunpack.c.l.b16 %v2874
      %v2917 = vunpack.c.h.b16 %v2874
      %v2918 = vunpack.c.l.b16 %v2875
      %v2919 = vunpack.c.h.b16 %v2875
      %v2920 = vunpack.c.l.b16 %v2876
      %v2921 = vunpack.c.h.b16 %v2876
      %v2922 = vunpack.c.l.b16 %v2877
      %v2923 = vunpack.c.h.b16 %v2877
      %v2924 = vunpack.c.l.b16 %v2878
      %v2925 = vunpack.c.h.b16 %v2878
      %v2926 = vunpack.c.l.b16 %v2879
      %v2927 = vunpack.c.h.b16 %v2879
      %v2928 = vunpack.c.l.b16 %v2880
      %v2929 = vunpack.c.h.b16 %v2880
      %v2930 = vunpack.c.l.b16 %v2881
      %v2931 = vunpack.c.h.b16 %v2881
      %v2932 = vunpack.c.l.b16 %v2882
      %v2933 = vunpack.c.h.b16 %v2882
      %v2934 = vunpack.c.l.b16 %v2883
      %v2935 = vunpack.c.h.b16 %v2883
      %v2936 = vunpack.c.l.b16 %v2884
      %v2937 = vunpack.c.h.b16 %v2884
      %v2938 = vunpack.c.l.b16 %v2885
      %v2939 = vunpack.c.h.b16 %v2885
      %v2940 = vunpack.c.l.b16 %v2886
      %v2941 = vunpack.c.h.b16 %v2886
      %v2942 = vunpack.c.l.b16 %v2887
      %v2943 = vunpack.c.h.b16 %v2887
      %v2944 = vunpack.c.l.b16 %v2888
      %v2945 = vunpack.c.h.b16 %v2888
      %v2946 = vunpack.c.l.b16 %v2889
      %v2947 = vunpack.c.h.b16 %v2889
      %v2948 = vunpack.c.l.b16 %v2890
      %v2949 = vunpack.c.h.b16 %v2890
      %v2950 = vunpack.c.l.b16 %v2891
      %v2951 = vunpack.c.h.b16 %v2891
      %v2952 = vpack.c.b16 %v2922, %v2912
      %v2953 = vpack.c.b16 %v2923, %v2913
      %v2954 = vpack.c.b16 %v2924, %v2914
      %v2955 = vpack.c.b16 %v2925, %v2915
      %v2956 = vpack.c.b16 %v2926, %v2916
      %v2957 = vpack.c.b16 %v2927, %v2917
      %v2958 = vpack.c.b16 %v2928, %v2918
      %v2959 = vpack.c.b16 %v2929, %v2919
      %v2960 = vpack.c.b16 %v2930, %v2920
      %v2961 = vpack.c.b16 %v2931, %v2921
      %v2962 = vpack.c.b16 %v2942, %v2932
      %v2963 = vpack.c.b16 %v2943, %v2933
      %v2964 = vpack.c.b16 %v2944, %v2934
      %v2965 = vpack.c.b16 %v2945, %v2935
      %v2966 = vpack.c.b16 %v2946, %v2936
      %v2967 = vpack.c.b16 %v2947, %v2937
      %v2968 = vpack.c.b16 %v2948, %v2938
      %v2969 = vpack.c.b16 %v2949, %v2939
      %v2970 = vpack.c.b16 %v2950, %v2940
      %v2971 = vpack.c.b16 %v2951, %v2941
      %2992 = vmatpush.bf16.msra.mxu0 0
      %2993 = vmatpush.bf16.msra.mxu0 0
      %2994 = vmatpush.bf16.msra.mxu0 0
      %2995 = vmatpush.bf16.msra.mxu0 0
      %2996 = vmatpush.bf16.msra.mxu0 0
      %2997 = vmatpush.bf16.msra.mxu0 0
      %2998 = vmatpush.bf16.msra.mxu0 %v2962
      %2999 = vmatpush.bf16.msra.mxu0 %v2952
      %3000 = vmatmul.bf16.gmra.mxu0 %v362
      %v3001 = vpop.f32.mrf.mxu0
      %v3002 = vadd.f32 0.0, %v3001
      %v3003 = vpop.f32.mrf.mxu0
      %v3004 = vadd.f32 0.0, %v3003
      %3005 = vmatmul.bf16.gmra.mxu0 %v365
      %v3006 = vpop.f32.mrf.mxu0
      %v3007 = vadd.f32 0.0, %v3006
      %v3008 = vpop.f32.mrf.mxu0
      %v3009 = vadd.f32 0.0, %v3008
      %3010 = vdwg.mxu0
      %3011 = vmatpush.bf16.msra.mxu0 0
      %3012 = vmatpush.bf16.msra.mxu0 0
      %3013 = vmatpush.bf16.msra.mxu0 0
      %3014 = vmatpush.bf16.msra.mxu0 0
      %3015 = vmatpush.bf16.msra.mxu0 0
      %3016 = vmatpush.bf16.msra.mxu0 0
      %3017 = vmatpush.bf16.msra.mxu0 %v2963
      %3018 = vmatpush.bf16.msra.mxu0 %v2953
      %3019 = vmatmul.bf16.gmra.mxu0 %v362
      %v3020 = vpop.f32.mrf.mxu0
      %v3021 = vadd.f32 0.0, %v3020
      %v3022 = vpop.f32.mrf.mxu0
      %v3023 = vadd.f32 0.0, %v3022
      %3024 = vmatmul.bf16.gmra.mxu0 %v365
      %v3025 = vpop.f32.mrf.mxu0
      %v3026 = vadd.f32 0.0, %v3025
      %v3027 = vpop.f32.mrf.mxu0
      %v3028 = vadd.f32 0.0, %v3027
      %3029 = vdwg.mxu0
      %3030 = vmatpush.bf16.msra.mxu0 0
      %3031 = vmatpush.bf16.msra.mxu0 0
      %3032 = vmatpush.bf16.msra.mxu0 0
      %3033 = vmatpush.bf16.msra.mxu0 0
      %3034 = vmatpush.bf16.msra.mxu0 0
      %3035 = vmatpush.bf16.msra.mxu0 0
      %3036 = vmatpush.bf16.msra.mxu0 %v2964
      %3037 = vmatpush.bf16.msra.mxu0 %v2954
      %3038 = vmatmul.bf16.gmra.mxu0 %v362
      %v3039 = vpop.f32.mrf.mxu0
      %v3040 = vadd.f32 0.0, %v3039
      %v3041 = vpop.f32.mrf.mxu0
      %v3042 = vadd.f32 0.0, %v3041
      %3043 = vmatmul.bf16.gmra.mxu0 %v365
      %v3044 = vpop.f32.mrf.mxu0
      %v3045 = vadd.f32 0.0, %v3044
      %v3046 = vpop.f32.mrf.mxu0
      %v3047 = vadd.f32 0.0, %v3046
      %3048 = vdwg.mxu0
      %3049 = vmatpush.bf16.msra.mxu0 0
      %3050 = vmatpush.bf16.msra.mxu0 0
      %3051 = vmatpush.bf16.msra.mxu0 0
      %3052 = vmatpush.bf16.msra.mxu0 0
      %3053 = vmatpush.bf16.msra.mxu0 0
      %3054 = vmatpush.bf16.msra.mxu0 0
      %3055 = vmatpush.bf16.msra.mxu0 %v2965
      %3056 = vmatpush.bf16.msra.mxu0 %v2955
      %3057 = vmatmul.bf16.gmra.mxu0 %v362
      %v3058 = vpop.f32.mrf.mxu0
      %v3059 = vadd.f32 0.0, %v3058
      %v3060 = vpop.f32.mrf.mxu0
      %v3061 = vadd.f32 0.0, %v3060
      %3062 = vmatmul.bf16.gmra.mxu0 %v365
      %v3063 = vpop.f32.mrf.mxu0
      %v3064 = vadd.f32 0.0, %v3063
      %v3065 = vpop.f32.mrf.mxu0
      %v3066 = vadd.f32 0.0, %v3065
      %3067 = vdwg.mxu0
      %3068 = vmatpush.bf16.msra.mxu0 0
      %3069 = vmatpush.bf16.msra.mxu0 0
      %3070 = vmatpush.bf16.msra.mxu0 0
      %3071 = vmatpush.bf16.msra.mxu0 0
      %3072 = vmatpush.bf16.msra.mxu0 0
      %3073 = vmatpush.bf16.msra.mxu0 0
      %3074 = vmatpush.bf16.msra.mxu0 %v2966
      %3075 = vmatpush.bf16.msra.mxu0 %v2956
      %3076 = vmatmul.bf16.gmra.mxu0 %v362
      %v3077 = vpop.f32.mrf.mxu0
      %v3078 = vadd.f32 0.0, %v3077
      %v3079 = vpop.f32.mrf.mxu0
      %v3080 = vadd.f32 0.0, %v3079
      %3081 = vmatmul.bf16.gmra.mxu0 %v365
      %v3082 = vpop.f32.mrf.mxu0
      %v3083 = vadd.f32 0.0, %v3082
      %v3084 = vpop.f32.mrf.mxu0
      %v3085 = vadd.f32 0.0, %v3084
      %3086 = vdwg.mxu0
      %3087 = vmatpush.bf16.msra.mxu0 0
      %3088 = vmatpush.bf16.msra.mxu0 0
      %3089 = vmatpush.bf16.msra.mxu0 0
      %3090 = vmatpush.bf16.msra.mxu0 0
      %3091 = vmatpush.bf16.msra.mxu0 0
      %3092 = vmatpush.bf16.msra.mxu0 0
      %3093 = vmatpush.bf16.msra.mxu0 %v2967
      %3094 = vmatpush.bf16.msra.mxu0 %v2957
      %3095 = vmatmul.bf16.gmra.mxu0 %v362
      %v3096 = vpop.f32.mrf.mxu0
      %v3097 = vadd.f32 0.0, %v3096
      %v3098 = vpop.f32.mrf.mxu0
      %v3099 = vadd.f32 0.0, %v3098
      %3100 = vmatmul.bf16.gmra.mxu0 %v365
      %v3101 = vpop.f32.mrf.mxu0
      %v3102 = vadd.f32 0.0, %v3101
      %v3103 = vpop.f32.mrf.mxu0
      %v3104 = vadd.f32 0.0, %v3103
      %3105 = vdwg.mxu0
      %3106 = vmatpush.bf16.msra.mxu0 0
      %3107 = vmatpush.bf16.msra.mxu0 0
      %3108 = vmatpush.bf16.msra.mxu0 0
      %3109 = vmatpush.bf16.msra.mxu0 0
      %3110 = vmatpush.bf16.msra.mxu0 0
      %3111 = vmatpush.bf16.msra.mxu0 0
      %3112 = vmatpush.bf16.msra.mxu0 %v2968
      %3113 = vmatpush.bf16.msra.mxu0 %v2958
      %3114 = vmatmul.bf16.gmra.mxu0 %v362
      %v3115 = vpop.f32.mrf.mxu0
      %v3116 = vadd.f32 0.0, %v3115
      %v3117 = vpop.f32.mrf.mxu0
      %v3118 = vadd.f32 0.0, %v3117
      %3119 = vmatmul.bf16.gmra.mxu0 %v365
      %v3120 = vpop.f32.mrf.mxu0
      %v3121 = vadd.f32 0.0, %v3120
      %v3122 = vpop.f32.mrf.mxu0
      %v3123 = vadd.f32 0.0, %v3122
      %3124 = vdwg.mxu0
      %3125 = vmatpush.bf16.msra.mxu0 0
      %3126 = vmatpush.bf16.msra.mxu0 0
      %3127 = vmatpush.bf16.msra.mxu0 0
      %3128 = vmatpush.bf16.msra.mxu0 0
      %3129 = vmatpush.bf16.msra.mxu0 0
      %3130 = vmatpush.bf16.msra.mxu0 0
      %3131 = vmatpush.bf16.msra.mxu0 %v2969
      %3132 = vmatpush.bf16.msra.mxu0 %v2959
      %3133 = vmatmul.bf16.gmra.mxu0 %v362
      %v3134 = vpop.f32.mrf.mxu0
      %v3135 = vadd.f32 0.0, %v3134
      %v3136 = vpop.f32.mrf.mxu0
      %v3137 = vadd.f32 0.0, %v3136
      %3138 = vmatmul.bf16.gmra.mxu0 %v365
      %v3139 = vpop.f32.mrf.mxu0
      %v3140 = vadd.f32 0.0, %v3139
      %v3141 = vpop.f32.mrf.mxu0
      %v3142 = vadd.f32 0.0, %v3141
      %3143 = vdwg.mxu0
      %3144 = vmatpush.bf16.msra.mxu0 0
      %3145 = vmatpush.bf16.msra.mxu0 0
      %3146 = vmatpush.bf16.msra.mxu0 0
      %3147 = vmatpush.bf16.msra.mxu0 0
      %3148 = vmatpush.bf16.msra.mxu0 0
      %3149 = vmatpush.bf16.msra.mxu0 0
      %3150 = vmatpush.bf16.msra.mxu0 %v2970
      %3151 = vmatpush.bf16.msra.mxu0 %v2960
      %3152 = vmatmul.bf16.gmra.mxu0 %v362
      %v3153 = vpop.f32.mrf.mxu0
      %v3154 = vadd.f32 0.0, %v3153
      %v3155 = vpop.f32.mrf.mxu0
      %v3156 = vadd.f32 0.0, %v3155
      %3157 = vmatmul.bf16.gmra.mxu0 %v365
      %v3158 = vpop.f32.mrf.mxu0
      %v3159 = vadd.f32 0.0, %v3158
      %v3160 = vpop.f32.mrf.mxu0
      %v3161 = vadd.f32 0.0, %v3160
      %3162 = vdwg.mxu0
      %3163 = vmatpush.bf16.msra.mxu0 0
      %3164 = vmatpush.bf16.msra.mxu0 0
      %3165 = vmatpush.bf16.msra.mxu0 0
      %3166 = vmatpush.bf16.msra.mxu0 0
      %3167 = vmatpush.bf16.msra.mxu0 0
      %3168 = vmatpush.bf16.msra.mxu0 0
      %3169 = vmatpush.bf16.msra.mxu0 %v2971
      %3170 = vmatpush.bf16.msra.mxu0 %v2961
      %3171 = vmatmul.bf16.gmra.mxu0 %v362
      %v3172 = vpop.f32.mrf.mxu0
      %v3173 = vadd.f32 0.0, %v3172
      %v3174 = vpop.f32.mrf.mxu0
      %v3175 = vadd.f32 0.0, %v3174
      %3176 = vmatmul.bf16.gmra.mxu0 %v365
      %v3177 = vpop.f32.mrf.mxu0
      %v3178 = vadd.f32 0.0, %v3177
      %v3179 = vpop.f32.mrf.mxu0
      %v3180 = vadd.f32 0.0, %v3179
      %3181 = vdwg.mxu0
      %v3182 = vmax.f32 %v3002, %v3040
      %v3183 = vmax.f32 %v3021, %v3059
      %v3184 = vmax.f32 %v3004, %v3042
      %v3185 = vmax.f32 %v3023, %v3061
      %v3186 = vmax.f32 %v3007, %v3045
      %v3187 = vmax.f32 %v3026, %v3064
      %v3188 = vmax.f32 %v3009, %v3047
      %v3189 = vmax.f32 %v3028, %v3066
      %v3190 = vmax.f32 %v3182, %v3078
      %v3191 = vmax.f32 %v3183, %v3097
      %v3192 = vmax.f32 %v3184, %v3080
      %v3193 = vmax.f32 %v3185, %v3099
      %v3194 = vmax.f32 %v3186, %v3083
      %v3195 = vmax.f32 %v3187, %v3102
      %v3196 = vmax.f32 %v3188, %v3085
      %v3197 = vmax.f32 %v3189, %v3104
      %v3198 = vmax.f32 %v3190, %v3116
      %v3199 = vmax.f32 %v3191, %v3135
      %v3200 = vmax.f32 %v3192, %v3118
      %v3201 = vmax.f32 %v3193, %v3137
      %v3202 = vmax.f32 %v3194, %v3121
      %v3203 = vmax.f32 %v3195, %v3140
      %v3204 = vmax.f32 %v3196, %v3123
      %v3205 = vmax.f32 %v3197, %v3142
      %v3206 = vmax.f32 %v3198, %v3154
      %v3207 = vmax.f32 %v3199, %v3173
      %v3208 = vmax.f32 %v3200, %v3156
      %v3209 = vmax.f32 %v3201, %v3175
      %v3210 = vmax.f32 %v3202, %v3159
      %v3211 = vmax.f32 %v3203, %v3178
      %v3212 = vmax.f32 %v3204, %v3161
      %v3213 = vmax.f32 %v3205, %v3180
      %v3214 = vmax.f32 %v3206, %v3210
      %v3215 = vmax.f32 %v3207, %v3211
      %v3216 = vmax.f32 %v3208, %v3212
      %v3217 = vmax.f32 %v3209, %v3213
      %vm3218 = vcmp.ge.f32.partialorder %v3214, 0.0
      %vm3219 = vcmp.ge.f32.partialorder %v3215, 0.0
      %vm3220 = vcmp.ge.f32.partialorder %v3216, 0.0
      %vm3221 = vcmp.ge.f32.partialorder %v3217, 0.0
      %v3222 = vmul.f32 %v3214, 0.01
      %v3223 = vmul.f32 %v3215, 0.01
      %v3224 = vmul.f32 %v3216, 0.01
      %v3225 = vmul.f32 %v3217, 0.01
      %v3226 = vsel %vm3218, %v3214, %v3222
      %v3227 = vsel %vm3219, %v3215, %v3223
      %v3228 = vsel %vm3220, %v3216, %v3224
      %v3229 = vsel %vm3221, %v3217, %v3225
      %vm3230 = vcmp.ge.f32.partialorder %v3226, 0.0
      %vm3231 = vcmp.ge.f32.partialorder %v3227, 0.0
      %vm3232 = vcmp.ge.f32.partialorder %v3228, 0.0
      %vm3233 = vcmp.ge.f32.partialorder %v3229, 0.0
      %v3234 = vmul.f32 %v3226, 0.01
      %v3235 = vmul.f32 %v3227, 0.01
      %v3236 = vmul.f32 %v3228, 0.01
      %v3237 = vmul.f32 %v3229, 0.01
      %v3238 = vsel %vm3230, %v3226, %v3234
      %v3239 = vsel %vm3231, %v3227, %v3235
      %v3240 = vsel %vm3232, %v3228, %v3236
      %v3241 = vsel %vm3233, %v3229, %v3237
      %3242 = vst [vmem:[#allocation2 + $0xe0] sm:$0xff] %v3238
      %3243 = vst [vmem:[#allocation2 + $0xe8] sm:$0xff] %v3239
      %3244 = vst [vmem:[#allocation2 + $0xf0] sm:$0xff] %v3240
      %3245 = vst [vmem:[#allocation2 + $0xf8] sm:$0xff] %v3241
      %s3246 = scalar_lea.vmem %s219, 1280
      %v3247 = vld [vmem:[%s3246] sm:$0xff]
      %v3248 = vld [vmem:[%s3246 + $0x8] sm:$0xff]
      %v3249 = vld [vmem:[%s3246 + $0x10] sm:$0xff]
      %v3250 = vld [vmem:[%s3246 + $0x18] sm:$0xff]
      %v3251 = vld [vmem:[%s3246 + $0x20] sm:$0xff]
      %v3252 = vld [vmem:[%s3246 + $0x28] sm:$0xff]
      %v3253 = vld [vmem:[%s3246 + $0x30] sm:$0xff]
      %v3254 = vld [vmem:[%s3246 + $0x38] sm:$0xff]
      %v3255 = vld [vmem:[%s3246 + $0x40] sm:$0xff]
      %v3256 = vld [vmem:[%s3246 + $0x48] sm:$0xff]
      %v3257 = vld [vmem:[%s3246 + $0x50] sm:$0xff]
      %v3258 = vld [vmem:[%s3246 + $0x58] sm:$0xff]
      %v3259 = vld [vmem:[%s3246 + $0x60] sm:$0xff]
      %v3260 = vld [vmem:[%s3246 + $0x68] sm:$0xff]
      %v3261 = vld [vmem:[%s3246 + $0x70] sm:$0xff]
      %v3262 = vld [vmem:[%s3246 + $0x78] sm:$0xff]
      %v3263 = vld [vmem:[%s3246 + $0x80] sm:$0xff]
      %v3264 = vld [vmem:[%s3246 + $0x88] sm:$0xff]
      %v3265 = vld [vmem:[%s3246 + $0x90] sm:$0xff]
      %v3266 = vld [vmem:[%s3246 + $0x98] sm:$0xff]
      %v3287 = vunpack.c.l.b16 %v3247
      %v3288 = vunpack.c.h.b16 %v3247
      %v3289 = vunpack.c.l.b16 %v3248
      %v3290 = vunpack.c.h.b16 %v3248
      %v3291 = vunpack.c.l.b16 %v3249
      %v3292 = vunpack.c.h.b16 %v3249
      %v3293 = vunpack.c.l.b16 %v3250
      %v3294 = vunpack.c.h.b16 %v3250
      %v3295 = vunpack.c.l.b16 %v3251
      %v3296 = vunpack.c.h.b16 %v3251
      %v3297 = vunpack.c.l.b16 %v3252
      %v3298 = vunpack.c.h.b16 %v3252
      %v3299 = vunpack.c.l.b16 %v3253
      %v3300 = vunpack.c.h.b16 %v3253
      %v3301 = vunpack.c.l.b16 %v3254
      %v3302 = vunpack.c.h.b16 %v3254
      %v3303 = vunpack.c.l.b16 %v3255
      %v3304 = vunpack.c.h.b16 %v3255
      %v3305 = vunpack.c.l.b16 %v3256
      %v3306 = vunpack.c.h.b16 %v3256
      %v3307 = vunpack.c.l.b16 %v3257
      %v3308 = vunpack.c.h.b16 %v3257
      %v3309 = vunpack.c.l.b16 %v3258
      %v3310 = vunpack.c.h.b16 %v3258
      %v3311 = vunpack.c.l.b16 %v3259
      %v3312 = vunpack.c.h.b16 %v3259
      %v3313 = vunpack.c.l.b16 %v3260
      %v3314 = vunpack.c.h.b16 %v3260
      %v3315 = vunpack.c.l.b16 %v3261
      %v3316 = vunpack.c.h.b16 %v3261
      %v3317 = vunpack.c.l.b16 %v3262
      %v3318 = vunpack.c.h.b16 %v3262
      %v3319 = vunpack.c.l.b16 %v3263
      %v3320 = vunpack.c.h.b16 %v3263
      %v3321 = vunpack.c.l.b16 %v3264
      %v3322 = vunpack.c.h.b16 %v3264
      %v3323 = vunpack.c.l.b16 %v3265
      %v3324 = vunpack.c.h.b16 %v3265
      %v3325 = vunpack.c.l.b16 %v3266
      %v3326 = vunpack.c.h.b16 %v3266
      %v3327 = vpack.c.b16 %v3297, %v3287
      %v3328 = vpack.c.b16 %v3298, %v3288
      %v3329 = vpack.c.b16 %v3299, %v3289
      %v3330 = vpack.c.b16 %v3300, %v3290
      %v3331 = vpack.c.b16 %v3301, %v3291
      %v3332 = vpack.c.b16 %v3302, %v3292
      %v3333 = vpack.c.b16 %v3303, %v3293
      %v3334 = vpack.c.b16 %v3304, %v3294
      %v3335 = vpack.c.b16 %v3305, %v3295
      %v3336 = vpack.c.b16 %v3306, %v3296
      %v3337 = vpack.c.b16 %v3317, %v3307
      %v3338 = vpack.c.b16 %v3318, %v3308
      %v3339 = vpack.c.b16 %v3319, %v3309
      %v3340 = vpack.c.b16 %v3320, %v3310
      %v3341 = vpack.c.b16 %v3321, %v3311
      %v3342 = vpack.c.b16 %v3322, %v3312
      %v3343 = vpack.c.b16 %v3323, %v3313
      %v3344 = vpack.c.b16 %v3324, %v3314
      %v3345 = vpack.c.b16 %v3325, %v3315
      %v3346 = vpack.c.b16 %v3326, %v3316
      %3367 = vmatpush.bf16.msra.mxu0 0
      %3368 = vmatpush.bf16.msra.mxu0 0
      %3369 = vmatpush.bf16.msra.mxu0 0
      %3370 = vmatpush.bf16.msra.mxu0 0
      %3371 = vmatpush.bf16.msra.mxu0 0
      %3372 = vmatpush.bf16.msra.mxu0 0
      %3373 = vmatpush.bf16.msra.mxu0 %v3337
      %3374 = vmatpush.bf16.msra.mxu0 %v3327
      %3375 = vmatmul.bf16.gmra.mxu0 %v362
      %v3376 = vpop.f32.mrf.mxu0
      %v3377 = vadd.f32 0.0, %v3376
      %v3378 = vpop.f32.mrf.mxu0
      %v3379 = vadd.f32 0.0, %v3378
      %3380 = vmatmul.bf16.gmra.mxu0 %v365
      %v3381 = vpop.f32.mrf.mxu0
      %v3382 = vadd.f32 0.0, %v3381
      %v3383 = vpop.f32.mrf.mxu0
      %v3384 = vadd.f32 0.0, %v3383
      %3385 = vdwg.mxu0
      %3386 = vmatpush.bf16.msra.mxu0 0
      %3387 = vmatpush.bf16.msra.mxu0 0
      %3388 = vmatpush.bf16.msra.mxu0 0
      %3389 = vmatpush.bf16.msra.mxu0 0
      %3390 = vmatpush.bf16.msra.mxu0 0
      %3391 = vmatpush.bf16.msra.mxu0 0
      %3392 = vmatpush.bf16.msra.mxu0 %v3338
      %3393 = vmatpush.bf16.msra.mxu0 %v3328
      %3394 = vmatmul.bf16.gmra.mxu0 %v362
      %v3395 = vpop.f32.mrf.mxu0
      %v3396 = vadd.f32 0.0, %v3395
      %v3397 = vpop.f32.mrf.mxu0
      %v3398 = vadd.f32 0.0, %v3397
      %3399 = vmatmul.bf16.gmra.mxu0 %v365
      %v3400 = vpop.f32.mrf.mxu0
      %v3401 = vadd.f32 0.0, %v3400
      %v3402 = vpop.f32.mrf.mxu0
      %v3403 = vadd.f32 0.0, %v3402
      %3404 = vdwg.mxu0
      %3405 = vmatpush.bf16.msra.mxu0 0
      %3406 = vmatpush.bf16.msra.mxu0 0
      %3407 = vmatpush.bf16.msra.mxu0 0
      %3408 = vmatpush.bf16.msra.mxu0 0
      %3409 = vmatpush.bf16.msra.mxu0 0
      %3410 = vmatpush.bf16.msra.mxu0 0
      %3411 = vmatpush.bf16.msra.mxu0 %v3339
      %3412 = vmatpush.bf16.msra.mxu0 %v3329
      %3413 = vmatmul.bf16.gmra.mxu0 %v362
      %v3414 = vpop.f32.mrf.mxu0
      %v3415 = vadd.f32 0.0, %v3414
      %v3416 = vpop.f32.mrf.mxu0
      %v3417 = vadd.f32 0.0, %v3416
      %3418 = vmatmul.bf16.gmra.mxu0 %v365
      %v3419 = vpop.f32.mrf.mxu0
      %v3420 = vadd.f32 0.0, %v3419
      %v3421 = vpop.f32.mrf.mxu0
      %v3422 = vadd.f32 0.0, %v3421
      %3423 = vdwg.mxu0
      %3424 = vmatpush.bf16.msra.mxu0 0
      %3425 = vmatpush.bf16.msra.mxu0 0
      %3426 = vmatpush.bf16.msra.mxu0 0
      %3427 = vmatpush.bf16.msra.mxu0 0
      %3428 = vmatpush.bf16.msra.mxu0 0
      %3429 = vmatpush.bf16.msra.mxu0 0
      %3430 = vmatpush.bf16.msra.mxu0 %v3340
      %3431 = vmatpush.bf16.msra.mxu0 %v3330
      %3432 = vmatmul.bf16.gmra.mxu0 %v362
      %v3433 = vpop.f32.mrf.mxu0
      %v3434 = vadd.f32 0.0, %v3433
      %v3435 = vpop.f32.mrf.mxu0
      %v3436 = vadd.f32 0.0, %v3435
      %3437 = vmatmul.bf16.gmra.mxu0 %v365
      %v3438 = vpop.f32.mrf.mxu0
      %v3439 = vadd.f32 0.0, %v3438
      %v3440 = vpop.f32.mrf.mxu0
      %v3441 = vadd.f32 0.0, %v3440
      %3442 = vdwg.mxu0
      %3443 = vmatpush.bf16.msra.mxu0 0
      %3444 = vmatpush.bf16.msra.mxu0 0
      %3445 = vmatpush.bf16.msra.mxu0 0
      %3446 = vmatpush.bf16.msra.mxu0 0
      %3447 = vmatpush.bf16.msra.mxu0 0
      %3448 = vmatpush.bf16.msra.mxu0 0
      %3449 = vmatpush.bf16.msra.mxu0 %v3341
      %3450 = vmatpush.bf16.msra.mxu0 %v3331
      %3451 = vmatmul.bf16.gmra.mxu0 %v362
      %v3452 = vpop.f32.mrf.mxu0
      %v3453 = vadd.f32 0.0, %v3452
      %v3454 = vpop.f32.mrf.mxu0
      %v3455 = vadd.f32 0.0, %v3454
      %3456 = vmatmul.bf16.gmra.mxu0 %v365
      %v3457 = vpop.f32.mrf.mxu0
      %v3458 = vadd.f32 0.0, %v3457
      %v3459 = vpop.f32.mrf.mxu0
      %v3460 = vadd.f32 0.0, %v3459
      %3461 = vdwg.mxu0
      %3462 = vmatpush.bf16.msra.mxu0 0
      %3463 = vmatpush.bf16.msra.mxu0 0
      %3464 = vmatpush.bf16.msra.mxu0 0
      %3465 = vmatpush.bf16.msra.mxu0 0
      %3466 = vmatpush.bf16.msra.mxu0 0
      %3467 = vmatpush.bf16.msra.mxu0 0
      %3468 = vmatpush.bf16.msra.mxu0 %v3342
      %3469 = vmatpush.bf16.msra.mxu0 %v3332
      %3470 = vmatmul.bf16.gmra.mxu0 %v362
      %v3471 = vpop.f32.mrf.mxu0
      %v3472 = vadd.f32 0.0, %v3471
      %v3473 = vpop.f32.mrf.mxu0
      %v3474 = vadd.f32 0.0, %v3473
      %3475 = vmatmul.bf16.gmra.mxu0 %v365
      %v3476 = vpop.f32.mrf.mxu0
      %v3477 = vadd.f32 0.0, %v3476
      %v3478 = vpop.f32.mrf.mxu0
      %v3479 = vadd.f32 0.0, %v3478
      %3480 = vdwg.mxu0
      %3481 = vmatpush.bf16.msra.mxu0 0
      %3482 = vmatpush.bf16.msra.mxu0 0
      %3483 = vmatpush.bf16.msra.mxu0 0
      %3484 = vmatpush.bf16.msra.mxu0 0
      %3485 = vmatpush.bf16.msra.mxu0 0
      %3486 = vmatpush.bf16.msra.mxu0 0
      %3487 = vmatpush.bf16.msra.mxu0 %v3343
      %3488 = vmatpush.bf16.msra.mxu0 %v3333
      %3489 = vmatmul.bf16.gmra.mxu0 %v362
      %v3490 = vpop.f32.mrf.mxu0
      %v3491 = vadd.f32 0.0, %v3490
      %v3492 = vpop.f32.mrf.mxu0
      %v3493 = vadd.f32 0.0, %v3492
      %3494 = vmatmul.bf16.gmra.mxu0 %v365
      %v3495 = vpop.f32.mrf.mxu0
      %v3496 = vadd.f32 0.0, %v3495
      %v3497 = vpop.f32.mrf.mxu0
      %v3498 = vadd.f32 0.0, %v3497
      %3499 = vdwg.mxu0
      %3500 = vmatpush.bf16.msra.mxu0 0
      %3501 = vmatpush.bf16.msra.mxu0 0
      %3502 = vmatpush.bf16.msra.mxu0 0
      %3503 = vmatpush.bf16.msra.mxu0 0
      %3504 = vmatpush.bf16.msra.mxu0 0
      %3505 = vmatpush.bf16.msra.mxu0 0
      %3506 = vmatpush.bf16.msra.mxu0 %v3344
      %3507 = vmatpush.bf16.msra.mxu0 %v3334
      %3508 = vmatmul.bf16.gmra.mxu0 %v362
      %v3509 = vpop.f32.mrf.mxu0
      %v3510 = vadd.f32 0.0, %v3509
      %v3511 = vpop.f32.mrf.mxu0
      %v3512 = vadd.f32 0.0, %v3511
      %3513 = vmatmul.bf16.gmra.mxu0 %v365
      %v3514 = vpop.f32.mrf.mxu0
      %v3515 = vadd.f32 0.0, %v3514
      %v3516 = vpop.f32.mrf.mxu0
      %v3517 = vadd.f32 0.0, %v3516
      %3518 = vdwg.mxu0
      %3519 = vmatpush.bf16.msra.mxu0 0
      %3520 = vmatpush.bf16.msra.mxu0 0
      %3521 = vmatpush.bf16.msra.mxu0 0
      %3522 = vmatpush.bf16.msra.mxu0 0
      %3523 = vmatpush.bf16.msra.mxu0 0
      %3524 = vmatpush.bf16.msra.mxu0 0
      %3525 = vmatpush.bf16.msra.mxu0 %v3345
      %3526 = vmatpush.bf16.msra.mxu0 %v3335
      %3527 = vmatmul.bf16.gmra.mxu0 %v362
      %v3528 = vpop.f32.mrf.mxu0
      %v3529 = vadd.f32 0.0, %v3528
      %v3530 = vpop.f32.mrf.mxu0
      %v3531 = vadd.f32 0.0, %v3530
      %3532 = vmatmul.bf16.gmra.mxu0 %v365
      %v3533 = vpop.f32.mrf.mxu0
      %v3534 = vadd.f32 0.0, %v3533
      %v3535 = vpop.f32.mrf.mxu0
      %v3536 = vadd.f32 0.0, %v3535
      %3537 = vdwg.mxu0
      %3538 = vmatpush.bf16.msra.mxu0 0
      %3539 = vmatpush.bf16.msra.mxu0 0
      %3540 = vmatpush.bf16.msra.mxu0 0
      %3541 = vmatpush.bf16.msra.mxu0 0
      %3542 = vmatpush.bf16.msra.mxu0 0
      %3543 = vmatpush.bf16.msra.mxu0 0
      %3544 = vmatpush.bf16.msra.mxu0 %v3346
      %3545 = vmatpush.bf16.msra.mxu0 %v3336
      %3546 = vmatmul.bf16.gmra.mxu0 %v362
      %v3547 = vpop.f32.mrf.mxu0
      %v3548 = vadd.f32 0.0, %v3547
      %v3549 = vpop.f32.mrf.mxu0
      %v3550 = vadd.f32 0.0, %v3549
      %3551 = vmatmul.bf16.gmra.mxu0 %v365
      %v3552 = vpop.f32.mrf.mxu0
      %v3553 = vadd.f32 0.0, %v3552
      %v3554 = vpop.f32.mrf.mxu0
      %v3555 = vadd.f32 0.0, %v3554
      %3556 = vdwg.mxu0
      %v3557 = vmax.f32 %v3377, %v3415
      %v3558 = vmax.f32 %v3396, %v3434
      %v3559 = vmax.f32 %v3379, %v3417
      %v3560 = vmax.f32 %v3398, %v3436
      %v3561 = vmax.f32 %v3382, %v3420
      %v3562 = vmax.f32 %v3401, %v3439
      %v3563 = vmax.f32 %v3384, %v3422
      %v3564 = vmax.f32 %v3403, %v3441
      %v3565 = vmax.f32 %v3557, %v3453
      %v3566 = vmax.f32 %v3558, %v3472
      %v3567 = vmax.f32 %v3559, %v3455
      %v3568 = vmax.f32 %v3560, %v3474
      %v3569 = vmax.f32 %v3561, %v3458
      %v3570 = vmax.f32 %v3562, %v3477
      %v3571 = vmax.f32 %v3563, %v3460
      %v3572 = vmax.f32 %v3564, %v3479
      %v3573 = vmax.f32 %v3565, %v3491
      %v3574 = vmax.f32 %v3566, %v3510
      %v3575 = vmax.f32 %v3567, %v3493
      %v3576 = vmax.f32 %v3568, %v3512
      %v3577 = vmax.f32 %v3569, %v3496
      %v3578 = vmax.f32 %v3570, %v3515
      %v3579 = vmax.f32 %v3571, %v3498
      %v3580 = vmax.f32 %v3572, %v3517
      %v3581 = vmax.f32 %v3573, %v3529
      %v3582 = vmax.f32 %v3574, %v3548
      %v3583 = vmax.f32 %v3575, %v3531
      %v3584 = vmax.f32 %v3576, %v3550
      %v3585 = vmax.f32 %v3577, %v3534
      %v3586 = vmax.f32 %v3578, %v3553
      %v3587 = vmax.f32 %v3579, %v3536
      %v3588 = vmax.f32 %v3580, %v3555
      %v3589 = vmax.f32 %v3581, %v3585
      %v3590 = vmax.f32 %v3582, %v3586
      %v3591 = vmax.f32 %v3583, %v3587
      %v3592 = vmax.f32 %v3584, %v3588
      %vm3593 = vcmp.ge.f32.partialorder %v3589, 0.0
      %vm3594 = vcmp.ge.f32.partialorder %v3590, 0.0
      %vm3595 = vcmp.ge.f32.partialorder %v3591, 0.0
      %vm3596 = vcmp.ge.f32.partialorder %v3592, 0.0
      %v3597 = vmul.f32 %v3589, 0.01
      %v3598 = vmul.f32 %v3590, 0.01
      %v3599 = vmul.f32 %v3591, 0.01
      %v3600 = vmul.f32 %v3592, 0.01
      %v3601 = vsel %vm3593, %v3589, %v3597
      %v3602 = vsel %vm3594, %v3590, %v3598
      %v3603 = vsel %vm3595, %v3591, %v3599
      %v3604 = vsel %vm3596, %v3592, %v3600
      %vm3605 = vcmp.ge.f32.partialorder %v3601, 0.0
      %vm3606 = vcmp.ge.f32.partialorder %v3602, 0.0
      %vm3607 = vcmp.ge.f32.partialorder %v3603, 0.0
      %vm3608 = vcmp.ge.f32.partialorder %v3604, 0.0
      %v3609 = vmul.f32 %v3601, 0.01
      %v3610 = vmul.f32 %v3602, 0.01
      %v3611 = vmul.f32 %v3603, 0.01
      %v3612 = vmul.f32 %v3604, 0.01
      %v3613 = vsel %vm3605, %v3601, %v3609
      %v3614 = vsel %vm3606, %v3602, %v3610
      %v3615 = vsel %vm3607, %v3603, %v3611
      %v3616 = vsel %vm3608, %v3604, %v3612
      %3617 = vst [vmem:[#allocation2 + $0x100] sm:$0xff] %v3613
      %3618 = vst [vmem:[#allocation2 + $0x108] sm:$0xff] %v3614
      %3619 = vst [vmem:[#allocation2 + $0x110] sm:$0xff] %v3615
      %3620 = vst [vmem:[#allocation2 + $0x118] sm:$0xff] %v3616
      %s3621 = scalar_lea.vmem %s219, 1440
      %v3622 = vld [vmem:[%s3621] sm:$0xff]
      %v3623 = vld [vmem:[%s3621 + $0x8] sm:$0xff]
      %v3624 = vld [vmem:[%s3621 + $0x10] sm:$0xff]
      %v3625 = vld [vmem:[%s3621 + $0x18] sm:$0xff]
      %v3626 = vld [vmem:[%s3621 + $0x20] sm:$0xff]
      %v3627 = vld [vmem:[%s3621 + $0x28] sm:$0xff]
      %v3628 = vld [vmem:[%s3621 + $0x30] sm:$0xff]
      %v3629 = vld [vmem:[%s3621 + $0x38] sm:$0xff]
      %v3630 = vld [vmem:[%s3621 + $0x40] sm:$0xff]
      %v3631 = vld [vmem:[%s3621 + $0x48] sm:$0xff]
      %v3632 = vld [vmem:[%s3621 + $0x50] sm:$0xff]
      %v3633 = vld [vmem:[%s3621 + $0x58] sm:$0xff]
      %v3634 = vld [vmem:[%s3621 + $0x60] sm:$0xff]
      %v3635 = vld [vmem:[%s3621 + $0x68] sm:$0xff]
      %v3636 = vld [vmem:[%s3621 + $0x70] sm:$0xff]
      %v3637 = vld [vmem:[%s3621 + $0x78] sm:$0xff]
      %v3638 = vld [vmem:[%s3621 + $0x80] sm:$0xff]
      %v3639 = vld [vmem:[%s3621 + $0x88] sm:$0xff]
      %v3640 = vld [vmem:[%s3621 + $0x90] sm:$0xff]
      %v3641 = vld [vmem:[%s3621 + $0x98] sm:$0xff]
      %v3662 = vunpack.c.l.b16 %v3622
      %v3663 = vunpack.c.h.b16 %v3622
      %v3664 = vunpack.c.l.b16 %v3623
      %v3665 = vunpack.c.h.b16 %v3623
      %v3666 = vunpack.c.l.b16 %v3624
      %v3667 = vunpack.c.h.b16 %v3624
      %v3668 = vunpack.c.l.b16 %v3625
      %v3669 = vunpack.c.h.b16 %v3625
      %v3670 = vunpack.c.l.b16 %v3626
      %v3671 = vunpack.c.h.b16 %v3626
      %v3672 = vunpack.c.l.b16 %v3627
      %v3673 = vunpack.c.h.b16 %v3627
      %v3674 = vunpack.c.l.b16 %v3628
      %v3675 = vunpack.c.h.b16 %v3628
      %v3676 = vunpack.c.l.b16 %v3629
      %v3677 = vunpack.c.h.b16 %v3629
      %v3678 = vunpack.c.l.b16 %v3630
      %v3679 = vunpack.c.h.b16 %v3630
      %v3680 = vunpack.c.l.b16 %v3631
      %v3681 = vunpack.c.h.b16 %v3631
      %v3682 = vunpack.c.l.b16 %v3632
      %v3683 = vunpack.c.h.b16 %v3632
      %v3684 = vunpack.c.l.b16 %v3633
      %v3685 = vunpack.c.h.b16 %v3633
      %v3686 = vunpack.c.l.b16 %v3634
      %v3687 = vunpack.c.h.b16 %v3634
      %v3688 = vunpack.c.l.b16 %v3635
      %v3689 = vunpack.c.h.b16 %v3635
      %v3690 = vunpack.c.l.b16 %v3636
      %v3691 = vunpack.c.h.b16 %v3636
      %v3692 = vunpack.c.l.b16 %v3637
      %v3693 = vunpack.c.h.b16 %v3637
      %v3694 = vunpack.c.l.b16 %v3638
      %v3695 = vunpack.c.h.b16 %v3638
      %v3696 = vunpack.c.l.b16 %v3639
      %v3697 = vunpack.c.h.b16 %v3639
      %v3698 = vunpack.c.l.b16 %v3640
      %v3699 = vunpack.c.h.b16 %v3640
      %v3700 = vunpack.c.l.b16 %v3641
      %v3701 = vunpack.c.h.b16 %v3641
      %v3702 = vpack.c.b16 %v3672, %v3662
      %v3703 = vpack.c.b16 %v3673, %v3663
      %v3704 = vpack.c.b16 %v3674, %v3664
      %v3705 = vpack.c.b16 %v3675, %v3665
      %v3706 = vpack.c.b16 %v3676, %v3666
      %v3707 = vpack.c.b16 %v3677, %v3667
      %v3708 = vpack.c.b16 %v3678, %v3668
      %v3709 = vpack.c.b16 %v3679, %v3669
      %v3710 = vpack.c.b16 %v3680, %v3670
      %v3711 = vpack.c.b16 %v3681, %v3671
      %v3712 = vpack.c.b16 %v3692, %v3682
      %v3713 = vpack.c.b16 %v3693, %v3683
      %v3714 = vpack.c.b16 %v3694, %v3684
      %v3715 = vpack.c.b16 %v3695, %v3685
      %v3716 = vpack.c.b16 %v3696, %v3686
      %v3717 = vpack.c.b16 %v3697, %v3687
      %v3718 = vpack.c.b16 %v3698, %v3688
      %v3719 = vpack.c.b16 %v3699, %v3689
      %v3720 = vpack.c.b16 %v3700, %v3690
      %v3721 = vpack.c.b16 %v3701, %v3691
      %3742 = vmatpush.bf16.msra.mxu0 0
      %3743 = vmatpush.bf16.msra.mxu0 0
      %3744 = vmatpush.bf16.msra.mxu0 0
      %3745 = vmatpush.bf16.msra.mxu0 0
      %3746 = vmatpush.bf16.msra.mxu0 0
      %3747 = vmatpush.bf16.msra.mxu0 0
      %3748 = vmatpush.bf16.msra.mxu0 %v3712
      %3749 = vmatpush.bf16.msra.mxu0 %v3702
      %3750 = vmatmul.bf16.gmra.mxu0 %v362
      %v3751 = vpop.f32.mrf.mxu0
      %v3752 = vadd.f32 0.0, %v3751
      %v3753 = vpop.f32.mrf.mxu0
      %v3754 = vadd.f32 0.0, %v3753
      %3755 = vmatmul.bf16.gmra.mxu0 %v365
      %v3756 = vpop.f32.mrf.mxu0
      %v3757 = vadd.f32 0.0, %v3756
      %v3758 = vpop.f32.mrf.mxu0
      %v3759 = vadd.f32 0.0, %v3758
      %3760 = vdwg.mxu0
      %3761 = vmatpush.bf16.msra.mxu0 0
      %3762 = vmatpush.bf16.msra.mxu0 0
      %3763 = vmatpush.bf16.msra.mxu0 0
      %3764 = vmatpush.bf16.msra.mxu0 0
      %3765 = vmatpush.bf16.msra.mxu0 0
      %3766 = vmatpush.bf16.msra.mxu0 0
      %3767 = vmatpush.bf16.msra.mxu0 %v3713
      %3768 = vmatpush.bf16.msra.mxu0 %v3703
      %3769 = vmatmul.bf16.gmra.mxu0 %v362
      %v3770 = vpop.f32.mrf.mxu0
      %v3771 = vadd.f32 0.0, %v3770
      %v3772 = vpop.f32.mrf.mxu0
      %v3773 = vadd.f32 0.0, %v3772
      %3774 = vmatmul.bf16.gmra.mxu0 %v365
      %v3775 = vpop.f32.mrf.mxu0
      %v3776 = vadd.f32 0.0, %v3775
      %v3777 = vpop.f32.mrf.mxu0
      %v3778 = vadd.f32 0.0, %v3777
      %3779 = vdwg.mxu0
      %3780 = vmatpush.bf16.msra.mxu0 0
      %3781 = vmatpush.bf16.msra.mxu0 0
      %3782 = vmatpush.bf16.msra.mxu0 0
      %3783 = vmatpush.bf16.msra.mxu0 0
      %3784 = vmatpush.bf16.msra.mxu0 0
      %3785 = vmatpush.bf16.msra.mxu0 0
      %3786 = vmatpush.bf16.msra.mxu0 %v3714
      %3787 = vmatpush.bf16.msra.mxu0 %v3704
      %3788 = vmatmul.bf16.gmra.mxu0 %v362
      %v3789 = vpop.f32.mrf.mxu0
      %v3790 = vadd.f32 0.0, %v3789
      %v3791 = vpop.f32.mrf.mxu0
      %v3792 = vadd.f32 0.0, %v3791
      %3793 = vmatmul.bf16.gmra.mxu0 %v365
      %v3794 = vpop.f32.mrf.mxu0
      %v3795 = vadd.f32 0.0, %v3794
      %v3796 = vpop.f32.mrf.mxu0
      %v3797 = vadd.f32 0.0, %v3796
      %3798 = vdwg.mxu0
      %3799 = vmatpush.bf16.msra.mxu0 0
      %3800 = vmatpush.bf16.msra.mxu0 0
      %3801 = vmatpush.bf16.msra.mxu0 0
      %3802 = vmatpush.bf16.msra.mxu0 0
      %3803 = vmatpush.bf16.msra.mxu0 0
      %3804 = vmatpush.bf16.msra.mxu0 0
      %3805 = vmatpush.bf16.msra.mxu0 %v3715
      %3806 = vmatpush.bf16.msra.mxu0 %v3705
      %3807 = vmatmul.bf16.gmra.mxu0 %v362
      %v3808 = vpop.f32.mrf.mxu0
      %v3809 = vadd.f32 0.0, %v3808
      %v3810 = vpop.f32.mrf.mxu0
      %v3811 = vadd.f32 0.0, %v3810
      %3812 = vmatmul.bf16.gmra.mxu0 %v365
      %v3813 = vpop.f32.mrf.mxu0
      %v3814 = vadd.f32 0.0, %v3813
      %v3815 = vpop.f32.mrf.mxu0
      %v3816 = vadd.f32 0.0, %v3815
      %3817 = vdwg.mxu0
      %3818 = vmatpush.bf16.msra.mxu0 0
      %3819 = vmatpush.bf16.msra.mxu0 0
      %3820 = vmatpush.bf16.msra.mxu0 0
      %3821 = vmatpush.bf16.msra.mxu0 0
      %3822 = vmatpush.bf16.msra.mxu0 0
      %3823 = vmatpush.bf16.msra.mxu0 0
      %3824 = vmatpush.bf16.msra.mxu0 %v3716
      %3825 = vmatpush.bf16.msra.mxu0 %v3706
      %3826 = vmatmul.bf16.gmra.mxu0 %v362
      %v3827 = vpop.f32.mrf.mxu0
      %v3828 = vadd.f32 0.0, %v3827
      %v3829 = vpop.f32.mrf.mxu0
      %v3830 = vadd.f32 0.0, %v3829
      %3831 = vmatmul.bf16.gmra.mxu0 %v365
      %v3832 = vpop.f32.mrf.mxu0
      %v3833 = vadd.f32 0.0, %v3832
      %v3834 = vpop.f32.mrf.mxu0
      %v3835 = vadd.f32 0.0, %v3834
      %3836 = vdwg.mxu0
      %3837 = vmatpush.bf16.msra.mxu0 0
      %3838 = vmatpush.bf16.msra.mxu0 0
      %3839 = vmatpush.bf16.msra.mxu0 0
      %3840 = vmatpush.bf16.msra.mxu0 0
      %3841 = vmatpush.bf16.msra.mxu0 0
      %3842 = vmatpush.bf16.msra.mxu0 0
      %3843 = vmatpush.bf16.msra.mxu0 %v3717
      %3844 = vmatpush.bf16.msra.mxu0 %v3707
      %3845 = vmatmul.bf16.gmra.mxu0 %v362
      %v3846 = vpop.f32.mrf.mxu0
      %v3847 = vadd.f32 0.0, %v3846
      %v3848 = vpop.f32.mrf.mxu0
      %v3849 = vadd.f32 0.0, %v3848
      %3850 = vmatmul.bf16.gmra.mxu0 %v365
      %v3851 = vpop.f32.mrf.mxu0
      %v3852 = vadd.f32 0.0, %v3851
      %v3853 = vpop.f32.mrf.mxu0
      %v3854 = vadd.f32 0.0, %v3853
      %3855 = vdwg.mxu0
      %3856 = vmatpush.bf16.msra.mxu0 0
      %3857 = vmatpush.bf16.msra.mxu0 0
      %3858 = vmatpush.bf16.msra.mxu0 0
      %3859 = vmatpush.bf16.msra.mxu0 0
      %3860 = vmatpush.bf16.msra.mxu0 0
      %3861 = vmatpush.bf16.msra.mxu0 0
      %3862 = vmatpush.bf16.msra.mxu0 %v3718
      %3863 = vmatpush.bf16.msra.mxu0 %v3708
      %3864 = vmatmul.bf16.gmra.mxu0 %v362
      %v3865 = vpop.f32.mrf.mxu0
      %v3866 = vadd.f32 0.0, %v3865
      %v3867 = vpop.f32.mrf.mxu0
      %v3868 = vadd.f32 0.0, %v3867
      %3869 = vmatmul.bf16.gmra.mxu0 %v365
      %v3870 = vpop.f32.mrf.mxu0
      %v3871 = vadd.f32 0.0, %v3870
      %v3872 = vpop.f32.mrf.mxu0
      %v3873 = vadd.f32 0.0, %v3872
      %3874 = vdwg.mxu0
      %3875 = vmatpush.bf16.msra.mxu0 0
      %3876 = vmatpush.bf16.msra.mxu0 0
      %3877 = vmatpush.bf16.msra.mxu0 0
      %3878 = vmatpush.bf16.msra.mxu0 0
      %3879 = vmatpush.bf16.msra.mxu0 0
      %3880 = vmatpush.bf16.msra.mxu0 0
      %3881 = vmatpush.bf16.msra.mxu0 %v3719
      %3882 = vmatpush.bf16.msra.mxu0 %v3709
      %3883 = vmatmul.bf16.gmra.mxu0 %v362
      %v3884 = vpop.f32.mrf.mxu0
      %v3885 = vadd.f32 0.0, %v3884
      %v3886 = vpop.f32.mrf.mxu0
      %v3887 = vadd.f32 0.0, %v3886
      %3888 = vmatmul.bf16.gmra.mxu0 %v365
      %v3889 = vpop.f32.mrf.mxu0
      %v3890 = vadd.f32 0.0, %v3889
      %v3891 = vpop.f32.mrf.mxu0
      %v3892 = vadd.f32 0.0, %v3891
      %3893 = vdwg.mxu0
      %3894 = vmatpush.bf16.msra.mxu0 0
      %3895 = vmatpush.bf16.msra.mxu0 0
      %3896 = vmatpush.bf16.msra.mxu0 0
      %3897 = vmatpush.bf16.msra.mxu0 0
      %3898 = vmatpush.bf16.msra.mxu0 0
      %3899 = vmatpush.bf16.msra.mxu0 0
      %3900 = vmatpush.bf16.msra.mxu0 %v3720
      %3901 = vmatpush.bf16.msra.mxu0 %v3710
      %3902 = vmatmul.bf16.gmra.mxu0 %v362
      %v3903 = vpop.f32.mrf.mxu0
      %v3904 = vadd.f32 0.0, %v3903
      %v3905 = vpop.f32.mrf.mxu0
      %v3906 = vadd.f32 0.0, %v3905
      %3907 = vmatmul.bf16.gmra.mxu0 %v365
      %v3908 = vpop.f32.mrf.mxu0
      %v3909 = vadd.f32 0.0, %v3908
      %v3910 = vpop.f32.mrf.mxu0
      %v3911 = vadd.f32 0.0, %v3910
      %3912 = vdwg.mxu0
      %3913 = vmatpush.bf16.msra.mxu0 0
      %3914 = vmatpush.bf16.msra.mxu0 0
      %3915 = vmatpush.bf16.msra.mxu0 0
      %3916 = vmatpush.bf16.msra.mxu0 0
      %3917 = vmatpush.bf16.msra.mxu0 0
      %3918 = vmatpush.bf16.msra.mxu0 0
      %3919 = vmatpush.bf16.msra.mxu0 %v3721
      %3920 = vmatpush.bf16.msra.mxu0 %v3711
      %3921 = vmatmul.bf16.gmra.mxu0 %v362
      %v3922 = vpop.f32.mrf.mxu0
      %v3923 = vadd.f32 0.0, %v3922
      %v3924 = vpop.f32.mrf.mxu0
      %v3925 = vadd.f32 0.0, %v3924
      %3926 = vmatmul.bf16.gmra.mxu0 %v365
      %v3927 = vpop.f32.mrf.mxu0
      %v3928 = vadd.f32 0.0, %v3927
      %v3929 = vpop.f32.mrf.mxu0
      %v3930 = vadd.f32 0.0, %v3929
      %3931 = vdwg.mxu0
      %v3932 = vmax.f32 %v3752, %v3790
      %v3933 = vmax.f32 %v3771, %v3809
      %v3934 = vmax.f32 %v3754, %v3792
      %v3935 = vmax.f32 %v3773, %v3811
      %v3936 = vmax.f32 %v3757, %v3795
      %v3937 = vmax.f32 %v3776, %v3814
      %v3938 = vmax.f32 %v3759, %v3797
      %v3939 = vmax.f32 %v3778, %v3816
      %v3940 = vmax.f32 %v3932, %v3828
      %v3941 = vmax.f32 %v3933, %v3847
      %v3942 = vmax.f32 %v3934, %v3830
      %v3943 = vmax.f32 %v3935, %v3849
      %v3944 = vmax.f32 %v3936, %v3833
      %v3945 = vmax.f32 %v3937, %v3852
      %v3946 = vmax.f32 %v3938, %v3835
      %v3947 = vmax.f32 %v3939, %v3854
      %v3948 = vmax.f32 %v3940, %v3866
      %v3949 = vmax.f32 %v3941, %v3885
      %v3950 = vmax.f32 %v3942, %v3868
      %v3951 = vmax.f32 %v3943, %v3887
      %v3952 = vmax.f32 %v3944, %v3871
      %v3953 = vmax.f32 %v3945, %v3890
      %v3954 = vmax.f32 %v3946, %v3873
      %v3955 = vmax.f32 %v3947, %v3892
      %v3956 = vmax.f32 %v3948, %v3904
      %v3957 = vmax.f32 %v3949, %v3923
      %v3958 = vmax.f32 %v3950, %v3906
      %v3959 = vmax.f32 %v3951, %v3925
      %v3960 = vmax.f32 %v3952, %v3909
      %v3961 = vmax.f32 %v3953, %v3928
      %v3962 = vmax.f32 %v3954, %v3911
      %v3963 = vmax.f32 %v3955, %v3930
      %v3964 = vmax.f32 %v3956, %v3960
      %v3965 = vmax.f32 %v3957, %v3961
      %v3966 = vmax.f32 %v3958, %v3962
      %v3967 = vmax.f32 %v3959, %v3963
      %vm3968 = vcmp.ge.f32.partialorder %v3964, 0.0
      %vm3969 = vcmp.ge.f32.partialorder %v3965, 0.0
      %vm3970 = vcmp.ge.f32.partialorder %v3966, 0.0
      %vm3971 = vcmp.ge.f32.partialorder %v3967, 0.0
      %v3972 = vmul.f32 %v3964, 0.01
      %v3973 = vmul.f32 %v3965, 0.01
      %v3974 = vmul.f32 %v3966, 0.01
      %v3975 = vmul.f32 %v3967, 0.01
      %v3976 = vsel %vm3968, %v3964, %v3972
      %v3977 = vsel %vm3969, %v3965, %v3973
      %v3978 = vsel %vm3970, %v3966, %v3974
      %v3979 = vsel %vm3971, %v3967, %v3975
      %vm3980 = vcmp.ge.f32.partialorder %v3976, 0.0
      %vm3981 = vcmp.ge.f32.partialorder %v3977, 0.0
      %vm3982 = vcmp.ge.f32.partialorder %v3978, 0.0
      %vm3983 = vcmp.ge.f32.partialorder %v3979, 0.0
      %v3984 = vmul.f32 %v3976, 0.01
      %v3985 = vmul.f32 %v3977, 0.01
      %v3986 = vmul.f32 %v3978, 0.01
      %v3987 = vmul.f32 %v3979, 0.01
      %v3988 = vsel %vm3980, %v3976, %v3984
      %v3989 = vsel %vm3981, %v3977, %v3985
      %v3990 = vsel %vm3982, %v3978, %v3986
      %v3991 = vsel %vm3983, %v3979, %v3987
      %3992 = vst [vmem:[#allocation2 + $0x120] sm:$0xff] %v3988
      %3993 = vst [vmem:[#allocation2 + $0x128] sm:$0xff] %v3989
      %3994 = vst [vmem:[#allocation2 + $0x130] sm:$0xff] %v3990
      %3995 = vst [vmem:[#allocation2 + $0x138] sm:$0xff] %v3991
      %s3996 = scalar_lea.vmem %s219, 1600
      %v3997 = vld [vmem:[%s3996] sm:$0xff]
      %v3998 = vld [vmem:[%s3996 + $0x8] sm:$0xff]
      %v3999 = vld [vmem:[%s3996 + $0x10] sm:$0xff]
      %v4000 = vld [vmem:[%s3996 + $0x18] sm:$0xff]
      %v4001 = vld [vmem:[%s3996 + $0x20] sm:$0xff]
      %v4002 = vld [vmem:[%s3996 + $0x28] sm:$0xff]
      %v4003 = vld [vmem:[%s3996 + $0x30] sm:$0xff]
      %v4004 = vld [vmem:[%s3996 + $0x38] sm:$0xff]
      %v4005 = vld [vmem:[%s3996 + $0x40] sm:$0xff]
      %v4006 = vld [vmem:[%s3996 + $0x48] sm:$0xff]
      %v4007 = vld [vmem:[%s3996 + $0x50] sm:$0xff]
      %v4008 = vld [vmem:[%s3996 + $0x58] sm:$0xff]
      %v4009 = vld [vmem:[%s3996 + $0x60] sm:$0xff]
      %v4010 = vld [vmem:[%s3996 + $0x68] sm:$0xff]
      %v4011 = vld [vmem:[%s3996 + $0x70] sm:$0xff]
      %v4012 = vld [vmem:[%s3996 + $0x78] sm:$0xff]
      %v4013 = vld [vmem:[%s3996 + $0x80] sm:$0xff]
      %v4014 = vld [vmem:[%s3996 + $0x88] sm:$0xff]
      %v4015 = vld [vmem:[%s3996 + $0x90] sm:$0xff]
      %v4016 = vld [vmem:[%s3996 + $0x98] sm:$0xff]
      %v4037 = vunpack.c.l.b16 %v3997
      %v4038 = vunpack.c.h.b16 %v3997
      %v4039 = vunpack.c.l.b16 %v3998
      %v4040 = vunpack.c.h.b16 %v3998
      %v4041 = vunpack.c.l.b16 %v3999
      %v4042 = vunpack.c.h.b16 %v3999
      %v4043 = vunpack.c.l.b16 %v4000
      %v4044 = vunpack.c.h.b16 %v4000
      %v4045 = vunpack.c.l.b16 %v4001
      %v4046 = vunpack.c.h.b16 %v4001
      %v4047 = vunpack.c.l.b16 %v4002
      %v4048 = vunpack.c.h.b16 %v4002
      %v4049 = vunpack.c.l.b16 %v4003
      %v4050 = vunpack.c.h.b16 %v4003
      %v4051 = vunpack.c.l.b16 %v4004
      %v4052 = vunpack.c.h.b16 %v4004
      %v4053 = vunpack.c.l.b16 %v4005
      %v4054 = vunpack.c.h.b16 %v4005
      %v4055 = vunpack.c.l.b16 %v4006
      %v4056 = vunpack.c.h.b16 %v4006
      %v4057 = vunpack.c.l.b16 %v4007
      %v4058 = vunpack.c.h.b16 %v4007
      %v4059 = vunpack.c.l.b16 %v4008
      %v4060 = vunpack.c.h.b16 %v4008
      %v4061 = vunpack.c.l.b16 %v4009
      %v4062 = vunpack.c.h.b16 %v4009
      %v4063 = vunpack.c.l.b16 %v4010
      %v4064 = vunpack.c.h.b16 %v4010
      %v4065 = vunpack.c.l.b16 %v4011
      %v4066 = vunpack.c.h.b16 %v4011
      %v4067 = vunpack.c.l.b16 %v4012
      %v4068 = vunpack.c.h.b16 %v4012
      %v4069 = vunpack.c.l.b16 %v4013
      %v4070 = vunpack.c.h.b16 %v4013
      %v4071 = vunpack.c.l.b16 %v4014
      %v4072 = vunpack.c.h.b16 %v4014
      %v4073 = vunpack.c.l.b16 %v4015
      %v4074 = vunpack.c.h.b16 %v4015
      %v4075 = vunpack.c.l.b16 %v4016
      %v4076 = vunpack.c.h.b16 %v4016
      %v4077 = vpack.c.b16 %v4047, %v4037
      %v4078 = vpack.c.b16 %v4048, %v4038
      %v4079 = vpack.c.b16 %v4049, %v4039
      %v4080 = vpack.c.b16 %v4050, %v4040
      %v4081 = vpack.c.b16 %v4051, %v4041
      %v4082 = vpack.c.b16 %v4052, %v4042
      %v4083 = vpack.c.b16 %v4053, %v4043
      %v4084 = vpack.c.b16 %v4054, %v4044
      %v4085 = vpack.c.b16 %v4055, %v4045
      %v4086 = vpack.c.b16 %v4056, %v4046
      %v4087 = vpack.c.b16 %v4067, %v4057
      %v4088 = vpack.c.b16 %v4068, %v4058
      %v4089 = vpack.c.b16 %v4069, %v4059
      %v4090 = vpack.c.b16 %v4070, %v4060
      %v4091 = vpack.c.b16 %v4071, %v4061
      %v4092 = vpack.c.b16 %v4072, %v4062
      %v4093 = vpack.c.b16 %v4073, %v4063
      %v4094 = vpack.c.b16 %v4074, %v4064
      %v4095 = vpack.c.b16 %v4075, %v4065
      %v4096 = vpack.c.b16 %v4076, %v4066
      %4117 = vmatpush.bf16.msra.mxu0 0
      %4118 = vmatpush.bf16.msra.mxu0 0
      %4119 = vmatpush.bf16.msra.mxu0 0
      %4120 = vmatpush.bf16.msra.mxu0 0
      %4121 = vmatpush.bf16.msra.mxu0 0
      %4122 = vmatpush.bf16.msra.mxu0 0
      %4123 = vmatpush.bf16.msra.mxu0 %v4087
      %4124 = vmatpush.bf16.msra.mxu0 %v4077
      %4125 = vmatmul.bf16.gmra.mxu0 %v362
      %v4126 = vpop.f32.mrf.mxu0
      %v4127 = vadd.f32 0.0, %v4126
      %v4128 = vpop.f32.mrf.mxu0
      %v4129 = vadd.f32 0.0, %v4128
      %4130 = vmatmul.bf16.gmra.mxu0 %v365
      %v4131 = vpop.f32.mrf.mxu0
      %v4132 = vadd.f32 0.0, %v4131
      %v4133 = vpop.f32.mrf.mxu0
      %v4134 = vadd.f32 0.0, %v4133
      %4135 = vdwg.mxu0
      %4136 = vmatpush.bf16.msra.mxu0 0
      %4137 = vmatpush.bf16.msra.mxu0 0
      %4138 = vmatpush.bf16.msra.mxu0 0
      %4139 = vmatpush.bf16.msra.mxu0 0
      %4140 = vmatpush.bf16.msra.mxu0 0
      %4141 = vmatpush.bf16.msra.mxu0 0
      %4142 = vmatpush.bf16.msra.mxu0 %v4088
      %4143 = vmatpush.bf16.msra.mxu0 %v4078
      %4144 = vmatmul.bf16.gmra.mxu0 %v362
      %v4145 = vpop.f32.mrf.mxu0
      %v4146 = vadd.f32 0.0, %v4145
      %v4147 = vpop.f32.mrf.mxu0
      %v4148 = vadd.f32 0.0, %v4147
      %4149 = vmatmul.bf16.gmra.mxu0 %v365
      %v4150 = vpop.f32.mrf.mxu0
      %v4151 = vadd.f32 0.0, %v4150
      %v4152 = vpop.f32.mrf.mxu0
      %v4153 = vadd.f32 0.0, %v4152
      %4154 = vdwg.mxu0
      %4155 = vmatpush.bf16.msra.mxu0 0
      %4156 = vmatpush.bf16.msra.mxu0 0
      %4157 = vmatpush.bf16.msra.mxu0 0
      %4158 = vmatpush.bf16.msra.mxu0 0
      %4159 = vmatpush.bf16.msra.mxu0 0
      %4160 = vmatpush.bf16.msra.mxu0 0
      %4161 = vmatpush.bf16.msra.mxu0 %v4089
      %4162 = vmatpush.bf16.msra.mxu0 %v4079
      %4163 = vmatmul.bf16.gmra.mxu0 %v362
      %v4164 = vpop.f32.mrf.mxu0
      %v4165 = vadd.f32 0.0, %v4164
      %v4166 = vpop.f32.mrf.mxu0
      %v4167 = vadd.f32 0.0, %v4166
      %4168 = vmatmul.bf16.gmra.mxu0 %v365
      %v4169 = vpop.f32.mrf.mxu0
      %v4170 = vadd.f32 0.0, %v4169
      %v4171 = vpop.f32.mrf.mxu0
      %v4172 = vadd.f32 0.0, %v4171
      %4173 = vdwg.mxu0
      %4174 = vmatpush.bf16.msra.mxu0 0
      %4175 = vmatpush.bf16.msra.mxu0 0
      %4176 = vmatpush.bf16.msra.mxu0 0
      %4177 = vmatpush.bf16.msra.mxu0 0
      %4178 = vmatpush.bf16.msra.mxu0 0
      %4179 = vmatpush.bf16.msra.mxu0 0
      %4180 = vmatpush.bf16.msra.mxu0 %v4090
      %4181 = vmatpush.bf16.msra.mxu0 %v4080
      %4182 = vmatmul.bf16.gmra.mxu0 %v362
      %v4183 = vpop.f32.mrf.mxu0
      %v4184 = vadd.f32 0.0, %v4183
      %v4185 = vpop.f32.mrf.mxu0
      %v4186 = vadd.f32 0.0, %v4185
      %4187 = vmatmul.bf16.gmra.mxu0 %v365
      %v4188 = vpop.f32.mrf.mxu0
      %v4189 = vadd.f32 0.0, %v4188
      %v4190 = vpop.f32.mrf.mxu0
      %v4191 = vadd.f32 0.0, %v4190
      %4192 = vdwg.mxu0
      %4193 = vmatpush.bf16.msra.mxu0 0
      %4194 = vmatpush.bf16.msra.mxu0 0
      %4195 = vmatpush.bf16.msra.mxu0 0
      %4196 = vmatpush.bf16.msra.mxu0 0
      %4197 = vmatpush.bf16.msra.mxu0 0
      %4198 = vmatpush.bf16.msra.mxu0 0
      %4199 = vmatpush.bf16.msra.mxu0 %v4091
      %4200 = vmatpush.bf16.msra.mxu0 %v4081
      %4201 = vmatmul.bf16.gmra.mxu0 %v362
      %v4202 = vpop.f32.mrf.mxu0
      %v4203 = vadd.f32 0.0, %v4202
      %v4204 = vpop.f32.mrf.mxu0
      %v4205 = vadd.f32 0.0, %v4204
      %4206 = vmatmul.bf16.gmra.mxu0 %v365
      %v4207 = vpop.f32.mrf.mxu0
      %v4208 = vadd.f32 0.0, %v4207
      %v4209 = vpop.f32.mrf.mxu0
      %v4210 = vadd.f32 0.0, %v4209
      %4211 = vdwg.mxu0
      %4212 = vmatpush.bf16.msra.mxu0 0
      %4213 = vmatpush.bf16.msra.mxu0 0
      %4214 = vmatpush.bf16.msra.mxu0 0
      %4215 = vmatpush.bf16.msra.mxu0 0
      %4216 = vmatpush.bf16.msra.mxu0 0
      %4217 = vmatpush.bf16.msra.mxu0 0
      %4218 = vmatpush.bf16.msra.mxu0 %v4092
      %4219 = vmatpush.bf16.msra.mxu0 %v4082
      %4220 = vmatmul.bf16.gmra.mxu0 %v362
      %v4221 = vpop.f32.mrf.mxu0
      %v4222 = vadd.f32 0.0, %v4221
      %v4223 = vpop.f32.mrf.mxu0
      %v4224 = vadd.f32 0.0, %v4223
      %4225 = vmatmul.bf16.gmra.mxu0 %v365
      %v4226 = vpop.f32.mrf.mxu0
      %v4227 = vadd.f32 0.0, %v4226
      %v4228 = vpop.f32.mrf.mxu0
      %v4229 = vadd.f32 0.0, %v4228
      %4230 = vdwg.mxu0
      %4231 = vmatpush.bf16.msra.mxu0 0
      %4232 = vmatpush.bf16.msra.mxu0 0
      %4233 = vmatpush.bf16.msra.mxu0 0
      %4234 = vmatpush.bf16.msra.mxu0 0
      %4235 = vmatpush.bf16.msra.mxu0 0
      %4236 = vmatpush.bf16.msra.mxu0 0
      %4237 = vmatpush.bf16.msra.mxu0 %v4093
      %4238 = vmatpush.bf16.msra.mxu0 %v4083
      %4239 = vmatmul.bf16.gmra.mxu0 %v362
      %v4240 = vpop.f32.mrf.mxu0
      %v4241 = vadd.f32 0.0, %v4240
      %v4242 = vpop.f32.mrf.mxu0
      %v4243 = vadd.f32 0.0, %v4242
      %4244 = vmatmul.bf16.gmra.mxu0 %v365
      %v4245 = vpop.f32.mrf.mxu0
      %v4246 = vadd.f32 0.0, %v4245
      %v4247 = vpop.f32.mrf.mxu0
      %v4248 = vadd.f32 0.0, %v4247
      %4249 = vdwg.mxu0
      %4250 = vmatpush.bf16.msra.mxu0 0
      %4251 = vmatpush.bf16.msra.mxu0 0
      %4252 = vmatpush.bf16.msra.mxu0 0
      %4253 = vmatpush.bf16.msra.mxu0 0
      %4254 = vmatpush.bf16.msra.mxu0 0
      %4255 = vmatpush.bf16.msra.mxu0 0
      %4256 = vmatpush.bf16.msra.mxu0 %v4094
      %4257 = vmatpush.bf16.msra.mxu0 %v4084
      %4258 = vmatmul.bf16.gmra.mxu0 %v362
      %v4259 = vpop.f32.mrf.mxu0
      %v4260 = vadd.f32 0.0, %v4259
      %v4261 = vpop.f32.mrf.mxu0
      %v4262 = vadd.f32 0.0, %v4261
      %4263 = vmatmul.bf16.gmra.mxu0 %v365
      %v4264 = vpop.f32.mrf.mxu0
      %v4265 = vadd.f32 0.0, %v4264
      %v4266 = vpop.f32.mrf.mxu0
      %v4267 = vadd.f32 0.0, %v4266
      %4268 = vdwg.mxu0
      %4269 = vmatpush.bf16.msra.mxu0 0
      %4270 = vmatpush.bf16.msra.mxu0 0
      %4271 = vmatpush.bf16.msra.mxu0 0
      %4272 = vmatpush.bf16.msra.mxu0 0
      %4273 = vmatpush.bf16.msra.mxu0 0
      %4274 = vmatpush.bf16.msra.mxu0 0
      %4275 = vmatpush.bf16.msra.mxu0 %v4095
      %4276 = vmatpush.bf16.msra.mxu0 %v4085
      %4277 = vmatmul.bf16.gmra.mxu0 %v362
      %v4278 = vpop.f32.mrf.mxu0
      %v4279 = vadd.f32 0.0, %v4278
      %v4280 = vpop.f32.mrf.mxu0
      %v4281 = vadd.f32 0.0, %v4280
      %4282 = vmatmul.bf16.gmra.mxu0 %v365
      %v4283 = vpop.f32.mrf.mxu0
      %v4284 = vadd.f32 0.0, %v4283
      %v4285 = vpop.f32.mrf.mxu0
      %v4286 = vadd.f32 0.0, %v4285
      %4287 = vdwg.mxu0
      %4288 = vmatpush.bf16.msra.mxu0 0
      %4289 = vmatpush.bf16.msra.mxu0 0
      %4290 = vmatpush.bf16.msra.mxu0 0
      %4291 = vmatpush.bf16.msra.mxu0 0
      %4292 = vmatpush.bf16.msra.mxu0 0
      %4293 = vmatpush.bf16.msra.mxu0 0
      %4294 = vmatpush.bf16.msra.mxu0 %v4096
      %4295 = vmatpush.bf16.msra.mxu0 %v4086
      %4296 = vmatmul.bf16.gmra.mxu0 %v362
      %v4297 = vpop.f32.mrf.mxu0
      %v4298 = vadd.f32 0.0, %v4297
      %v4299 = vpop.f32.mrf.mxu0
      %v4300 = vadd.f32 0.0, %v4299
      %4301 = vmatmul.bf16.gmra.mxu0 %v365
      %v4302 = vpop.f32.mrf.mxu0
      %v4303 = vadd.f32 0.0, %v4302
      %v4304 = vpop.f32.mrf.mxu0
      %v4305 = vadd.f32 0.0, %v4304
      %4306 = vdwg.mxu0
      %v4307 = vmax.f32 %v4127, %v4165
      %v4308 = vmax.f32 %v4146, %v4184
      %v4309 = vmax.f32 %v4129, %v4167
      %v4310 = vmax.f32 %v4148, %v4186
      %v4311 = vmax.f32 %v4132, %v4170
      %v4312 = vmax.f32 %v4151, %v4189
      %v4313 = vmax.f32 %v4134, %v4172
      %v4314 = vmax.f32 %v4153, %v4191
      %v4315 = vmax.f32 %v4307, %v4203
      %v4316 = vmax.f32 %v4308, %v4222
      %v4317 = vmax.f32 %v4309, %v4205
      %v4318 = vmax.f32 %v4310, %v4224
      %v4319 = vmax.f32 %v4311, %v4208
      %v4320 = vmax.f32 %v4312, %v4227
      %v4321 = vmax.f32 %v4313, %v4210
      %v4322 = vmax.f32 %v4314, %v4229
      %v4323 = vmax.f32 %v4315, %v4241
      %v4324 = vmax.f32 %v4316, %v4260
      %v4325 = vmax.f32 %v4317, %v4243
      %v4326 = vmax.f32 %v4318, %v4262
      %v4327 = vmax.f32 %v4319, %v4246
      %v4328 = vmax.f32 %v4320, %v4265
      %v4329 = vmax.f32 %v4321, %v4248
      %v4330 = vmax.f32 %v4322, %v4267
      %v4331 = vmax.f32 %v4323, %v4279
      %v4332 = vmax.f32 %v4324, %v4298
      %v4333 = vmax.f32 %v4325, %v4281
      %v4334 = vmax.f32 %v4326, %v4300
      %v4335 = vmax.f32 %v4327, %v4284
      %v4336 = vmax.f32 %v4328, %v4303
      %v4337 = vmax.f32 %v4329, %v4286
      %v4338 = vmax.f32 %v4330, %v4305
      %v4339 = vmax.f32 %v4331, %v4335
      %v4340 = vmax.f32 %v4332, %v4336
      %v4341 = vmax.f32 %v4333, %v4337
      %v4342 = vmax.f32 %v4334, %v4338
      %vm4343 = vcmp.ge.f32.partialorder %v4339, 0.0
      %vm4344 = vcmp.ge.f32.partialorder %v4340, 0.0
      %vm4345 = vcmp.ge.f32.partialorder %v4341, 0.0
      %vm4346 = vcmp.ge.f32.partialorder %v4342, 0.0
      %v4347 = vmul.f32 %v4339, 0.01
      %v4348 = vmul.f32 %v4340, 0.01
      %v4349 = vmul.f32 %v4341, 0.01
      %v4350 = vmul.f32 %v4342, 0.01
      %v4351 = vsel %vm4343, %v4339, %v4347
      %v4352 = vsel %vm4344, %v4340, %v4348
      %v4353 = vsel %vm4345, %v4341, %v4349
      %v4354 = vsel %vm4346, %v4342, %v4350
      %vm4355 = vcmp.ge.f32.partialorder %v4351, 0.0
      %vm4356 = vcmp.ge.f32.partialorder %v4352, 0.0
      %vm4357 = vcmp.ge.f32.partialorder %v4353, 0.0
      %vm4358 = vcmp.ge.f32.partialorder %v4354, 0.0
      %v4359 = vmul.f32 %v4351, 0.01
      %v4360 = vmul.f32 %v4352, 0.01
      %v4361 = vmul.f32 %v4353, 0.01
      %v4362 = vmul.f32 %v4354, 0.01
      %v4363 = vsel %vm4355, %v4351, %v4359
      %v4364 = vsel %vm4356, %v4352, %v4360
      %v4365 = vsel %vm4357, %v4353, %v4361
      %v4366 = vsel %vm4358, %v4354, %v4362
      %4367 = vst [vmem:[#allocation2 + $0x140] sm:$0xff] %v4363
      %4368 = vst [vmem:[#allocation2 + $0x148] sm:$0xff] %v4364
      %4369 = vst [vmem:[#allocation2 + $0x150] sm:$0xff] %v4365
      %4370 = vst [vmem:[#allocation2 + $0x158] sm:$0xff] %v4366
      %s4371 = scalar_lea.vmem %s219, 1760
      %v4372 = vld [vmem:[%s4371] sm:$0xff]
      %v4373 = vld [vmem:[%s4371 + $0x8] sm:$0xff]
      %v4374 = vld [vmem:[%s4371 + $0x10] sm:$0xff]
      %v4375 = vld [vmem:[%s4371 + $0x18] sm:$0xff]
      %v4376 = vld [vmem:[%s4371 + $0x20] sm:$0xff]
      %v4377 = vld [vmem:[%s4371 + $0x28] sm:$0xff]
      %v4378 = vld [vmem:[%s4371 + $0x30] sm:$0xff]
      %v4379 = vld [vmem:[%s4371 + $0x38] sm:$0xff]
      %v4380 = vld [vmem:[%s4371 + $0x40] sm:$0xff]
      %v4381 = vld [vmem:[%s4371 + $0x48] sm:$0xff]
      %v4382 = vld [vmem:[%s4371 + $0x50] sm:$0xff]
      %v4383 = vld [vmem:[%s4371 + $0x58] sm:$0xff]
      %v4384 = vld [vmem:[%s4371 + $0x60] sm:$0xff]
      %v4385 = vld [vmem:[%s4371 + $0x68] sm:$0xff]
      %v4386 = vld [vmem:[%s4371 + $0x70] sm:$0xff]
      %v4387 = vld [vmem:[%s4371 + $0x78] sm:$0xff]
      %v4388 = vld [vmem:[%s4371 + $0x80] sm:$0xff]
      %v4389 = vld [vmem:[%s4371 + $0x88] sm:$0xff]
      %v4390 = vld [vmem:[%s4371 + $0x90] sm:$0xff]
      %v4391 = vld [vmem:[%s4371 + $0x98] sm:$0xff]
      %v4412 = vunpack.c.l.b16 %v4372
      %v4413 = vunpack.c.h.b16 %v4372
      %v4414 = vunpack.c.l.b16 %v4373
      %v4415 = vunpack.c.h.b16 %v4373
      %v4416 = vunpack.c.l.b16 %v4374
      %v4417 = vunpack.c.h.b16 %v4374
      %v4418 = vunpack.c.l.b16 %v4375
      %v4419 = vunpack.c.h.b16 %v4375
      %v4420 = vunpack.c.l.b16 %v4376
      %v4421 = vunpack.c.h.b16 %v4376
      %v4422 = vunpack.c.l.b16 %v4377
      %v4423 = vunpack.c.h.b16 %v4377
      %v4424 = vunpack.c.l.b16 %v4378
      %v4425 = vunpack.c.h.b16 %v4378
      %v4426 = vunpack.c.l.b16 %v4379
      %v4427 = vunpack.c.h.b16 %v4379
      %v4428 = vunpack.c.l.b16 %v4380
      %v4429 = vunpack.c.h.b16 %v4380
      %v4430 = vunpack.c.l.b16 %v4381
      %v4431 = vunpack.c.h.b16 %v4381
      %v4432 = vunpack.c.l.b16 %v4382
      %v4433 = vunpack.c.h.b16 %v4382
      %v4434 = vunpack.c.l.b16 %v4383
      %v4435 = vunpack.c.h.b16 %v4383
      %v4436 = vunpack.c.l.b16 %v4384
      %v4437 = vunpack.c.h.b16 %v4384
      %v4438 = vunpack.c.l.b16 %v4385
      %v4439 = vunpack.c.h.b16 %v4385
      %v4440 = vunpack.c.l.b16 %v4386
      %v4441 = vunpack.c.h.b16 %v4386
      %v4442 = vunpack.c.l.b16 %v4387
      %v4443 = vunpack.c.h.b16 %v4387
      %v4444 = vunpack.c.l.b16 %v4388
      %v4445 = vunpack.c.h.b16 %v4388
      %v4446 = vunpack.c.l.b16 %v4389
      %v4447 = vunpack.c.h.b16 %v4389
      %v4448 = vunpack.c.l.b16 %v4390
      %v4449 = vunpack.c.h.b16 %v4390
      %v4450 = vunpack.c.l.b16 %v4391
      %v4451 = vunpack.c.h.b16 %v4391
      %v4452 = vpack.c.b16 %v4422, %v4412
      %v4453 = vpack.c.b16 %v4423, %v4413
      %v4454 = vpack.c.b16 %v4424, %v4414
      %v4455 = vpack.c.b16 %v4425, %v4415
      %v4456 = vpack.c.b16 %v4426, %v4416
      %v4457 = vpack.c.b16 %v4427, %v4417
      %v4458 = vpack.c.b16 %v4428, %v4418
      %v4459 = vpack.c.b16 %v4429, %v4419
      %v4460 = vpack.c.b16 %v4430, %v4420
      %v4461 = vpack.c.b16 %v4431, %v4421
      %v4462 = vpack.c.b16 %v4442, %v4432
      %v4463 = vpack.c.b16 %v4443, %v4433
      %v4464 = vpack.c.b16 %v4444, %v4434
      %v4465 = vpack.c.b16 %v4445, %v4435
      %v4466 = vpack.c.b16 %v4446, %v4436
      %v4467 = vpack.c.b16 %v4447, %v4437
      %v4468 = vpack.c.b16 %v4448, %v4438
      %v4469 = vpack.c.b16 %v4449, %v4439
      %v4470 = vpack.c.b16 %v4450, %v4440
      %v4471 = vpack.c.b16 %v4451, %v4441
      %4492 = vmatpush.bf16.msra.mxu0 0
      %4493 = vmatpush.bf16.msra.mxu0 0
      %4494 = vmatpush.bf16.msra.mxu0 0
      %4495 = vmatpush.bf16.msra.mxu0 0
      %4496 = vmatpush.bf16.msra.mxu0 0
      %4497 = vmatpush.bf16.msra.mxu0 0
      %4498 = vmatpush.bf16.msra.mxu0 %v4462
      %4499 = vmatpush.bf16.msra.mxu0 %v4452
      %4500 = vmatmul.bf16.gmra.mxu0 %v362
      %v4501 = vpop.f32.mrf.mxu0
      %v4502 = vadd.f32 0.0, %v4501
      %v4503 = vpop.f32.mrf.mxu0
      %v4504 = vadd.f32 0.0, %v4503
      %4505 = vmatmul.bf16.gmra.mxu0 %v365
      %v4506 = vpop.f32.mrf.mxu0
      %v4507 = vadd.f32 0.0, %v4506
      %v4508 = vpop.f32.mrf.mxu0
      %v4509 = vadd.f32 0.0, %v4508
      %4510 = vdwg.mxu0
      %4511 = vmatpush.bf16.msra.mxu0 0
      %4512 = vmatpush.bf16.msra.mxu0 0
      %4513 = vmatpush.bf16.msra.mxu0 0
      %4514 = vmatpush.bf16.msra.mxu0 0
      %4515 = vmatpush.bf16.msra.mxu0 0
      %4516 = vmatpush.bf16.msra.mxu0 0
      %4517 = vmatpush.bf16.msra.mxu0 %v4463
      %4518 = vmatpush.bf16.msra.mxu0 %v4453
      %4519 = vmatmul.bf16.gmra.mxu0 %v362
      %v4520 = vpop.f32.mrf.mxu0
      %v4521 = vadd.f32 0.0, %v4520
      %v4522 = vpop.f32.mrf.mxu0
      %v4523 = vadd.f32 0.0, %v4522
      %4524 = vmatmul.bf16.gmra.mxu0 %v365
      %v4525 = vpop.f32.mrf.mxu0
      %v4526 = vadd.f32 0.0, %v4525
      %v4527 = vpop.f32.mrf.mxu0
      %v4528 = vadd.f32 0.0, %v4527
      %4529 = vdwg.mxu0
      %4530 = vmatpush.bf16.msra.mxu0 0
      %4531 = vmatpush.bf16.msra.mxu0 0
      %4532 = vmatpush.bf16.msra.mxu0 0
      %4533 = vmatpush.bf16.msra.mxu0 0
      %4534 = vmatpush.bf16.msra.mxu0 0
      %4535 = vmatpush.bf16.msra.mxu0 0
      %4536 = vmatpush.bf16.msra.mxu0 %v4464
      %4537 = vmatpush.bf16.msra.mxu0 %v4454
      %4538 = vmatmul.bf16.gmra.mxu0 %v362
      %v4539 = vpop.f32.mrf.mxu0
      %v4540 = vadd.f32 0.0, %v4539
      %v4541 = vpop.f32.mrf.mxu0
      %v4542 = vadd.f32 0.0, %v4541
      %4543 = vmatmul.bf16.gmra.mxu0 %v365
      %v4544 = vpop.f32.mrf.mxu0
      %v4545 = vadd.f32 0.0, %v4544
      %v4546 = vpop.f32.mrf.mxu0
      %v4547 = vadd.f32 0.0, %v4546
      %4548 = vdwg.mxu0
      %4549 = vmatpush.bf16.msra.mxu0 0
      %4550 = vmatpush.bf16.msra.mxu0 0
      %4551 = vmatpush.bf16.msra.mxu0 0
      %4552 = vmatpush.bf16.msra.mxu0 0
      %4553 = vmatpush.bf16.msra.mxu0 0
      %4554 = vmatpush.bf16.msra.mxu0 0
      %4555 = vmatpush.bf16.msra.mxu0 %v4465
      %4556 = vmatpush.bf16.msra.mxu0 %v4455
      %4557 = vmatmul.bf16.gmra.mxu0 %v362
      %v4558 = vpop.f32.mrf.mxu0
      %v4559 = vadd.f32 0.0, %v4558
      %v4560 = vpop.f32.mrf.mxu0
      %v4561 = vadd.f32 0.0, %v4560
      %4562 = vmatmul.bf16.gmra.mxu0 %v365
      %v4563 = vpop.f32.mrf.mxu0
      %v4564 = vadd.f32 0.0, %v4563
      %v4565 = vpop.f32.mrf.mxu0
      %v4566 = vadd.f32 0.0, %v4565
      %4567 = vdwg.mxu0
      %4568 = vmatpush.bf16.msra.mxu0 0
      %4569 = vmatpush.bf16.msra.mxu0 0
      %4570 = vmatpush.bf16.msra.mxu0 0
      %4571 = vmatpush.bf16.msra.mxu0 0
      %4572 = vmatpush.bf16.msra.mxu0 0
      %4573 = vmatpush.bf16.msra.mxu0 0
      %4574 = vmatpush.bf16.msra.mxu0 %v4466
      %4575 = vmatpush.bf16.msra.mxu0 %v4456
      %4576 = vmatmul.bf16.gmra.mxu0 %v362
      %v4577 = vpop.f32.mrf.mxu0
      %v4578 = vadd.f32 0.0, %v4577
      %v4579 = vpop.f32.mrf.mxu0
      %v4580 = vadd.f32 0.0, %v4579
      %4581 = vmatmul.bf16.gmra.mxu0 %v365
      %v4582 = vpop.f32.mrf.mxu0
      %v4583 = vadd.f32 0.0, %v4582
      %v4584 = vpop.f32.mrf.mxu0
      %v4585 = vadd.f32 0.0, %v4584
      %4586 = vdwg.mxu0
      %4587 = vmatpush.bf16.msra.mxu0 0
      %4588 = vmatpush.bf16.msra.mxu0 0
      %4589 = vmatpush.bf16.msra.mxu0 0
      %4590 = vmatpush.bf16.msra.mxu0 0
      %4591 = vmatpush.bf16.msra.mxu0 0
      %4592 = vmatpush.bf16.msra.mxu0 0
      %4593 = vmatpush.bf16.msra.mxu0 %v4467
      %4594 = vmatpush.bf16.msra.mxu0 %v4457
      %4595 = vmatmul.bf16.gmra.mxu0 %v362
      %v4596 = vpop.f32.mrf.mxu0
      %v4597 = vadd.f32 0.0, %v4596
      %v4598 = vpop.f32.mrf.mxu0
      %v4599 = vadd.f32 0.0, %v4598
      %4600 = vmatmul.bf16.gmra.mxu0 %v365
      %v4601 = vpop.f32.mrf.mxu0
      %v4602 = vadd.f32 0.0, %v4601
      %v4603 = vpop.f32.mrf.mxu0
      %v4604 = vadd.f32 0.0, %v4603
      %4605 = vdwg.mxu0
      %4606 = vmatpush.bf16.msra.mxu0 0
      %4607 = vmatpush.bf16.msra.mxu0 0
      %4608 = vmatpush.bf16.msra.mxu0 0
      %4609 = vmatpush.bf16.msra.mxu0 0
      %4610 = vmatpush.bf16.msra.mxu0 0
      %4611 = vmatpush.bf16.msra.mxu0 0
      %4612 = vmatpush.bf16.msra.mxu0 %v4468
      %4613 = vmatpush.bf16.msra.mxu0 %v4458
      %4614 = vmatmul.bf16.gmra.mxu0 %v362
      %v4615 = vpop.f32.mrf.mxu0
      %v4616 = vadd.f32 0.0, %v4615
      %v4617 = vpop.f32.mrf.mxu0
      %v4618 = vadd.f32 0.0, %v4617
      %4619 = vmatmul.bf16.gmra.mxu0 %v365
      %v4620 = vpop.f32.mrf.mxu0
      %v4621 = vadd.f32 0.0, %v4620
      %v4622 = vpop.f32.mrf.mxu0
      %v4623 = vadd.f32 0.0, %v4622
      %4624 = vdwg.mxu0
      %4625 = vmatpush.bf16.msra.mxu0 0
      %4626 = vmatpush.bf16.msra.mxu0 0
      %4627 = vmatpush.bf16.msra.mxu0 0
      %4628 = vmatpush.bf16.msra.mxu0 0
      %4629 = vmatpush.bf16.msra.mxu0 0
      %4630 = vmatpush.bf16.msra.mxu0 0
      %4631 = vmatpush.bf16.msra.mxu0 %v4469
      %4632 = vmatpush.bf16.msra.mxu0 %v4459
      %4633 = vmatmul.bf16.gmra.mxu0 %v362
      %v4634 = vpop.f32.mrf.mxu0
      %v4635 = vadd.f32 0.0, %v4634
      %v4636 = vpop.f32.mrf.mxu0
      %v4637 = vadd.f32 0.0, %v4636
      %4638 = vmatmul.bf16.gmra.mxu0 %v365
      %v4639 = vpop.f32.mrf.mxu0
      %v4640 = vadd.f32 0.0, %v4639
      %v4641 = vpop.f32.mrf.mxu0
      %v4642 = vadd.f32 0.0, %v4641
      %4643 = vdwg.mxu0
      %4644 = vmatpush.bf16.msra.mxu0 0
      %4645 = vmatpush.bf16.msra.mxu0 0
      %4646 = vmatpush.bf16.msra.mxu0 0
      %4647 = vmatpush.bf16.msra.mxu0 0
      %4648 = vmatpush.bf16.msra.mxu0 0
      %4649 = vmatpush.bf16.msra.mxu0 0
      %4650 = vmatpush.bf16.msra.mxu0 %v4470
      %4651 = vmatpush.bf16.msra.mxu0 %v4460
      %4652 = vmatmul.bf16.gmra.mxu0 %v362
      %v4653 = vpop.f32.mrf.mxu0
      %v4654 = vadd.f32 0.0, %v4653
      %v4655 = vpop.f32.mrf.mxu0
      %v4656 = vadd.f32 0.0, %v4655
      %4657 = vmatmul.bf16.gmra.mxu0 %v365
      %v4658 = vpop.f32.mrf.mxu0
      %v4659 = vadd.f32 0.0, %v4658
      %v4660 = vpop.f32.mrf.mxu0
      %v4661 = vadd.f32 0.0, %v4660
      %4662 = vdwg.mxu0
      %4663 = vmatpush.bf16.msra.mxu0 0
      %4664 = vmatpush.bf16.msra.mxu0 0
      %4665 = vmatpush.bf16.msra.mxu0 0
      %4666 = vmatpush.bf16.msra.mxu0 0
      %4667 = vmatpush.bf16.msra.mxu0 0
      %4668 = vmatpush.bf16.msra.mxu0 0
      %4669 = vmatpush.bf16.msra.mxu0 %v4471
      %4670 = vmatpush.bf16.msra.mxu0 %v4461
      %4671 = vmatmul.bf16.gmra.mxu0 %v362
      %v4672 = vpop.f32.mrf.mxu0
      %v4673 = vadd.f32 0.0, %v4672
      %v4674 = vpop.f32.mrf.mxu0
      %v4675 = vadd.f32 0.0, %v4674
      %4676 = vmatmul.bf16.gmra.mxu0 %v365
      %v4677 = vpop.f32.mrf.mxu0
      %v4678 = vadd.f32 0.0, %v4677
      %v4679 = vpop.f32.mrf.mxu0
      %v4680 = vadd.f32 0.0, %v4679
      %4681 = vdwg.mxu0
      %v4682 = vmax.f32 %v4502, %v4540
      %v4683 = vmax.f32 %v4521, %v4559
      %v4684 = vmax.f32 %v4504, %v4542
      %v4685 = vmax.f32 %v4523, %v4561
      %v4686 = vmax.f32 %v4507, %v4545
      %v4687 = vmax.f32 %v4526, %v4564
      %v4688 = vmax.f32 %v4509, %v4547
      %v4689 = vmax.f32 %v4528, %v4566
      %v4690 = vmax.f32 %v4682, %v4578
      %v4691 = vmax.f32 %v4683, %v4597
      %v4692 = vmax.f32 %v4684, %v4580
      %v4693 = vmax.f32 %v4685, %v4599
      %v4694 = vmax.f32 %v4686, %v4583
      %v4695 = vmax.f32 %v4687, %v4602
      %v4696 = vmax.f32 %v4688, %v4585
      %v4697 = vmax.f32 %v4689, %v4604
      %v4698 = vmax.f32 %v4690, %v4616
      %v4699 = vmax.f32 %v4691, %v4635
      %v4700 = vmax.f32 %v4692, %v4618
      %v4701 = vmax.f32 %v4693, %v4637
      %v4702 = vmax.f32 %v4694, %v4621
      %v4703 = vmax.f32 %v4695, %v4640
      %v4704 = vmax.f32 %v4696, %v4623
      %v4705 = vmax.f32 %v4697, %v4642
      %v4706 = vmax.f32 %v4698, %v4654
      %v4707 = vmax.f32 %v4699, %v4673
      %v4708 = vmax.f32 %v4700, %v4656
      %v4709 = vmax.f32 %v4701, %v4675
      %v4710 = vmax.f32 %v4702, %v4659
      %v4711 = vmax.f32 %v4703, %v4678
      %v4712 = vmax.f32 %v4704, %v4661
      %v4713 = vmax.f32 %v4705, %v4680
      %v4714 = vmax.f32 %v4706, %v4710
      %v4715 = vmax.f32 %v4707, %v4711
      %v4716 = vmax.f32 %v4708, %v4712
      %v4717 = vmax.f32 %v4709, %v4713
      %vm4718 = vcmp.ge.f32.partialorder %v4714, 0.0
      %vm4719 = vcmp.ge.f32.partialorder %v4715, 0.0
      %vm4720 = vcmp.ge.f32.partialorder %v4716, 0.0
      %vm4721 = vcmp.ge.f32.partialorder %v4717, 0.0
      %v4722 = vmul.f32 %v4714, 0.01
      %v4723 = vmul.f32 %v4715, 0.01
      %v4724 = vmul.f32 %v4716, 0.01
      %v4725 = vmul.f32 %v4717, 0.01
      %v4726 = vsel %vm4718, %v4714, %v4722
      %v4727 = vsel %vm4719, %v4715, %v4723
      %v4728 = vsel %vm4720, %v4716, %v4724
      %v4729 = vsel %vm4721, %v4717, %v4725
      %vm4730 = vcmp.ge.f32.partialorder %v4726, 0.0
      %vm4731 = vcmp.ge.f32.partialorder %v4727, 0.0
      %vm4732 = vcmp.ge.f32.partialorder %v4728, 0.0
      %vm4733 = vcmp.ge.f32.partialorder %v4729, 0.0
      %v4734 = vmul.f32 %v4726, 0.01
      %v4735 = vmul.f32 %v4727, 0.01
      %v4736 = vmul.f32 %v4728, 0.01
      %v4737 = vmul.f32 %v4729, 0.01
      %v4738 = vsel %vm4730, %v4726, %v4734
      %v4739 = vsel %vm4731, %v4727, %v4735
      %v4740 = vsel %vm4732, %v4728, %v4736
      %v4741 = vsel %vm4733, %v4729, %v4737
      %4742 = vst [vmem:[#allocation2 + $0x160] sm:$0xff] %v4738
      %4743 = vst [vmem:[#allocation2 + $0x168] sm:$0xff] %v4739
      %4744 = vst [vmem:[#allocation2 + $0x170] sm:$0xff] %v4740
      %4745 = vst [vmem:[#allocation2 + $0x178] sm:$0xff] %v4741
      %v4746 = vld [vmem:[#allocation2] sm:$0xff]
      %v4747 = vld [vmem:[#allocation2 + $0x8] sm:$0xff]
      %v4748 = vld [vmem:[#allocation2 + $0x10] sm:$0xff]
      %v4749 = vld [vmem:[#allocation2 + $0x18] sm:$0xff]
      %v4750 = vld [vmem:[#allocation2 + $0x20] sm:$0xff]
      %v4751 = vld [vmem:[#allocation2 + $0x28] sm:$0xff]
      %v4752 = vld [vmem:[#allocation2 + $0x30] sm:$0xff]
      %v4753 = vld [vmem:[#allocation2 + $0x38] sm:$0xff]
      %v4754 = vld [vmem:[#allocation2 + $0x40] sm:$0xff]
      %v4755 = vld [vmem:[#allocation2 + $0x48] sm:$0xff]
      %v4756 = vld [vmem:[#allocation2 + $0x50] sm:$0xff]
      %v4757 = vld [vmem:[#allocation2 + $0x58] sm:$0xff]
      %v4758 = vld [vmem:[#allocation2 + $0x60] sm:$0xff]
      %v4759 = vld [vmem:[#allocation2 + $0x68] sm:$0xff]
      %v4760 = vld [vmem:[#allocation2 + $0x70] sm:$0xff]
      %v4761 = vld [vmem:[#allocation2 + $0x78] sm:$0xff]
      %v4762 = vld [vmem:[#allocation2 + $0x80] sm:$0xff]
      %v4763 = vld [vmem:[#allocation2 + $0x88] sm:$0xff]
      %v4764 = vld [vmem:[#allocation2 + $0x90] sm:$0xff]
      %v4765 = vld [vmem:[#allocation2 + $0x98] sm:$0xff]
      %v4766 = vld [vmem:[#allocation2 + $0xa0] sm:$0xff]
      %v4767 = vld [vmem:[#allocation2 + $0xa8] sm:$0xff]
      %v4768 = vld [vmem:[#allocation2 + $0xb0] sm:$0xff]
      %v4769 = vld [vmem:[#allocation2 + $0xb8] sm:$0xff]
      %v4770 = vld [vmem:[#allocation2 + $0xc0] sm:$0xff]
      %v4771 = vld [vmem:[#allocation2 + $0xc8] sm:$0xff]
      %v4772 = vld [vmem:[#allocation2 + $0xd0] sm:$0xff]
      %v4773 = vld [vmem:[#allocation2 + $0xd8] sm:$0xff]
      %v4774 = vld [vmem:[#allocation2 + $0xe0] sm:$0xff]
      %v4775 = vld [vmem:[#allocation2 + $0xe8] sm:$0xff]
      %v4776 = vld [vmem:[#allocation2 + $0xf0] sm:$0xff]
      %v4777 = vld [vmem:[#allocation2 + $0xf8] sm:$0xff]
      %v4778 = vld [vmem:[#allocation2 + $0x100] sm:$0xff]
      %v4779 = vld [vmem:[#allocation2 + $0x108] sm:$0xff]
      %v4780 = vld [vmem:[#allocation2 + $0x110] sm:$0xff]
      %v4781 = vld [vmem:[#allocation2 + $0x118] sm:$0xff]
      %v4782 = vld [vmem:[#allocation2 + $0x120] sm:$0xff]
      %v4783 = vld [vmem:[#allocation2 + $0x128] sm:$0xff]
      %v4784 = vld [vmem:[#allocation2 + $0x130] sm:$0xff]
      %v4785 = vld [vmem:[#allocation2 + $0x138] sm:$0xff]
      %v4786 = vld [vmem:[#allocation2 + $0x140] sm:$0xff]
      %v4787 = vld [vmem:[#allocation2 + $0x148] sm:$0xff]
      %v4788 = vld [vmem:[#allocation2 + $0x150] sm:$0xff]
      %v4789 = vld [vmem:[#allocation2 + $0x158] sm:$0xff]
      %v4790 = vld [vmem:[#allocation2 + $0x160] sm:$0xff]
      %v4791 = vld [vmem:[#allocation2 + $0x168] sm:$0xff]
      %v4792 = vld [vmem:[#allocation2 + $0x170] sm:$0xff]
      %v4793 = vld [vmem:[#allocation2 + $0x178] sm:$0xff]
      %v4794 = vld [vmem:[%s2] sm:$0xff]
      %v4795 = vld [vmem:[%s2 + $0x8] sm:$0xff]
      %v4796 = vld [vmem:[%s2 + $0x10] sm:$0xff]
      %v4797 = vld [vmem:[%s2 + $0x18] sm:$0xff]
      %v4798 = vld [vmem:[%s2 + $0x20] sm:$0xff]
      %v4799 = vld [vmem:[%s2 + $0x28] sm:$0xff]
      %v4800 = vld [vmem:[%s2 + $0x30] sm:$0xff]
      %v4801 = vld [vmem:[%s2 + $0x38] sm:$0xff]
      %v4802 = vld [vmem:[%s2 + $0x40] sm:$0xff]
      %v4803 = vld [vmem:[%s2 + $0x48] sm:$0xff]
      %v4804 = vld [vmem:[%s2 + $0x50] sm:$0xff]
      %v4805 = vld [vmem:[%s2 + $0x58] sm:$0xff]
      %v4806 = vld [vmem:[%s2 + $0x60] sm:$0xff]
      %v4807 = vld [vmem:[%s2 + $0x68] sm:$0xff]
      %v4808 = vld [vmem:[%s2 + $0x70] sm:$0xff]
      %v4809 = vld [vmem:[%s2 + $0x78] sm:$0xff]
      %v4810 = vld [vmem:[%s2 + $0x80] sm:$0xff]
      %v4811 = vld [vmem:[%s2 + $0x88] sm:$0xff]
      %v4812 = vld [vmem:[%s2 + $0x90] sm:$0xff]
      %v4813 = vld [vmem:[%s2 + $0x98] sm:$0xff]
      %v4814 = vld [vmem:[%s2 + $0xa0] sm:$0xff]
      %v4815 = vld [vmem:[%s2 + $0xa8] sm:$0xff]
      %v4816 = vld [vmem:[%s2 + $0xb0] sm:$0xff]
      %v4817 = vld [vmem:[%s2 + $0xb8] sm:$0xff]
      %v4818 = vld [vmem:[%s2 + $0xc0] sm:$0xff]
      %v4819 = vld [vmem:[%s2 + $0xc8] sm:$0xff]
      %v4820 = vld [vmem:[%s2 + $0xd0] sm:$0xff]
      %v4821 = vld [vmem:[%s2 + $0xd8] sm:$0xff]
      %v4822 = vld [vmem:[%s2 + $0xe0] sm:$0xff]
      %v4823 = vld [vmem:[%s2 + $0xe8] sm:$0xff]
      %v4824 = vld [vmem:[%s2 + $0xf0] sm:$0xff]
      %v4825 = vld [vmem:[%s2 + $0xf8] sm:$0xff]
      %v4826 = vld [vmem:[%s2 + $0x100] sm:$0xff]
      %v4827 = vld [vmem:[%s2 + $0x108] sm:$0xff]
      %v4828 = vld [vmem:[%s2 + $0x110] sm:$0xff]
      %v4829 = vld [vmem:[%s2 + $0x118] sm:$0xff]
      %v4830 = vld [vmem:[%s2 + $0x120] sm:$0xff]
      %v4831 = vld [vmem:[%s2 + $0x128] sm:$0xff]
      %v4832 = vld [vmem:[%s2 + $0x130] sm:$0xff]
      %v4833 = vld [vmem:[%s2 + $0x138] sm:$0xff]
      %v4834 = vld [vmem:[%s2 + $0x140] sm:$0xff]
      %v4835 = vld [vmem:[%s2 + $0x148] sm:$0xff]
      %v4836 = vld [vmem:[%s2 + $0x150] sm:$0xff]
      %v4837 = vld [vmem:[%s2 + $0x158] sm:$0xff]
      %v4838 = vld [vmem:[%s2 + $0x160] sm:$0xff]
      %v4839 = vld [vmem:[%s2 + $0x168] sm:$0xff]
      %v4840 = vld [vmem:[%s2 + $0x170] sm:$0xff]
      %v4841 = vld [vmem:[%s2 + $0x178] sm:$0xff]
      %v4842 = vmul.f32 %v4746, %v4794
      %v4843 = vmul.f32 %v4747, %v4795
      %v4844 = vmul.f32 %v4748, %v4796
      %v4845 = vmul.f32 %v4749, %v4797
      %v4846 = vmul.f32 %v4750, %v4798
      %v4847 = vmul.f32 %v4751, %v4799
      %v4848 = vmul.f32 %v4752, %v4800
      %v4849 = vmul.f32 %v4753, %v4801
      %v4850 = vmul.f32 %v4754, %v4802
      %v4851 = vmul.f32 %v4755, %v4803
      %v4852 = vmul.f32 %v4756, %v4804
      %v4853 = vmul.f32 %v4757, %v4805
      %v4854 = vmul.f32 %v4758, %v4806
      %v4855 = vmul.f32 %v4759, %v4807
      %v4856 = vmul.f32 %v4760, %v4808
      %v4857 = vmul.f32 %v4761, %v4809
      %v4858 = vmul.f32 %v4762, %v4810
      %v4859 = vmul.f32 %v4763, %v4811
      %v4860 = vmul.f32 %v4764, %v4812
      %v4861 = vmul.f32 %v4765, %v4813
      %v4862 = vmul.f32 %v4766, %v4814
      %v4863 = vmul.f32 %v4767, %v4815
      %v4864 = vmul.f32 %v4768, %v4816
      %v4865 = vmul.f32 %v4769, %v4817
      %v4866 = vmul.f32 %v4770, %v4818
      %v4867 = vmul.f32 %v4771, %v4819
      %v4868 = vmul.f32 %v4772, %v4820
      %v4869 = vmul.f32 %v4773, %v4821
      %v4870 = vmul.f32 %v4774, %v4822
      %v4871 = vmul.f32 %v4775, %v4823
      %v4872 = vmul.f32 %v4776, %v4824
      %v4873 = vmul.f32 %v4777, %v4825
      %v4874 = vmul.f32 %v4778, %v4826
      %v4875 = vmul.f32 %v4779, %v4827
      %v4876 = vmul.f32 %v4780, %v4828
      %v4877 = vmul.f32 %v4781, %v4829
      %v4878 = vmul.f32 %v4782, %v4830
      %v4879 = vmul.f32 %v4783, %v4831
      %v4880 = vmul.f32 %v4784, %v4832
      %v4881 = vmul.f32 %v4785, %v4833
      %v4882 = vmul.f32 %v4786, %v4834
      %v4883 = vmul.f32 %v4787, %v4835
      %v4884 = vmul.f32 %v4788, %v4836
      %v4885 = vmul.f32 %v4789, %v4837
      %v4886 = vmul.f32 %v4790, %v4838
      %v4887 = vmul.f32 %v4791, %v4839
      %v4888 = vmul.f32 %v4792, %v4840
      %v4889 = vmul.f32 %v4793, %v4841
      %s4890 = scalar_lea.vmem %s2, 384
      %v4891 = vld [vmem:[%s4890] sm:$0xff]
      %v4892 = vld [vmem:[%s4890 + $0x8] sm:$0xff]
      %v4893 = vld [vmem:[%s4890 + $0x10] sm:$0xff]
      %v4894 = vld [vmem:[%s4890 + $0x18] sm:$0xff]
      %v4895 = vld [vmem:[%s4890 + $0x20] sm:$0xff]
      %v4896 = vld [vmem:[%s4890 + $0x28] sm:$0xff]
      %v4897 = vld [vmem:[%s4890 + $0x30] sm:$0xff]
      %v4898 = vld [vmem:[%s4890 + $0x38] sm:$0xff]
      %v4899 = vld [vmem:[%s4890 + $0x40] sm:$0xff]
      %v4900 = vld [vmem:[%s4890 + $0x48] sm:$0xff]
      %v4901 = vld [vmem:[%s4890 + $0x50] sm:$0xff]
      %v4902 = vld [vmem:[%s4890 + $0x58] sm:$0xff]
      %v4903 = vld [vmem:[%s4890 + $0x60] sm:$0xff]
      %v4904 = vld [vmem:[%s4890 + $0x68] sm:$0xff]
      %v4905 = vld [vmem:[%s4890 + $0x70] sm:$0xff]
      %v4906 = vld [vmem:[%s4890 + $0x78] sm:$0xff]
      %v4907 = vld [vmem:[%s4890 + $0x80] sm:$0xff]
      %v4908 = vld [vmem:[%s4890 + $0x88] sm:$0xff]
      %v4909 = vld [vmem:[%s4890 + $0x90] sm:$0xff]
      %v4910 = vld [vmem:[%s4890 + $0x98] sm:$0xff]
      %v4911 = vld [vmem:[%s4890 + $0xa0] sm:$0xff]
      %v4912 = vld [vmem:[%s4890 + $0xa8] sm:$0xff]
      %v4913 = vld [vmem:[%s4890 + $0xb0] sm:$0xff]
      %v4914 = vld [vmem:[%s4890 + $0xb8] sm:$0xff]
      %v4915 = vld [vmem:[%s4890 + $0xc0] sm:$0xff]
      %v4916 = vld [vmem:[%s4890 + $0xc8] sm:$0xff]
      %v4917 = vld [vmem:[%s4890 + $0xd0] sm:$0xff]
      %v4918 = vld [vmem:[%s4890 + $0xd8] sm:$0xff]
      %v4919 = vld [vmem:[%s4890 + $0xe0] sm:$0xff]
      %v4920 = vld [vmem:[%s4890 + $0xe8] sm:$0xff]
      %v4921 = vld [vmem:[%s4890 + $0xf0] sm:$0xff]
      %v4922 = vld [vmem:[%s4890 + $0xf8] sm:$0xff]
      %v4923 = vld [vmem:[%s4890 + $0x100] sm:$0xff]
      %v4924 = vld [vmem:[%s4890 + $0x108] sm:$0xff]
      %v4925 = vld [vmem:[%s4890 + $0x110] sm:$0xff]
      %v4926 = vld [vmem:[%s4890 + $0x118] sm:$0xff]
      %v4927 = vld [vmem:[%s4890 + $0x120] sm:$0xff]
      %v4928 = vld [vmem:[%s4890 + $0x128] sm:$0xff]
      %v4929 = vld [vmem:[%s4890 + $0x130] sm:$0xff]
      %v4930 = vld [vmem:[%s4890 + $0x138] sm:$0xff]
      %v4931 = vld [vmem:[%s4890 + $0x140] sm:$0xff]
      %v4932 = vld [vmem:[%s4890 + $0x148] sm:$0xff]
      %v4933 = vld [vmem:[%s4890 + $0x150] sm:$0xff]
      %v4934 = vld [vmem:[%s4890 + $0x158] sm:$0xff]
      %v4935 = vld [vmem:[%s4890 + $0x160] sm:$0xff]
      %v4936 = vld [vmem:[%s4890 + $0x168] sm:$0xff]
      %v4937 = vld [vmem:[%s4890 + $0x170] sm:$0xff]
      %v4938 = vld [vmem:[%s4890 + $0x178] sm:$0xff]
      %v4939 = vadd.f32 %v4842, %v4891
      %v4940 = vadd.f32 %v4843, %v4892
      %v4941 = vadd.f32 %v4844, %v4893
      %v4942 = vadd.f32 %v4845, %v4894
      %v4943 = vadd.f32 %v4846, %v4895
      %v4944 = vadd.f32 %v4847, %v4896
      %v4945 = vadd.f32 %v4848, %v4897
      %v4946 = vadd.f32 %v4849, %v4898
      %v4947 = vadd.f32 %v4850, %v4899
      %v4948 = vadd.f32 %v4851, %v4900
      %v4949 = vadd.f32 %v4852, %v4901
      %v4950 = vadd.f32 %v4853, %v4902
      %v4951 = vadd.f32 %v4854, %v4903
      %v4952 = vadd.f32 %v4855, %v4904
      %v4953 = vadd.f32 %v4856, %v4905
      %v4954 = vadd.f32 %v4857, %v4906
      %v4955 = vadd.f32 %v4858, %v4907
      %v4956 = vadd.f32 %v4859, %v4908
      %v4957 = vadd.f32 %v4860, %v4909
      %v4958 = vadd.f32 %v4861, %v4910
      %v4959 = vadd.f32 %v4862, %v4911
      %v4960 = vadd.f32 %v4863, %v4912
      %v4961 = vadd.f32 %v4864, %v4913
      %v4962 = vadd.f32 %v4865, %v4914
      %v4963 = vadd.f32 %v4866, %v4915
      %v4964 = vadd.f32 %v4867, %v4916
      %v4965 = vadd.f32 %v4868, %v4917
      %v4966 = vadd.f32 %v4869, %v4918
      %v4967 = vadd.f32 %v4870, %v4919
      %v4968 = vadd.f32 %v4871, %v4920
      %v4969 = vadd.f32 %v4872, %v4921
      %v4970 = vadd.f32 %v4873, %v4922
      %v4971 = vadd.f32 %v4874, %v4923
      %v4972 = vadd.f32 %v4875, %v4924
      %v4973 = vadd.f32 %v4876, %v4925
      %v4974 = vadd.f32 %v4877, %v4926
      %v4975 = vadd.f32 %v4878, %v4927
      %v4976 = vadd.f32 %v4879, %v4928
      %v4977 = vadd.f32 %v4880, %v4929
      %v4978 = vadd.f32 %v4881, %v4930
      %v4979 = vadd.f32 %v4882, %v4931
      %v4980 = vadd.f32 %v4883, %v4932
      %v4981 = vadd.f32 %v4884, %v4933
      %v4982 = vadd.f32 %v4885, %v4934
      %v4983 = vadd.f32 %v4886, %v4935
      %v4984 = vadd.f32 %v4887, %v4936
      %v4985 = vadd.f32 %v4888, %v4937
      %v4986 = vadd.f32 %v4889, %v4938
      %vm4987 = vcmp.ge.f32.partialorder %v4939, 0.0
      %vm4988 = vcmp.ge.f32.partialorder %v4940, 0.0
      %vm4989 = vcmp.ge.f32.partialorder %v4941, 0.0
      %vm4990 = vcmp.ge.f32.partialorder %v4942, 0.0
      %vm4991 = vcmp.ge.f32.partialorder %v4943, 0.0
      %vm4992 = vcmp.ge.f32.partialorder %v4944, 0.0
      %vm4993 = vcmp.ge.f32.partialorder %v4945, 0.0
      %vm4994 = vcmp.ge.f32.partialorder %v4946, 0.0
      %vm4995 = vcmp.ge.f32.partialorder %v4947, 0.0
      %vm4996 = vcmp.ge.f32.partialorder %v4948, 0.0
      %vm4997 = vcmp.ge.f32.partialorder %v4949, 0.0
      %vm4998 = vcmp.ge.f32.partialorder %v4950, 0.0
      %vm4999 = vcmp.ge.f32.partialorder %v4951, 0.0
      %vm5000 = vcmp.ge.f32.partialorder %v4952, 0.0
      %vm5001 = vcmp.ge.f32.partialorder %v4953, 0.0
      %vm5002 = vcmp.ge.f32.partialorder %v4954, 0.0
      %vm5003 = vcmp.ge.f32.partialorder %v4955, 0.0
      %vm5004 = vcmp.ge.f32.partialorder %v4956, 0.0
      %vm5005 = vcmp.ge.f32.partialorder %v4957, 0.0
      %vm5006 = vcmp.ge.f32.partialorder %v4958, 0.0
      %vm5007 = vcmp.ge.f32.partialorder %v4959, 0.0
      %vm5008 = vcmp.ge.f32.partialorder %v4960, 0.0
      %vm5009 = vcmp.ge.f32.partialorder %v4961, 0.0
      %vm5010 = vcmp.ge.f32.partialorder %v4962, 0.0
      %vm5011 = vcmp.ge.f32.partialorder %v4963, 0.0
      %vm5012 = vcmp.ge.f32.partialorder %v4964, 0.0
      %vm5013 = vcmp.ge.f32.partialorder %v4965, 0.0
      %vm5014 = vcmp.ge.f32.partialorder %v4966, 0.0
      %vm5015 = vcmp.ge.f32.partialorder %v4967, 0.0
      %vm5016 = vcmp.ge.f32.partialorder %v4968, 0.0
      %vm5017 = vcmp.ge.f32.partialorder %v4969, 0.0
      %vm5018 = vcmp.ge.f32.partialorder %v4970, 0.0
      %vm5019 = vcmp.ge.f32.partialorder %v4971, 0.0
      %vm5020 = vcmp.ge.f32.partialorder %v4972, 0.0
      %vm5021 = vcmp.ge.f32.partialorder %v4973, 0.0
      %vm5022 = vcmp.ge.f32.partialorder %v4974, 0.0
      %vm5023 = vcmp.ge.f32.partialorder %v4975, 0.0
      %vm5024 = vcmp.ge.f32.partialorder %v4976, 0.0
      %vm5025 = vcmp.ge.f32.partialorder %v4977, 0.0
      %vm5026 = vcmp.ge.f32.partialorder %v4978, 0.0
      %vm5027 = vcmp.ge.f32.partialorder %v4979, 0.0
      %vm5028 = vcmp.ge.f32.partialorder %v4980, 0.0
      %vm5029 = vcmp.ge.f32.partialorder %v4981, 0.0
      %vm5030 = vcmp.ge.f32.partialorder %v4982, 0.0
      %vm5031 = vcmp.ge.f32.partialorder %v4983, 0.0
      %vm5032 = vcmp.ge.f32.partialorder %v4984, 0.0
      %vm5033 = vcmp.ge.f32.partialorder %v4985, 0.0
      %vm5034 = vcmp.ge.f32.partialorder %v4986, 0.0
      %v5035 = vmul.f32 %v4939, 0.01
      %v5036 = vmul.f32 %v4940, 0.01
      %v5037 = vmul.f32 %v4941, 0.01
      %v5038 = vmul.f32 %v4942, 0.01
      %v5039 = vmul.f32 %v4943, 0.01
      %v5040 = vmul.f32 %v4944, 0.01
      %v5041 = vmul.f32 %v4945, 0.01
      %v5042 = vmul.f32 %v4946, 0.01
      %v5043 = vmul.f32 %v4947, 0.01
      %v5044 = vmul.f32 %v4948, 0.01
      %v5045 = vmul.f32 %v4949, 0.01
      %v5046 = vmul.f32 %v4950, 0.01
      %v5047 = vmul.f32 %v4951, 0.01
      %v5048 = vmul.f32 %v4952, 0.01
      %v5049 = vmul.f32 %v4953, 0.01
      %v5050 = vmul.f32 %v4954, 0.01
      %v5051 = vmul.f32 %v4955, 0.01
      %v5052 = vmul.f32 %v4956, 0.01
      %v5053 = vmul.f32 %v4957, 0.01
      %v5054 = vmul.f32 %v4958, 0.01
      %v5055 = vmul.f32 %v4959, 0.01
      %v5056 = vmul.f32 %v4960, 0.01
      %v5057 = vmul.f32 %v4961, 0.01
      %v5058 = vmul.f32 %v4962, 0.01
      %v5059 = vmul.f32 %v4963, 0.01
      %v5060 = vmul.f32 %v4964, 0.01
      %v5061 = vmul.f32 %v4965, 0.01
      %v5062 = vmul.f32 %v4966, 0.01
      %v5063 = vmul.f32 %v4967, 0.01
      %v5064 = vmul.f32 %v4968, 0.01
      %v5065 = vmul.f32 %v4969, 0.01
      %v5066 = vmul.f32 %v4970, 0.01
      %v5067 = vmul.f32 %v4971, 0.01
      %v5068 = vmul.f32 %v4972, 0.01
      %v5069 = vmul.f32 %v4973, 0.01
      %v5070 = vmul.f32 %v4974, 0.01
      %v5071 = vmul.f32 %v4975, 0.01
      %v5072 = vmul.f32 %v4976, 0.01
      %v5073 = vmul.f32 %v4977, 0.01
      %v5074 = vmul.f32 %v4978, 0.01
      %v5075 = vmul.f32 %v4979, 0.01
      %v5076 = vmul.f32 %v4980, 0.01
      %v5077 = vmul.f32 %v4981, 0.01
      %v5078 = vmul.f32 %v4982, 0.01
      %v5079 = vmul.f32 %v4983, 0.01
      %v5080 = vmul.f32 %v4984, 0.01
      %v5081 = vmul.f32 %v4985, 0.01
      %v5082 = vmul.f32 %v4986, 0.01
      %v5083 = vsel %vm4987, %v4939, %v5035
      %v5084 = vsel %vm4988, %v4940, %v5036
      %v5085 = vsel %vm4989, %v4941, %v5037
      %v5086 = vsel %vm4990, %v4942, %v5038
      %v5087 = vsel %vm4991, %v4943, %v5039
      %v5088 = vsel %vm4992, %v4944, %v5040
      %v5089 = vsel %vm4993, %v4945, %v5041
      %v5090 = vsel %vm4994, %v4946, %v5042
      %v5091 = vsel %vm4995, %v4947, %v5043
      %v5092 = vsel %vm4996, %v4948, %v5044
      %v5093 = vsel %vm4997, %v4949, %v5045
      %v5094 = vsel %vm4998, %v4950, %v5046
      %v5095 = vsel %vm4999, %v4951, %v5047
      %v5096 = vsel %vm5000, %v4952, %v5048
      %v5097 = vsel %vm5001, %v4953, %v5049
      %v5098 = vsel %vm5002, %v4954, %v5050
      %v5099 = vsel %vm5003, %v4955, %v5051
      %v5100 = vsel %vm5004, %v4956, %v5052
      %v5101 = vsel %vm5005, %v4957, %v5053
      %v5102 = vsel %vm5006, %v4958, %v5054
      %v5103 = vsel %vm5007, %v4959, %v5055
      %v5104 = vsel %vm5008, %v4960, %v5056
      %v5105 = vsel %vm5009, %v4961, %v5057
      %v5106 = vsel %vm5010, %v4962, %v5058
      %v5107 = vsel %vm5011, %v4963, %v5059
      %v5108 = vsel %vm5012, %v4964, %v5060
      %v5109 = vsel %vm5013, %v4965, %v5061
      %v5110 = vsel %vm5014, %v4966, %v5062
      %v5111 = vsel %vm5015, %v4967, %v5063
      %v5112 = vsel %vm5016, %v4968, %v5064
      %v5113 = vsel %vm5017, %v4969, %v5065
      %v5114 = vsel %vm5018, %v4970, %v5066
      %v5115 = vsel %vm5019, %v4971, %v5067
      %v5116 = vsel %vm5020, %v4972, %v5068
      %v5117 = vsel %vm5021, %v4973, %v5069
      %v5118 = vsel %vm5022, %v4974, %v5070
      %v5119 = vsel %vm5023, %v4975, %v5071
      %v5120 = vsel %vm5024, %v4976, %v5072
      %v5121 = vsel %vm5025, %v4977, %v5073
      %v5122 = vsel %vm5026, %v4978, %v5074
      %v5123 = vsel %vm5027, %v4979, %v5075
      %v5124 = vsel %vm5028, %v4980, %v5076
      %v5125 = vsel %vm5029, %v4981, %v5077
      %v5126 = vsel %vm5030, %v4982, %v5078
      %v5127 = vsel %vm5031, %v4983, %v5079
      %v5128 = vsel %vm5032, %v4984, %v5080
      %v5129 = vsel %vm5033, %v4985, %v5081
      %v5130 = vsel %vm5034, %v4986, %v5082
      %5131 = vst [vmem:[#allocation2] sm:$0xff] %v5083
      %5132 = vst [vmem:[#allocation2 + $0x8] sm:$0xff] %v5084
      %5133 = vst [vmem:[#allocation2 + $0x10] sm:$0xff] %v5085
      %5134 = vst [vmem:[#allocation2 + $0x18] sm:$0xff] %v5086
      %5135 = vst [vmem:[#allocation2 + $0x20] sm:$0xff] %v5087
      %5136 = vst [vmem:[#allocation2 + $0x28] sm:$0xff] %v5088
      %5137 = vst [vmem:[#allocation2 + $0x30] sm:$0xff] %v5089
      %5138 = vst [vmem:[#allocation2 + $0x38] sm:$0xff] %v5090
      %5139 = vst [vmem:[#allocation2 + $0x40] sm:$0xff] %v5091
      %5140 = vst [vmem:[#allocation2 + $0x48] sm:$0xff] %v5092
      %5141 = vst [vmem:[#allocation2 + $0x50] sm:$0xff] %v5093
      %5142 = vst [vmem:[#allocation2 + $0x58] sm:$0xff] %v5094
      %5143 = vst [vmem:[#allocation2 + $0x60] sm:$0xff] %v5095
      %5144 = vst [vmem:[#allocation2 + $0x68] sm:$0xff] %v5096
      %5145 = vst [vmem:[#allocation2 + $0x70] sm:$0xff] %v5097
      %5146 = vst [vmem:[#allocation2 + $0x78] sm:$0xff] %v5098
      %5147 = vst [vmem:[#allocation2 + $0x80] sm:$0xff] %v5099
      %5148 = vst [vmem:[#allocation2 + $0x88] sm:$0xff] %v5100
      %5149 = vst [vmem:[#allocation2 + $0x90] sm:$0xff] %v5101
      %5150 = vst [vmem:[#allocation2 + $0x98] sm:$0xff] %v5102
      %5151 = vst [vmem:[#allocation2 + $0xa0] sm:$0xff] %v5103
      %5152 = vst [vmem:[#allocation2 + $0xa8] sm:$0xff] %v5104
      %5153 = vst [vmem:[#allocation2 + $0xb0] sm:$0xff] %v5105
      %5154 = vst [vmem:[#allocation2 + $0xb8] sm:$0xff] %v5106
      %5155 = vst [vmem:[#allocation2 + $0xc0] sm:$0xff] %v5107
      %5156 = vst [vmem:[#allocation2 + $0xc8] sm:$0xff] %v5108
      %5157 = vst [vmem:[#allocation2 + $0xd0] sm:$0xff] %v5109
      %5158 = vst [vmem:[#allocation2 + $0xd8] sm:$0xff] %v5110
      %5159 = vst [vmem:[#allocation2 + $0xe0] sm:$0xff] %v5111
      %5160 = vst [vmem:[#allocation2 + $0xe8] sm:$0xff] %v5112
      %5161 = vst [vmem:[#allocation2 + $0xf0] sm:$0xff] %v5113
      %5162 = vst [vmem:[#allocation2 + $0xf8] sm:$0xff] %v5114
      %5163 = vst [vmem:[#allocation2 + $0x100] sm:$0xff] %v5115
      %5164 = vst [vmem:[#allocation2 + $0x108] sm:$0xff] %v5116
      %5165 = vst [vmem:[#allocation2 + $0x110] sm:$0xff] %v5117
      %5166 = vst [vmem:[#allocation2 + $0x118] sm:$0xff] %v5118
      %5167 = vst [vmem:[#allocation2 + $0x120] sm:$0xff] %v5119
      %5168 = vst [vmem:[#allocation2 + $0x128] sm:$0xff] %v5120
      %5169 = vst [vmem:[#allocation2 + $0x130] sm:$0xff] %v5121
      %5170 = vst [vmem:[#allocation2 + $0x138] sm:$0xff] %v5122
      %5171 = vst [vmem:[#allocation2 + $0x140] sm:$0xff] %v5123
      %5172 = vst [vmem:[#allocation2 + $0x148] sm:$0xff] %v5124
      %5173 = vst [vmem:[#allocation2 + $0x150] sm:$0xff] %v5125
      %5174 = vst [vmem:[#allocation2 + $0x158] sm:$0xff] %v5126
      %5175 = vst [vmem:[#allocation2 + $0x160] sm:$0xff] %v5127
      %5176 = vst [vmem:[#allocation2 + $0x168] sm:$0xff] %v5128
      %5177 = vst [vmem:[#allocation2 + $0x170] sm:$0xff] %v5129
      %5178 = vst [vmem:[#allocation2 + $0x178] sm:$0xff] %v5130
      %v5179 = vld [vmem:[#allocation2] sm:$0xff]
      %v5180 = vld [vmem:[#allocation2 + $0x8] sm:$0xff]
      %v5181 = vld [vmem:[#allocation2 + $0x10] sm:$0xff]
      %v5182 = vld [vmem:[#allocation2 + $0x18] sm:$0xff]
      %v5183 = vld [vmem:[#allocation2 + $0x20] sm:$0xff]
      %v5184 = vld [vmem:[#allocation2 + $0x28] sm:$0xff]
      %v5185 = vld [vmem:[#allocation2 + $0x30] sm:$0xff]
      %v5186 = vld [vmem:[#allocation2 + $0x38] sm:$0xff]
      %v5187 = vld [vmem:[#allocation2 + $0x40] sm:$0xff]
      %v5188 = vld [vmem:[#allocation2 + $0x48] sm:$0xff]
      %v5189 = vld [vmem:[#allocation2 + $0x50] sm:$0xff]
      %v5190 = vld [vmem:[#allocation2 + $0x58] sm:$0xff]
      %v5191 = vld [vmem:[#allocation2 + $0x60] sm:$0xff]
      %v5192 = vld [vmem:[#allocation2 + $0x68] sm:$0xff]
      %v5193 = vld [vmem:[#allocation2 + $0x70] sm:$0xff]
      %v5194 = vld [vmem:[#allocation2 + $0x78] sm:$0xff]
      %v5195 = vld [vmem:[#allocation2 + $0x80] sm:$0xff]
      %v5196 = vld [vmem:[#allocation2 + $0x88] sm:$0xff]
      %v5197 = vld [vmem:[#allocation2 + $0x90] sm:$0xff]
      %v5198 = vld [vmem:[#allocation2 + $0x98] sm:$0xff]
      %v5199 = vld [vmem:[#allocation2 + $0xa0] sm:$0xff]
      %v5200 = vld [vmem:[#allocation2 + $0xa8] sm:$0xff]
      %v5201 = vld [vmem:[#allocation2 + $0xb0] sm:$0xff]
      %v5202 = vld [vmem:[#allocation2 + $0xb8] sm:$0xff]
      %v5203 = vld [vmem:[#allocation2 + $0xc0] sm:$0xff]
      %v5204 = vld [vmem:[#allocation2 + $0xc8] sm:$0xff]
      %v5205 = vld [vmem:[#allocation2 + $0xd0] sm:$0xff]
      %v5206 = vld [vmem:[#allocation2 + $0xd8] sm:$0xff]
      %v5207 = vld [vmem:[#allocation2 + $0xe0] sm:$0xff]
      %v5208 = vld [vmem:[#allocation2 + $0xe8] sm:$0xff]
      %v5209 = vld [vmem:[#allocation2 + $0xf0] sm:$0xff]
      %v5210 = vld [vmem:[#allocation2 + $0xf8] sm:$0xff]
      %v5211 = vld [vmem:[#allocation2 + $0x100] sm:$0xff]
      %v5212 = vld [vmem:[#allocation2 + $0x108] sm:$0xff]
      %v5213 = vld [vmem:[#allocation2 + $0x110] sm:$0xff]
      %v5214 = vld [vmem:[#allocation2 + $0x118] sm:$0xff]
      %v5215 = vld [vmem:[#allocation2 + $0x120] sm:$0xff]
      %v5216 = vld [vmem:[#allocation2 + $0x128] sm:$0xff]
      %v5217 = vld [vmem:[#allocation2 + $0x130] sm:$0xff]
      %v5218 = vld [vmem:[#allocation2 + $0x138] sm:$0xff]
      %v5219 = vld [vmem:[#allocation2 + $0x140] sm:$0xff]
      %v5220 = vld [vmem:[#allocation2 + $0x148] sm:$0xff]
      %v5221 = vld [vmem:[#allocation2 + $0x150] sm:$0xff]
      %v5222 = vld [vmem:[#allocation2 + $0x158] sm:$0xff]
      %v5223 = vld [vmem:[#allocation2 + $0x160] sm:$0xff]
      %v5224 = vld [vmem:[#allocation2 + $0x168] sm:$0xff]
      %v5225 = vld [vmem:[#allocation2 + $0x170] sm:$0xff]
      %v5226 = vld [vmem:[#allocation2 + $0x178] sm:$0xff]
      %v5227 = vld [vmem:[%s3] sm:$0xff]
      %v5228 = vld [vmem:[%s3 + $0x8] sm:$0xff]
      %v5229 = vld [vmem:[%s3 + $0x10] sm:$0xff]
      %v5230 = vld [vmem:[%s3 + $0x18] sm:$0xff]
      %v5231 = vld [vmem:[%s3 + $0x20] sm:$0xff]
      %v5232 = vld [vmem:[%s3 + $0x28] sm:$0xff]
      %v5233 = vld [vmem:[%s3 + $0x30] sm:$0xff]
      %v5234 = vld [vmem:[%s3 + $0x38] sm:$0xff]
      %v5235 = vld [vmem:[%s3 + $0x40] sm:$0xff]
      %v5236 = vld [vmem:[%s3 + $0x48] sm:$0xff]
      %v5237 = vld [vmem:[%s3 + $0x50] sm:$0xff]
      %v5238 = vld [vmem:[%s3 + $0x58] sm:$0xff]
      %v5239 = vld [vmem:[%s3 + $0x60] sm:$0xff]
      %v5240 = vld [vmem:[%s3 + $0x68] sm:$0xff]
      %v5241 = vld [vmem:[%s3 + $0x70] sm:$0xff]
      %v5242 = vld [vmem:[%s3 + $0x78] sm:$0xff]
      %v5243 = vld [vmem:[%s3 + $0x80] sm:$0xff]
      %v5244 = vld [vmem:[%s3 + $0x88] sm:$0xff]
      %v5245 = vld [vmem:[%s3 + $0x90] sm:$0xff]
      %v5246 = vld [vmem:[%s3 + $0x98] sm:$0xff]
      %v5247 = vld [vmem:[%s3 + $0xa0] sm:$0xff]
      %v5248 = vld [vmem:[%s3 + $0xa8] sm:$0xff]
      %v5249 = vld [vmem:[%s3 + $0xb0] sm:$0xff]
      %v5250 = vld [vmem:[%s3 + $0xb8] sm:$0xff]
      %v5251 = vunpack.c.l.bf16 %v5227
      %v5252 = vunpack.c.h.bf16 %v5227
      %v5253 = vunpack.c.l.bf16 %v5228
      %v5254 = vunpack.c.h.bf16 %v5228
      %v5255 = vunpack.c.l.bf16 %v5229
      %v5256 = vunpack.c.h.bf16 %v5229
      %v5257 = vunpack.c.l.bf16 %v5230
      %v5258 = vunpack.c.h.bf16 %v5230
      %v5259 = vunpack.c.l.bf16 %v5231
      %v5260 = vunpack.c.h.bf16 %v5231
      %v5261 = vunpack.c.l.bf16 %v5232
      %v5262 = vunpack.c.h.bf16 %v5232
      %v5263 = vunpack.c.l.bf16 %v5233
      %v5264 = vunpack.c.h.bf16 %v5233
      %v5265 = vunpack.c.l.bf16 %v5234
      %v5266 = vunpack.c.h.bf16 %v5234
      %v5267 = vunpack.c.l.bf16 %v5235
      %v5268 = vunpack.c.h.bf16 %v5235
      %v5269 = vunpack.c.l.bf16 %v5236
      %v5270 = vunpack.c.h.bf16 %v5236
      %v5271 = vunpack.c.l.bf16 %v5237
      %v5272 = vunpack.c.h.bf16 %v5237
      %v5273 = vunpack.c.l.bf16 %v5238
      %v5274 = vunpack.c.h.bf16 %v5238
      %v5275 = vunpack.c.l.bf16 %v5239
      %v5276 = vunpack.c.h.bf16 %v5239
      %v5277 = vunpack.c.l.bf16 %v5240
      %v5278 = vunpack.c.h.bf16 %v5240
      %v5279 = vunpack.c.l.bf16 %v5241
      %v5280 = vunpack.c.h.bf16 %v5241
      %v5281 = vunpack.c.l.bf16 %v5242
      %v5282 = vunpack.c.h.bf16 %v5242
      %v5283 = vunpack.c.l.bf16 %v5243
      %v5284 = vunpack.c.h.bf16 %v5243
      %v5285 = vunpack.c.l.bf16 %v5244
      %v5286 = vunpack.c.h.bf16 %v5244
      %v5287 = vunpack.c.l.bf16 %v5245
      %v5288 = vunpack.c.h.bf16 %v5245
      %v5289 = vunpack.c.l.bf16 %v5246
      %v5290 = vunpack.c.h.bf16 %v5246
      %v5291 = vunpack.c.l.bf16 %v5247
      %v5292 = vunpack.c.h.bf16 %v5247
      %v5293 = vunpack.c.l.bf16 %v5248
      %v5294 = vunpack.c.h.bf16 %v5248
      %v5295 = vunpack.c.l.bf16 %v5249
      %v5296 = vunpack.c.h.bf16 %v5249
      %v5297 = vunpack.c.l.bf16 %v5250
      %v5298 = vunpack.c.h.bf16 %v5250
      %v5299 = vmul.f32 %v5179, %v5251
      %v5300 = vmul.f32 %v5180, %v5252
      %v5301 = vmul.f32 %v5181, %v5253
      %v5302 = vmul.f32 %v5182, %v5254
      %v5303 = vmul.f32 %v5183, %v5255
      %v5304 = vmul.f32 %v5184, %v5256
      %v5305 = vmul.f32 %v5185, %v5257
      %v5306 = vmul.f32 %v5186, %v5258
      %v5307 = vmul.f32 %v5187, %v5259
      %v5308 = vmul.f32 %v5188, %v5260
      %v5309 = vmul.f32 %v5189, %v5261
      %v5310 = vmul.f32 %v5190, %v5262
      %v5311 = vmul.f32 %v5191, %v5263
      %v5312 = vmul.f32 %v5192, %v5264
      %v5313 = vmul.f32 %v5193, %v5265
      %v5314 = vmul.f32 %v5194, %v5266
      %v5315 = vmul.f32 %v5195, %v5267
      %v5316 = vmul.f32 %v5196, %v5268
      %v5317 = vmul.f32 %v5197, %v5269
      %v5318 = vmul.f32 %v5198, %v5270
      %v5319 = vmul.f32 %v5199, %v5271
      %v5320 = vmul.f32 %v5200, %v5272
      %v5321 = vmul.f32 %v5201, %v5273
      %v5322 = vmul.f32 %v5202, %v5274
      %v5323 = vmul.f32 %v5203, %v5275
      %v5324 = vmul.f32 %v5204, %v5276
      %v5325 = vmul.f32 %v5205, %v5277
      %v5326 = vmul.f32 %v5206, %v5278
      %v5327 = vmul.f32 %v5207, %v5279
      %v5328 = vmul.f32 %v5208, %v5280
      %v5329 = vmul.f32 %v5209, %v5281
      %v5330 = vmul.f32 %v5210, %v5282
      %v5331 = vmul.f32 %v5211, %v5283
      %v5332 = vmul.f32 %v5212, %v5284
      %v5333 = vmul.f32 %v5213, %v5285
      %v5334 = vmul.f32 %v5214, %v5286
      %v5335 = vmul.f32 %v5215, %v5287
      %v5336 = vmul.f32 %v5216, %v5288
      %v5337 = vmul.f32 %v5217, %v5289
      %v5338 = vmul.f32 %v5218, %v5290
      %v5339 = vmul.f32 %v5219, %v5291
      %v5340 = vmul.f32 %v5220, %v5292
      %v5341 = vmul.f32 %v5221, %v5293
      %v5342 = vmul.f32 %v5222, %v5294
      %v5343 = vmul.f32 %v5223, %v5295
      %v5344 = vmul.f32 %v5224, %v5296
      %v5345 = vmul.f32 %v5225, %v5297
      %v5346 = vmul.f32 %v5226, %v5298
      %v5347 = vadd.f32 %v5299, %v5301
      %v5348 = vadd.f32 %v5347, %v5303
      %v5349 = vadd.f32 %v5348, %v5305
      %v5350 = vadd.f32 %v5349, %v5307
      %v5351 = vadd.f32 %v5350, %v5309
      %v5352 = vadd.f32 %v5351, %v5311
      %v5353 = vadd.f32 %v5352, %v5313
      %v5354 = vadd.f32 %v5353, %v5315
      %v5355 = vadd.f32 %v5354, %v5317
      %v5356 = vadd.f32 %v5355, %v5319
      %v5357 = vadd.f32 %v5356, %v5321
      %v5358 = vadd.f32 %v5357, %v5323
      %v5359 = vadd.f32 %v5358, %v5325
      %v5360 = vadd.f32 %v5359, %v5327
      %v5361 = vadd.f32 %v5360, %v5329
      %v5362 = vadd.f32 %v5361, %v5331
      %v5363 = vadd.f32 %v5362, %v5333
      %v5364 = vadd.f32 %v5363, %v5335
      %v5365 = vadd.f32 %v5364, %v5337
      %v5366 = vadd.f32 %v5365, %v5339
      %v5367 = vadd.f32 %v5366, %v5341
      %v5368 = vadd.f32 %v5367, %v5343
      %v5369 = vadd.f32 %v5368, %v5345
      %v5370 = vrot.slane %v5369, 4
      %v5371 = vadd.f32 %v5369, %v5370
      %v5372 = vrot.slane %v5371, 2
      %v5373 = vadd.f32 %v5371, %v5372
      %v5374 = vrot.slane %v5373, 1
      %v5375 = vadd.f32 %v5373, %v5374
      %v5376 = vadd.f32 %v5300, %v5302
      %v5377 = vadd.f32 %v5376, %v5304
      %v5378 = vadd.f32 %v5377, %v5306
      %v5379 = vadd.f32 %v5378, %v5308
      %v5380 = vadd.f32 %v5379, %v5310
      %v5381 = vadd.f32 %v5380, %v5312
      %v5382 = vadd.f32 %v5381, %v5314
      %v5383 = vadd.f32 %v5382, %v5316
      %v5384 = vadd.f32 %v5383, %v5318
      %v5385 = vadd.f32 %v5384, %v5320
      %v5386 = vadd.f32 %v5385, %v5322
      %v5387 = vadd.f32 %v5386, %v5324
      %v5388 = vadd.f32 %v5387, %v5326
      %v5389 = vadd.f32 %v5388, %v5328
      %v5390 = vadd.f32 %v5389, %v5330
      %v5391 = vadd.f32 %v5390, %v5332
      %v5392 = vadd.f32 %v5391, %v5334
      %v5393 = vadd.f32 %v5392, %v5336
      %v5394 = vadd.f32 %v5393, %v5338
      %v5395 = vadd.f32 %v5394, %v5340
      %v5396 = vadd.f32 %v5395, %v5342
      %v5397 = vadd.f32 %v5396, %v5344
      %v5398 = vadd.f32 %v5397, %v5346
      %v5399 = vrot.slane %v5398, 4
      %v5400 = vadd.f32 %v5398, %v5399
      %v5401 = vrot.slane %v5400, 2
      %v5402 = vadd.f32 %v5400, %v5401
      %v5403 = vrot.slane %v5402, 1
      %v5404 = vadd.f32 %v5402, %v5403
      %s5405 = scalar_lea.vmem %s3, 192
      %v5406 = vld [vmem:[%s5405] sm:$0xff]
      %v5407 = vld [vmem:[%s5405 + $0x8] sm:$0xff]
      %v5408 = vld [vmem:[%s5405 + $0x10] sm:$0xff]
      %v5409 = vld [vmem:[%s5405 + $0x18] sm:$0xff]
      %v5410 = vld [vmem:[%s5405 + $0x20] sm:$0xff]
      %v5411 = vld [vmem:[%s5405 + $0x28] sm:$0xff]
      %v5412 = vld [vmem:[%s5405 + $0x30] sm:$0xff]
      %v5413 = vld [vmem:[%s5405 + $0x38] sm:$0xff]
      %v5414 = vld [vmem:[%s5405 + $0x40] sm:$0xff]
      %v5415 = vld [vmem:[%s5405 + $0x48] sm:$0xff]
      %v5416 = vld [vmem:[%s5405 + $0x50] sm:$0xff]
      %v5417 = vld [vmem:[%s5405 + $0x58] sm:$0xff]
      %v5418 = vld [vmem:[%s5405 + $0x60] sm:$0xff]
      %v5419 = vld [vmem:[%s5405 + $0x68] sm:$0xff]
      %v5420 = vld [vmem:[%s5405 + $0x70] sm:$0xff]
      %v5421 = vld [vmem:[%s5405 + $0x78] sm:$0xff]
      %v5422 = vld [vmem:[%s5405 + $0x80] sm:$0xff]
      %v5423 = vld [vmem:[%s5405 + $0x88] sm:$0xff]
      %v5424 = vld [vmem:[%s5405 + $0x90] sm:$0xff]
      %v5425 = vld [vmem:[%s5405 + $0x98] sm:$0xff]
      %v5426 = vld [vmem:[%s5405 + $0xa0] sm:$0xff]
      %v5427 = vld [vmem:[%s5405 + $0xa8] sm:$0xff]
      %v5428 = vld [vmem:[%s5405 + $0xb0] sm:$0xff]
      %v5429 = vld [vmem:[%s5405 + $0xb8] sm:$0xff]
      %v5430 = vunpack.c.l.bf16 %v5406
      %v5431 = vunpack.c.h.bf16 %v5406
      %v5432 = vunpack.c.l.bf16 %v5407
      %v5433 = vunpack.c.h.bf16 %v5407
      %v5434 = vunpack.c.l.bf16 %v5408
      %v5435 = vunpack.c.h.bf16 %v5408
      %v5436 = vunpack.c.l.bf16 %v5409
      %v5437 = vunpack.c.h.bf16 %v5409
      %v5438 = vunpack.c.l.bf16 %v5410
      %v5439 = vunpack.c.h.bf16 %v5410
      %v5440 = vunpack.c.l.bf16 %v5411
      %v5441 = vunpack.c.h.bf16 %v5411
      %v5442 = vunpack.c.l.bf16 %v5412
      %v5443 = vunpack.c.h.bf16 %v5412
      %v5444 = vunpack.c.l.bf16 %v5413
      %v5445 = vunpack.c.h.bf16 %v5413
      %v5446 = vunpack.c.l.bf16 %v5414
      %v5447 = vunpack.c.h.bf16 %v5414
      %v5448 = vunpack.c.l.bf16 %v5415
      %v5449 = vunpack.c.h.bf16 %v5415
      %v5450 = vunpack.c.l.bf16 %v5416
      %v5451 = vunpack.c.h.bf16 %v5416
      %v5452 = vunpack.c.l.bf16 %v5417
      %v5453 = vunpack.c.h.bf16 %v5417
      %v5454 = vunpack.c.l.bf16 %v5418
      %v5455 = vunpack.c.h.bf16 %v5418
      %v5456 = vunpack.c.l.bf16 %v5419
      %v5457 = vunpack.c.h.bf16 %v5419
      %v5458 = vunpack.c.l.bf16 %v5420
      %v5459 = vunpack.c.h.bf16 %v5420
      %v5460 = vunpack.c.l.bf16 %v5421
      %v5461 = vunpack.c.h.bf16 %v5421
      %v5462 = vunpack.c.l.bf16 %v5422
      %v5463 = vunpack.c.h.bf16 %v5422
      %v5464 = vunpack.c.l.bf16 %v5423
      %v5465 = vunpack.c.h.bf16 %v5423
      %v5466 = vunpack.c.l.bf16 %v5424
      %v5467 = vunpack.c.h.bf16 %v5424
      %v5468 = vunpack.c.l.bf16 %v5425
      %v5469 = vunpack.c.h.bf16 %v5425
      %v5470 = vunpack.c.l.bf16 %v5426
      %v5471 = vunpack.c.h.bf16 %v5426
      %v5472 = vunpack.c.l.bf16 %v5427
      %v5473 = vunpack.c.h.bf16 %v5427
      %v5474 = vunpack.c.l.bf16 %v5428
      %v5475 = vunpack.c.h.bf16 %v5428
      %v5476 = vunpack.c.l.bf16 %v5429
      %v5477 = vunpack.c.h.bf16 %v5429
      %v5478 = vmul.f32 %v5179, %v5430
      %v5479 = vmul.f32 %v5180, %v5431
      %v5480 = vmul.f32 %v5181, %v5432
      %v5481 = vmul.f32 %v5182, %v5433
      %v5482 = vmul.f32 %v5183, %v5434
      %v5483 = vmul.f32 %v5184, %v5435
      %v5484 = vmul.f32 %v5185, %v5436
      %v5485 = vmul.f32 %v5186, %v5437
      %v5486 = vmul.f32 %v5187, %v5438
      %v5487 = vmul.f32 %v5188, %v5439
      %v5488 = vmul.f32 %v5189, %v5440
      %v5489 = vmul.f32 %v5190, %v5441
      %v5490 = vmul.f32 %v5191, %v5442
      %v5491 = vmul.f32 %v5192, %v5443
      %v5492 = vmul.f32 %v5193, %v5444
      %v5493 = vmul.f32 %v5194, %v5445
      %v5494 = vmul.f32 %v5195, %v5446
      %v5495 = vmul.f32 %v5196, %v5447
      %v5496 = vmul.f32 %v5197, %v5448
      %v5497 = vmul.f32 %v5198, %v5449
      %v5498 = vmul.f32 %v5199, %v5450
      %v5499 = vmul.f32 %v5200, %v5451
      %v5500 = vmul.f32 %v5201, %v5452
      %v5501 = vmul.f32 %v5202, %v5453
      %v5502 = vmul.f32 %v5203, %v5454
      %v5503 = vmul.f32 %v5204, %v5455
      %v5504 = vmul.f32 %v5205, %v5456
      %v5505 = vmul.f32 %v5206, %v5457
      %v5506 = vmul.f32 %v5207, %v5458
      %v5507 = vmul.f32 %v5208, %v5459
      %v5508 = vmul.f32 %v5209, %v5460
      %v5509 = vmul.f32 %v5210, %v5461
      %v5510 = vmul.f32 %v5211, %v5462
      %v5511 = vmul.f32 %v5212, %v5463
      %v5512 = vmul.f32 %v5213, %v5464
      %v5513 = vmul.f32 %v5214, %v5465
      %v5514 = vmul.f32 %v5215, %v5466
      %v5515 = vmul.f32 %v5216, %v5467
      %v5516 = vmul.f32 %v5217, %v5468
      %v5517 = vmul.f32 %v5218, %v5469
      %v5518 = vmul.f32 %v5219, %v5470
      %v5519 = vmul.f32 %v5220, %v5471
      %v5520 = vmul.f32 %v5221, %v5472
      %v5521 = vmul.f32 %v5222, %v5473
      %v5522 = vmul.f32 %v5223, %v5474
      %v5523 = vmul.f32 %v5224, %v5475
      %v5524 = vmul.f32 %v5225, %v5476
      %v5525 = vmul.f32 %v5226, %v5477
      %v5526 = vadd.f32 %v5478, %v5480
      %v5527 = vadd.f32 %v5526, %v5482
      %v5528 = vadd.f32 %v5527, %v5484
      %v5529 = vadd.f32 %v5528, %v5486
      %v5530 = vadd.f32 %v5529, %v5488
      %v5531 = vadd.f32 %v5530, %v5490
      %v5532 = vadd.f32 %v5531, %v5492
      %v5533 = vadd.f32 %v5532, %v5494
      %v5534 = vadd.f32 %v5533, %v5496
      %v5535 = vadd.f32 %v5534, %v5498
      %v5536 = vadd.f32 %v5535, %v5500
      %v5537 = vadd.f32 %v5536, %v5502
      %v5538 = vadd.f32 %v5537, %v5504
      %v5539 = vadd.f32 %v5538, %v5506
      %v5540 = vadd.f32 %v5539, %v5508
      %v5541 = vadd.f32 %v5540, %v5510
      %v5542 = vadd.f32 %v5541, %v5512
      %v5543 = vadd.f32 %v5542, %v5514
      %v5544 = vadd.f32 %v5543, %v5516
      %v5545 = vadd.f32 %v5544, %v5518
      %v5546 = vadd.f32 %v5545, %v5520
      %v5547 = vadd.f32 %v5546, %v5522
      %v5548 = vadd.f32 %v5547, %v5524
      %v5549 = vrot.slane %v5548, 4
      %v5550 = vadd.f32 %v5548, %v5549
      %v5551 = vrot.slane %v5550, 2
      %v5552 = vadd.f32 %v5550, %v5551
      %v5553 = vrot.slane %v5552, 1
      %v5554 = vadd.f32 %v5552, %v5553
      %v5555 = vadd.f32 %v5479, %v5481
      %v5556 = vadd.f32 %v5555, %v5483
      %v5557 = vadd.f32 %v5556, %v5485
      %v5558 = vadd.f32 %v5557, %v5487
      %v5559 = vadd.f32 %v5558, %v5489
      %v5560 = vadd.f32 %v5559, %v5491
      %v5561 = vadd.f32 %v5560, %v5493
      %v5562 = vadd.f32 %v5561, %v5495
      %v5563 = vadd.f32 %v5562, %v5497
      %v5564 = vadd.f32 %v5563, %v5499
      %v5565 = vadd.f32 %v5564, %v5501
      %v5566 = vadd.f32 %v5565, %v5503
      %v5567 = vadd.f32 %v5566, %v5505
      %v5568 = vadd.f32 %v5567, %v5507
      %v5569 = vadd.f32 %v5568, %v5509
      %v5570 = vadd.f32 %v5569, %v5511
      %v5571 = vadd.f32 %v5570, %v5513
      %v5572 = vadd.f32 %v5571, %v5515
      %v5573 = vadd.f32 %v5572, %v5517
      %v5574 = vadd.f32 %v5573, %v5519
      %v5575 = vadd.f32 %v5574, %v5521
      %v5576 = vadd.f32 %v5575, %v5523
      %v5577 = vadd.f32 %v5576, %v5525
      %v5578 = vrot.slane %v5577, 4
      %v5579 = vadd.f32 %v5577, %v5578
      %v5580 = vrot.slane %v5579, 2
      %v5581 = vadd.f32 %v5579, %v5580
      %v5582 = vrot.slane %v5581, 1
      %v5583 = vadd.f32 %v5581, %v5582
      %s5584 = scalar_lea.vmem %s3, 384
      %v5585 = vld [vmem:[%s5584] sm:$0xff]
      %v5586 = vld [vmem:[%s5584 + $0x8] sm:$0xff]
      %v5587 = vld [vmem:[%s5584 + $0x10] sm:$0xff]
      %v5588 = vld [vmem:[%s5584 + $0x18] sm:$0xff]
      %v5589 = vld [vmem:[%s5584 + $0x20] sm:$0xff]
      %v5590 = vld [vmem:[%s5584 + $0x28] sm:$0xff]
      %v5591 = vld [vmem:[%s5584 + $0x30] sm:$0xff]
      %v5592 = vld [vmem:[%s5584 + $0x38] sm:$0xff]
      %v5593 = vld [vmem:[%s5584 + $0x40] sm:$0xff]
      %v5594 = vld [vmem:[%s5584 + $0x48] sm:$0xff]
      %v5595 = vld [vmem:[%s5584 + $0x50] sm:$0xff]
      %v5596 = vld [vmem:[%s5584 + $0x58] sm:$0xff]
      %v5597 = vld [vmem:[%s5584 + $0x60] sm:$0xff]
      %v5598 = vld [vmem:[%s5584 + $0x68] sm:$0xff]
      %v5599 = vld [vmem:[%s5584 + $0x70] sm:$0xff]
      %v5600 = vld [vmem:[%s5584 + $0x78] sm:$0xff]
      %v5601 = vld [vmem:[%s5584 + $0x80] sm:$0xff]
      %v5602 = vld [vmem:[%s5584 + $0x88] sm:$0xff]
      %v5603 = vld [vmem:[%s5584 + $0x90] sm:$0xff]
      %v5604 = vld [vmem:[%s5584 + $0x98] sm:$0xff]
      %v5605 = vld [vmem:[%s5584 + $0xa0] sm:$0xff]
      %v5606 = vld [vmem:[%s5584 + $0xa8] sm:$0xff]
      %v5607 = vld [vmem:[%s5584 + $0xb0] sm:$0xff]
      %v5608 = vld [vmem:[%s5584 + $0xb8] sm:$0xff]
      %v5609 = vunpack.c.l.bf16 %v5585
      %v5610 = vunpack.c.h.bf16 %v5585
      %v5611 = vunpack.c.l.bf16 %v5586
      %v5612 = vunpack.c.h.bf16 %v5586
      %v5613 = vunpack.c.l.bf16 %v5587
      %v5614 = vunpack.c.h.bf16 %v5587
      %v5615 = vunpack.c.l.bf16 %v5588
      %v5616 = vunpack.c.h.bf16 %v5588
      %v5617 = vunpack.c.l.bf16 %v5589
      %v5618 = vunpack.c.h.bf16 %v5589
      %v5619 = vunpack.c.l.bf16 %v5590
      %v5620 = vunpack.c.h.bf16 %v5590
      %v5621 = vunpack.c.l.bf16 %v5591
      %v5622 = vunpack.c.h.bf16 %v5591
      %v5623 = vunpack.c.l.bf16 %v5592
      %v5624 = vunpack.c.h.bf16 %v5592
      %v5625 = vunpack.c.l.bf16 %v5593
      %v5626 = vunpack.c.h.bf16 %v5593
      %v5627 = vunpack.c.l.bf16 %v5594
      %v5628 = vunpack.c.h.bf16 %v5594
      %v5629 = vunpack.c.l.bf16 %v5595
      %v5630 = vunpack.c.h.bf16 %v5595
      %v5631 = vunpack.c.l.bf16 %v5596
      %v5632 = vunpack.c.h.bf16 %v5596
      %v5633 = vunpack.c.l.bf16 %v5597
      %v5634 = vunpack.c.h.bf16 %v5597
      %v5635 = vunpack.c.l.bf16 %v5598
      %v5636 = vunpack.c.h.bf16 %v5598
      %v5637 = vunpack.c.l.bf16 %v5599
      %v5638 = vunpack.c.h.bf16 %v5599
      %v5639 = vunpack.c.l.bf16 %v5600
      %v5640 = vunpack.c.h.bf16 %v5600
      %v5641 = vunpack.c.l.bf16 %v5601
      %v5642 = vunpack.c.h.bf16 %v5601
      %v5643 = vunpack.c.l.bf16 %v5602
      %v5644 = vunpack.c.h.bf16 %v5602
      %v5645 = vunpack.c.l.bf16 %v5603
      %v5646 = vunpack.c.h.bf16 %v5603
      %v5647 = vunpack.c.l.bf16 %v5604
      %v5648 = vunpack.c.h.bf16 %v5604
      %v5649 = vunpack.c.l.bf16 %v5605
      %v5650 = vunpack.c.h.bf16 %v5605
      %v5651 = vunpack.c.l.bf16 %v5606
      %v5652 = vunpack.c.h.bf16 %v5606
      %v5653 = vunpack.c.l.bf16 %v5607
      %v5654 = vunpack.c.h.bf16 %v5607
      %v5655 = vunpack.c.l.bf16 %v5608
      %v5656 = vunpack.c.h.bf16 %v5608
      %v5657 = vmul.f32 %v5179, %v5609
      %v5658 = vmul.f32 %v5180, %v5610
      %v5659 = vmul.f32 %v5181, %v5611
      %v5660 = vmul.f32 %v5182, %v5612
      %v5661 = vmul.f32 %v5183, %v5613
      %v5662 = vmul.f32 %v5184, %v5614
      %v5663 = vmul.f32 %v5185, %v5615
      %v5664 = vmul.f32 %v5186, %v5616
      %v5665 = vmul.f32 %v5187, %v5617
      %v5666 = vmul.f32 %v5188, %v5618
      %v5667 = vmul.f32 %v5189, %v5619
      %v5668 = vmul.f32 %v5190, %v5620
      %v5669 = vmul.f32 %v5191, %v5621
      %v5670 = vmul.f32 %v5192, %v5622
      %v5671 = vmul.f32 %v5193, %v5623
      %v5672 = vmul.f32 %v5194, %v5624
      %v5673 = vmul.f32 %v5195, %v5625
      %v5674 = vmul.f32 %v5196, %v5626
      %v5675 = vmul.f32 %v5197, %v5627
      %v5676 = vmul.f32 %v5198, %v5628
      %v5677 = vmul.f32 %v5199, %v5629
      %v5678 = vmul.f32 %v5200, %v5630
      %v5679 = vmul.f32 %v5201, %v5631
      %v5680 = vmul.f32 %v5202, %v5632
      %v5681 = vmul.f32 %v5203, %v5633
      %v5682 = vmul.f32 %v5204, %v5634
      %v5683 = vmul.f32 %v5205, %v5635
      %v5684 = vmul.f32 %v5206, %v5636
      %v5685 = vmul.f32 %v5207, %v5637
      %v5686 = vmul.f32 %v5208, %v5638
      %v5687 = vmul.f32 %v5209, %v5639
      %v5688 = vmul.f32 %v5210, %v5640
      %v5689 = vmul.f32 %v5211, %v5641
      %v5690 = vmul.f32 %v5212, %v5642
      %v5691 = vmul.f32 %v5213, %v5643
      %v5692 = vmul.f32 %v5214, %v5644
      %v5693 = vmul.f32 %v5215, %v5645
      %v5694 = vmul.f32 %v5216, %v5646
      %v5695 = vmul.f32 %v5217, %v5647
      %v5696 = vmul.f32 %v5218, %v5648
      %v5697 = vmul.f32 %v5219, %v5649
      %v5698 = vmul.f32 %v5220, %v5650
      %v5699 = vmul.f32 %v5221, %v5651
      %v5700 = vmul.f32 %v5222, %v5652
      %v5701 = vmul.f32 %v5223, %v5653
      %v5702 = vmul.f32 %v5224, %v5654
      %v5703 = vmul.f32 %v5225, %v5655
      %v5704 = vmul.f32 %v5226, %v5656
      %v5705 = vadd.f32 %v5657, %v5659
      %v5706 = vadd.f32 %v5705, %v5661
      %v5707 = vadd.f32 %v5706, %v5663
      %v5708 = vadd.f32 %v5707, %v5665
      %v5709 = vadd.f32 %v5708, %v5667
      %v5710 = vadd.f32 %v5709, %v5669
      %v5711 = vadd.f32 %v5710, %v5671
      %v5712 = vadd.f32 %v5711, %v5673
      %v5713 = vadd.f32 %v5712, %v5675
      %v5714 = vadd.f32 %v5713, %v5677
      %v5715 = vadd.f32 %v5714, %v5679
      %v5716 = vadd.f32 %v5715, %v5681
      %v5717 = vadd.f32 %v5716, %v5683
      %v5718 = vadd.f32 %v5717, %v5685
      %v5719 = vadd.f32 %v5718, %v5687
      %v5720 = vadd.f32 %v5719, %v5689
      %v5721 = vadd.f32 %v5720, %v5691
      %v5722 = vadd.f32 %v5721, %v5693
      %v5723 = vadd.f32 %v5722, %v5695
      %v5724 = vadd.f32 %v5723, %v5697
      %v5725 = vadd.f32 %v5724, %v5699
      %v5726 = vadd.f32 %v5725, %v5701
      %v5727 = vadd.f32 %v5726, %v5703
      %v5728 = vrot.slane %v5727, 4
      %v5729 = vadd.f32 %v5727, %v5728
      %v5730 = vrot.slane %v5729, 2
      %v5731 = vadd.f32 %v5729, %v5730
      %v5732 = vrot.slane %v5731, 1
      %v5733 = vadd.f32 %v5731, %v5732
      %v5734 = vadd.f32 %v5658, %v5660
      %v5735 = vadd.f32 %v5734, %v5662
      %v5736 = vadd.f32 %v5735, %v5664
      %v5737 = vadd.f32 %v5736, %v5666
      %v5738 = vadd.f32 %v5737, %v5668
      %v5739 = vadd.f32 %v5738, %v5670
      %v5740 = vadd.f32 %v5739, %v5672
      %v5741 = vadd.f32 %v5740, %v5674
      %v5742 = vadd.f32 %v5741, %v5676
      %v5743 = vadd.f32 %v5742, %v5678
      %v5744 = vadd.f32 %v5743, %v5680
      %v5745 = vadd.f32 %v5744, %v5682
      %v5746 = vadd.f32 %v5745, %v5684
      %v5747 = vadd.f32 %v5746, %v5686
      %v5748 = vadd.f32 %v5747, %v5688
      %v5749 = vadd.f32 %v5748, %v5690
      %v5750 = vadd.f32 %v5749, %v5692
      %v5751 = vadd.f32 %v5750, %v5694
      %v5752 = vadd.f32 %v5751, %v5696
      %v5753 = vadd.f32 %v5752, %v5698
      %v5754 = vadd.f32 %v5753, %v5700
      %v5755 = vadd.f32 %v5754, %v5702
      %v5756 = vadd.f32 %v5755, %v5704
      %v5757 = vrot.slane %v5756, 4
      %v5758 = vadd.f32 %v5756, %v5757
      %v5759 = vrot.slane %v5758, 2
      %v5760 = vadd.f32 %v5758, %v5759
      %v5761 = vrot.slane %v5760, 1
      %v5762 = vadd.f32 %v5760, %v5761
      %s5763 = scalar_lea.vmem %s3, 576
      %v5764 = vld [vmem:[%s5763] sm:$0xff]
      %v5765 = vld [vmem:[%s5763 + $0x8] sm:$0xff]
      %v5766 = vld [vmem:[%s5763 + $0x10] sm:$0xff]
      %v5767 = vld [vmem:[%s5763 + $0x18] sm:$0xff]
      %v5768 = vld [vmem:[%s5763 + $0x20] sm:$0xff]
      %v5769 = vld [vmem:[%s5763 + $0x28] sm:$0xff]
      %v5770 = vld [vmem:[%s5763 + $0x30] sm:$0xff]
      %v5771 = vld [vmem:[%s5763 + $0x38] sm:$0xff]
      %v5772 = vld [vmem:[%s5763 + $0x40] sm:$0xff]
      %v5773 = vld [vmem:[%s5763 + $0x48] sm:$0xff]
      %v5774 = vld [vmem:[%s5763 + $0x50] sm:$0xff]
      %v5775 = vld [vmem:[%s5763 + $0x58] sm:$0xff]
      %v5776 = vld [vmem:[%s5763 + $0x60] sm:$0xff]
      %v5777 = vld [vmem:[%s5763 + $0x68] sm:$0xff]
      %v5778 = vld [vmem:[%s5763 + $0x70] sm:$0xff]
      %v5779 = vld [vmem:[%s5763 + $0x78] sm:$0xff]
      %v5780 = vld [vmem:[%s5763 + $0x80] sm:$0xff]
      %v5781 = vld [vmem:[%s5763 + $0x88] sm:$0xff]
      %v5782 = vld [vmem:[%s5763 + $0x90] sm:$0xff]
      %v5783 = vld [vmem:[%s5763 + $0x98] sm:$0xff]
      %v5784 = vld [vmem:[%s5763 + $0xa0] sm:$0xff]
      %v5785 = vld [vmem:[%s5763 + $0xa8] sm:$0xff]
      %v5786 = vld [vmem:[%s5763 + $0xb0] sm:$0xff]
      %v5787 = vld [vmem:[%s5763 + $0xb8] sm:$0xff]
      %v5788 = vunpack.c.l.bf16 %v5764
      %v5789 = vunpack.c.h.bf16 %v5764
      %v5790 = vunpack.c.l.bf16 %v5765
      %v5791 = vunpack.c.h.bf16 %v5765
      %v5792 = vunpack.c.l.bf16 %v5766
      %v5793 = vunpack.c.h.bf16 %v5766
      %v5794 = vunpack.c.l.bf16 %v5767
      %v5795 = vunpack.c.h.bf16 %v5767
      %v5796 = vunpack.c.l.bf16 %v5768
      %v5797 = vunpack.c.h.bf16 %v5768
      %v5798 = vunpack.c.l.bf16 %v5769
      %v5799 = vunpack.c.h.bf16 %v5769
      %v5800 = vunpack.c.l.bf16 %v5770
      %v5801 = vunpack.c.h.bf16 %v5770
      %v5802 = vunpack.c.l.bf16 %v5771
      %v5803 = vunpack.c.h.bf16 %v5771
      %v5804 = vunpack.c.l.bf16 %v5772
      %v5805 = vunpack.c.h.bf16 %v5772
      %v5806 = vunpack.c.l.bf16 %v5773
      %v5807 = vunpack.c.h.bf16 %v5773
      %v5808 = vunpack.c.l.bf16 %v5774
      %v5809 = vunpack.c.h.bf16 %v5774
      %v5810 = vunpack.c.l.bf16 %v5775
      %v5811 = vunpack.c.h.bf16 %v5775
      %v5812 = vunpack.c.l.bf16 %v5776
      %v5813 = vunpack.c.h.bf16 %v5776
      %v5814 = vunpack.c.l.bf16 %v5777
      %v5815 = vunpack.c.h.bf16 %v5777
      %v5816 = vunpack.c.l.bf16 %v5778
      %v5817 = vunpack.c.h.bf16 %v5778
      %v5818 = vunpack.c.l.bf16 %v5779
      %v5819 = vunpack.c.h.bf16 %v5779
      %v5820 = vunpack.c.l.bf16 %v5780
      %v5821 = vunpack.c.h.bf16 %v5780
      %v5822 = vunpack.c.l.bf16 %v5781
      %v5823 = vunpack.c.h.bf16 %v5781
      %v5824 = vunpack.c.l.bf16 %v5782
      %v5825 = vunpack.c.h.bf16 %v5782
      %v5826 = vunpack.c.l.bf16 %v5783
      %v5827 = vunpack.c.h.bf16 %v5783
      %v5828 = vunpack.c.l.bf16 %v5784
      %v5829 = vunpack.c.h.bf16 %v5784
      %v5830 = vunpack.c.l.bf16 %v5785
      %v5831 = vunpack.c.h.bf16 %v5785
      %v5832 = vunpack.c.l.bf16 %v5786
      %v5833 = vunpack.c.h.bf16 %v5786
      %v5834 = vunpack.c.l.bf16 %v5787
      %v5835 = vunpack.c.h.bf16 %v5787
      %v5836 = vmul.f32 %v5179, %v5788
      %v5837 = vmul.f32 %v5180, %v5789
      %v5838 = vmul.f32 %v5181, %v5790
      %v5839 = vmul.f32 %v5182, %v5791
      %v5840 = vmul.f32 %v5183, %v5792
      %v5841 = vmul.f32 %v5184, %v5793
      %v5842 = vmul.f32 %v5185, %v5794
      %v5843 = vmul.f32 %v5186, %v5795
      %v5844 = vmul.f32 %v5187, %v5796
      %v5845 = vmul.f32 %v5188, %v5797
      %v5846 = vmul.f32 %v5189, %v5798
      %v5847 = vmul.f32 %v5190, %v5799
      %v5848 = vmul.f32 %v5191, %v5800
      %v5849 = vmul.f32 %v5192, %v5801
      %v5850 = vmul.f32 %v5193, %v5802
      %v5851 = vmul.f32 %v5194, %v5803
      %v5852 = vmul.f32 %v5195, %v5804
      %v5853 = vmul.f32 %v5196, %v5805
      %v5854 = vmul.f32 %v5197, %v5806
      %v5855 = vmul.f32 %v5198, %v5807
      %v5856 = vmul.f32 %v5199, %v5808
      %v5857 = vmul.f32 %v5200, %v5809
      %v5858 = vmul.f32 %v5201, %v5810
      %v5859 = vmul.f32 %v5202, %v5811
      %v5860 = vmul.f32 %v5203, %v5812
      %v5861 = vmul.f32 %v5204, %v5813
      %v5862 = vmul.f32 %v5205, %v5814
      %v5863 = vmul.f32 %v5206, %v5815
      %v5864 = vmul.f32 %v5207, %v5816
      %v5865 = vmul.f32 %v5208, %v5817
      %v5866 = vmul.f32 %v5209, %v5818
      %v5867 = vmul.f32 %v5210, %v5819
      %v5868 = vmul.f32 %v5211, %v5820
      %v5869 = vmul.f32 %v5212, %v5821
      %v5870 = vmul.f32 %v5213, %v5822
      %v5871 = vmul.f32 %v5214, %v5823
      %v5872 = vmul.f32 %v5215, %v5824
      %v5873 = vmul.f32 %v5216, %v5825
      %v5874 = vmul.f32 %v5217, %v5826
      %v5875 = vmul.f32 %v5218, %v5827
      %v5876 = vmul.f32 %v5219, %v5828
      %v5877 = vmul.f32 %v5220, %v5829
      %v5878 = vmul.f32 %v5221, %v5830
      %v5879 = vmul.f32 %v5222, %v5831
      %v5880 = vmul.f32 %v5223, %v5832
      %v5881 = vmul.f32 %v5224, %v5833
      %v5882 = vmul.f32 %v5225, %v5834
      %v5883 = vmul.f32 %v5226, %v5835
      %v5884 = vadd.f32 %v5836, %v5838
      %v5885 = vadd.f32 %v5884, %v5840
      %v5886 = vadd.f32 %v5885, %v5842
      %v5887 = vadd.f32 %v5886, %v5844
      %v5888 = vadd.f32 %v5887, %v5846
      %v5889 = vadd.f32 %v5888, %v5848
      %v5890 = vadd.f32 %v5889, %v5850
      %v5891 = vadd.f32 %v5890, %v5852
      %v5892 = vadd.f32 %v5891, %v5854
      %v5893 = vadd.f32 %v5892, %v5856
      %v5894 = vadd.f32 %v5893, %v5858
      %v5895 = vadd.f32 %v5894, %v5860
      %v5896 = vadd.f32 %v5895, %v5862
      %v5897 = vadd.f32 %v5896, %v5864
      %v5898 = vadd.f32 %v5897, %v5866
      %v5899 = vadd.f32 %v5898, %v5868
      %v5900 = vadd.f32 %v5899, %v5870
      %v5901 = vadd.f32 %v5900, %v5872
      %v5902 = vadd.f32 %v5901, %v5874
      %v5903 = vadd.f32 %v5902, %v5876
      %v5904 = vadd.f32 %v5903, %v5878
      %v5905 = vadd.f32 %v5904, %v5880
      %v5906 = vadd.f32 %v5905, %v5882
      %v5907 = vrot.slane %v5906, 4
      %v5908 = vadd.f32 %v5906, %v5907
      %v5909 = vrot.slane %v5908, 2
      %v5910 = vadd.f32 %v5908, %v5909
      %v5911 = vrot.slane %v5910, 1
      %v5912 = vadd.f32 %v5910, %v5911
      %v5913 = vadd.f32 %v5837, %v5839
      %v5914 = vadd.f32 %v5913, %v5841
      %v5915 = vadd.f32 %v5914, %v5843
      %v5916 = vadd.f32 %v5915, %v5845
      %v5917 = vadd.f32 %v5916, %v5847
      %v5918 = vadd.f32 %v5917, %v5849
      %v5919 = vadd.f32 %v5918, %v5851
      %v5920 = vadd.f32 %v5919, %v5853
      %v5921 = vadd.f32 %v5920, %v5855
      %v5922 = vadd.f32 %v5921, %v5857
      %v5923 = vadd.f32 %v5922, %v5859
      %v5924 = vadd.f32 %v5923, %v5861
      %v5925 = vadd.f32 %v5924, %v5863
      %v5926 = vadd.f32 %v5925, %v5865
      %v5927 = vadd.f32 %v5926, %v5867
      %v5928 = vadd.f32 %v5927, %v5869
      %v5929 = vadd.f32 %v5928, %v5871
      %v5930 = vadd.f32 %v5929, %v5873
      %v5931 = vadd.f32 %v5930, %v5875
      %v5932 = vadd.f32 %v5931, %v5877
      %v5933 = vadd.f32 %v5932, %v5879
      %v5934 = vadd.f32 %v5933, %v5881
      %v5935 = vadd.f32 %v5934, %v5883
      %v5936 = vrot.slane %v5935, 4
      %v5937 = vadd.f32 %v5935, %v5936
      %v5938 = vrot.slane %v5937, 2
      %v5939 = vadd.f32 %v5937, %v5938
      %v5940 = vrot.slane %v5939, 1
      %v5941 = vadd.f32 %v5939, %v5940
      %s5942 = scalar_lea.vmem %s3, 768
      %v5943 = vld [vmem:[%s5942] sm:$0xff]
      %v5944 = vld [vmem:[%s5942 + $0x8] sm:$0xff]
      %v5945 = vld [vmem:[%s5942 + $0x10] sm:$0xff]
      %v5946 = vld [vmem:[%s5942 + $0x18] sm:$0xff]
      %v5947 = vld [vmem:[%s5942 + $0x20] sm:$0xff]
      %v5948 = vld [vmem:[%s5942 + $0x28] sm:$0xff]
      %v5949 = vld [vmem:[%s5942 + $0x30] sm:$0xff]
      %v5950 = vld [vmem:[%s5942 + $0x38] sm:$0xff]
      %v5951 = vld [vmem:[%s5942 + $0x40] sm:$0xff]
      %v5952 = vld [vmem:[%s5942 + $0x48] sm:$0xff]
      %v5953 = vld [vmem:[%s5942 + $0x50] sm:$0xff]
      %v5954 = vld [vmem:[%s5942 + $0x58] sm:$0xff]
      %v5955 = vld [vmem:[%s5942 + $0x60] sm:$0xff]
      %v5956 = vld [vmem:[%s5942 + $0x68] sm:$0xff]
      %v5957 = vld [vmem:[%s5942 + $0x70] sm:$0xff]
      %v5958 = vld [vmem:[%s5942 + $0x78] sm:$0xff]
      %v5959 = vld [vmem:[%s5942 + $0x80] sm:$0xff]
      %v5960 = vld [vmem:[%s5942 + $0x88] sm:$0xff]
      %v5961 = vld [vmem:[%s5942 + $0x90] sm:$0xff]
      %v5962 = vld [vmem:[%s5942 + $0x98] sm:$0xff]
      %v5963 = vld [vmem:[%s5942 + $0xa0] sm:$0xff]
      %v5964 = vld [vmem:[%s5942 + $0xa8] sm:$0xff]
      %v5965 = vld [vmem:[%s5942 + $0xb0] sm:$0xff]
      %v5966 = vld [vmem:[%s5942 + $0xb8] sm:$0xff]
      %v5967 = vunpack.c.l.bf16 %v5943
      %v5968 = vunpack.c.h.bf16 %v5943
      %v5969 = vunpack.c.l.bf16 %v5944
      %v5970 = vunpack.c.h.bf16 %v5944
      %v5971 = vunpack.c.l.bf16 %v5945
      %v5972 = vunpack.c.h.bf16 %v5945
      %v5973 = vunpack.c.l.bf16 %v5946
      %v5974 = vunpack.c.h.bf16 %v5946
      %v5975 = vunpack.c.l.bf16 %v5947
      %v5976 = vunpack.c.h.bf16 %v5947
      %v5977 = vunpack.c.l.bf16 %v5948
      %v5978 = vunpack.c.h.bf16 %v5948
      %v5979 = vunpack.c.l.bf16 %v5949
      %v5980 = vunpack.c.h.bf16 %v5949
      %v5981 = vunpack.c.l.bf16 %v5950
      %v5982 = vunpack.c.h.bf16 %v5950
      %v5983 = vunpack.c.l.bf16 %v5951
      %v5984 = vunpack.c.h.bf16 %v5951
      %v5985 = vunpack.c.l.bf16 %v5952
      %v5986 = vunpack.c.h.bf16 %v5952
      %v5987 = vunpack.c.l.bf16 %v5953
      %v5988 = vunpack.c.h.bf16 %v5953
      %v5989 = vunpack.c.l.bf16 %v5954
      %v5990 = vunpack.c.h.bf16 %v5954
      %v5991 = vunpack.c.l.bf16 %v5955
      %v5992 = vunpack.c.h.bf16 %v5955
      %v5993 = vunpack.c.l.bf16 %v5956
      %v5994 = vunpack.c.h.bf16 %v5956
      %v5995 = vunpack.c.l.bf16 %v5957
      %v5996 = vunpack.c.h.bf16 %v5957
      %v5997 = vunpack.c.l.bf16 %v5958
      %v5998 = vunpack.c.h.bf16 %v5958
      %v5999 = vunpack.c.l.bf16 %v5959
      %v6000 = vunpack.c.h.bf16 %v5959
      %v6001 = vunpack.c.l.bf16 %v5960
      %v6002 = vunpack.c.h.bf16 %v5960
      %v6003 = vunpack.c.l.bf16 %v5961
      %v6004 = vunpack.c.h.bf16 %v5961
      %v6005 = vunpack.c.l.bf16 %v5962
      %v6006 = vunpack.c.h.bf16 %v5962
      %v6007 = vunpack.c.l.bf16 %v5963
      %v6008 = vunpack.c.h.bf16 %v5963
      %v6009 = vunpack.c.l.bf16 %v5964
      %v6010 = vunpack.c.h.bf16 %v5964
      %v6011 = vunpack.c.l.bf16 %v5965
      %v6012 = vunpack.c.h.bf16 %v5965
      %v6013 = vunpack.c.l.bf16 %v5966
      %v6014 = vunpack.c.h.bf16 %v5966
      %v6015 = vmul.f32 %v5179, %v5967
      %v6016 = vmul.f32 %v5180, %v5968
      %v6017 = vmul.f32 %v5181, %v5969
      %v6018 = vmul.f32 %v5182, %v5970
      %v6019 = vmul.f32 %v5183, %v5971
      %v6020 = vmul.f32 %v5184, %v5972
      %v6021 = vmul.f32 %v5185, %v5973
      %v6022 = vmul.f32 %v5186, %v5974
      %v6023 = vmul.f32 %v5187, %v5975
      %v6024 = vmul.f32 %v5188, %v5976
      %v6025 = vmul.f32 %v5189, %v5977
      %v6026 = vmul.f32 %v5190, %v5978
      %v6027 = vmul.f32 %v5191, %v5979
      %v6028 = vmul.f32 %v5192, %v5980
      %v6029 = vmul.f32 %v5193, %v5981
      %v6030 = vmul.f32 %v5194, %v5982
      %v6031 = vmul.f32 %v5195, %v5983
      %v6032 = vmul.f32 %v5196, %v5984
      %v6033 = vmul.f32 %v5197, %v5985
      %v6034 = vmul.f32 %v5198, %v5986
      %v6035 = vmul.f32 %v5199, %v5987
      %v6036 = vmul.f32 %v5200, %v5988
      %v6037 = vmul.f32 %v5201, %v5989
      %v6038 = vmul.f32 %v5202, %v5990
      %v6039 = vmul.f32 %v5203, %v5991
      %v6040 = vmul.f32 %v5204, %v5992
      %v6041 = vmul.f32 %v5205, %v5993
      %v6042 = vmul.f32 %v5206, %v5994
      %v6043 = vmul.f32 %v5207, %v5995
      %v6044 = vmul.f32 %v5208, %v5996
      %v6045 = vmul.f32 %v5209, %v5997
      %v6046 = vmul.f32 %v5210, %v5998
      %v6047 = vmul.f32 %v5211, %v5999
      %v6048 = vmul.f32 %v5212, %v6000
      %v6049 = vmul.f32 %v5213, %v6001
      %v6050 = vmul.f32 %v5214, %v6002
      %v6051 = vmul.f32 %v5215, %v6003
      %v6052 = vmul.f32 %v5216, %v6004
      %v6053 = vmul.f32 %v5217, %v6005
      %v6054 = vmul.f32 %v5218, %v6006
      %v6055 = vmul.f32 %v5219, %v6007
      %v6056 = vmul.f32 %v5220, %v6008
      %v6057 = vmul.f32 %v5221, %v6009
      %v6058 = vmul.f32 %v5222, %v6010
      %v6059 = vmul.f32 %v5223, %v6011
      %v6060 = vmul.f32 %v5224, %v6012
      %v6061 = vmul.f32 %v5225, %v6013
      %v6062 = vmul.f32 %v5226, %v6014
      %v6063 = vadd.f32 %v6015, %v6017
      %v6064 = vadd.f32 %v6063, %v6019
      %v6065 = vadd.f32 %v6064, %v6021
      %v6066 = vadd.f32 %v6065, %v6023
      %v6067 = vadd.f32 %v6066, %v6025
      %v6068 = vadd.f32 %v6067, %v6027
      %v6069 = vadd.f32 %v6068, %v6029
      %v6070 = vadd.f32 %v6069, %v6031
      %v6071 = vadd.f32 %v6070, %v6033
      %v6072 = vadd.f32 %v6071, %v6035
      %v6073 = vadd.f32 %v6072, %v6037
      %v6074 = vadd.f32 %v6073, %v6039
      %v6075 = vadd.f32 %v6074, %v6041
      %v6076 = vadd.f32 %v6075, %v6043
      %v6077 = vadd.f32 %v6076, %v6045
      %v6078 = vadd.f32 %v6077, %v6047
      %v6079 = vadd.f32 %v6078, %v6049
      %v6080 = vadd.f32 %v6079, %v6051
      %v6081 = vadd.f32 %v6080, %v6053
      %v6082 = vadd.f32 %v6081, %v6055
      %v6083 = vadd.f32 %v6082, %v6057
      %v6084 = vadd.f32 %v6083, %v6059
      %v6085 = vadd.f32 %v6084, %v6061
      %v6086 = vrot.slane %v6085, 4
      %v6087 = vadd.f32 %v6085, %v6086
      %v6088 = vrot.slane %v6087, 2
      %v6089 = vadd.f32 %v6087, %v6088
      %v6090 = vrot.slane %v6089, 1
      %v6091 = vadd.f32 %v6089, %v6090
      %v6092 = vadd.f32 %v6016, %v6018
      %v6093 = vadd.f32 %v6092, %v6020
      %v6094 = vadd.f32 %v6093, %v6022
      %v6095 = vadd.f32 %v6094, %v6024
      %v6096 = vadd.f32 %v6095, %v6026
      %v6097 = vadd.f32 %v6096, %v6028
      %v6098 = vadd.f32 %v6097, %v6030
      %v6099 = vadd.f32 %v6098, %v6032
      %v6100 = vadd.f32 %v6099, %v6034
      %v6101 = vadd.f32 %v6100, %v6036
      %v6102 = vadd.f32 %v6101, %v6038
      %v6103 = vadd.f32 %v6102, %v6040
      %v6104 = vadd.f32 %v6103, %v6042
      %v6105 = vadd.f32 %v6104, %v6044
      %v6106 = vadd.f32 %v6105, %v6046
      %v6107 = vadd.f32 %v6106, %v6048
      %v6108 = vadd.f32 %v6107, %v6050
      %v6109 = vadd.f32 %v6108, %v6052
      %v6110 = vadd.f32 %v6109, %v6054
      %v6111 = vadd.f32 %v6110, %v6056
      %v6112 = vadd.f32 %v6111, %v6058
      %v6113 = vadd.f32 %v6112, %v6060
      %v6114 = vadd.f32 %v6113, %v6062
      %v6115 = vrot.slane %v6114, 4
      %v6116 = vadd.f32 %v6114, %v6115
      %v6117 = vrot.slane %v6116, 2
      %v6118 = vadd.f32 %v6116, %v6117
      %v6119 = vrot.slane %v6118, 1
      %v6120 = vadd.f32 %v6118, %v6119
      %s6121 = scalar_lea.vmem %s3, 960
      %v6122 = vld [vmem:[%s6121] sm:$0xff]
      %v6123 = vld [vmem:[%s6121 + $0x8] sm:$0xff]
      %v6124 = vld [vmem:[%s6121 + $0x10] sm:$0xff]
      %v6125 = vld [vmem:[%s6121 + $0x18] sm:$0xff]
      %v6126 = vld [vmem:[%s6121 + $0x20] sm:$0xff]
      %v6127 = vld [vmem:[%s6121 + $0x28] sm:$0xff]
      %v6128 = vld [vmem:[%s6121 + $0x30] sm:$0xff]
      %v6129 = vld [vmem:[%s6121 + $0x38] sm:$0xff]
      %v6130 = vld [vmem:[%s6121 + $0x40] sm:$0xff]
      %v6131 = vld [vmem:[%s6121 + $0x48] sm:$0xff]
      %v6132 = vld [vmem:[%s6121 + $0x50] sm:$0xff]
      %v6133 = vld [vmem:[%s6121 + $0x58] sm:$0xff]
      %v6134 = vld [vmem:[%s6121 + $0x60] sm:$0xff]
      %v6135 = vld [vmem:[%s6121 + $0x68] sm:$0xff]
      %v6136 = vld [vmem:[%s6121 + $0x70] sm:$0xff]
      %v6137 = vld [vmem:[%s6121 + $0x78] sm:$0xff]
      %v6138 = vld [vmem:[%s6121 + $0x80] sm:$0xff]
      %v6139 = vld [vmem:[%s6121 + $0x88] sm:$0xff]
      %v6140 = vld [vmem:[%s6121 + $0x90] sm:$0xff]
      %v6141 = vld [vmem:[%s6121 + $0x98] sm:$0xff]
      %v6142 = vld [vmem:[%s6121 + $0xa0] sm:$0xff]
      %v6143 = vld [vmem:[%s6121 + $0xa8] sm:$0xff]
      %v6144 = vld [vmem:[%s6121 + $0xb0] sm:$0xff]
      %v6145 = vld [vmem:[%s6121 + $0xb8] sm:$0xff]
      %v6146 = vunpack.c.l.bf16 %v6122
      %v6147 = vunpack.c.h.bf16 %v6122
      %v6148 = vunpack.c.l.bf16 %v6123
      %v6149 = vunpack.c.h.bf16 %v6123
      %v6150 = vunpack.c.l.bf16 %v6124
      %v6151 = vunpack.c.h.bf16 %v6124
      %v6152 = vunpack.c.l.bf16 %v6125
      %v6153 = vunpack.c.h.bf16 %v6125
      %v6154 = vunpack.c.l.bf16 %v6126
      %v6155 = vunpack.c.h.bf16 %v6126
      %v6156 = vunpack.c.l.bf16 %v6127
      %v6157 = vunpack.c.h.bf16 %v6127
      %v6158 = vunpack.c.l.bf16 %v6128
      %v6159 = vunpack.c.h.bf16 %v6128
      %v6160 = vunpack.c.l.bf16 %v6129
      %v6161 = vunpack.c.h.bf16 %v6129
      %v6162 = vunpack.c.l.bf16 %v6130
      %v6163 = vunpack.c.h.bf16 %v6130
      %v6164 = vunpack.c.l.bf16 %v6131
      %v6165 = vunpack.c.h.bf16 %v6131
      %v6166 = vunpack.c.l.bf16 %v6132
      %v6167 = vunpack.c.h.bf16 %v6132
      %v6168 = vunpack.c.l.bf16 %v6133
      %v6169 = vunpack.c.h.bf16 %v6133
      %v6170 = vunpack.c.l.bf16 %v6134
      %v6171 = vunpack.c.h.bf16 %v6134
      %v6172 = vunpack.c.l.bf16 %v6135
      %v6173 = vunpack.c.h.bf16 %v6135
      %v6174 = vunpack.c.l.bf16 %v6136
      %v6175 = vunpack.c.h.bf16 %v6136
      %v6176 = vunpack.c.l.bf16 %v6137
      %v6177 = vunpack.c.h.bf16 %v6137
      %v6178 = vunpack.c.l.bf16 %v6138
      %v6179 = vunpack.c.h.bf16 %v6138
      %v6180 = vunpack.c.l.bf16 %v6139
      %v6181 = vunpack.c.h.bf16 %v6139
      %v6182 = vunpack.c.l.bf16 %v6140
      %v6183 = vunpack.c.h.bf16 %v6140
      %v6184 = vunpack.c.l.bf16 %v6141
      %v6185 = vunpack.c.h.bf16 %v6141
      %v6186 = vunpack.c.l.bf16 %v6142
      %v6187 = vunpack.c.h.bf16 %v6142
      %v6188 = vunpack.c.l.bf16 %v6143
      %v6189 = vunpack.c.h.bf16 %v6143
      %v6190 = vunpack.c.l.bf16 %v6144
      %v6191 = vunpack.c.h.bf16 %v6144
      %v6192 = vunpack.c.l.bf16 %v6145
      %v6193 = vunpack.c.h.bf16 %v6145
      %v6194 = vmul.f32 %v5179, %v6146
      %v6195 = vmul.f32 %v5180, %v6147
      %v6196 = vmul.f32 %v5181, %v6148
      %v6197 = vmul.f32 %v5182, %v6149
      %v6198 = vmul.f32 %v5183, %v6150
      %v6199 = vmul.f32 %v5184, %v6151
      %v6200 = vmul.f32 %v5185, %v6152
      %v6201 = vmul.f32 %v5186, %v6153
      %v6202 = vmul.f32 %v5187, %v6154
      %v6203 = vmul.f32 %v5188, %v6155
      %v6204 = vmul.f32 %v5189, %v6156
      %v6205 = vmul.f32 %v5190, %v6157
      %v6206 = vmul.f32 %v5191, %v6158
      %v6207 = vmul.f32 %v5192, %v6159
      %v6208 = vmul.f32 %v5193, %v6160
      %v6209 = vmul.f32 %v5194, %v6161
      %v6210 = vmul.f32 %v5195, %v6162
      %v6211 = vmul.f32 %v5196, %v6163
      %v6212 = vmul.f32 %v5197, %v6164
      %v6213 = vmul.f32 %v5198, %v6165
      %v6214 = vmul.f32 %v5199, %v6166
      %v6215 = vmul.f32 %v5200, %v6167
      %v6216 = vmul.f32 %v5201, %v6168
      %v6217 = vmul.f32 %v5202, %v6169
      %v6218 = vmul.f32 %v5203, %v6170
      %v6219 = vmul.f32 %v5204, %v6171
      %v6220 = vmul.f32 %v5205, %v6172
      %v6221 = vmul.f32 %v5206, %v6173
      %v6222 = vmul.f32 %v5207, %v6174
      %v6223 = vmul.f32 %v5208, %v6175
      %v6224 = vmul.f32 %v5209, %v6176
      %v6225 = vmul.f32 %v5210, %v6177
      %v6226 = vmul.f32 %v5211, %v6178
      %v6227 = vmul.f32 %v5212, %v6179
      %v6228 = vmul.f32 %v5213, %v6180
      %v6229 = vmul.f32 %v5214, %v6181
      %v6230 = vmul.f32 %v5215, %v6182
      %v6231 = vmul.f32 %v5216, %v6183
      %v6232 = vmul.f32 %v5217, %v6184
      %v6233 = vmul.f32 %v5218, %v6185
      %v6234 = vmul.f32 %v5219, %v6186
      %v6235 = vmul.f32 %v5220, %v6187
      %v6236 = vmul.f32 %v5221, %v6188
      %v6237 = vmul.f32 %v5222, %v6189
      %v6238 = vmul.f32 %v5223, %v6190
      %v6239 = vmul.f32 %v5224, %v6191
      %v6240 = vmul.f32 %v5225, %v6192
      %v6241 = vmul.f32 %v5226, %v6193
      %v6242 = vadd.f32 %v6194, %v6196
      %v6243 = vadd.f32 %v6242, %v6198
      %v6244 = vadd.f32 %v6243, %v6200
      %v6245 = vadd.f32 %v6244, %v6202
      %v6246 = vadd.f32 %v6245, %v6204
      %v6247 = vadd.f32 %v6246, %v6206
      %v6248 = vadd.f32 %v6247, %v6208
      %v6249 = vadd.f32 %v6248, %v6210
      %v6250 = vadd.f32 %v6249, %v6212
      %v6251 = vadd.f32 %v6250, %v6214
      %v6252 = vadd.f32 %v6251, %v6216
      %v6253 = vadd.f32 %v6252, %v6218
      %v6254 = vadd.f32 %v6253, %v6220
      %v6255 = vadd.f32 %v6254, %v6222
      %v6256 = vadd.f32 %v6255, %v6224
      %v6257 = vadd.f32 %v6256, %v6226
      %v6258 = vadd.f32 %v6257, %v6228
      %v6259 = vadd.f32 %v6258, %v6230
      %v6260 = vadd.f32 %v6259, %v6232
      %v6261 = vadd.f32 %v6260, %v6234
      %v6262 = vadd.f32 %v6261, %v6236
      %v6263 = vadd.f32 %v6262, %v6238
      %v6264 = vadd.f32 %v6263, %v6240
      %v6265 = vrot.slane %v6264, 4
      %v6266 = vadd.f32 %v6264, %v6265
      %v6267 = vrot.slane %v6266, 2
      %v6268 = vadd.f32 %v6266, %v6267
      %v6269 = vrot.slane %v6268, 1
      %v6270 = vadd.f32 %v6268, %v6269
      %v6271 = vadd.f32 %v6195, %v6197
      %v6272 = vadd.f32 %v6271, %v6199
      %v6273 = vadd.f32 %v6272, %v6201
      %v6274 = vadd.f32 %v6273, %v6203
      %v6275 = vadd.f32 %v6274, %v6205
      %v6276 = vadd.f32 %v6275, %v6207
      %v6277 = vadd.f32 %v6276, %v6209
      %v6278 = vadd.f32 %v6277, %v6211
      %v6279 = vadd.f32 %v6278, %v6213
      %v6280 = vadd.f32 %v6279, %v6215
      %v6281 = vadd.f32 %v6280, %v6217
      %v6282 = vadd.f32 %v6281, %v6219
      %v6283 = vadd.f32 %v6282, %v6221
      %v6284 = vadd.f32 %v6283, %v6223
      %v6285 = vadd.f32 %v6284, %v6225
      %v6286 = vadd.f32 %v6285, %v6227
      %v6287 = vadd.f32 %v6286, %v6229
      %v6288 = vadd.f32 %v6287, %v6231
      %v6289 = vadd.f32 %v6288, %v6233
      %v6290 = vadd.f32 %v6289, %v6235
      %v6291 = vadd.f32 %v6290, %v6237
      %v6292 = vadd.f32 %v6291, %v6239
      %v6293 = vadd.f32 %v6292, %v6241
      %v6294 = vrot.slane %v6293, 4
      %v6295 = vadd.f32 %v6293, %v6294
      %v6296 = vrot.slane %v6295, 2
      %v6297 = vadd.f32 %v6295, %v6296
      %v6298 = vrot.slane %v6297, 1
      %v6299 = vadd.f32 %v6297, %v6298
      %s6300 = scalar_lea.vmem %s3, 1152
      %v6301 = vld [vmem:[%s6300] sm:$0xff]
      %v6302 = vld [vmem:[%s6300 + $0x8] sm:$0xff]
      %v6303 = vld [vmem:[%s6300 + $0x10] sm:$0xff]
      %v6304 = vld [vmem:[%s6300 + $0x18] sm:$0xff]
      %v6305 = vld [vmem:[%s6300 + $0x20] sm:$0xff]
      %v6306 = vld [vmem:[%s6300 + $0x28] sm:$0xff]
      %v6307 = vld [vmem:[%s6300 + $0x30] sm:$0xff]
      %v6308 = vld [vmem:[%s6300 + $0x38] sm:$0xff]
      %v6309 = vld [vmem:[%s6300 + $0x40] sm:$0xff]
      %v6310 = vld [vmem:[%s6300 + $0x48] sm:$0xff]
      %v6311 = vld [vmem:[%s6300 + $0x50] sm:$0xff]
      %v6312 = vld [vmem:[%s6300 + $0x58] sm:$0xff]
      %v6313 = vld [vmem:[%s6300 + $0x60] sm:$0xff]
      %v6314 = vld [vmem:[%s6300 + $0x68] sm:$0xff]
      %v6315 = vld [vmem:[%s6300 + $0x70] sm:$0xff]
      %v6316 = vld [vmem:[%s6300 + $0x78] sm:$0xff]
      %v6317 = vld [vmem:[%s6300 + $0x80] sm:$0xff]
      %v6318 = vld [vmem:[%s6300 + $0x88] sm:$0xff]
      %v6319 = vld [vmem:[%s6300 + $0x90] sm:$0xff]
      %v6320 = vld [vmem:[%s6300 + $0x98] sm:$0xff]
      %v6321 = vld [vmem:[%s6300 + $0xa0] sm:$0xff]
      %v6322 = vld [vmem:[%s6300 + $0xa8] sm:$0xff]
      %v6323 = vld [vmem:[%s6300 + $0xb0] sm:$0xff]
      %v6324 = vld [vmem:[%s6300 + $0xb8] sm:$0xff]
      %v6325 = vunpack.c.l.bf16 %v6301
      %v6326 = vunpack.c.h.bf16 %v6301
      %v6327 = vunpack.c.l.bf16 %v6302
      %v6328 = vunpack.c.h.bf16 %v6302
      %v6329 = vunpack.c.l.bf16 %v6303
      %v6330 = vunpack.c.h.bf16 %v6303
      %v6331 = vunpack.c.l.bf16 %v6304
      %v6332 = vunpack.c.h.bf16 %v6304
      %v6333 = vunpack.c.l.bf16 %v6305
      %v6334 = vunpack.c.h.bf16 %v6305
      %v6335 = vunpack.c.l.bf16 %v6306
      %v6336 = vunpack.c.h.bf16 %v6306
      %v6337 = vunpack.c.l.bf16 %v6307
      %v6338 = vunpack.c.h.bf16 %v6307
      %v6339 = vunpack.c.l.bf16 %v6308
      %v6340 = vunpack.c.h.bf16 %v6308
      %v6341 = vunpack.c.l.bf16 %v6309
      %v6342 = vunpack.c.h.bf16 %v6309
      %v6343 = vunpack.c.l.bf16 %v6310
      %v6344 = vunpack.c.h.bf16 %v6310
      %v6345 = vunpack.c.l.bf16 %v6311
      %v6346 = vunpack.c.h.bf16 %v6311
      %v6347 = vunpack.c.l.bf16 %v6312
      %v6348 = vunpack.c.h.bf16 %v6312
      %v6349 = vunpack.c.l.bf16 %v6313
      %v6350 = vunpack.c.h.bf16 %v6313
      %v6351 = vunpack.c.l.bf16 %v6314
      %v6352 = vunpack.c.h.bf16 %v6314
      %v6353 = vunpack.c.l.bf16 %v6315
      %v6354 = vunpack.c.h.bf16 %v6315
      %v6355 = vunpack.c.l.bf16 %v6316
      %v6356 = vunpack.c.h.bf16 %v6316
      %v6357 = vunpack.c.l.bf16 %v6317
      %v6358 = vunpack.c.h.bf16 %v6317
      %v6359 = vunpack.c.l.bf16 %v6318
      %v6360 = vunpack.c.h.bf16 %v6318
      %v6361 = vunpack.c.l.bf16 %v6319
      %v6362 = vunpack.c.h.bf16 %v6319
      %v6363 = vunpack.c.l.bf16 %v6320
      %v6364 = vunpack.c.h.bf16 %v6320
      %v6365 = vunpack.c.l.bf16 %v6321
      %v6366 = vunpack.c.h.bf16 %v6321
      %v6367 = vunpack.c.l.bf16 %v6322
      %v6368 = vunpack.c.h.bf16 %v6322
      %v6369 = vunpack.c.l.bf16 %v6323
      %v6370 = vunpack.c.h.bf16 %v6323
      %v6371 = vunpack.c.l.bf16 %v6324
      %v6372 = vunpack.c.h.bf16 %v6324
      %v6373 = vmul.f32 %v5179, %v6325
      %v6374 = vmul.f32 %v5180, %v6326
      %v6375 = vmul.f32 %v5181, %v6327
      %v6376 = vmul.f32 %v5182, %v6328
      %v6377 = vmul.f32 %v5183, %v6329
      %v6378 = vmul.f32 %v5184, %v6330
      %v6379 = vmul.f32 %v5185, %v6331
      %v6380 = vmul.f32 %v5186, %v6332
      %v6381 = vmul.f32 %v5187, %v6333
      %v6382 = vmul.f32 %v5188, %v6334
      %v6383 = vmul.f32 %v5189, %v6335
      %v6384 = vmul.f32 %v5190, %v6336
      %v6385 = vmul.f32 %v5191, %v6337
      %v6386 = vmul.f32 %v5192, %v6338
      %v6387 = vmul.f32 %v5193, %v6339
      %v6388 = vmul.f32 %v5194, %v6340
      %v6389 = vmul.f32 %v5195, %v6341
      %v6390 = vmul.f32 %v5196, %v6342
      %v6391 = vmul.f32 %v5197, %v6343
      %v6392 = vmul.f32 %v5198, %v6344
      %v6393 = vmul.f32 %v5199, %v6345
      %v6394 = vmul.f32 %v5200, %v6346
      %v6395 = vmul.f32 %v5201, %v6347
      %v6396 = vmul.f32 %v5202, %v6348
      %v6397 = vmul.f32 %v5203, %v6349
      %v6398 = vmul.f32 %v5204, %v6350
      %v6399 = vmul.f32 %v5205, %v6351
      %v6400 = vmul.f32 %v5206, %v6352
      %v6401 = vmul.f32 %v5207, %v6353
      %v6402 = vmul.f32 %v5208, %v6354
      %v6403 = vmul.f32 %v5209, %v6355
      %v6404 = vmul.f32 %v5210, %v6356
      %v6405 = vmul.f32 %v5211, %v6357
      %v6406 = vmul.f32 %v5212, %v6358
      %v6407 = vmul.f32 %v5213, %v6359
      %v6408 = vmul.f32 %v5214, %v6360
      %v6409 = vmul.f32 %v5215, %v6361
      %v6410 = vmul.f32 %v5216, %v6362
      %v6411 = vmul.f32 %v5217, %v6363
      %v6412 = vmul.f32 %v5218, %v6364
      %v6413 = vmul.f32 %v5219, %v6365
      %v6414 = vmul.f32 %v5220, %v6366
      %v6415 = vmul.f32 %v5221, %v6367
      %v6416 = vmul.f32 %v5222, %v6368
      %v6417 = vmul.f32 %v5223, %v6369
      %v6418 = vmul.f32 %v5224, %v6370
      %v6419 = vmul.f32 %v5225, %v6371
      %v6420 = vmul.f32 %v5226, %v6372
      %v6421 = vadd.f32 %v6373, %v6375
      %v6422 = vadd.f32 %v6421, %v6377
      %v6423 = vadd.f32 %v6422, %v6379
      %v6424 = vadd.f32 %v6423, %v6381
      %v6425 = vadd.f32 %v6424, %v6383
      %v6426 = vadd.f32 %v6425, %v6385
      %v6427 = vadd.f32 %v6426, %v6387
      %v6428 = vadd.f32 %v6427, %v6389
      %v6429 = vadd.f32 %v6428, %v6391
      %v6430 = vadd.f32 %v6429, %v6393
      %v6431 = vadd.f32 %v6430, %v6395
      %v6432 = vadd.f32 %v6431, %v6397
      %v6433 = vadd.f32 %v6432, %v6399
      %v6434 = vadd.f32 %v6433, %v6401
      %v6435 = vadd.f32 %v6434, %v6403
      %v6436 = vadd.f32 %v6435, %v6405
      %v6437 = vadd.f32 %v6436, %v6407
      %v6438 = vadd.f32 %v6437, %v6409
      %v6439 = vadd.f32 %v6438, %v6411
      %v6440 = vadd.f32 %v6439, %v6413
      %v6441 = vadd.f32 %v6440, %v6415
      %v6442 = vadd.f32 %v6441, %v6417
      %v6443 = vadd.f32 %v6442, %v6419
      %v6444 = vrot.slane %v6443, 4
      %v6445 = vadd.f32 %v6443, %v6444
      %v6446 = vrot.slane %v6445, 2
      %v6447 = vadd.f32 %v6445, %v6446
      %v6448 = vrot.slane %v6447, 1
      %v6449 = vadd.f32 %v6447, %v6448
      %v6450 = vadd.f32 %v6374, %v6376
      %v6451 = vadd.f32 %v6450, %v6378
      %v6452 = vadd.f32 %v6451, %v6380
      %v6453 = vadd.f32 %v6452, %v6382
      %v6454 = vadd.f32 %v6453, %v6384
      %v6455 = vadd.f32 %v6454, %v6386
      %v6456 = vadd.f32 %v6455, %v6388
      %v6457 = vadd.f32 %v6456, %v6390
      %v6458 = vadd.f32 %v6457, %v6392
      %v6459 = vadd.f32 %v6458, %v6394
      %v6460 = vadd.f32 %v6459, %v6396
      %v6461 = vadd.f32 %v6460, %v6398
      %v6462 = vadd.f32 %v6461, %v6400
      %v6463 = vadd.f32 %v6462, %v6402
      %v6464 = vadd.f32 %v6463, %v6404
      %v6465 = vadd.f32 %v6464, %v6406
      %v6466 = vadd.f32 %v6465, %v6408
      %v6467 = vadd.f32 %v6466, %v6410
      %v6468 = vadd.f32 %v6467, %v6412
      %v6469 = vadd.f32 %v6468, %v6414
      %v6470 = vadd.f32 %v6469, %v6416
      %v6471 = vadd.f32 %v6470, %v6418
      %v6472 = vadd.f32 %v6471, %v6420
      %v6473 = vrot.slane %v6472, 4
      %v6474 = vadd.f32 %v6472, %v6473
      %v6475 = vrot.slane %v6474, 2
      %v6476 = vadd.f32 %v6474, %v6475
      %v6477 = vrot.slane %v6476, 1
      %v6478 = vadd.f32 %v6476, %v6477
      %s6479 = scalar_lea.vmem %s3, 1344
      %v6480 = vld [vmem:[%s6479] sm:$0xff]
      %v6481 = vld [vmem:[%s6479 + $0x8] sm:$0xff]
      %v6482 = vld [vmem:[%s6479 + $0x10] sm:$0xff]
      %v6483 = vld [vmem:[%s6479 + $0x18] sm:$0xff]
      %v6484 = vld [vmem:[%s6479 + $0x20] sm:$0xff]
      %v6485 = vld [vmem:[%s6479 + $0x28] sm:$0xff]
      %v6486 = vld [vmem:[%s6479 + $0x30] sm:$0xff]
      %v6487 = vld [vmem:[%s6479 + $0x38] sm:$0xff]
      %v6488 = vld [vmem:[%s6479 + $0x40] sm:$0xff]
      %v6489 = vld [vmem:[%s6479 + $0x48] sm:$0xff]
      %v6490 = vld [vmem:[%s6479 + $0x50] sm:$0xff]
      %v6491 = vld [vmem:[%s6479 + $0x58] sm:$0xff]
      %v6492 = vld [vmem:[%s6479 + $0x60] sm:$0xff]
      %v6493 = vld [vmem:[%s6479 + $0x68] sm:$0xff]
      %v6494 = vld [vmem:[%s6479 + $0x70] sm:$0xff]
      %v6495 = vld [vmem:[%s6479 + $0x78] sm:$0xff]
      %v6496 = vld [vmem:[%s6479 + $0x80] sm:$0xff]
      %v6497 = vld [vmem:[%s6479 + $0x88] sm:$0xff]
      %v6498 = vld [vmem:[%s6479 + $0x90] sm:$0xff]
      %v6499 = vld [vmem:[%s6479 + $0x98] sm:$0xff]
      %v6500 = vld [vmem:[%s6479 + $0xa0] sm:$0xff]
      %v6501 = vld [vmem:[%s6479 + $0xa8] sm:$0xff]
      %v6502 = vld [vmem:[%s6479 + $0xb0] sm:$0xff]
      %v6503 = vld [vmem:[%s6479 + $0xb8] sm:$0xff]
      %v6504 = vunpack.c.l.bf16 %v6480
      %v6505 = vunpack.c.h.bf16 %v6480
      %v6506 = vunpack.c.l.bf16 %v6481
      %v6507 = vunpack.c.h.bf16 %v6481
      %v6508 = vunpack.c.l.bf16 %v6482
      %v6509 = vunpack.c.h.bf16 %v6482
      %v6510 = vunpack.c.l.bf16 %v6483
      %v6511 = vunpack.c.h.bf16 %v6483
      %v6512 = vunpack.c.l.bf16 %v6484
      %v6513 = vunpack.c.h.bf16 %v6484
      %v6514 = vunpack.c.l.bf16 %v6485
      %v6515 = vunpack.c.h.bf16 %v6485
      %v6516 = vunpack.c.l.bf16 %v6486
      %v6517 = vunpack.c.h.bf16 %v6486
      %v6518 = vunpack.c.l.bf16 %v6487
      %v6519 = vunpack.c.h.bf16 %v6487
      %v6520 = vunpack.c.l.bf16 %v6488
      %v6521 = vunpack.c.h.bf16 %v6488
      %v6522 = vunpack.c.l.bf16 %v6489
      %v6523 = vunpack.c.h.bf16 %v6489
      %v6524 = vunpack.c.l.bf16 %v6490
      %v6525 = vunpack.c.h.bf16 %v6490
      %v6526 = vunpack.c.l.bf16 %v6491
      %v6527 = vunpack.c.h.bf16 %v6491
      %v6528 = vunpack.c.l.bf16 %v6492
      %v6529 = vunpack.c.h.bf16 %v6492
      %v6530 = vunpack.c.l.bf16 %v6493
      %v6531 = vunpack.c.h.bf16 %v6493
      %v6532 = vunpack.c.l.bf16 %v6494
      %v6533 = vunpack.c.h.bf16 %v6494
      %v6534 = vunpack.c.l.bf16 %v6495
      %v6535 = vunpack.c.h.bf16 %v6495
      %v6536 = vunpack.c.l.bf16 %v6496
      %v6537 = vunpack.c.h.bf16 %v6496
      %v6538 = vunpack.c.l.bf16 %v6497
      %v6539 = vunpack.c.h.bf16 %v6497
      %v6540 = vunpack.c.l.bf16 %v6498
      %v6541 = vunpack.c.h.bf16 %v6498
      %v6542 = vunpack.c.l.bf16 %v6499
      %v6543 = vunpack.c.h.bf16 %v6499
      %v6544 = vunpack.c.l.bf16 %v6500
      %v6545 = vunpack.c.h.bf16 %v6500
      %v6546 = vunpack.c.l.bf16 %v6501
      %v6547 = vunpack.c.h.bf16 %v6501
      %v6548 = vunpack.c.l.bf16 %v6502
      %v6549 = vunpack.c.h.bf16 %v6502
      %v6550 = vunpack.c.l.bf16 %v6503
      %v6551 = vunpack.c.h.bf16 %v6503
      %v6552 = vmul.f32 %v5179, %v6504
      %v6553 = vmul.f32 %v5180, %v6505
      %v6554 = vmul.f32 %v5181, %v6506
      %v6555 = vmul.f32 %v5182, %v6507
      %v6556 = vmul.f32 %v5183, %v6508
      %v6557 = vmul.f32 %v5184, %v6509
      %v6558 = vmul.f32 %v5185, %v6510
      %v6559 = vmul.f32 %v5186, %v6511
      %v6560 = vmul.f32 %v5187, %v6512
      %v6561 = vmul.f32 %v5188, %v6513
      %v6562 = vmul.f32 %v5189, %v6514
      %v6563 = vmul.f32 %v5190, %v6515
      %v6564 = vmul.f32 %v5191, %v6516
      %v6565 = vmul.f32 %v5192, %v6517
      %v6566 = vmul.f32 %v5193, %v6518
      %v6567 = vmul.f32 %v5194, %v6519
      %v6568 = vmul.f32 %v5195, %v6520
      %v6569 = vmul.f32 %v5196, %v6521
      %v6570 = vmul.f32 %v5197, %v6522
      %v6571 = vmul.f32 %v5198, %v6523
      %v6572 = vmul.f32 %v5199, %v6524
      %v6573 = vmul.f32 %v5200, %v6525
      %v6574 = vmul.f32 %v5201, %v6526
      %v6575 = vmul.f32 %v5202, %v6527
      %v6576 = vmul.f32 %v5203, %v6528
      %v6577 = vmul.f32 %v5204, %v6529
      %v6578 = vmul.f32 %v5205, %v6530
      %v6579 = vmul.f32 %v5206, %v6531
      %v6580 = vmul.f32 %v5207, %v6532
      %v6581 = vmul.f32 %v5208, %v6533
      %v6582 = vmul.f32 %v5209, %v6534
      %v6583 = vmul.f32 %v5210, %v6535
      %v6584 = vmul.f32 %v5211, %v6536
      %v6585 = vmul.f32 %v5212, %v6537
      %v6586 = vmul.f32 %v5213, %v6538
      %v6587 = vmul.f32 %v5214, %v6539
      %v6588 = vmul.f32 %v5215, %v6540
      %v6589 = vmul.f32 %v5216, %v6541
      %v6590 = vmul.f32 %v5217, %v6542
      %v6591 = vmul.f32 %v5218, %v6543
      %v6592 = vmul.f32 %v5219, %v6544
      %v6593 = vmul.f32 %v5220, %v6545
      %v6594 = vmul.f32 %v5221, %v6546
      %v6595 = vmul.f32 %v5222, %v6547
      %v6596 = vmul.f32 %v5223, %v6548
      %v6597 = vmul.f32 %v5224, %v6549
      %v6598 = vmul.f32 %v5225, %v6550
      %v6599 = vmul.f32 %v5226, %v6551
      %v6600 = vadd.f32 %v6552, %v6554
      %v6601 = vadd.f32 %v6600, %v6556
      %v6602 = vadd.f32 %v6601, %v6558
      %v6603 = vadd.f32 %v6602, %v6560
      %v6604 = vadd.f32 %v6603, %v6562
      %v6605 = vadd.f32 %v6604, %v6564
      %v6606 = vadd.f32 %v6605, %v6566
      %v6607 = vadd.f32 %v6606, %v6568
      %v6608 = vadd.f32 %v6607, %v6570
      %v6609 = vadd.f32 %v6608, %v6572
      %v6610 = vadd.f32 %v6609, %v6574
      %v6611 = vadd.f32 %v6610, %v6576
      %v6612 = vadd.f32 %v6611, %v6578
      %v6613 = vadd.f32 %v6612, %v6580
      %v6614 = vadd.f32 %v6613, %v6582
      %v6615 = vadd.f32 %v6614, %v6584
      %v6616 = vadd.f32 %v6615, %v6586
      %v6617 = vadd.f32 %v6616, %v6588
      %v6618 = vadd.f32 %v6617, %v6590
      %v6619 = vadd.f32 %v6618, %v6592
      %v6620 = vadd.f32 %v6619, %v6594
      %v6621 = vadd.f32 %v6620, %v6596
      %v6622 = vadd.f32 %v6621, %v6598
      %v6623 = vrot.slane %v6622, 4
      %v6624 = vadd.f32 %v6622, %v6623
      %v6625 = vrot.slane %v6624, 2
      %v6626 = vadd.f32 %v6624, %v6625
      %v6627 = vrot.slane %v6626, 1
      %v6628 = vadd.f32 %v6626, %v6627
      %v6629 = vadd.f32 %v6553, %v6555
      %v6630 = vadd.f32 %v6629, %v6557
      %v6631 = vadd.f32 %v6630, %v6559
      %v6632 = vadd.f32 %v6631, %v6561
      %v6633 = vadd.f32 %v6632, %v6563
      %v6634 = vadd.f32 %v6633, %v6565
      %v6635 = vadd.f32 %v6634, %v6567
      %v6636 = vadd.f32 %v6635, %v6569
      %v6637 = vadd.f32 %v6636, %v6571
      %v6638 = vadd.f32 %v6637, %v6573
      %v6639 = vadd.f32 %v6638, %v6575
      %v6640 = vadd.f32 %v6639, %v6577
      %v6641 = vadd.f32 %v6640, %v6579
      %v6642 = vadd.f32 %v6641, %v6581
      %v6643 = vadd.f32 %v6642, %v6583
      %v6644 = vadd.f32 %v6643, %v6585
      %v6645 = vadd.f32 %v6644, %v6587
      %v6646 = vadd.f32 %v6645, %v6589
      %v6647 = vadd.f32 %v6646, %v6591
      %v6648 = vadd.f32 %v6647, %v6593
      %v6649 = vadd.f32 %v6648, %v6595
      %v6650 = vadd.f32 %v6649, %v6597
      %v6651 = vadd.f32 %v6650, %v6599
      %v6652 = vrot.slane %v6651, 4
      %v6653 = vadd.f32 %v6651, %v6652
      %v6654 = vrot.slane %v6653, 2
      %v6655 = vadd.f32 %v6653, %v6654
      %v6656 = vrot.slane %v6655, 1
      %v6657 = vadd.f32 %v6655, %v6656
      %s6658 = scalar_lea.vmem %s3, 1536
      %v6659 = vld [vmem:[%s6658] sm:$0xff]
      %v6660 = vld [vmem:[%s6658 + $0x8] sm:$0xff]
      %v6661 = vld [vmem:[%s6658 + $0x10] sm:$0xff]
      %v6662 = vld [vmem:[%s6658 + $0x18] sm:$0xff]
      %v6663 = vld [vmem:[%s6658 + $0x20] sm:$0xff]
      %v6664 = vld [vmem:[%s6658 + $0x28] sm:$0xff]
      %v6665 = vld [vmem:[%s6658 + $0x30] sm:$0xff]
      %v6666 = vld [vmem:[%s6658 + $0x38] sm:$0xff]
      %v6667 = vld [vmem:[%s6658 + $0x40] sm:$0xff]
      %v6668 = vld [vmem:[%s6658 + $0x48] sm:$0xff]
      %v6669 = vld [vmem:[%s6658 + $0x50] sm:$0xff]
      %v6670 = vld [vmem:[%s6658 + $0x58] sm:$0xff]
      %v6671 = vld [vmem:[%s6658 + $0x60] sm:$0xff]
      %v6672 = vld [vmem:[%s6658 + $0x68] sm:$0xff]
      %v6673 = vld [vmem:[%s6658 + $0x70] sm:$0xff]
      %v6674 = vld [vmem:[%s6658 + $0x78] sm:$0xff]
      %v6675 = vld [vmem:[%s6658 + $0x80] sm:$0xff]
      %v6676 = vld [vmem:[%s6658 + $0x88] sm:$0xff]
      %v6677 = vld [vmem:[%s6658 + $0x90] sm:$0xff]
      %v6678 = vld [vmem:[%s6658 + $0x98] sm:$0xff]
      %v6679 = vld [vmem:[%s6658 + $0xa0] sm:$0xff]
      %v6680 = vld [vmem:[%s6658 + $0xa8] sm:$0xff]
      %v6681 = vld [vmem:[%s6658 + $0xb0] sm:$0xff]
      %v6682 = vld [vmem:[%s6658 + $0xb8] sm:$0xff]
      %v6683 = vunpack.c.l.bf16 %v6659
      %v6684 = vunpack.c.h.bf16 %v6659
      %v6685 = vunpack.c.l.bf16 %v6660
      %v6686 = vunpack.c.h.bf16 %v6660
      %v6687 = vunpack.c.l.bf16 %v6661
      %v6688 = vunpack.c.h.bf16 %v6661
      %v6689 = vunpack.c.l.bf16 %v6662
      %v6690 = vunpack.c.h.bf16 %v6662
      %v6691 = vunpack.c.l.bf16 %v6663
      %v6692 = vunpack.c.h.bf16 %v6663
      %v6693 = vunpack.c.l.bf16 %v6664
      %v6694 = vunpack.c.h.bf16 %v6664
      %v6695 = vunpack.c.l.bf16 %v6665
      %v6696 = vunpack.c.h.bf16 %v6665
      %v6697 = vunpack.c.l.bf16 %v6666
      %v6698 = vunpack.c.h.bf16 %v6666
      %v6699 = vunpack.c.l.bf16 %v6667
      %v6700 = vunpack.c.h.bf16 %v6667
      %v6701 = vunpack.c.l.bf16 %v6668
      %v6702 = vunpack.c.h.bf16 %v6668
      %v6703 = vunpack.c.l.bf16 %v6669
      %v6704 = vunpack.c.h.bf16 %v6669
      %v6705 = vunpack.c.l.bf16 %v6670
      %v6706 = vunpack.c.h.bf16 %v6670
      %v6707 = vunpack.c.l.bf16 %v6671
      %v6708 = vunpack.c.h.bf16 %v6671
      %v6709 = vunpack.c.l.bf16 %v6672
      %v6710 = vunpack.c.h.bf16 %v6672
      %v6711 = vunpack.c.l.bf16 %v6673
      %v6712 = vunpack.c.h.bf16 %v6673
      %v6713 = vunpack.c.l.bf16 %v6674
      %v6714 = vunpack.c.h.bf16 %v6674
      %v6715 = vunpack.c.l.bf16 %v6675
      %v6716 = vunpack.c.h.bf16 %v6675
      %v6717 = vunpack.c.l.bf16 %v6676
      %v6718 = vunpack.c.h.bf16 %v6676
      %v6719 = vunpack.c.l.bf16 %v6677
      %v6720 = vunpack.c.h.bf16 %v6677
      %v6721 = vunpack.c.l.bf16 %v6678
      %v6722 = vunpack.c.h.bf16 %v6678
      %v6723 = vunpack.c.l.bf16 %v6679
      %v6724 = vunpack.c.h.bf16 %v6679
      %v6725 = vunpack.c.l.bf16 %v6680
      %v6726 = vunpack.c.h.bf16 %v6680
      %v6727 = vunpack.c.l.bf16 %v6681
      %v6728 = vunpack.c.h.bf16 %v6681
      %v6729 = vunpack.c.l.bf16 %v6682
      %v6730 = vunpack.c.h.bf16 %v6682
      %v6731 = vmul.f32 %v5179, %v6683
      %v6732 = vmul.f32 %v5180, %v6684
      %v6733 = vmul.f32 %v5181, %v6685
      %v6734 = vmul.f32 %v5182, %v6686
      %v6735 = vmul.f32 %v5183, %v6687
      %v6736 = vmul.f32 %v5184, %v6688
      %v6737 = vmul.f32 %v5185, %v6689
      %v6738 = vmul.f32 %v5186, %v6690
      %v6739 = vmul.f32 %v5187, %v6691
      %v6740 = vmul.f32 %v5188, %v6692
      %v6741 = vmul.f32 %v5189, %v6693
      %v6742 = vmul.f32 %v5190, %v6694
      %v6743 = vmul.f32 %v5191, %v6695
      %v6744 = vmul.f32 %v5192, %v6696
      %v6745 = vmul.f32 %v5193, %v6697
      %v6746 = vmul.f32 %v5194, %v6698
      %v6747 = vmul.f32 %v5195, %v6699
      %v6748 = vmul.f32 %v5196, %v6700
      %v6749 = vmul.f32 %v5197, %v6701
      %v6750 = vmul.f32 %v5198, %v6702
      %v6751 = vmul.f32 %v5199, %v6703
      %v6752 = vmul.f32 %v5200, %v6704
      %v6753 = vmul.f32 %v5201, %v6705
      %v6754 = vmul.f32 %v5202, %v6706
      %v6755 = vmul.f32 %v5203, %v6707
      %v6756 = vmul.f32 %v5204, %v6708
      %v6757 = vmul.f32 %v5205, %v6709
      %v6758 = vmul.f32 %v5206, %v6710
      %v6759 = vmul.f32 %v5207, %v6711
      %v6760 = vmul.f32 %v5208, %v6712
      %v6761 = vmul.f32 %v5209, %v6713
      %v6762 = vmul.f32 %v5210, %v6714
      %v6763 = vmul.f32 %v5211, %v6715
      %v6764 = vmul.f32 %v5212, %v6716
      %v6765 = vmul.f32 %v5213, %v6717
      %v6766 = vmul.f32 %v5214, %v6718
      %v6767 = vmul.f32 %v5215, %v6719
      %v6768 = vmul.f32 %v5216, %v6720
      %v6769 = vmul.f32 %v5217, %v6721
      %v6770 = vmul.f32 %v5218, %v6722
      %v6771 = vmul.f32 %v5219, %v6723
      %v6772 = vmul.f32 %v5220, %v6724
      %v6773 = vmul.f32 %v5221, %v6725
      %v6774 = vmul.f32 %v5222, %v6726
      %v6775 = vmul.f32 %v5223, %v6727
      %v6776 = vmul.f32 %v5224, %v6728
      %v6777 = vmul.f32 %v5225, %v6729
      %v6778 = vmul.f32 %v5226, %v6730
      %v6779 = vadd.f32 %v6731, %v6733
      %v6780 = vadd.f32 %v6779, %v6735
      %v6781 = vadd.f32 %v6780, %v6737
      %v6782 = vadd.f32 %v6781, %v6739
      %v6783 = vadd.f32 %v6782, %v6741
      %v6784 = vadd.f32 %v6783, %v6743
      %v6785 = vadd.f32 %v6784, %v6745
      %v6786 = vadd.f32 %v6785, %v6747
      %v6787 = vadd.f32 %v6786, %v6749
      %v6788 = vadd.f32 %v6787, %v6751
      %v6789 = vadd.f32 %v6788, %v6753
      %v6790 = vadd.f32 %v6789, %v6755
      %v6791 = vadd.f32 %v6790, %v6757
      %v6792 = vadd.f32 %v6791, %v6759
      %v6793 = vadd.f32 %v6792, %v6761
      %v6794 = vadd.f32 %v6793, %v6763
      %v6795 = vadd.f32 %v6794, %v6765
      %v6796 = vadd.f32 %v6795, %v6767
      %v6797 = vadd.f32 %v6796, %v6769
      %v6798 = vadd.f32 %v6797, %v6771
      %v6799 = vadd.f32 %v6798, %v6773
      %v6800 = vadd.f32 %v6799, %v6775
      %v6801 = vadd.f32 %v6800, %v6777
      %v6802 = vrot.slane %v6801, 4
      %v6803 = vadd.f32 %v6801, %v6802
      %v6804 = vrot.slane %v6803, 2
      %v6805 = vadd.f32 %v6803, %v6804
      %v6806 = vrot.slane %v6805, 1
      %v6807 = vadd.f32 %v6805, %v6806
      %v6808 = vadd.f32 %v6732, %v6734
      %v6809 = vadd.f32 %v6808, %v6736
      %v6810 = vadd.f32 %v6809, %v6738
      %v6811 = vadd.f32 %v6810, %v6740
      %v6812 = vadd.f32 %v6811, %v6742
      %v6813 = vadd.f32 %v6812, %v6744
      %v6814 = vadd.f32 %v6813, %v6746
      %v6815 = vadd.f32 %v6814, %v6748
      %v6816 = vadd.f32 %v6815, %v6750
      %v6817 = vadd.f32 %v6816, %v6752
      %v6818 = vadd.f32 %v6817, %v6754
      %v6819 = vadd.f32 %v6818, %v6756
      %v6820 = vadd.f32 %v6819, %v6758
      %v6821 = vadd.f32 %v6820, %v6760
      %v6822 = vadd.f32 %v6821, %v6762
      %v6823 = vadd.f32 %v6822, %v6764
      %v6824 = vadd.f32 %v6823, %v6766
      %v6825 = vadd.f32 %v6824, %v6768
      %v6826 = vadd.f32 %v6825, %v6770
      %v6827 = vadd.f32 %v6826, %v6772
      %v6828 = vadd.f32 %v6827, %v6774
      %v6829 = vadd.f32 %v6828, %v6776
      %v6830 = vadd.f32 %v6829, %v6778
      %v6831 = vrot.slane %v6830, 4
      %v6832 = vadd.f32 %v6830, %v6831
      %v6833 = vrot.slane %v6832, 2
      %v6834 = vadd.f32 %v6832, %v6833
      %v6835 = vrot.slane %v6834, 1
      %v6836 = vadd.f32 %v6834, %v6835
      %s6837 = scalar_lea.vmem %s3, 1728
      %v6838 = vld [vmem:[%s6837] sm:$0xff]
      %v6839 = vld [vmem:[%s6837 + $0x8] sm:$0xff]
      %v6840 = vld [vmem:[%s6837 + $0x10] sm:$0xff]
      %v6841 = vld [vmem:[%s6837 + $0x18] sm:$0xff]
      %v6842 = vld [vmem:[%s6837 + $0x20] sm:$0xff]
      %v6843 = vld [vmem:[%s6837 + $0x28] sm:$0xff]
      %v6844 = vld [vmem:[%s6837 + $0x30] sm:$0xff]
      %v6845 = vld [vmem:[%s6837 + $0x38] sm:$0xff]
      %v6846 = vld [vmem:[%s6837 + $0x40] sm:$0xff]
      %v6847 = vld [vmem:[%s6837 + $0x48] sm:$0xff]
      %v6848 = vld [vmem:[%s6837 + $0x50] sm:$0xff]
      %v6849 = vld [vmem:[%s6837 + $0x58] sm:$0xff]
      %v6850 = vld [vmem:[%s6837 + $0x60] sm:$0xff]
      %v6851 = vld [vmem:[%s6837 + $0x68] sm:$0xff]
      %v6852 = vld [vmem:[%s6837 + $0x70] sm:$0xff]
      %v6853 = vld [vmem:[%s6837 + $0x78] sm:$0xff]
      %v6854 = vld [vmem:[%s6837 + $0x80] sm:$0xff]
      %v6855 = vld [vmem:[%s6837 + $0x88] sm:$0xff]
      %v6856 = vld [vmem:[%s6837 + $0x90] sm:$0xff]
      %v6857 = vld [vmem:[%s6837 + $0x98] sm:$0xff]
      %v6858 = vld [vmem:[%s6837 + $0xa0] sm:$0xff]
      %v6859 = vld [vmem:[%s6837 + $0xa8] sm:$0xff]
      %v6860 = vld [vmem:[%s6837 + $0xb0] sm:$0xff]
      %v6861 = vld [vmem:[%s6837 + $0xb8] sm:$0xff]
      %v6862 = vunpack.c.l.bf16 %v6838
      %v6863 = vunpack.c.h.bf16 %v6838
      %v6864 = vunpack.c.l.bf16 %v6839
      %v6865 = vunpack.c.h.bf16 %v6839
      %v6866 = vunpack.c.l.bf16 %v6840
      %v6867 = vunpack.c.h.bf16 %v6840
      %v6868 = vunpack.c.l.bf16 %v6841
      %v6869 = vunpack.c.h.bf16 %v6841
      %v6870 = vunpack.c.l.bf16 %v6842
      %v6871 = vunpack.c.h.bf16 %v6842
      %v6872 = vunpack.c.l.bf16 %v6843
      %v6873 = vunpack.c.h.bf16 %v6843
      %v6874 = vunpack.c.l.bf16 %v6844
      %v6875 = vunpack.c.h.bf16 %v6844
      %v6876 = vunpack.c.l.bf16 %v6845
      %v6877 = vunpack.c.h.bf16 %v6845
      %v6878 = vunpack.c.l.bf16 %v6846
      %v6879 = vunpack.c.h.bf16 %v6846
      %v6880 = vunpack.c.l.bf16 %v6847
      %v6881 = vunpack.c.h.bf16 %v6847
      %v6882 = vunpack.c.l.bf16 %v6848
      %v6883 = vunpack.c.h.bf16 %v6848
      %v6884 = vunpack.c.l.bf16 %v6849
      %v6885 = vunpack.c.h.bf16 %v6849
      %v6886 = vunpack.c.l.bf16 %v6850
      %v6887 = vunpack.c.h.bf16 %v6850
      %v6888 = vunpack.c.l.bf16 %v6851
      %v6889 = vunpack.c.h.bf16 %v6851
      %v6890 = vunpack.c.l.bf16 %v6852
      %v6891 = vunpack.c.h.bf16 %v6852
      %v6892 = vunpack.c.l.bf16 %v6853
      %v6893 = vunpack.c.h.bf16 %v6853
      %v6894 = vunpack.c.l.bf16 %v6854
      %v6895 = vunpack.c.h.bf16 %v6854
      %v6896 = vunpack.c.l.bf16 %v6855
      %v6897 = vunpack.c.h.bf16 %v6855
      %v6898 = vunpack.c.l.bf16 %v6856
      %v6899 = vunpack.c.h.bf16 %v6856
      %v6900 = vunpack.c.l.bf16 %v6857
      %v6901 = vunpack.c.h.bf16 %v6857
      %v6902 = vunpack.c.l.bf16 %v6858
      %v6903 = vunpack.c.h.bf16 %v6858
      %v6904 = vunpack.c.l.bf16 %v6859
      %v6905 = vunpack.c.h.bf16 %v6859
      %v6906 = vunpack.c.l.bf16 %v6860
      %v6907 = vunpack.c.h.bf16 %v6860
      %v6908 = vunpack.c.l.bf16 %v6861
      %v6909 = vunpack.c.h.bf16 %v6861
      %v6910 = vmul.f32 %v5179, %v6862
      %v6911 = vmul.f32 %v5180, %v6863
      %v6912 = vmul.f32 %v5181, %v6864
      %v6913 = vmul.f32 %v5182, %v6865
      %v6914 = vmul.f32 %v5183, %v6866
      %v6915 = vmul.f32 %v5184, %v6867
      %v6916 = vmul.f32 %v5185, %v6868
      %v6917 = vmul.f32 %v5186, %v6869
      %v6918 = vmul.f32 %v5187, %v6870
      %v6919 = vmul.f32 %v5188, %v6871
      %v6920 = vmul.f32 %v5189, %v6872
      %v6921 = vmul.f32 %v5190, %v6873
      %v6922 = vmul.f32 %v5191, %v6874
      %v6923 = vmul.f32 %v5192, %v6875
      %v6924 = vmul.f32 %v5193, %v6876
      %v6925 = vmul.f32 %v5194, %v6877
      %v6926 = vmul.f32 %v5195, %v6878
      %v6927 = vmul.f32 %v5196, %v6879
      %v6928 = vmul.f32 %v5197, %v6880
      %v6929 = vmul.f32 %v5198, %v6881
      %v6930 = vmul.f32 %v5199, %v6882
      %v6931 = vmul.f32 %v5200, %v6883
      %v6932 = vmul.f32 %v5201, %v6884
      %v6933 = vmul.f32 %v5202, %v6885
      %v6934 = vmul.f32 %v5203, %v6886
      %v6935 = vmul.f32 %v5204, %v6887
      %v6936 = vmul.f32 %v5205, %v6888
      %v6937 = vmul.f32 %v5206, %v6889
      %v6938 = vmul.f32 %v5207, %v6890
      %v6939 = vmul.f32 %v5208, %v6891
      %v6940 = vmul.f32 %v5209, %v6892
      %v6941 = vmul.f32 %v5210, %v6893
      %v6942 = vmul.f32 %v5211, %v6894
      %v6943 = vmul.f32 %v5212, %v6895
      %v6944 = vmul.f32 %v5213, %v6896
      %v6945 = vmul.f32 %v5214, %v6897
      %v6946 = vmul.f32 %v5215, %v6898
      %v6947 = vmul.f32 %v5216, %v6899
      %v6948 = vmul.f32 %v5217, %v6900
      %v6949 = vmul.f32 %v5218, %v6901
      %v6950 = vmul.f32 %v5219, %v6902
      %v6951 = vmul.f32 %v5220, %v6903
      %v6952 = vmul.f32 %v5221, %v6904
      %v6953 = vmul.f32 %v5222, %v6905
      %v6954 = vmul.f32 %v5223, %v6906
      %v6955 = vmul.f32 %v5224, %v6907
      %v6956 = vmul.f32 %v5225, %v6908
      %v6957 = vmul.f32 %v5226, %v6909
      %v6958 = vadd.f32 %v6910, %v6912
      %v6959 = vadd.f32 %v6958, %v6914
      %v6960 = vadd.f32 %v6959, %v6916
      %v6961 = vadd.f32 %v6960, %v6918
      %v6962 = vadd.f32 %v6961, %v6920
      %v6963 = vadd.f32 %v6962, %v6922
      %v6964 = vadd.f32 %v6963, %v6924
      %v6965 = vadd.f32 %v6964, %v6926
      %v6966 = vadd.f32 %v6965, %v6928
      %v6967 = vadd.f32 %v6966, %v6930
      %v6968 = vadd.f32 %v6967, %v6932
      %v6969 = vadd.f32 %v6968, %v6934
      %v6970 = vadd.f32 %v6969, %v6936
      %v6971 = vadd.f32 %v6970, %v6938
      %v6972 = vadd.f32 %v6971, %v6940
      %v6973 = vadd.f32 %v6972, %v6942
      %v6974 = vadd.f32 %v6973, %v6944
      %v6975 = vadd.f32 %v6974, %v6946
      %v6976 = vadd.f32 %v6975, %v6948
      %v6977 = vadd.f32 %v6976, %v6950
      %v6978 = vadd.f32 %v6977, %v6952
      %v6979 = vadd.f32 %v6978, %v6954
      %v6980 = vadd.f32 %v6979, %v6956
      %v6981 = vrot.slane %v6980, 4
      %v6982 = vadd.f32 %v6980, %v6981
      %v6983 = vrot.slane %v6982, 2
      %v6984 = vadd.f32 %v6982, %v6983
      %v6985 = vrot.slane %v6984, 1
      %v6986 = vadd.f32 %v6984, %v6985
      %v6987 = vadd.f32 %v6911, %v6913
      %v6988 = vadd.f32 %v6987, %v6915
      %v6989 = vadd.f32 %v6988, %v6917
      %v6990 = vadd.f32 %v6989, %v6919
      %v6991 = vadd.f32 %v6990, %v6921
      %v6992 = vadd.f32 %v6991, %v6923
      %v6993 = vadd.f32 %v6992, %v6925
      %v6994 = vadd.f32 %v6993, %v6927
      %v6995 = vadd.f32 %v6994, %v6929
      %v6996 = vadd.f32 %v6995, %v6931
      %v6997 = vadd.f32 %v6996, %v6933
      %v6998 = vadd.f32 %v6997, %v6935
      %v6999 = vadd.f32 %v6998, %v6937
      %v7000 = vadd.f32 %v6999, %v6939
      %v7001 = vadd.f32 %v7000, %v6941
      %v7002 = vadd.f32 %v7001, %v6943
      %v7003 = vadd.f32 %v7002, %v6945
      %v7004 = vadd.f32 %v7003, %v6947
      %v7005 = vadd.f32 %v7004, %v6949
      %v7006 = vadd.f32 %v7005, %v6951
      %v7007 = vadd.f32 %v7006, %v6953
      %v7008 = vadd.f32 %v7007, %v6955
      %v7009 = vadd.f32 %v7008, %v6957
      %v7010 = vrot.slane %v7009, 4
      %v7011 = vadd.f32 %v7009, %v7010
      %v7012 = vrot.slane %v7011, 2
      %v7013 = vadd.f32 %v7011, %v7012
      %v7014 = vrot.slane %v7013, 1
      %v7015 = vadd.f32 %v7013, %v7014
      %s7016 = scalar_lea.vmem %s3, 1920
      %v7017 = vld [vmem:[%s7016] sm:$0xff]
      %v7018 = vld [vmem:[%s7016 + $0x8] sm:$0xff]
      %v7019 = vld [vmem:[%s7016 + $0x10] sm:$0xff]
      %v7020 = vld [vmem:[%s7016 + $0x18] sm:$0xff]
      %v7021 = vld [vmem:[%s7016 + $0x20] sm:$0xff]
      %v7022 = vld [vmem:[%s7016 + $0x28] sm:$0xff]
      %v7023 = vld [vmem:[%s7016 + $0x30] sm:$0xff]
      %v7024 = vld [vmem:[%s7016 + $0x38] sm:$0xff]
      %v7025 = vld [vmem:[%s7016 + $0x40] sm:$0xff]
      %v7026 = vld [vmem:[%s7016 + $0x48] sm:$0xff]
      %v7027 = vld [vmem:[%s7016 + $0x50] sm:$0xff]
      %v7028 = vld [vmem:[%s7016 + $0x58] sm:$0xff]
      %v7029 = vld [vmem:[%s7016 + $0x60] sm:$0xff]
      %v7030 = vld [vmem:[%s7016 + $0x68] sm:$0xff]
      %v7031 = vld [vmem:[%s7016 + $0x70] sm:$0xff]
      %v7032 = vld [vmem:[%s7016 + $0x78] sm:$0xff]
      %v7033 = vld [vmem:[%s7016 + $0x80] sm:$0xff]
      %v7034 = vld [vmem:[%s7016 + $0x88] sm:$0xff]
      %v7035 = vld [vmem:[%s7016 + $0x90] sm:$0xff]
      %v7036 = vld [vmem:[%s7016 + $0x98] sm:$0xff]
      %v7037 = vld [vmem:[%s7016 + $0xa0] sm:$0xff]
      %v7038 = vld [vmem:[%s7016 + $0xa8] sm:$0xff]
      %v7039 = vld [vmem:[%s7016 + $0xb0] sm:$0xff]
      %v7040 = vld [vmem:[%s7016 + $0xb8] sm:$0xff]
      %v7041 = vunpack.c.l.bf16 %v7017
      %v7042 = vunpack.c.h.bf16 %v7017
      %v7043 = vunpack.c.l.bf16 %v7018
      %v7044 = vunpack.c.h.bf16 %v7018
      %v7045 = vunpack.c.l.bf16 %v7019
      %v7046 = vunpack.c.h.bf16 %v7019
      %v7047 = vunpack.c.l.bf16 %v7020
      %v7048 = vunpack.c.h.bf16 %v7020
      %v7049 = vunpack.c.l.bf16 %v7021
      %v7050 = vunpack.c.h.bf16 %v7021
      %v7051 = vunpack.c.l.bf16 %v7022
      %v7052 = vunpack.c.h.bf16 %v7022
      %v7053 = vunpack.c.l.bf16 %v7023
      %v7054 = vunpack.c.h.bf16 %v7023
      %v7055 = vunpack.c.l.bf16 %v7024
      %v7056 = vunpack.c.h.bf16 %v7024
      %v7057 = vunpack.c.l.bf16 %v7025
      %v7058 = vunpack.c.h.bf16 %v7025
      %v7059 = vunpack.c.l.bf16 %v7026
      %v7060 = vunpack.c.h.bf16 %v7026
      %v7061 = vunpack.c.l.bf16 %v7027
      %v7062 = vunpack.c.h.bf16 %v7027
      %v7063 = vunpack.c.l.bf16 %v7028
      %v7064 = vunpack.c.h.bf16 %v7028
      %v7065 = vunpack.c.l.bf16 %v7029
      %v7066 = vunpack.c.h.bf16 %v7029
      %v7067 = vunpack.c.l.bf16 %v7030
      %v7068 = vunpack.c.h.bf16 %v7030
      %v7069 = vunpack.c.l.bf16 %v7031
      %v7070 = vunpack.c.h.bf16 %v7031
      %v7071 = vunpack.c.l.bf16 %v7032
      %v7072 = vunpack.c.h.bf16 %v7032
      %v7073 = vunpack.c.l.bf16 %v7033
      %v7074 = vunpack.c.h.bf16 %v7033
      %v7075 = vunpack.c.l.bf16 %v7034
      %v7076 = vunpack.c.h.bf16 %v7034
      %v7077 = vunpack.c.l.bf16 %v7035
      %v7078 = vunpack.c.h.bf16 %v7035
      %v7079 = vunpack.c.l.bf16 %v7036
      %v7080 = vunpack.c.h.bf16 %v7036
      %v7081 = vunpack.c.l.bf16 %v7037
      %v7082 = vunpack.c.h.bf16 %v7037
      %v7083 = vunpack.c.l.bf16 %v7038
      %v7084 = vunpack.c.h.bf16 %v7038
      %v7085 = vunpack.c.l.bf16 %v7039
      %v7086 = vunpack.c.h.bf16 %v7039
      %v7087 = vunpack.c.l.bf16 %v7040
      %v7088 = vunpack.c.h.bf16 %v7040
      %v7089 = vmul.f32 %v5179, %v7041
      %v7090 = vmul.f32 %v5180, %v7042
      %v7091 = vmul.f32 %v5181, %v7043
      %v7092 = vmul.f32 %v5182, %v7044
      %v7093 = vmul.f32 %v5183, %v7045
      %v7094 = vmul.f32 %v5184, %v7046
      %v7095 = vmul.f32 %v5185, %v7047
      %v7096 = vmul.f32 %v5186, %v7048
      %v7097 = vmul.f32 %v5187, %v7049
      %v7098 = vmul.f32 %v5188, %v7050
      %v7099 = vmul.f32 %v5189, %v7051
      %v7100 = vmul.f32 %v5190, %v7052
      %v7101 = vmul.f32 %v5191, %v7053
      %v7102 = vmul.f32 %v5192, %v7054
      %v7103 = vmul.f32 %v5193, %v7055
      %v7104 = vmul.f32 %v5194, %v7056
      %v7105 = vmul.f32 %v5195, %v7057
      %v7106 = vmul.f32 %v5196, %v7058
      %v7107 = vmul.f32 %v5197, %v7059
      %v7108 = vmul.f32 %v5198, %v7060
      %v7109 = vmul.f32 %v5199, %v7061
      %v7110 = vmul.f32 %v5200, %v7062
      %v7111 = vmul.f32 %v5201, %v7063
      %v7112 = vmul.f32 %v5202, %v7064
      %v7113 = vmul.f32 %v5203, %v7065
      %v7114 = vmul.f32 %v5204, %v7066
      %v7115 = vmul.f32 %v5205, %v7067
      %v7116 = vmul.f32 %v5206, %v7068
      %v7117 = vmul.f32 %v5207, %v7069
      %v7118 = vmul.f32 %v5208, %v7070
      %v7119 = vmul.f32 %v5209, %v7071
      %v7120 = vmul.f32 %v5210, %v7072
      %v7121 = vmul.f32 %v5211, %v7073
      %v7122 = vmul.f32 %v5212, %v7074
      %v7123 = vmul.f32 %v5213, %v7075
      %v7124 = vmul.f32 %v5214, %v7076
      %v7125 = vmul.f32 %v5215, %v7077
      %v7126 = vmul.f32 %v5216, %v7078
      %v7127 = vmul.f32 %v5217, %v7079
      %v7128 = vmul.f32 %v5218, %v7080
      %v7129 = vmul.f32 %v5219, %v7081
      %v7130 = vmul.f32 %v5220, %v7082
      %v7131 = vmul.f32 %v5221, %v7083
      %v7132 = vmul.f32 %v5222, %v7084
      %v7133 = vmul.f32 %v5223, %v7085
      %v7134 = vmul.f32 %v5224, %v7086
      %v7135 = vmul.f32 %v5225, %v7087
      %v7136 = vmul.f32 %v5226, %v7088
      %v7137 = vadd.f32 %v7089, %v7091
      %v7138 = vadd.f32 %v7137, %v7093
      %v7139 = vadd.f32 %v7138, %v7095
      %v7140 = vadd.f32 %v7139, %v7097
      %v7141 = vadd.f32 %v7140, %v7099
      %v7142 = vadd.f32 %v7141, %v7101
      %v7143 = vadd.f32 %v7142, %v7103
      %v7144 = vadd.f32 %v7143, %v7105
      %v7145 = vadd.f32 %v7144, %v7107
      %v7146 = vadd.f32 %v7145, %v7109
      %v7147 = vadd.f32 %v7146, %v7111
      %v7148 = vadd.f32 %v7147, %v7113
      %v7149 = vadd.f32 %v7148, %v7115
      %v7150 = vadd.f32 %v7149, %v7117
      %v7151 = vadd.f32 %v7150, %v7119
      %v7152 = vadd.f32 %v7151, %v7121
      %v7153 = vadd.f32 %v7152, %v7123
      %v7154 = vadd.f32 %v7153, %v7125
      %v7155 = vadd.f32 %v7154, %v7127
      %v7156 = vadd.f32 %v7155, %v7129
      %v7157 = vadd.f32 %v7156, %v7131
      %v7158 = vadd.f32 %v7157, %v7133
      %v7159 = vadd.f32 %v7158, %v7135
      %v7160 = vrot.slane %v7159, 4
      %v7161 = vadd.f32 %v7159, %v7160
      %v7162 = vrot.slane %v7161, 2
      %v7163 = vadd.f32 %v7161, %v7162
      %v7164 = vrot.slane %v7163, 1
      %v7165 = vadd.f32 %v7163, %v7164
      %v7166 = vadd.f32 %v7090, %v7092
      %v7167 = vadd.f32 %v7166, %v7094
      %v7168 = vadd.f32 %v7167, %v7096
      %v7169 = vadd.f32 %v7168, %v7098
      %v7170 = vadd.f32 %v7169, %v7100
      %v7171 = vadd.f32 %v7170, %v7102
      %v7172 = vadd.f32 %v7171, %v7104
      %v7173 = vadd.f32 %v7172, %v7106
      %v7174 = vadd.f32 %v7173, %v7108
      %v7175 = vadd.f32 %v7174, %v7110
      %v7176 = vadd.f32 %v7175, %v7112
      %v7177 = vadd.f32 %v7176, %v7114
      %v7178 = vadd.f32 %v7177, %v7116
      %v7179 = vadd.f32 %v7178, %v7118
      %v7180 = vadd.f32 %v7179, %v7120
      %v7181 = vadd.f32 %v7180, %v7122
      %v7182 = vadd.f32 %v7181, %v7124
      %v7183 = vadd.f32 %v7182, %v7126
      %v7184 = vadd.f32 %v7183, %v7128
      %v7185 = vadd.f32 %v7184, %v7130
      %v7186 = vadd.f32 %v7185, %v7132
      %v7187 = vadd.f32 %v7186, %v7134
      %v7188 = vadd.f32 %v7187, %v7136
      %v7189 = vrot.slane %v7188, 4
      %v7190 = vadd.f32 %v7188, %v7189
      %v7191 = vrot.slane %v7190, 2
      %v7192 = vadd.f32 %v7190, %v7191
      %v7193 = vrot.slane %v7192, 1
      %v7194 = vadd.f32 %v7192, %v7193
      %vm7195 = vcmask 1040384
      %v7196 = vsel %vm7195, %v5375, %v5554
      %v7197 = vsel %vm7195, %v5404, %v5583
      %vm7198 = vcmask 1041408
      %v7199 = vsel %vm7198, %v7196, %v5733
      %v7200 = vsel %vm7198, %v7197, %v5762
      %vm7201 = vcmask 1042432
      %v7202 = vsel %vm7201, %v7199, %v5912
      %v7203 = vsel %vm7201, %v7200, %v5941
      %vm7204 = vcmask 1043456
      %v7205 = vsel %vm7204, %v7202, %v6091
      %v7206 = vsel %vm7204, %v7203, %v6120
      %vm7207 = vcmask 1044480
      %v7208 = vsel %vm7207, %v7205, %v6270
      %v7209 = vsel %vm7207, %v7206, %v6299
      %vm7210 = vcmask 1045504
      %v7211 = vsel %vm7210, %v7208, %v6449
      %v7212 = vsel %vm7210, %v7209, %v6478
      %vm7213 = vcmask 1046528
      %v7214 = vsel %vm7213, %v7211, %v6628
      %v7215 = vsel %vm7213, %v7212, %v6657
      %v7216 = vsel %vm7195, %v6807, %v6986
      %v7217 = vsel %vm7195, %v6836, %v7015
      %v7218 = vsel %vm7198, %v7216, %v7165
      %v7219 = vsel %vm7198, %v7217, %v7194
      %v7220 = vsel %vm7201, %v7218, 0.0
      %v7221 = vsel %vm7201, %v7219, 0.0
      %v7222 = vadd.f32 %v7214, %v7215
      %7223 = vadd.xlane.f32.xlu0 %v7222
      %v7224 = vpop.xlane.xlu0 %7223
      %v7225 = vadd.f32 %v7220, %v7221
      %7226 = vadd.xlane.f32.xlu0 %v7225
      %v7227 = vpop.xlane.xlu0 %7226
      %v7228 = vld [vmem:[%s4] sm:$0xff]
      %v7229 = vld [vmem:[%s4 + $0x8] sm:$0xff]
      %v7230 = vadd.f32 %v7224, %v7228
      %v7231 = vadd.f32 %v7227, %v7229
      %vm7232 = vcmp.ge.f32.partialorder %v7230, 0.0
      %vm7233 = vcmp.ge.f32.partialorder %v7231, 0.0
      %v7234 = vmul.f32 %v7230, 0.01
      %v7235 = vmul.f32 %v7231, 0.01
      %v7236 = vsel %vm7232, %v7230, %v7234
      %v7237 = vsel %vm7233, %v7231, %v7235
      %7238 = vst [vmem:[%s224] sm:$0xff] %v7236
      %7239 = vst [vmem:[%s224 + $0x8] sm:$0xff] %v7237
      %p7240 = scmp.lt.s32.totalorder %s16, 1
      %s7241 = scalar_select %p7240, %s16, 1
      %s7242 = smul.addr %s7241, 2
      %s7243 = smul.addr %s7242, 8
      %s7244 = scalar_lea.vmem %s5, %s7243
      // Predicated region
      $region41: #{cnn_forward_pallas.1} parent=39 // pred_check
        %p7245 = pneg %p144
      $region42: #{cnn_forward_pallas.1} parent=39 // pred_check_branch
        %7247 = sbr.rel (%p7245) target = $region44
      $region43: #{cnn_forward_pallas.1} parent=39 // pred_region
        _
      $region44: #{cnn_forward_pallas.1} parent=39 // pred_fallthru
        _
    $region40: #{cnn_forward_pallas.1} parent=5 // pred_fallthru
      _
    %p7248 = scmp.le.s32.totalorder 2, %s11
    // Predicated region
    $region45: #{cnn_forward_pallas.1} parent=5 // pred_check
      %p7249 = pneg %p7248
    $region46: #{cnn_forward_pallas.1} parent=5 // pred_check_branch
      %7251 = sbr.rel (%p7249) target = $region48
    $region47: #{cnn_forward_pallas.1} parent=5 // pred_region
      %s7252 = ssub.s32 %s11, 2
      // Predicated region
      $region49: #{cnn_forward_pallas.1} parent=47 // pred_check
        %p7253 = pneg %p150
      $region50: #{cnn_forward_pallas.1} parent=47 // pred_check_branch
        %7255 = sbr.rel (%p7253) target = $region52
      $region51: #{cnn_forward_pallas.1} parent=47 // pred_region
        %p7256 = scmp.lt.s32.totalorder %s17, 1
        %s7257 = scalar_select %p7256, %s17, 1
        %s7258 = smul.addr %s7257, 2
        %s7259 = smul.addr %s7258, 8
        %s7260 = scalar_lea.vmem %s5, %s7259
      $region52: #{cnn_forward_pallas.1} parent=47 // pred_fallthru
        _
    $region48: #{cnn_forward_pallas.1} parent=5 // pred_fallthru
      _
  $region6: #{cnn_forward_pallas.1} parent=0 // loop_footer
    %s15 = sadd.s32 1, %s11
  $region7: #{cnn_forward_pallas.1} parent=0 // loop_footer_branch
    %10 = sbr.rel target = $region3
  $region8: #{cnn_forward_pallas.1} parent=0 // loop_exit
    _

</llo_original>
